<compile_context>
chip_gen: v6e
topology: v6e:2x2x1
jax: 0.10.0
libtpu: 0.0.40
codegen_flags: <defaults>
</compile_context>

<pallas_src>
import functools

import jax
import jax.numpy as jnp
from jax import lax
from jax.experimental import pallas as pl
from jax.experimental.pallas import tpu as pltpu

_LANE = 128
_MASK = -1e30
_MIB = 1024 * 1024
_VMEM_LIMIT = None


def _round_up(v, m):
    return ((v + m - 1) // m) * m


def _vmem_limit_bytes():
    cap = 128 * _MIB
    try:
        cap = int(pltpu.get_tpu_info().vmem_capacity_bytes)
    except Exception:
        pass
    # ~3/4 of physical VMEM, clamped: 48 MiB on v7x (64 MiB), 96 MiB on v5e/v6e (128 MiB).
    return int(max(32 * _MIB, min(100 * _MIB, (cap * 3) // 4)))


def _compiler_params():
    global _VMEM_LIMIT
    if _VMEM_LIMIT is None:
        _VMEM_LIMIT = _vmem_limit_bytes()
    return pltpu.CompilerParams(dimension_semantics=("parallel",),
                                vmem_limit_bytes=_VMEM_LIMIT)


# --------------------------------- kernels -------------------------------------

def _feature_transform_kernel(x_ref, w_ref, att_ref, h_ref, a_ref):
    """h = x @ W (lane-padded), a = h @ [att_src_blockdiag | att_dst_blockdiag]."""
    h = jnp.dot(x_ref[...].astype(jnp.float32), w_ref[...],
                preferred_element_type=jnp.float32)                  # [T, out_pad]
    h_ref[...] = h
    a_ref[...] = jnp.dot(h, att_ref[...], preferred_element_type=jnp.float32)  # [T, 2H]


def _masked_softmax(e, neg):
    """LeakyReLU(0.2) + additive mask + row softmax over src nodes."""
    e = jnp.where(e > 0, e, 0.2 * e)                 # LeakyReLU (PyG default slope)
    e = e + neg                                      # additive -1e30 mask, computed once
    m = jnp.max(e, axis=1, keepdims=True)
    p = jnp.exp(e - m)                               # masked entries underflow to exactly 0
    inv = 1.0 / jnp.sum(p, axis=1, keepdims=True)    # self-loops guarantee denom >= 1
    return p * inv


def _gat_attn1_kernel(hf_ref, asrc_t_ref, adst_ref, b_ref, adj_ref, w2_ref, att2_ref,
                      h2_ref, a2_ref, *, heads, out_ch):
    """Layer-1 masked multi-head attention + ELU, fused with layer-2 feature transform."""
    neg = jnp.where(adj_ref[...].astype(jnp.float32) > 0.0, 0.0, _MASK)   # [T, N] once
    hf = hf_ref[...]                                                       # [N, out_pad] f32
    adst = adst_ref[...]                                                   # [T, H]
    asrc_t = asrc_t_ref[...]                                               # [H, N]
    t = adj_ref.shape[0]
    out_pad = hf_ref.shape[1]

    outs = []
    for h in range(heads):
        attn = _masked_softmax(adst[:, h:h + 1] + asrc_t[h:h + 1, :], neg)  # [T, N]
        outs.append(jnp.dot(attn, hf[:, h * out_ch:(h + 1) * out_ch],
                            preferred_element_type=jnp.float32))            # [T, C]
    hc = heads * out_ch
    if out_pad > hc:
        outs.append(jnp.zeros((t, out_pad - hc), jnp.float32))               # lane padding
    # Lane-dense assembly: one [T, out_pad] block, bias + ELU once, single full-width use.
    hcat = jnp.concatenate(outs, axis=1) + b_ref[...]
    hcat = jnp.where(hcat > 0, hcat, jnp.exp(hcat) - 1.0)                    # F.elu; pad stays 0

    # Fused layer-2 feature transform for this dst tile (W2 pad rows/cols are zero).
    h2 = jnp.dot(hcat, w2_ref[...], preferred_element_type=jnp.float32)      # [T, c_pad]
    h2_ref[...] = h2
    a2_ref[...] = jnp.dot(h2, att2_ref[...], preferred_element_type=jnp.float32)  # [T, 2]


def _gat_attn2_kernel(hf_ref, asrc_t_ref, adst_ref, b_ref, adj_ref, logp_ref, z_ref,
                      *, num_classes):
    """Layer-2 single-head masked attention + bias, logits + fused log_softmax."""
    neg = jnp.where(adj_ref[...].astype(jnp.float32) > 0.0, 0.0, _MASK)
    attn = _masked_softmax(adst_ref[...] + asrc_t_ref[...], neg)             # [T, N]
    logits = jnp.dot(attn, hf_ref[...], preferred_element_type=jnp.float32) + b_ref[...]
    z_ref[...] = logits.astype(z_ref.dtype)          # padded class columns are exactly 0
    # log_softmax over the `num_classes` valid columns (lane-padded to c_pad).
    col = lax.broadcasted_iota(jnp.int32, logits.shape, 1)
    valid = col < num_classes
    m = jnp.max(jnp.where(valid, logits, _MASK), axis=-1, keepdims=True)
    s = logits - m
    denom = jnp.sum(jnp.where(valid, jnp.exp(s), 0.0), axis=-1, keepdims=True)
    logp_ref[...] = s - jnp.log(denom)


def _inner_product_kernel(zt_ref, zf_ref, o_ref):
    # InnerProductDecoder (act = identity): tile @ full.T, contracting the class axis.
    zt = zt_ref[...].astype(jnp.float32)
    zf = zf_ref[...].astype(jnp.float32)
    o_ref[...] = lax.dot_general(zt, zf,
                                 dimension_numbers=(((1,), (1,)), ((), ())),
                                 preferred_element_type=jnp.float32)


# ------------------------------ pallas_call wrappers ----------------------------

def feature_transform(x, w_pad, att_blk, *, tile):
    n, f_in = x.shape
    out_pad = w_pad.shape[1]
    a_w = att_blk.shape[1]
    assert n % tile == 0 and tile % 8 == 0
    return pl.pallas_call(
        _feature_transform_kernel,
        out_shape=(jax.ShapeDtypeStruct((n, out_pad), jnp.float32),
                   jax.ShapeDtypeStruct((n, a_w), jnp.float32)),
        grid_spec=pltpu.PrefetchScalarGridSpec(
            num_scalar_prefetch=0,
            grid=(n // tile,),
            in_specs=[
                pl.BlockSpec((tile, f_in), lambda i: (i, 0)),      # x tile
                pl.BlockSpec((f_in, out_pad), lambda i: (0, 0)),   # W (lane-padded)
                pl.BlockSpec((out_pad, a_w), lambda i: (0, 0)),    # [att_src | att_dst] blkdiag
            ],
            out_specs=[pl.BlockSpec((tile, out_pad), lambda i: (i, 0)),
                       pl.BlockSpec((tile, a_w), lambda i: (i, 0))],
        ),
        compiler_params=_compiler_params(),
    )(x, w_pad, att_blk)


def gat_attn1(h1, asrc_t, adst, b1, adj_i8, w2_pad, att2_blk, *, heads, out_ch, tile):
    n, out_pad = h1.shape
    c_pad = w2_pad.shape[1]
    assert n % tile == 0 and tile % 8 == 0
    kern = functools.partial(_gat_attn1_kernel, heads=heads, out_ch=out_ch)
    return pl.pallas_call(
        kern,
        out_shape=(jax.ShapeDtypeStruct((n, c_pad), jnp.float32),   # W2-transformed features
                   jax.ShapeDtypeStruct((n, 2), jnp.float32)),      # [a_src2 | a_dst2]
        grid_spec=pltpu.PrefetchScalarGridSpec(
            num_scalar_prefetch=0,
            grid=(n // tile,),
            in_specs=[
                pl.BlockSpec((n, out_pad), lambda i: (0, 0)),       # h1, all src nodes
                pl.BlockSpec((heads, n), lambda i: (0, 0)),         # a_src^T [H, N]
                pl.BlockSpec((tile, heads), lambda i: (i, 0)),      # a_dst tile
                pl.BlockSpec((1, out_pad), lambda i: (0, 0)),       # bias1 (padded)
                pl.BlockSpec((tile, n), lambda i: (i, 0)),          # adj tile (int8)
                pl.BlockSpec((out_pad, c_pad), lambda i: (0, 0)),   # W2 (fused transform)
                pl.BlockSpec((c_pad, 2), lambda i: (0, 0)),         # [att_src2 | att_dst2]
            ],
            out_specs=[pl.BlockSpec((tile, c_pad), lambda i: (i, 0)),
                       pl.BlockSpec((tile, 2), lambda i: (i, 0))],
        ),
        compiler_params=_compiler_params(),
    )(h1, asrc_t, adst, b1, adj_i8, w2_pad, att2_blk)


def gat_attn2(h2, asrc2_t, adst2, b2, adj_i8, *, num_classes, tile):
    n, c_pad = h2.shape
    assert n % tile == 0 and tile % 8 == 0
    kern = functools.partial(_gat_attn2_kernel, num_classes=num_classes)
    return pl.pallas_call(
        kern,
        out_shape=(jax.ShapeDtypeStruct((n, c_pad), jnp.float32),    # log_softmax (padded)
                   jax.ShapeDtypeStruct((n, c_pad), jnp.bfloat16)),  # logits z (padded)
        grid_spec=pltpu.PrefetchScalarGridSpec(
            num_scalar_prefetch=0,
            grid=(n // tile,),
            in_specs=[
                pl.BlockSpec((n, c_pad), lambda i: (0, 0)),          # h2, all src nodes
                pl.BlockSpec((1, n), lambda i: (0, 0)),              # a_src2^T [1, N]
                pl.BlockSpec((tile, 1), lambda i: (i, 0)),           # a_dst2 tile
                pl.BlockSpec((1, c_pad), lambda i: (0, 0)),          # bias2 (padded)
                pl.BlockSpec((tile, n), lambda i: (i, 0)),           # adj tile (int8)
            ],
            out_specs=[pl.BlockSpec((tile, c_pad), lambda i: (i, 0)),
                       pl.BlockSpec((tile, c_pad), lambda i: (i, 0))],
        ),
        compiler_params=_compiler_params(),
    )(h2, asrc2_t, adst2, b2, adj_i8)


def inner_product_decoder(z, *, tile):
    n, c_pad = z.shape
    assert n % tile == 0 and tile % 8 == 0
    return pl.pallas_call(
        _inner_product_kernel,
        out_shape=jax.ShapeDtypeStruct((n, n), jnp.float32),
        grid_spec=pltpu.PrefetchScalarGridSpec(
            num_scalar_prefetch=0,
            grid=(n // tile,),
            in_specs=[pl.BlockSpec((tile, c_pad), lambda i: (i, 0)),
                      pl.BlockSpec((n, c_pad), lambda i: (0, 0))],
            out_specs=pl.BlockSpec((tile, n), lambda i: (i, 0)),
        ),
        compiler_params=_compiler_params(),
    )(z, z)


# ------------------------------ model wrapper ------------------------------------

def init_params(key, num_features, num_classes, hidden, heads):
    ks = jax.random.split(key, 6)

    def glorot(k, shape):
        lim = (6.0 / (shape[0] + shape[-1])) ** 0.5
        return jax.random.uniform(k, shape, jnp.float32, -lim, lim)

    return {
        "w1": glorot(ks[0], (num_features, heads * hidden)),
        "att_src1": glorot(ks[1], (heads, hidden)),
        "att_dst1": glorot(ks[2], (heads, hidden)),
        "b1": jnp.zeros((1, heads * hidden), jnp.float32),
        "w2": glorot(ks[3], (heads * hidden, num_classes)),
        "att_src2": glorot(ks[4], (1, num_classes)),
        "att_dst2": glorot(ks[5], (1, num_classes)),
        "b2": jnp.zeros((1, num_classes), jnp.float32),
    }


def _att_block(att_src, att_dst, rows):
    """[H, C] per-head att vectors -> block-diagonal [rows, 2H] MXU operand (src | dst)."""
    h, c = att_src.shape
    blk = jnp.zeros((rows, 2 * h), jnp.float32)
    for k in range(h):
        blk = blk.at[k * c:(k + 1) * c, k].set(att_src[k])
        blk = blk.at[k * c:(k + 1) * c, h + k].set(att_dst[k])
    return blk


def prepare_params(params, *, heads, hidden, num_classes):
    """Pad / repack raw GATConv params into lane-dense, kernel-ready form."""
    f_in = params["w1"].shape[0]
    hc = heads * hidden
    out_pad = _round_up(hc, _LANE)
    c_pad = _round_up(num_classes, _LANE)
    w1p = jnp.zeros((f_in, out_pad), jnp.float32).at[:, :hc].set(params["w1"])
    b1p = jnp.zeros((1, out_pad), jnp.float32).at[:, :hc].set(params["b1"])
    w2p = jnp.zeros((out_pad, c_pad), jnp.float32).at[:hc, :num_classes].set(params["w2"])
    b2p = jnp.zeros((1, c_pad), jnp.float32).at[:, :num_classes].set(params["b2"])
    att1 = _att_block(params["att_src1"], params["att_dst1"], out_pad)
    att2 = _att_block(params["att_src2"], params["att_dst2"], c_pad)
    return {"w1p": w1p, "b1p": b1p, "att1": att1,
            "w2p": w2p, "b2p": b2p, "att2": att2}


def gatnet_forward(params, x, adj_i8, *, heads, hidden, num_classes, tile):
    # F.dropout(p=0.6) on features and attention weights is identity in eval mode.
    kp = prepare_params(params, heads=heads, hidden=hidden, num_classes=num_classes)

    # Hoisted layer-1 feature transform + attention logits (computed exactly once).
    h1, a1 = feature_transform(x, kp["w1p"], kp["att1"], tile=tile)    # [N,128], [N,2H]
    asrc1_t = a1[:, :heads].T                                          # [H, N] (one transpose)
    adst1 = a1[:, heads:]                                              # [N, H]

    # Layer-1 attention + ELU, fused with the layer-2 feature transform.
    h2, a2 = gat_attn1(h1, asrc1_t, adst1, kp["b1p"], adj_i8, kp["w2p"], kp["att2"],
                       heads=heads, out_ch=hidden, tile=tile)          # [N,c_pad], [N,2]
    asrc2_t = a2[:, 0:1].T                                             # [1, N]
    adst2 = a2[:, 1:2]                                                 # [N, 1]

    logp_pad, z = gat_attn2(h2, asrc2_t, adst2, kp["b2p"], adj_i8,
                            num_classes=num_classes, tile=tile)        # f32, bf16
    x_product = inner_product_decoder(z, tile=tile)                    # [N, N] f32
    return logp_pad[:, :num_classes], x_product


# ------------------------------------ main ----------------------------------------

if __name__ == "__main__":
    N, F_IN, HIDDEN, HEADS, NUM_CLASSES = 256, 32, 8, 8, 8
    TILE = 64                                        # grid of 4 -> 2 steps per v7x TC

    key = jax.random.PRNGKey(0)
    kx, ke, kd, kp = jax.random.split(key, 4)

    x = jax.random.normal(kx, (N, F_IN), jnp.float32)

    # deterministic small edge set (edge_index: row 0 = src, row 1 = dst)
    E = 1024
    src = jax.random.randint(ke, (E,), 0, N)
    dst = (src + jax.random.randint(kd, (E,), 1, N)) % N
    edge_index = jnp.stack([src, dst]).astype(jnp.int32)

    # dense adjacency mask adj[dst, src] as int8 (4x less O(N^2) traffic than f32);
    # self-loops added as in PyG GATConv (guarantees no empty softmax rows).
    adj = jnp.zeros((N, N), jnp.int8)
    adj = adj.at[edge_index[1], edge_index[0]].set(1)
    adj = adj.at[jnp.arange(N), jnp.arange(N)].set(1)

    params = init_params(kp, F_IN, NUM_CLASSES, HIDDEN, HEADS)

    forward = jax.jit(functools.partial(
        gatnet_forward, heads=HEADS, hidden=HIDDEN, num_classes=NUM_CLASSES, tile=TILE))

    log_probs, x_product = forward(params, x, adj)
    jax.block_until_ready((log_probs, x_product))

    assert log_probs.shape == (N, NUM_CLASSES)
    assert x_product.shape == (N, N)
    assert bool(jnp.all(jnp.isfinite(log_probs)))
    assert bool(jnp.all(jnp.isfinite(x_product)))
    print("KERNEL_OK")
</pallas_src>

<mosaic_0001>
module attributes {stable_mosaic.version = 11 : i64} {
  func.func @_feature_transform_kernel(%arg0: i32, %arg1: memref<64x32xf32, #tpu.memory_space<vmem>>, %arg2: memref<32x128xf32, #tpu.memory_space<vmem>>, %arg3: memref<128x16xf32, #tpu.memory_space<vmem>>, %arg4: memref<64x128xf32, #tpu.memory_space<vmem>>, %arg5: memref<64x16xf32, #tpu.memory_space<vmem>>) attributes {dimension_semantics = [#tpu.dimension_semantics<parallel>], iteration_bounds = array<i64: 4>, scalar_prefetch = 0 : i64, scratch_operands = 0 : i64, tpu.core_type = #tpu.core_type<tc>, window_params = [{transform_indices = @transform_0, window_bounds = array<i64: 64, 32>}, {pipeline_mode = #tpu.pipeline_mode<synchronous>, transform_indices = @transform_1, window_bounds = array<i64: 32, 128>}, {pipeline_mode = #tpu.pipeline_mode<synchronous>, transform_indices = @transform_2, window_bounds = array<i64: 128, 16>}, {transform_indices = @transform_3, window_bounds = array<i64: 64, 128>}, {transform_indices = @transform_4, window_bounds = array<i64: 64, 16>}]} {
    %c0 = arith.constant 0 : index
    %c0_0 = arith.constant 0 : index
    %0 = vector.load %arg1[%c0, %c0_0] : memref<64x32xf32, #tpu.memory_space<vmem>>, vector<64x32xf32>
    %c0_1 = arith.constant 0 : index
    %c0_2 = arith.constant 0 : index
    %1 = vector.load %arg2[%c0_1, %c0_2] : memref<32x128xf32, #tpu.memory_space<vmem>>, vector<32x128xf32>
    %cst = arith.constant dense<0.000000e+00> : vector<64x128xf32>
    %2 = tpu.matmul %0, %1, %cst {dimension_numbers = #tpu.dot_dimension_numbers<[1], [0], [0], [1], [0, 0, 1, 1], [], []>} : vector<64x32xf32>, vector<32x128xf32>, vector<64x128xf32> -> vector<64x128xf32>
    %c0_3 = arith.constant 0 : index
    %c0_4 = arith.constant 0 : index
    %3 = vector.load %arg4[%c0_3, %c0_4] : memref<64x128xf32, #tpu.memory_space<vmem>>, vector<64x128xf32>
    tpu.vector_store %arg4[%c0_3, %c0_4], %2 {strides = array<i32>} : memref<64x128xf32, #tpu.memory_space<vmem>>, vector<64x128xf32>,
    %c0_5 = arith.constant 0 : index
    %c0_6 = arith.constant 0 : index
    %4 = vector.load %arg3[%c0_5, %c0_6] : memref<128x16xf32, #tpu.memory_space<vmem>>, vector<128x16xf32>
    %cst_7 = arith.constant dense<0.000000e+00> : vector<64x16xf32>
    %5 = tpu.matmul %2, %4, %cst_7 {dimension_numbers = #tpu.dot_dimension_numbers<[1], [0], [0], [1], [0, 0, 1, 1], [], []>} : vector<64x128xf32>, vector<128x16xf32>, vector<64x16xf32> -> vector<64x16xf32>
    %c0_8 = arith.constant 0 : index
    %c0_9 = arith.constant 0 : index
    %6 = vector.load %arg5[%c0_8, %c0_9] : memref<64x16xf32, #tpu.memory_space<vmem>>, vector<64x16xf32>
    tpu.vector_store %arg5[%c0_8, %c0_9], %5 {strides = array<i32>} : memref<64x16xf32, #tpu.memory_space<vmem>>, vector<64x16xf32>,
    return
  }
  func.func @transform_0(%arg0: i32) -> (i32, i32) {
    %c0_i32 = arith.constant 0 : i32
    %c0_i32_0 = arith.constant 0 : i32
    return %arg0, %c0_i32 : i32, i32
  }
  func.func @transform_1(%arg0: i32) -> (i32, i32) {
    %c0_i32 = arith.constant 0 : i32
    %c0_i32_0 = arith.constant 0 : i32
    %c0_i32_1 = arith.constant 0 : i32
    return %c0_i32, %c0_i32_0 : i32, i32
  }
  func.func @transform_2(%arg0: i32) -> (i32, i32) {
    %c0_i32 = arith.constant 0 : i32
    %c0_i32_0 = arith.constant 0 : i32
    %c0_i32_1 = arith.constant 0 : i32
    return %c0_i32, %c0_i32_0 : i32, i32
  }
  func.func @transform_3(%arg0: i32) -> (i32, i32) {
    %c0_i32 = arith.constant 0 : i32
    %c0_i32_0 = arith.constant 0 : i32
    return %arg0, %c0_i32 : i32, i32
  }
  func.func @transform_4(%arg0: i32) -> (i32, i32) {
    %c0_i32 = arith.constant 0 : i32
    %c0_i32_0 = arith.constant 0 : i32
    return %arg0, %c0_i32 : i32, i32
  }
}

module attributes {stable_mosaic.version = 11 : i64} {
  func.func @_gat_attn1_kernel(%arg0: i32, %arg1: memref<256x128xf32, #tpu.memory_space<vmem>>, %arg2: memref<8x256xf32, #tpu.memory_space<vmem>>, %arg3: memref<64x8xf32, #tpu.memory_space<vmem>>, %arg4: memref<1x128xf32, #tpu.memory_space<vmem>>, %arg5: memref<64x256xi8, #tpu.memory_space<vmem>>, %arg6: memref<128x128xf32, #tpu.memory_space<vmem>>, %arg7: memref<128x2xf32, #tpu.memory_space<vmem>>, %arg8: memref<64x128xf32, #tpu.memory_space<vmem>>, %arg9: memref<64x2xf32, #tpu.memory_space<vmem>>) attributes {dimension_semantics = [#tpu.dimension_semantics<parallel>], iteration_bounds = array<i64: 4>, scalar_prefetch = 0 : i64, scratch_operands = 0 : i64, tpu.core_type = #tpu.core_type<tc>, window_params = [{pipeline_mode = #tpu.pipeline_mode<synchronous>, transform_indices = @transform_0, window_bounds = array<i64: 256, 128>}, {pipeline_mode = #tpu.pipeline_mode<synchronous>, transform_indices = @transform_1, window_bounds = array<i64: 8, 256>}, {transform_indices = @transform_2, window_bounds = array<i64: 64, 8>}, {pipeline_mode = #tpu.pipeline_mode<synchronous>, transform_indices = @transform_3, window_bounds = array<i64: 1, 128>}, {transform_indices = @transform_4, window_bounds = array<i64: 64, 256>}, {pipeline_mode = #tpu.pipeline_mode<synchronous>, transform_indices = @transform_5, window_bounds = array<i64: 128, 128>}, {pipeline_mode = #tpu.pipeline_mode<synchronous>, transform_indices = @transform_6, window_bounds = array<i64: 128, 2>}, {transform_indices = @transform_7, window_bounds = array<i64: 64, 128>}, {transform_indices = @transform_8, window_bounds = array<i64: 64, 2>}]} {
    %c0 = arith.constant 0 : index
    %c0_0 = arith.constant 0 : index
    %0 = vector.load %arg5[%c0, %c0_0] : memref<64x256xi8, #tpu.memory_space<vmem>>, vector<64x256xi8>
    %1 = arith.sitofp %0 : vector<64x256xi8> to vector<64x256xf32>
    %cst = arith.constant 0.000000e+00 : f32
    %2 = vector.broadcast %cst : f32 to vector<64x256xf32>
    %3 = arith.cmpf ogt, %1, %2 : vector<64x256xf32>
    %cst_1 = arith.constant 0.000000e+00 : f32
    %cst_2 = arith.constant -1.000000e+30 : f32
    %4 = vector.broadcast %cst_1 : f32 to vector<64x256xf32>
    %5 = vector.broadcast %cst_2 : f32 to vector<64x256xf32>
    %6 = arith.select %3, %4, %5 : vector<64x256xi1>, vector<64x256xf32>
    %c0_3 = arith.constant 0 : index
    %c0_4 = arith.constant 0 : index
    %7 = vector.load %arg1[%c0_3, %c0_4] : memref<256x128xf32, #tpu.memory_space<vmem>>, vector<256x128xf32>
    %c0_5 = arith.constant 0 : index
    %c0_6 = arith.constant 0 : index
    %8 = vector.load %arg3[%c0_5, %c0_6] : memref<64x8xf32, #tpu.memory_space<vmem>>, vector<64x8xf32>
    %c0_7 = arith.constant 0 : index
    %c0_8 = arith.constant 0 : index
    %9 = vector.load %arg2[%c0_7, %c0_8] : memref<8x256xf32, #tpu.memory_space<vmem>>, vector<8x256xf32>
    %10 = vector.extract_strided_slice %8 {offsets = [0, 0], sizes = [64, 1], strides = [1, 1]} : vector<64x8xf32> to vector<64x1xf32>
    %11 = vector.extract_strided_slice %9 {offsets = [0, 0], sizes = [1, 256], strides = [1, 1]} : vector<8x256xf32> to vector<1x256xf32>
    %12 = vector.broadcast %10 : vector<64x1xf32> to vector<64x256xf32>
    %13 = vector.broadcast %11 : vector<1x256xf32> to vector<64x256xf32>
    %14 = arith.addf %12, %13 : vector<64x256xf32>
    %cst_9 = arith.constant 0.000000e+00 : f32
    %15 = vector.broadcast %cst_9 : f32 to vector<64x256xf32>
    %16 = arith.cmpf ogt, %14, %15 : vector<64x256xf32>
    %cst_10 = arith.constant 2.000000e-01 : f32
    %17 = vector.broadcast %cst_10 : f32 to vector<64x256xf32>
    %18 = arith.mulf %17, %14 : vector<64x256xf32>
    %19 = arith.select %16, %14, %18 : vector<64x256xi1>, vector<64x256xf32>
    %20 = arith.addf %19, %6 : vector<64x256xf32>
    %cst_11 = arith.constant dense<0xFF800000> : vector<64xf32>
    %21 = vector.multi_reduction <maximumf>, %20, %cst_11 [1] : vector<64x256xf32> to vector<64xf32>
    %22 = vector.shape_cast %21 : vector<64xf32> to vector<64x1xf32>
    %23 = vector.broadcast %22 : vector<64x1xf32> to vector<64x256xf32>
    %24 = arith.subf %20, %23 : vector<64x256xf32>
    %25 = math.exp %24 : vector<64x256xf32>
    %cst_12 = arith.constant dense<0.000000e+00> : vector<64xf32>
    %26 = vector.multi_reduction <add>, %25, %cst_12 [1] : vector<64x256xf32> to vector<64xf32>
    %27 = vector.shape_cast %26 : vector<64xf32> to vector<64x1xf32>
    %cst_13 = arith.constant 1.000000e+00 : f32
    %28 = vector.broadcast %cst_13 : f32 to vector<64x1xf32>
    %29 = arith.divf %28, %27 : vector<64x1xf32>
    %30 = vector.broadcast %29 : vector<64x1xf32> to vector<64x256xf32>
    %31 = arith.mulf %25, %30 : vector<64x256xf32>
    %32 = vector.extract_strided_slice %7 {offsets = [0, 0], sizes = [256, 8], strides = [1, 1]} : vector<256x128xf32> to vector<256x8xf32>
    %cst_14 = arith.constant dense<0.000000e+00> : vector<64x8xf32>
    %33 = tpu.matmul %31, %32, %cst_14 {dimension_numbers = #tpu.dot_dimension_numbers<[1], [0], [0], [1], [0, 0, 1, 1], [], []>} : vector<64x256xf32>, vector<256x8xf32>, vector<64x8xf32> -> vector<64x8xf32>
    %34 = vector.extract_strided_slice %8 {offsets = [0, 1], sizes = [64, 1], strides = [1, 1]} : vector<64x8xf32> to vector<64x1xf32>
    %35 = vector.extract_strided_slice %9 {offsets = [1, 0], sizes = [1, 256], strides = [1, 1]} : vector<8x256xf32> to vector<1x256xf32>
    %36 = vector.broadcast %34 : vector<64x1xf32> to vector<64x256xf32>
    %37 = vector.broadcast %35 : vector<1x256xf32> to vector<64x256xf32>
    %38 = arith.addf %36, %37 : vector<64x256xf32>
    %cst_15 = arith.constant 0.000000e+00 : f32
    %39 = vector.broadcast %cst_15 : f32 to vector<64x256xf32>
    %40 = arith.cmpf ogt, %38, %39 : vector<64x256xf32>
    %cst_16 = arith.constant 2.000000e-01 : f32
    %41 = vector.broadcast %cst_16 : f32 to vector<64x256xf32>
    %42 = arith.mulf %41, %38 : vector<64x256xf32>
    %43 = arith.select %40, %38, %42 : vector<64x256xi1>, vector<64x256xf32>
    %44 = arith.addf %43, %6 : vector<64x256xf32>
    %cst_17 = arith.constant dense<0xFF800000> : vector<64xf32>
    %45 = vector.multi_reduction <maximumf>, %44, %cst_17 [1] : vector<64x256xf32> to vector<64xf32>
    %46 = vector.shape_cast %45 : vector<64xf32> to vector<64x1xf32>
    %47 = vector.broadcast %46 : vector<64x1xf32> to vector<64x256xf32>
    %48 = arith.subf %44, %47 : vector<64x256xf32>
    %49 = math.exp %48 : vector<64x256xf32>
    %cst_18 = arith.constant dense<0.000000e+00> : vector<64xf32>
    %50 = vector.multi_reduction <add>, %49, %cst_18 [1] : vector<64x256xf32> to vector<64xf32>
    %51 = vector.shape_cast %50 : vector<64xf32> to vector<64x1xf32>
    %cst_19 = arith.constant 1.000000e+00 : f32
    %52 = vector.broadcast %cst_19 : f32 to vector<64x1xf32>
    %53 = arith.divf %52, %51 : vector<64x1xf32>
    %54 = vector.broadcast %53 : vector<64x1xf32> to vector<64x256xf32>
    %55 = arith.mulf %49, %54 : vector<64x256xf32>
    %56 = vector.extract_strided_slice %7 {offsets = [0, 8], sizes = [256, 8], strides = [1, 1]} : vector<256x128xf32> to vector<256x8xf32>
    %cst_20 = arith.constant dense<0.000000e+00> : vector<64x8xf32>
    %57 = tpu.matmul %55, %56, %cst_20 {dimension_numbers = #tpu.dot_dimension_numbers<[1], [0], [0], [1], [0, 0, 1, 1], [], []>} : vector<64x256xf32>, vector<256x8xf32>, vector<64x8xf32> -> vector<64x8xf32>
    %58 = vector.extract_strided_slice %8 {offsets = [0, 2], sizes = [64, 1], strides = [1, 1]} : vector<64x8xf32> to vector<64x1xf32>
    %59 = vector.extract_strided_slice %9 {offsets = [2, 0], sizes = [1, 256], strides = [1, 1]} : vector<8x256xf32> to vector<1x256xf32>
    %60 = vector.broadcast %58 : vector<64x1xf32> to vector<64x256xf32>
    %61 = vector.broadcast %59 : vector<1x256xf32> to vector<64x256xf32>
    %62 = arith.addf %60, %61 : vector<64x256xf32>
    %cst_21 = arith.constant 0.000000e+00 : f32
    %63 = vector.broadcast %cst_21 : f32 to vector<64x256xf32>
    %64 = arith.cmpf ogt, %62, %63 : vector<64x256xf32>
    %cst_22 = arith.constant 2.000000e-01 : f32
    %65 = vector.broadcast %cst_22 : f32 to vector<64x256xf32>
    %66 = arith.mulf %65, %62 : vector<64x256xf32>
    %67 = arith.select %64, %62, %66 : vector<64x256xi1>, vector<64x256xf32>
    %68 = arith.addf %67, %6 : vector<64x256xf32>
    %cst_23 = arith.constant dense<0xFF800000> : vector<64xf32>
    %69 = vector.multi_reduction <maximumf>, %68, %cst_23 [1] : vector<64x256xf32> to vector<64xf32>
    %70 = vector.shape_cast %69 : vector<64xf32> to vector<64x1xf32>
    %71 = vector.broadcast %70 : vector<64x1xf32> to vector<64x256xf32>
    %72 = arith.subf %68, %71 : vector<64x256xf32>
    %73 = math.exp %72 : vector<64x256xf32>
    %cst_24 = arith.constant dense<0.000000e+00> : vector<64xf32>
    %74 = vector.multi_reduction <add>, %73, %cst_24 [1] : vector<64x256xf32> to vector<64xf32>
    %75 = vector.shape_cast %74 : vector<64xf32> to vector<64x1xf32>
    %cst_25 = arith.constant 1.000000e+00 : f32
    %76 = vector.broadcast %cst_25 : f32 to vector<64x1xf32>
    %77 = arith.divf %76, %75 : vector<64x1xf32>
    %78 = vector.broadcast %77 : vector<64x1xf32> to vector<64x256xf32>
    %79 = arith.mulf %73, %78 : vector<64x256xf32>
    %80 = vector.extract_strided_slice %7 {offsets = [0, 16], sizes = [256, 8], strides = [1, 1]} : vector<256x128xf32> to vector<256x8xf32>
    %cst_26 = arith.constant dense<0.000000e+00> : vector<64x8xf32>
    %81 = tpu.matmul %79, %80, %cst_26 {dimension_numbers = #tpu.dot_dimension_numbers<[1], [0], [0], [1], [0, 0, 1, 1], [], []>} : vector<64x256xf32>, vector<256x8xf32>, vector<64x8xf32> -> vector<64x8xf32>
    %82 = vector.extract_strided_slice %8 {offsets = [0, 3], sizes = [64, 1], strides = [1, 1]} : vector<64x8xf32> to vector<64x1xf32>
    %83 = vector.extract_strided_slice %9 {offsets = [3, 0], sizes = [1, 256], strides = [1, 1]} : vector<8x256xf32> to vector<1x256xf32>
    %84 = vector.broadcast %82 : vector<64x1xf32> to vector<64x256xf32>
    %85 = vector.broadcast %83 : vector<1x256xf32> to vector<64x256xf32>
    %86 = arith.addf %84, %85 : vector<64x256xf32>
    %cst_27 = arith.constant 0.000000e+00 : f32
    %87 = vector.broadcast %cst_27 : f32 to vector<64x256xf32>
    %88 = arith.cmpf ogt, %86, %87 : vector<64x256xf32>
    %cst_28 = arith.constant 2.000000e-01 : f32
    %89 = vector.broadcast %cst_28 : f32 to vector<64x256xf32>
    %90 = arith.mulf %89, %86 : vector<64x256xf32>
    %91 = arith.select %88, %86, %90 : vector<64x256xi1>, vector<64x256xf32>
    %92 = arith.addf %91, %6 : vector<64x256xf32>
    %cst_29 = arith.constant dense<0xFF800000> : vector<64xf32>
    %93 = vector.multi_reduction <maximumf>, %92, %cst_29 [1] : vector<64x256xf32> to vector<64xf32>
    %94 = vector.shape_cast %93 : vector<64xf32> to vector<64x1xf32>
    %95 = vector.broadcast %94 : vector<64x1xf32> to vector<64x256xf32>
    %96 = arith.subf %92, %95 : vector<64x256xf32>
    %97 = math.exp %96 : vector<64x256xf32>
    %cst_30 = arith.constant dense<0.000000e+00> : vector<64xf32>
    %98 = vector.multi_reduction <add>, %97, %cst_30 [1] : vector<64x256xf32> to vector<64xf32>
    %99 = vector.shape_cast %98 : vector<64xf32> to vector<64x1xf32>
    %cst_31 = arith.constant 1.000000e+00 : f32
    %100 = vector.broadcast %cst_31 : f32 to vector<64x1xf32>
    %101 = arith.divf %100, %99 : vector<64x1xf32>
    %102 = vector.broadcast %101 : vector<64x1xf32> to vector<64x256xf32>
    %103 = arith.mulf %97, %102 : vector<64x256xf32>
    %104 = vector.extract_strided_slice %7 {offsets = [0, 24], sizes = [256, 8], strides = [1, 1]} : vector<256x128xf32> to vector<256x8xf32>
    %cst_32 = arith.constant dense<0.000000e+00> : vector<64x8xf32>
    %105 = tpu.matmul %103, %104, %cst_32 {dimension_numbers = #tpu.dot_dimension_numbers<[1], [0], [0], [1], [0, 0, 1, 1], [], []>} : vector<64x256xf32>, vector<256x8xf32>, vector<64x8xf32> -> vector<64x8xf32>
    %106 = vector.extract_strided_slice %8 {offsets = [0, 4], sizes = [64, 1], strides = [1, 1]} : vector<64x8xf32> to vector<64x1xf32>
    %107 = vector.extract_strided_slice %9 {offsets = [4, 0], sizes = [1, 256], strides = [1, 1]} : vector<8x256xf32> to vector<1x256xf32>
    %108 = vector.broadcast %106 : vector<64x1xf32> to vector<64x256xf32>
    %109 = vector.broadcast %107 : vector<1x256xf32> to vector<64x256xf32>
    %110 = arith.addf %108, %109 : vector<64x256xf32>
    %cst_33 = arith.constant 0.000000e+00 : f32
    %111 = vector.broadcast %cst_33 : f32 to vector<64x256xf32>
    %112 = arith.cmpf ogt, %110, %111 : vector<64x256xf32>
    %cst_34 = arith.constant 2.000000e-01 : f32
    %113 = vector.broadcast %cst_34 : f32 to vector<64x256xf32>
    %114 = arith.mulf %113, %110 : vector<64x256xf32>
    %115 = arith.select %112, %110, %114 : vector<64x256xi1>, vector<64x256xf32>
    %116 = arith.addf %115, %6 : vector<64x256xf32>
    %cst_35 = arith.constant dense<0xFF800000> : vector<64xf32>
    %117 = vector.multi_reduction <maximumf>, %116, %cst_35 [1] : vector<64x256xf32> to vector<64xf32>
    %118 = vector.shape_cast %117 : vector<64xf32> to vector<64x1xf32>
    %119 = vector.broadcast %118 : vector<64x1xf32> to vector<64x256xf32>
    %120 = arith.subf %116, %119 : vector<64x256xf32>
    %121 = math.exp %120 : vector<64x256xf32>
    %cst_36 = arith.constant dense<0.000000e+00> : vector<64xf32>
    %122 = vector.multi_reduction <add>, %121, %cst_36 [1] : vector<64x256xf32> to vector<64xf32>
    %123 = vector.shape_cast %122 : vector<64xf32> to vector<64x1xf32>
    %cst_37 = arith.constant 1.000000e+00 : f32
    %124 = vector.broadcast %cst_37 : f32 to vector<64x1xf32>
    %125 = arith.divf %124, %123 : vector<64x1xf32>
    %126 = vector.broadcast %125 : vector<64x1xf32> to vector<64x256xf32>
    %127 = arith.mulf %121, %126 : vector<64x256xf32>
    %128 = vector.extract_strided_slice %7 {offsets = [0, 32], sizes = [256, 8], strides = [1, 1]} : vector<256x128xf32> to vector<256x8xf32>
    %cst_38 = arith.constant dense<0.000000e+00> : vector<64x8xf32>
    %129 = tpu.matmul %127, %128, %cst_38 {dimension_numbers = #tpu.dot_dimension_numbers<[1], [0], [0], [1], [0, 0, 1, 1], [], []>} : vector<64x256xf32>, vector<256x8xf32>, vector<64x8xf32> -> vector<64x8xf32>
    %130 = vector.extract_strided_slice %8 {offsets = [0, 5], sizes = [64, 1], strides = [1, 1]} : vector<64x8xf32> to vector<64x1xf32>
    %131 = vector.extract_strided_slice %9 {offsets = [5, 0], sizes = [1, 256], strides = [1, 1]} : vector<8x256xf32> to vector<1x256xf32>
    %132 = vector.broadcast %130 : vector<64x1xf32> to vector<64x256xf32>
    %133 = vector.broadcast %131 : vector<1x256xf32> to vector<64x256xf32>
    %134 = arith.addf %132, %133 : vector<64x256xf32>
    %cst_39 = arith.constant 0.000000e+00 : f32
    %135 = vector.broadcast %cst_39 : f32 to vector<64x256xf32>
    %136 = arith.cmpf ogt, %134, %135 : vector<64x256xf32>
    %cst_40 = arith.constant 2.000000e-01 : f32
    %137 = vector.broadcast %cst_40 : f32 to vector<64x256xf32>
    %138 = arith.mulf %137, %134 : vector<64x256xf32>
    %139 = arith.select %136, %134, %138 : vector<64x256xi1>, vector<64x256xf32>
    %140 = arith.addf %139, %6 : vector<64x256xf32>
    %cst_41 = arith.constant dense<0xFF800000> : vector<64xf32>
    %141 = vector.multi_reduction <maximumf>, %140, %cst_41 [1] : vector<64x256xf32> to vector<64xf32>
    %142 = vector.shape_cast %141 : vector<64xf32> to vector<64x1xf32>
    %143 = vector.broadcast %142 : vector<64x1xf32> to vector<64x256xf32>
    %144 = arith.subf %140, %143 : vector<64x256xf32>
    %145 = math.exp %144 : vector<64x256xf32>
    %cst_42 = arith.constant dense<0.000000e+00> : vector<64xf32>
    %146 = vector.multi_reduction <add>, %145, %cst_42 [1] : vector<64x256xf32> to vector<64xf32>
    %147 = vector.shape_cast %146 : vector<64xf32> to vector<64x1xf32>
    %cst_43 = arith.constant 1.000000e+00 : f32
    %148 = vector.broadcast %cst_43 : f32 to vector<64x1xf32>
    %149 = arith.divf %148, %147 : vector<64x1xf32>
    %150 = vector.broadcast %149 : vector<64x1xf32> to vector<64x256xf32>
    %151 = arith.mulf %145, %150 : vector<64x256xf32>
    %152 = vector.extract_strided_slice %7 {offsets = [0, 40], sizes = [256, 8], strides = [1, 1]} : vector<256x128xf32> to vector<256x8xf32>
    %cst_44 = arith.constant dense<0.000000e+00> : vector<64x8xf32>
    %153 = tpu.matmul %151, %152, %cst_44 {dimension_numbers = #tpu.dot_dimension_numbers<[1], [0], [0], [1], [0, 0, 1, 1], [], []>} : vector<64x256xf32>, vector<256x8xf32>, vector<64x8xf32> -> vector<64x8xf32>
    %154 = vector.extract_strided_slice %8 {offsets = [0, 6], sizes = [64, 1], strides = [1, 1]} : vector<64x8xf32> to vector<64x1xf32>
    %155 = vector.extract_strided_slice %9 {offsets = [6, 0], sizes = [1, 256], strides = [1, 1]} : vector<8x256xf32> to vector<1x256xf32>
    %156 = vector.broadcast %154 : vector<64x1xf32> to vector<64x256xf32>
    %157 = vector.broadcast %155 : vector<1x256xf32> to vector<64x256xf32>
    %158 = arith.addf %156, %157 : vector<64x256xf32>
    %cst_45 = arith.constant 0.000000e+00 : f32
    %159 = vector.broadcast %cst_45 : f32 to vector<64x256xf32>
    %160 = arith.cmpf ogt, %158, %159 : vector<64x256xf32>
    %cst_46 = arith.constant 2.000000e-01 : f32
    %161 = vector.broadcast %cst_46 : f32 to vector<64x256xf32>
    %162 = arith.mulf %161, %158 : vector<64x256xf32>
    %163 = arith.select %160, %158, %162 : vector<64x256xi1>, vector<64x256xf32>
    %164 = arith.addf %163, %6 : vector<64x256xf32>
    %cst_47 = arith.constant dense<0xFF800000> : vector<64xf32>
    %165 = vector.multi_reduction <maximumf>, %164, %cst_47 [1] : vector<64x256xf32> to vector<64xf32>
    %166 = vector.shape_cast %165 : vector<64xf32> to vector<64x1xf32>
    %167 = vector.broadcast %166 : vector<64x1xf32> to vector<64x256xf32>
    %168 = arith.subf %164, %167 : vector<64x256xf32>
    %169 = math.exp %168 : vector<64x256xf32>
    %cst_48 = arith.constant dense<0.000000e+00> : vector<64xf32>
    %170 = vector.multi_reduction <add>, %169, %cst_48 [1] : vector<64x256xf32> to vector<64xf32>
    %171 = vector.shape_cast %170 : vector<64xf32> to vector<64x1xf32>
    %cst_49 = arith.constant 1.000000e+00 : f32
    %172 = vector.broadcast %cst_49 : f32 to vector<64x1xf32>
    %173 = arith.divf %172, %171 : vector<64x1xf32>
    %174 = vector.broadcast %173 : vector<64x1xf32> to vector<64x256xf32>
    %175 = arith.mulf %169, %174 : vector<64x256xf32>
    %176 = vector.extract_strided_slice %7 {offsets = [0, 48], sizes = [256, 8], strides = [1, 1]} : vector<256x128xf32> to vector<256x8xf32>
    %cst_50 = arith.constant dense<0.000000e+00> : vector<64x8xf32>
    %177 = tpu.matmul %175, %176, %cst_50 {dimension_numbers = #tpu.dot_dimension_numbers<[1], [0], [0], [1], [0, 0, 1, 1], [], []>} : vector<64x256xf32>, vector<256x8xf32>, vector<64x8xf32> -> vector<64x8xf32>
    %178 = vector.extract_strided_slice %8 {offsets = [0, 7], sizes = [64, 1], strides = [1, 1]} : vector<64x8xf32> to vector<64x1xf32>
    %179 = vector.extract_strided_slice %9 {offsets = [7, 0], sizes = [1, 256], strides = [1, 1]} : vector<8x256xf32> to vector<1x256xf32>
    %180 = vector.broadcast %178 : vector<64x1xf32> to vector<64x256xf32>
    %181 = vector.broadcast %179 : vector<1x256xf32> to vector<64x256xf32>
    %182 = arith.addf %180, %181 : vector<64x256xf32>
    %cst_51 = arith.constant 0.000000e+00 : f32
    %183 = vector.broadcast %cst_51 : f32 to vector<64x256xf32>
    %184 = arith.cmpf ogt, %182, %183 : vector<64x256xf32>
    %cst_52 = arith.constant 2.000000e-01 : f32
    %185 = vector.broadcast %cst_52 : f32 to vector<64x256xf32>
    %186 = arith.mulf %185, %182 : vector<64x256xf32>
    %187 = arith.select %184, %182, %186 : vector<64x256xi1>, vector<64x256xf32>
    %188 = arith.addf %187, %6 : vector<64x256xf32>
    %cst_53 = arith.constant dense<0xFF800000> : vector<64xf32>
    %189 = vector.multi_reduction <maximumf>, %188, %cst_53 [1] : vector<64x256xf32> to vector<64xf32>
    %190 = vector.shape_cast %189 : vector<64xf32> to vector<64x1xf32>
    %191 = vector.broadcast %190 : vector<64x1xf32> to vector<64x256xf32>
    %192 = arith.subf %188, %191 : vector<64x256xf32>
    %193 = math.exp %192 : vector<64x256xf32>
    %cst_54 = arith.constant dense<0.000000e+00> : vector<64xf32>
    %194 = vector.multi_reduction <add>, %193, %cst_54 [1] : vector<64x256xf32> to vector<64xf32>
    %195 = vector.shape_cast %194 : vector<64xf32> to vector<64x1xf32>
    %cst_55 = arith.constant 1.000000e+00 : f32
    %196 = vector.broadcast %cst_55 : f32 to vector<64x1xf32>
    %197 = arith.divf %196, %195 : vector<64x1xf32>
    %198 = vector.broadcast %197 : vector<64x1xf32> to vector<64x256xf32>
    %199 = arith.mulf %193, %198 : vector<64x256xf32>
    %200 = vector.extract_strided_slice %7 {offsets = [0, 56], sizes = [256, 8], strides = [1, 1]} : vector<256x128xf32> to vector<256x8xf32>
    %cst_56 = arith.constant dense<0.000000e+00> : vector<64x8xf32>
    %201 = tpu.matmul %199, %200, %cst_56 {dimension_numbers = #tpu.dot_dimension_numbers<[1], [0], [0], [1], [0, 0, 1, 1], [], []>} : vector<64x256xf32>, vector<256x8xf32>, vector<64x8xf32> -> vector<64x8xf32>
    %cst_57 = arith.constant 0.000000e+00 : f32
    %202 = vector.broadcast %cst_57 : f32 to vector<64x64xf32>
    %203 = tpu.concatenate %33, %57, %81, %105, %129, %153, %177, %201, %202 in 1 : vector<64x8xf32>, vector<64x8xf32>, vector<64x8xf32>, vector<64x8xf32>, vector<64x8xf32>, vector<64x8xf32>, vector<64x8xf32>, vector<64x8xf32>, vector<64x64xf32> -> vector<64x128xf32>
    %c0_58 = arith.constant 0 : index
    %c0_59 = arith.constant 0 : index
    %204 = vector.load %arg4[%c0_58, %c0_59] : memref<1x128xf32, #tpu.memory_space<vmem>>, vector<1x128xf32>
    %205 = vector.broadcast %204 : vector<1x128xf32> to vector<64x128xf32>
    %206 = arith.addf %203, %205 : vector<64x128xf32>
    %cst_60 = arith.constant 0.000000e+00 : f32
    %207 = vector.broadcast %cst_60 : f32 to vector<64x128xf32>
    %208 = arith.cmpf ogt, %206, %207 : vector<64x128xf32>
    %209 = math.exp %206 : vector<64x128xf32>
    %cst_61 = arith.constant 1.000000e+00 : f32
    %210 = vector.broadcast %cst_61 : f32 to vector<64x128xf32>
    %211 = arith.subf %209, %210 : vector<64x128xf32>
    %212 = arith.select %208, %206, %211 : vector<64x128xi1>, vector<64x128xf32>
    %c0_62 = arith.constant 0 : index
    %c0_63 = arith.constant 0 : index
    %213 = vector.load %arg6[%c0_62, %c0_63] : memref<128x128xf32, #tpu.memory_space<vmem>>, vector<128x128xf32>
    %cst_64 = arith.constant dense<0.000000e+00> : vector<64x128xf32>
    %214 = tpu.matmul %212, %213, %cst_64 {dimension_numbers = #tpu.dot_dimension_numbers<[1], [0], [0], [1], [0, 0, 1, 1], [], []>} : vector<64x128xf32>, vector<128x128xf32>, vector<64x128xf32> -> vector<64x128xf32>
    %c0_65 = arith.constant 0 : index
    %c0_66 = arith.constant 0 : index
    %215 = vector.load %arg8[%c0_65, %c0_66] : memref<64x128xf32, #tpu.memory_space<vmem>>, vector<64x128xf32>
    tpu.vector_store %arg8[%c0_65, %c0_66], %214 {strides = array<i32>} : memref<64x128xf32, #tpu.memory_space<vmem>>, vector<64x128xf32>,
    %c0_67 = arith.constant 0 : index
    %c0_68 = arith.constant 0 : index
    %216 = vector.load %arg7[%c0_67, %c0_68] : memref<128x2xf32, #tpu.memory_space<vmem>>, vector<128x2xf32>
    %cst_69 = arith.constant dense<0.000000e+00> : vector<64x2xf32>
    %217 = tpu.matmul %214, %216, %cst_69 {dimension_numbers = #tpu.dot_dimension_numbers<[1], [0], [0], [1], [0, 0, 1, 1], [], []>} : vector<64x128xf32>, vector<128x2xf32>, vector<64x2xf32> -> vector<64x2xf32>
    %c0_70 = arith.constant 0 : index
    %c0_71 = arith.constant 0 : index
    %218 = vector.load %arg9[%c0_70, %c0_71] : memref<64x2xf32, #tpu.memory_space<vmem>>, vector<64x2xf32>
    tpu.vector_store %arg9[%c0_70, %c0_71], %217 {strides = array<i32>} : memref<64x2xf32, #tpu.memory_space<vmem>>, vector<64x2xf32>,
    return
  }
  func.func @transform_0(%arg0: i32) -> (i32, i32) {
    %c0_i32 = arith.constant 0 : i32
    %c0_i32_0 = arith.constant 0 : i32
    %c0_i32_1 = arith.constant 0 : i32
    return %c0_i32, %c0_i32_0 : i32, i32
  }
  func.func @transform_1(%arg0: i32) -> (i32, i32) {
    %c0_i32 = arith.constant 0 : i32
    %c0_i32_0 = arith.constant 0 : i32
    %c0_i32_1 = arith.constant 0 : i32
    return %c0_i32, %c0_i32_0 : i32, i32
  }
  func.func @transform_2(%arg0: i32) -> (i32, i32) {
    %c0_i32 = arith.constant 0 : i32
    %c0_i32_0 = arith.constant 0 : i32
    return %arg0, %c0_i32 : i32, i32
  }
  func.func @transform_3(%arg0: i32) -> (i32, i32) {
    %c0_i32 = arith.constant 0 : i32
    %c0_i32_0 = arith.constant 0 : i32
    %c0_i32_1 = arith.constant 0 : i32
    return %c0_i32, %c0_i32_0 : i32, i32
  }
  func.func @transform_4(%arg0: i32) -> (i32, i32) {
    %c0_i32 = arith.constant 0 : i32
    %c0_i32_0 = arith.constant 0 : i32
    return %arg0, %c0_i32 : i32, i32
  }
  func.func @transform_5(%arg0: i32) -> (i32, i32) {
    %c0_i32 = arith.constant 0 : i32
    %c0_i32_0 = arith.constant 0 : i32
    %c0_i32_1 = arith.constant 0 : i32
    return %c0_i32, %c0_i32_0 : i32, i32
  }
  func.func @transform_6(%arg0: i32) -> (i32, i32) {
    %c0_i32 = arith.constant 0 : i32
    %c0_i32_0 = arith.constant 0 : i32
    %c0_i32_1 = arith.constant 0 : i32
    return %c0_i32, %c0_i32_0 : i32, i32
  }
  func.func @transform_7(%arg0: i32) -> (i32, i32) {
    %c0_i32 = arith.constant 0 : i32
    %c0_i32_0 = arith.constant 0 : i32
    return %arg0, %c0_i32 : i32, i32
  }
  func.func @transform_8(%arg0: i32) -> (i32, i32) {
    %c0_i32 = arith.constant 0 : i32
    %c0_i32_0 = arith.constant 0 : i32
    return %arg0, %c0_i32 : i32, i32
  }
}

module attributes {stable_mosaic.version = 11 : i64} {
  func.func @_gat_attn2_kernel(%arg0: i32, %arg1: memref<256x128xf32, #tpu.memory_space<vmem>>, %arg2: memref<1x256xf32, #tpu.memory_space<vmem>>, %arg3: memref<64x1xf32, #tpu.memory_space<vmem>>, %arg4: memref<1x128xf32, #tpu.memory_space<vmem>>, %arg5: memref<64x256xi8, #tpu.memory_space<vmem>>, %arg6: memref<64x128xf32, #tpu.memory_space<vmem>>, %arg7: memref<64x128xbf16, #tpu.memory_space<vmem>>) attributes {dimension_semantics = [#tpu.dimension_semantics<parallel>], iteration_bounds = array<i64: 4>, scalar_prefetch = 0 : i64, scratch_operands = 0 : i64, tpu.core_type = #tpu.core_type<tc>, window_params = [{pipeline_mode = #tpu.pipeline_mode<synchronous>, transform_indices = @transform_0, window_bounds = array<i64: 256, 128>}, {pipeline_mode = #tpu.pipeline_mode<synchronous>, transform_indices = @transform_1, window_bounds = array<i64: 1, 256>}, {transform_indices = @transform_2, window_bounds = array<i64: 64, 1>}, {pipeline_mode = #tpu.pipeline_mode<synchronous>, transform_indices = @transform_3, window_bounds = array<i64: 1, 128>}, {transform_indices = @transform_4, window_bounds = array<i64: 64, 256>}, {transform_indices = @transform_5, window_bounds = array<i64: 64, 128>}, {transform_indices = @transform_6, window_bounds = array<i64: 64, 128>}]} {
    %c0 = arith.constant 0 : index
    %c0_0 = arith.constant 0 : index
    %0 = vector.load %arg5[%c0, %c0_0] : memref<64x256xi8, #tpu.memory_space<vmem>>, vector<64x256xi8>
    %1 = arith.sitofp %0 : vector<64x256xi8> to vector<64x256xf32>
    %cst = arith.constant 0.000000e+00 : f32
    %2 = vector.broadcast %cst : f32 to vector<64x256xf32>
    %3 = arith.cmpf ogt, %1, %2 : vector<64x256xf32>
    %cst_1 = arith.constant 0.000000e+00 : f32
    %cst_2 = arith.constant -1.000000e+30 : f32
    %4 = vector.broadcast %cst_1 : f32 to vector<64x256xf32>
    %5 = vector.broadcast %cst_2 : f32 to vector<64x256xf32>
    %6 = arith.select %3, %4, %5 : vector<64x256xi1>, vector<64x256xf32>
    %c0_3 = arith.constant 0 : index
    %c0_4 = arith.constant 0 : index
    %7 = vector.load %arg3[%c0_3, %c0_4] : memref<64x1xf32, #tpu.memory_space<vmem>>, vector<64x1xf32>
    %c0_5 = arith.constant 0 : index
    %c0_6 = arith.constant 0 : index
    %8 = vector.load %arg2[%c0_5, %c0_6] : memref<1x256xf32, #tpu.memory_space<vmem>>, vector<1x256xf32>
    %9 = vector.broadcast %7 : vector<64x1xf32> to vector<64x256xf32>
    %10 = vector.broadcast %8 : vector<1x256xf32> to vector<64x256xf32>
    %11 = arith.addf %9, %10 : vector<64x256xf32>
    %cst_7 = arith.constant 0.000000e+00 : f32
    %12 = vector.broadcast %cst_7 : f32 to vector<64x256xf32>
    %13 = arith.cmpf ogt, %11, %12 : vector<64x256xf32>
    %cst_8 = arith.constant 2.000000e-01 : f32
    %14 = vector.broadcast %cst_8 : f32 to vector<64x256xf32>
    %15 = arith.mulf %14, %11 : vector<64x256xf32>
    %16 = arith.select %13, %11, %15 : vector<64x256xi1>, vector<64x256xf32>
    %17 = arith.addf %16, %6 : vector<64x256xf32>
    %cst_9 = arith.constant dense<0xFF800000> : vector<64xf32>
    %18 = vector.multi_reduction <maximumf>, %17, %cst_9 [1] : vector<64x256xf32> to vector<64xf32>
    %19 = vector.shape_cast %18 : vector<64xf32> to vector<64x1xf32>
    %20 = vector.broadcast %19 : vector<64x1xf32> to vector<64x256xf32>
    %21 = arith.subf %17, %20 : vector<64x256xf32>
    %22 = math.exp %21 : vector<64x256xf32>
    %cst_10 = arith.constant dense<0.000000e+00> : vector<64xf32>
    %23 = vector.multi_reduction <add>, %22, %cst_10 [1] : vector<64x256xf32> to vector<64xf32>
    %24 = vector.shape_cast %23 : vector<64xf32> to vector<64x1xf32>
    %cst_11 = arith.constant 1.000000e+00 : f32
    %25 = vector.broadcast %cst_11 : f32 to vector<64x1xf32>
    %26 = arith.divf %25, %24 : vector<64x1xf32>
    %27 = vector.broadcast %26 : vector<64x1xf32> to vector<64x256xf32>
    %28 = arith.mulf %22, %27 : vector<64x256xf32>
    %c0_12 = arith.constant 0 : index
    %c0_13 = arith.constant 0 : index
    %29 = vector.load %arg1[%c0_12, %c0_13] : memref<256x128xf32, #tpu.memory_space<vmem>>, vector<256x128xf32>
    %cst_14 = arith.constant dense<0.000000e+00> : vector<64x128xf32>
    %30 = tpu.matmul %28, %29, %cst_14 {dimension_numbers = #tpu.dot_dimension_numbers<[1], [0], [0], [1], [0, 0, 1, 1], [], []>} : vector<64x256xf32>, vector<256x128xf32>, vector<64x128xf32> -> vector<64x128xf32>
    %c0_15 = arith.constant 0 : index
    %c0_16 = arith.constant 0 : index
    %31 = vector.load %arg4[%c0_15, %c0_16] : memref<1x128xf32, #tpu.memory_space<vmem>>, vector<1x128xf32>
    %32 = vector.broadcast %31 : vector<1x128xf32> to vector<64x128xf32>
    %33 = arith.addf %30, %32 : vector<64x128xf32>
    %34 = arith.truncf %33 : vector<64x128xf32> to vector<64x128xbf16>
    %c0_17 = arith.constant 0 : index
    %c0_18 = arith.constant 0 : index
    %35 = vector.load %arg7[%c0_17, %c0_18] : memref<64x128xbf16, #tpu.memory_space<vmem>>, vector<64x128xbf16>
    tpu.vector_store %arg7[%c0_17, %c0_18], %34 {strides = array<i32>} : memref<64x128xbf16, #tpu.memory_space<vmem>>, vector<64x128xbf16>,
    %36 = tpu.iota {dimensions = array<i32: 1>} : vector<64x128xi32>
    %c8_i32 = arith.constant 8 : i32
    %37 = vector.broadcast %c8_i32 : i32 to vector<64x128xi32>
    %38 = arith.cmpi slt, %36, %37 : vector<64x128xi32>
    %cst_19 = arith.constant -1.000000e+30 : f32
    %39 = vector.broadcast %cst_19 : f32 to vector<64x128xf32>
    %40 = arith.select %38, %33, %39 : vector<64x128xi1>, vector<64x128xf32>
    %cst_20 = arith.constant dense<0xFF800000> : vector<64xf32>
    %41 = vector.multi_reduction <maximumf>, %40, %cst_20 [1] : vector<64x128xf32> to vector<64xf32>
    %42 = vector.shape_cast %41 : vector<64xf32> to vector<64x1xf32>
    %43 = vector.broadcast %42 : vector<64x1xf32> to vector<64x128xf32>
    %44 = arith.subf %33, %43 : vector<64x128xf32>
    %45 = math.exp %44 : vector<64x128xf32>
    %cst_21 = arith.constant 0.000000e+00 : f32
    %46 = vector.broadcast %cst_21 : f32 to vector<64x128xf32>
    %47 = arith.select %38, %45, %46 : vector<64x128xi1>, vector<64x128xf32>
    %cst_22 = arith.constant dense<0.000000e+00> : vector<64xf32>
    %48 = vector.multi_reduction <add>, %47, %cst_22 [1] : vector<64x128xf32> to vector<64xf32>
    %49 = vector.shape_cast %48 : vector<64xf32> to vector<64x1xf32>
    %50 = math.log %49 : vector<64x1xf32>
    %51 = vector.broadcast %50 : vector<64x1xf32> to vector<64x128xf32>
    %52 = arith.subf %44, %51 : vector<64x128xf32>
    %c0_23 = arith.constant 0 : index
    %c0_24 = arith.constant 0 : index
    %53 = vector.load %arg6[%c0_23, %c0_24] : memref<64x128xf32, #tpu.memory_space<vmem>>, vector<64x128xf32>
    tpu.vector_store %arg6[%c0_23, %c0_24], %52 {strides = array<i32>} : memref<64x128xf32, #tpu.memory_space<vmem>>, vector<64x128xf32>,
    return
  }
  func.func @transform_0(%arg0: i32) -> (i32, i32) {
    %c0_i32 = arith.constant 0 : i32
    %c0_i32_0 = arith.constant 0 : i32
    %c0_i32_1 = arith.constant 0 : i32
    return %c0_i32, %c0_i32_0 : i32, i32
  }
  func.func @transform_1(%arg0: i32) -> (i32, i32) {
    %c0_i32 = arith.constant 0 : i32
    %c0_i32_0 = arith.constant 0 : i32
    %c0_i32_1 = arith.constant 0 : i32
    return %c0_i32, %c0_i32_0 : i32, i32
  }
  func.func @transform_2(%arg0: i32) -> (i32, i32) {
    %c0_i32 = arith.constant 0 : i32
    %c0_i32_0 = arith.constant 0 : i32
    return %arg0, %c0_i32 : i32, i32
  }
  func.func @transform_3(%arg0: i32) -> (i32, i32) {
    %c0_i32 = arith.constant 0 : i32
    %c0_i32_0 = arith.constant 0 : i32
    %c0_i32_1 = arith.constant 0 : i32
    return %c0_i32, %c0_i32_0 : i32, i32
  }
  func.func @transform_4(%arg0: i32) -> (i32, i32) {
    %c0_i32 = arith.constant 0 : i32
    %c0_i32_0 = arith.constant 0 : i32
    return %arg0, %c0_i32 : i32, i32
  }
  func.func @transform_5(%arg0: i32) -> (i32, i32) {
    %c0_i32 = arith.constant 0 : i32
    %c0_i32_0 = arith.constant 0 : i32
    return %arg0, %c0_i32 : i32, i32
  }
  func.func @transform_6(%arg0: i32) -> (i32, i32) {
    %c0_i32 = arith.constant 0 : i32
    %c0_i32_0 = arith.constant 0 : i32
    return %arg0, %c0_i32 : i32, i32
  }
}

module attributes {stable_mosaic.version = 11 : i64} {
  func.func @_inner_product_kernel(%arg0: i32, %arg1: memref<64x128xbf16, #tpu.memory_space<vmem>>, %arg2: memref<256x128xbf16, #tpu.memory_space<vmem>>, %arg3: memref<64x256xf32, #tpu.memory_space<vmem>>) attributes {dimension_semantics = [#tpu.dimension_semantics<parallel>], iteration_bounds = array<i64: 4>, scalar_prefetch = 0 : i64, scratch_operands = 0 : i64, tpu.core_type = #tpu.core_type<tc>, window_params = [{transform_indices = @transform_0, window_bounds = array<i64: 64, 128>}, {pipeline_mode = #tpu.pipeline_mode<synchronous>, transform_indices = @transform_1, window_bounds = array<i64: 256, 128>}, {transform_indices = @transform_2, window_bounds = array<i64: 64, 256>}]} {
    %c0 = arith.constant 0 : index
    %c0_0 = arith.constant 0 : index
    %0 = vector.load %arg1[%c0, %c0_0] : memref<64x128xbf16, #tpu.memory_space<vmem>>, vector<64x128xbf16>
    %1 = arith.extf %0 : vector<64x128xbf16> to vector<64x128xf32>
    %c0_1 = arith.constant 0 : index
    %c0_2 = arith.constant 0 : index
    %2 = vector.load %arg2[%c0_1, %c0_2] : memref<256x128xbf16, #tpu.memory_space<vmem>>, vector<256x128xbf16>
    %3 = arith.extf %2 : vector<256x128xbf16> to vector<256x128xf32>
    %cst = arith.constant dense<0.000000e+00> : vector<64x256xf32>
    %4 = tpu.matmul %1, %3, %cst {dimension_numbers = #tpu.dot_dimension_numbers<[1], [1], [0], [0], [0, 0, 1, 0], [], []>} : vector<64x128xf32>, vector<256x128xf32>, vector<64x256xf32> -> vector<64x256xf32>
    %c0_3 = arith.constant 0 : index
    %c0_4 = arith.constant 0 : index
    %5 = vector.load %arg3[%c0_3, %c0_4] : memref<64x256xf32, #tpu.memory_space<vmem>>, vector<64x256xf32>
    tpu.vector_store %arg3[%c0_3, %c0_4], %4 {strides = array<i32>} : memref<64x256xf32, #tpu.memory_space<vmem>>, vector<64x256xf32>,
    return
  }
  func.func @transform_0(%arg0: i32) -> (i32, i32) {
    %c0_i32 = arith.constant 0 : i32
    %c0_i32_0 = arith.constant 0 : i32
    return %arg0, %c0_i32 : i32, i32
  }
  func.func @transform_1(%arg0: i32) -> (i32, i32) {
    %c0_i32 = arith.constant 0 : i32
    %c0_i32_0 = arith.constant 0 : i32
    %c0_i32_1 = arith.constant 0 : i32
    return %c0_i32, %c0_i32_0 : i32, i32
  }
  func.func @transform_2(%arg0: i32) -> (i32, i32) {
    %c0_i32 = arith.constant 0 : i32
    %c0_i32_0 = arith.constant 0 : i32
    return %arg0, %c0_i32 : i32, i32
  }
}

</mosaic_0001>

<llo_original>
// kernel: gatnet_forward.4
$region0: #{gatnet_forward.4}
  #allocation0 [shape = 'u32[]', space=smem, size = 0x4, offset = 0x4, fixed_abs, tag = 'smem constant byte address 0x4 - core index']
  #allocation1 [shape = 'u32[144,128]{1,0:T(1,128)}', space=vmem, size = 0x12000, scoped, tag = 'internal scratch']
  %s0 = inlined_call_operand.vmem [shape: f32[256,32], index: 0, kind: input, shape index: {}]
  %s1 = inlined_call_operand.vmem [shape: f32[32,128], index: 1, kind: input, shape index: {}]
  %s2 = inlined_call_operand.vmem [shape: f32[128,16], index: 2, kind: input, shape index: {}]
  %s3 = inlined_call_operand.vmem [shape: f32[256,128], index: 3, kind: output, shape index: {0}]
  %s4 = inlined_call_operand.vmem [shape: f32[256,16], index: 4, kind: output, shape index: {1}]
  %5 = xla_tuple %s3, %s4
  %s6 = sld [smem:[#allocation0]]
  $region53: #{gatnet_forward.4} parent=0
    _
  %s8 = ssub.s32 1, %s6
  %s9 = scalar_select 0, %s8, %s6
  loop: start=0, step=1, limit=6
  $region2: #{gatnet_forward.4} parent=0 // loop_pre_header
    _
  $region3: #{gatnet_forward.4} parent=0 // loop_header
    %s11 = sphi 0, %s15
    %p12 = scmp.ge.s32.totalorder %s11, 6
    %s21 = sphi 0, %s23
    %s24 = sphi 0, %s21
    %s25 = sphi 0, %s24
    %s41 = sphi 0, %s25
    %s45 = sphi 0, %s45
    %s47 = sphi 0, %s45
    %s48 = sphi 0, %s47
    %s62 = sphi 0, %s48
    %s66 = sphi 0, %s66
    %s68 = sphi 0, %s66
    %s69 = sphi 0, %s68
    %s83 = sphi 0, %s69
    %s89 = sphi 0, %s91
    %s92 = sphi 0, %s89
    %s93 = sphi 0, %s92
    %s109 = sphi 0, %s93
    %s115 = sphi 0, %s117
    %s118 = sphi 0, %s115
    %s119 = sphi 0, %s118
    %s135 = sphi 0, %s119
  $region4: #{gatnet_forward.4} parent=0 // loop_header_branch
    %14 = sbr.rel (%p12) target = $region8
  $region5: #{gatnet_forward.4} parent=0 // loop_body
    %s16 = ssub.s32 %s11, 1
    %s17 = ssub.s32 %s11, 2
    %s18 = sadd.s32 %s11, 1
    %s19 = ssub.s32 %s11, %s18
    %p20 = scmp.eq.s32.totalorder %s19, 0
    %s22 = sadd.s32 %s21, 1
    %s23 = scalar_select %p20, %s21, %s22
    %p26 = pneg %p20
    %p27 = scmp.eq.s32.totalorder %s11, 3
    %p28 = por %p26, %p27
    %p29 = scmp.ne.s32.totalorder %s21, %s24
    %p30 = scmp.eq.s32.totalorder %s11, 0
    %p31 = por %p29, %p30
    %p32 = scmp.ne.s32.totalorder %s21, %s24
    %p33 = scmp.eq.s32.totalorder %s16, 3
    %p34 = por %p32, %p33
    %p35 = scmp.ne.s32.totalorder %s24, %s25
    %p36 = scmp.eq.s32.totalorder %s16, 0
    %p37 = por %p35, %p36
    %p38 = scmp.ne.s32.totalorder %s24, %s25
    %p39 = scmp.eq.s32.totalorder %s17, 3
    %p40 = por %p38, %p39
    %p42 = scmp.ne.s32.totalorder %s25, %s41
    %p43 = scmp.eq.s32.totalorder %s17, 0
    %p44 = por %p42, %p43
    %s46 = sadd.s32 %s45, 1
    %p49 = scmp.eq.s32.totalorder %s11, 3
    %p50 = scmp.ne.s32.totalorder %s45, %s47
    %p51 = scmp.eq.s32.totalorder %s11, 0
    %p52 = por %p50, %p51
    %p53 = scmp.ne.s32.totalorder %s45, %s47
    %p54 = scmp.eq.s32.totalorder %s16, 3
    %p55 = por %p53, %p54
    %p56 = scmp.ne.s32.totalorder %s47, %s48
    %p57 = scmp.eq.s32.totalorder %s16, 0
    %p58 = por %p56, %p57
    %p59 = scmp.ne.s32.totalorder %s47, %s48
    %p60 = scmp.eq.s32.totalorder %s17, 3
    %p61 = por %p59, %p60
    %p63 = scmp.ne.s32.totalorder %s48, %s62
    %p64 = scmp.eq.s32.totalorder %s17, 0
    %p65 = por %p63, %p64
    %s67 = sadd.s32 %s66, 1
    %p70 = scmp.eq.s32.totalorder %s11, 3
    %p71 = scmp.ne.s32.totalorder %s66, %s68
    %p72 = scmp.eq.s32.totalorder %s11, 0
    %p73 = por %p71, %p72
    %p74 = scmp.ne.s32.totalorder %s66, %s68
    %p75 = scmp.eq.s32.totalorder %s16, 3
    %p76 = por %p74, %p75
    %p77 = scmp.ne.s32.totalorder %s68, %s69
    %p78 = scmp.eq.s32.totalorder %s16, 0
    %p79 = por %p77, %p78
    %p80 = scmp.ne.s32.totalorder %s68, %s69
    %p81 = scmp.eq.s32.totalorder %s17, 3
    %p82 = por %p80, %p81
    %p84 = scmp.ne.s32.totalorder %s69, %s83
    %p85 = scmp.eq.s32.totalorder %s17, 0
    %p86 = por %p84, %p85
    %s87 = ssub.s32 %s11, %s18
    %p88 = scmp.eq.s32.totalorder %s87, 0
    %s90 = sadd.s32 %s89, 1
    %s91 = scalar_select %p88, %s89, %s90
    %p94 = pneg %p88
    %p95 = scmp.eq.s32.totalorder %s11, 3
    %p96 = por %p94, %p95
    %p97 = scmp.ne.s32.totalorder %s89, %s92
    %p98 = scmp.eq.s32.totalorder %s11, 0
    %p99 = por %p97, %p98
    %p100 = scmp.ne.s32.totalorder %s89, %s92
    %p101 = scmp.eq.s32.totalorder %s16, 3
    %p102 = por %p100, %p101
    %p103 = scmp.ne.s32.totalorder %s92, %s93
    %p104 = scmp.eq.s32.totalorder %s16, 0
    %p105 = por %p103, %p104
    %p106 = scmp.ne.s32.totalorder %s92, %s93
    %p107 = scmp.eq.s32.totalorder %s17, 3
    %p108 = por %p106, %p107
    %p110 = scmp.ne.s32.totalorder %s93, %s109
    %p111 = scmp.eq.s32.totalorder %s17, 0
    %p112 = por %p110, %p111
    %s113 = ssub.s32 %s11, %s18
    %p114 = scmp.eq.s32.totalorder %s113, 0
    %s116 = sadd.s32 %s115, 1
    %s117 = scalar_select %p114, %s115, %s116
    %p120 = pneg %p114
    %p121 = scmp.eq.s32.totalorder %s11, 3
    %p122 = por %p120, %p121
    %p123 = scmp.ne.s32.totalorder %s115, %s118
    %p124 = scmp.eq.s32.totalorder %s11, 0
    %p125 = por %p123, %p124
    %p126 = scmp.ne.s32.totalorder %s115, %s118
    %p127 = scmp.eq.s32.totalorder %s16, 3
    %p128 = por %p126, %p127
    %p129 = scmp.ne.s32.totalorder %s118, %s119
    %p130 = scmp.eq.s32.totalorder %s16, 0
    %p131 = por %p129, %p130
    %p132 = scmp.ne.s32.totalorder %s118, %s119
    %p133 = scmp.eq.s32.totalorder %s17, 3
    %p134 = por %p132, %p133
    %p136 = scmp.ne.s32.totalorder %s119, %s135
    %p137 = scmp.eq.s32.totalorder %s17, 0
    %p138 = por %p136, %p137
    %p139 = scmp.le.s32.totalorder 1, %s11
    %p140 = scmp.lt.s32.totalorder %s11, 5
    %p141 = pnand %p139, %p140
    %p142 = pneg %p141
    // Predicated region
    $region9: #{gatnet_forward.4} parent=5 // pred_check
      _
    $region10: #{gatnet_forward.4} parent=5 // pred_check_branch
      %144 = sbr.rel (%p141) target = $region12
    $region11: #{gatnet_forward.4} parent=5 // pred_region
      %s145 = ssub.s32 %s11, 1
      // Predicated region
      $region13: #{gatnet_forward.4} parent=11 // pred_check
        %p146 = pneg %p58
      $region14: #{gatnet_forward.4} parent=11 // pred_check_branch
        %148 = sbr.rel (%p146) target = $region16
      $region15: #{gatnet_forward.4} parent=11 // pred_region
        _
      $region16: #{gatnet_forward.4} parent=11 // pred_fallthru
        _
      // Predicated region
      $region17: #{gatnet_forward.4} parent=11 // pred_check
        %p149 = pneg %p79
      $region18: #{gatnet_forward.4} parent=11 // pred_check_branch
        %151 = sbr.rel (%p149) target = $region20
      $region19: #{gatnet_forward.4} parent=11 // pred_region
        _
      $region20: #{gatnet_forward.4} parent=11 // pred_fallthru
        _
    $region12: #{gatnet_forward.4} parent=5 // pred_fallthru
      _
    %p152 = scmp.lt.s32.totalorder %s11, 4
    // Predicated region
    $region21: #{gatnet_forward.4} parent=5 // pred_check
      %p153 = pneg %p152
    $region22: #{gatnet_forward.4} parent=5 // pred_check_branch
      %155 = sbr.rel (%p153) target = $region24
    $region23: #{gatnet_forward.4} parent=5 // pred_region
      // Predicated region
      $region25: #{gatnet_forward.4} parent=23 // pred_check
        %p156 = pneg %p31
      $region26: #{gatnet_forward.4} parent=23 // pred_check_branch
        %158 = sbr.rel (%p156) target = $region28
      $region27: #{gatnet_forward.4} parent=23 // pred_region
        %s159 = smul.u32 8, %s11
        %p160 = scmp.lt.s32.totalorder %s159, 31
        %s161 = scalar_select %p160, %s159, 31
        %s162 = smul.addr %s161, 8
        %s163 = scalar_lea.vmem %s0, %s162
        %s164 = smul.u32 8, %s11
      $region28: #{gatnet_forward.4} parent=23 // pred_fallthru
        _
    $region24: #{gatnet_forward.4} parent=5 // pred_fallthru
      _
    %p165 = scmp.le.s32.totalorder 1, %s11
    %p166 = scmp.lt.s32.totalorder %s11, 5
    %p167 = pnand %p165, %p166
    %p168 = pneg %p167
    // Predicated region
    $region29: #{gatnet_forward.4} parent=5 // pred_check
      _
    $region30: #{gatnet_forward.4} parent=5 // pred_check_branch
      %170 = sbr.rel (%p167) target = $region32
    $region31: #{gatnet_forward.4} parent=5 // pred_region
      %s171 = ssub.s32 %s11, 1
      %s172 = smul.u32 8, %s16
      %p173 = scmp.lt.s32.totalorder %s172, 31
      %s174 = scalar_select %p173, %s172, 31
      %s175 = smul.addr %s174, 8
      %s176 = scalar_lea.vmem %s0, %s175
      %p177 = pneg %p37
      %p178 = pneg %p34
      %p179 = pneg %p58
      %p180 = pneg %p55
      %p181 = pneg %p79
      %p182 = pneg %p76
      %p183 = pneg %p105
      %p184 = pneg %p102
      %s185 = smul.u32 8, %s16
      %p186 = scmp.lt.s32.totalorder %s185, 31
      %s187 = scalar_select %p186, %s185, 31
      %s188 = smul.addr %s187, 8
      %s189 = scalar_lea.vmem %s3, %s188
      %p190 = pneg %p131
      %p191 = pneg %p128
      %s192 = smul.u32 8, %s16
      %p193 = scmp.lt.s32.totalorder %s192, 31
      %s194 = scalar_select %p193, %s192, 31
      %s195 = smul.addr %s194, 8
      %s196 = scalar_lea.vmem %s4, %s195
      %s197 = smul.u32 8, %s16
      %p198 = scmp.lt.s32.totalorder %s197, 31
      %s199 = scalar_select %p198, %s197, 31
      %s200 = smul.addr %s199, 8
      %s201 = scalar_lea.vmem %s0, %s200
      %s202 = smul.u32 8, %s16
      %s203 = smul.u32 8, %s16
      %p204 = scmp.lt.s32.totalorder %s203, 31
      %s205 = scalar_select %p204, %s203, 31
      %s206 = smul.addr %s205, 8
      %s207 = scalar_lea.vmem %s3, %s206
      %s208 = smul.u32 8, %s16
      %s209 = smul.u32 8, %s16
      %p210 = scmp.lt.s32.totalorder %s209, 31
      %s211 = scalar_select %p210, %s209, 31
      %s212 = smul.addr %s211, 8
      %s213 = scalar_lea.vmem %s4, %s212
      %s214 = smul.u32 8, %s16
      %v215 = vld [vmem:[%s201] sm:$0xff]
      %v216 = vld [vmem:[%s201 + $0x8] sm:$0xff]
      %v217 = vld [vmem:[%s201 + $0x10] sm:$0xff]
      %v218 = vld [vmem:[%s201 + $0x18] sm:$0xff]
      %v219 = vld [vmem:[%s201 + $0x20] sm:$0xff]
      %v220 = vld [vmem:[%s201 + $0x28] sm:$0xff]
      %v221 = vld [vmem:[%s201 + $0x30] sm:$0xff]
      %v222 = vld [vmem:[%s201 + $0x38] sm:$0xff]
      %v223 = vld [vmem:[%s1] sm:$0xff]
      %v224 = vld [vmem:[%s1 + $0x8] sm:$0xff]
      %v225 = vld [vmem:[%s1 + $0x10] sm:$0xff]
      %v226 = vld [vmem:[%s1 + $0x18] sm:$0xff]
      %vm227 = vcmask 261120
      %v229 = vsel %vm227, %v215, 0
      %v232 = vsel %vm227, %v216, 0
      %v235 = vsel %vm227, %v217, 0
      %v238 = vsel %vm227, %v218, 0
      %v241 = vsel %vm227, %v219, 0
      %v244 = vsel %vm227, %v220, 0
      %v247 = vsel %vm227, %v221, 0
      %v250 = vsel %vm227, %v222, 0
      %252 = vmatprep.subr.mxu0 0.0
      %253 = vmatpush1.msra.mxu0 0.0
      %254 = vmatprep.subr.mxu0 0.0
      %255 = vmatpush1.msra.mxu0 0.0
      %256 = vmatprep.subr.mxu0 0.0
      %257 = vmatpush1.msra.mxu0 0.0
      %258 = vmatprep.subr.mxu0 0.0
      %259 = vmatpush1.msra.mxu0 0.0
      %260 = vmatprep.subr.mxu0 0.0
      %261 = vmatpush1.msra.mxu0 0.0
      %262 = vmatprep.subr.mxu0 0.0
      %263 = vmatpush1.msra.mxu0 0.0
      %264 = vmatprep.subr.mxu0 0.0
      %265 = vmatpush1.msra.mxu0 0.0
      %266 = vmatprep.subr.mxu0 0.0
      %267 = vmatpush1.msra.mxu0 0.0
      %268 = vmatprep.subr.mxu0 0.0
      %269 = vmatpush1.msra.mxu0 0.0
      %270 = vmatprep.subr.mxu0 0.0
      %271 = vmatpush1.msra.mxu0 0.0
      %272 = vmatprep.subr.mxu0 0.0
      %273 = vmatpush1.msra.mxu0 0.0
      %274 = vmatprep.subr.mxu0 0.0
      %275 = vmatpush1.msra.mxu0 0.0
      %276 = vmatprep.subr.mxu0 0.0
      %277 = vmatpush1.msra.mxu0 %v226
      %278 = vmatprep.subr.mxu0 0.0
      %279 = vmatpush1.msra.mxu0 %v225
      %280 = vmatprep.subr.mxu0 0.0
      %281 = vmatpush1.msra.mxu0 %v224
      %282 = vmatprep.subr.mxu0 0.0
      %283 = vmatpush1.msra.mxu0 %v223
      %284 = vmatprep.subr.mxu0 0.0
      %285 = vmatpush2.msra.mxu0 0.0
      %286 = vmatprep.subr.mxu0 0.0
      %287 = vmatpush2.msra.mxu0 0.0
      %288 = vmatprep.subr.mxu0 0.0
      %289 = vmatpush2.msra.mxu0 0.0
      %290 = vmatprep.subr.mxu0 0.0
      %291 = vmatpush2.msra.mxu0 0.0
      %292 = vmatprep.subr.mxu0 0.0
      %293 = vmatpush2.msra.mxu0 0.0
      %294 = vmatprep.subr.mxu0 0.0
      %295 = vmatpush2.msra.mxu0 0.0
      %296 = vmatprep.subr.mxu0 0.0
      %297 = vmatpush2.msra.mxu0 0.0
      %298 = vmatprep.subr.mxu0 0.0
      %299 = vmatpush2.msra.mxu0 0.0
      %300 = vmatprep.subr.mxu0 0.0
      %301 = vmatpush2.msra.mxu0 0.0
      %302 = vmatprep.subr.mxu0 0.0
      %303 = vmatpush2.msra.mxu0 0.0
      %304 = vmatprep.subr.mxu0 0.0
      %305 = vmatpush2.msra.mxu0 0.0
      %306 = vmatprep.subr.mxu0 0.0
      %307 = vmatpush2.msra.mxu0 0.0
      %308 = vmatprep.subr.mxu0 0.0
      %309 = vmatpush2.msra.mxu0 0.0
      %310 = vmatprep.subr.mxu0 0.0
      %311 = vmatpush2.msra.mxu0 0.0
      %312 = vmatprep.subr.mxu0 0.0
      %313 = vmatpush2.msra.mxu0 0.0
      %314 = vmatprep.subr.mxu0 0.0
      %315 = vmatpush2.msra.mxu0 0.0
      %316 = vmatprep.mubr.f32.mxu0 0.0
      %317 = vmatmul.mubr.f32.gmra.mxu0 %v229
      %v318 = vpop.f32.mrf.mxu0
      %v319 = vadd.f32 0.0, %v318
      %v320 = vpop.f32.mrf.mxu0
      %321 = vmatprep.mubr.f32.mxu0 0.0
      %322 = vmatmul.mubr.f32.gmra.mxu0 %v232
      %v323 = vpop.f32.mrf.mxu0
      %v324 = vadd.f32 0.0, %v323
      %v325 = vpop.f32.mrf.mxu0
      %326 = vmatprep.mubr.f32.mxu0 0.0
      %327 = vmatmul.mubr.f32.gmra.mxu0 %v235
      %v328 = vpop.f32.mrf.mxu0
      %v329 = vadd.f32 0.0, %v328
      %v330 = vpop.f32.mrf.mxu0
      %331 = vmatprep.mubr.f32.mxu0 0.0
      %332 = vmatmul.mubr.f32.gmra.mxu0 %v238
      %v333 = vpop.f32.mrf.mxu0
      %v334 = vadd.f32 0.0, %v333
      %v335 = vpop.f32.mrf.mxu0
      %336 = vmatprep.mubr.f32.mxu0 0.0
      %337 = vmatmul.mubr.f32.gmra.mxu0 %v241
      %v338 = vpop.f32.mrf.mxu0
      %v339 = vadd.f32 0.0, %v338
      %v340 = vpop.f32.mrf.mxu0
      %341 = vmatprep.mubr.f32.mxu0 0.0
      %342 = vmatmul.mubr.f32.gmra.mxu0 %v244
      %v343 = vpop.f32.mrf.mxu0
      %v344 = vadd.f32 0.0, %v343
      %v345 = vpop.f32.mrf.mxu0
      %346 = vmatprep.mubr.f32.mxu0 0.0
      %347 = vmatmul.mubr.f32.gmra.mxu0 %v247
      %v348 = vpop.f32.mrf.mxu0
      %v349 = vadd.f32 0.0, %v348
      %v350 = vpop.f32.mrf.mxu0
      %351 = vmatprep.mubr.f32.mxu0 0.0
      %352 = vmatmul.mubr.f32.gmra.mxu0 %v250
      %v353 = vpop.f32.mrf.mxu0
      %v354 = vadd.f32 0.0, %v353
      %v355 = vpop.f32.mrf.mxu0
      %356 = vdwg.mxu0
      %357 = vst [vmem:[%s207] sm:$0xff] %v319
      %358 = vst [vmem:[%s207 + $0x8] sm:$0xff] %v324
      %359 = vst [vmem:[%s207 + $0x10] sm:$0xff] %v329
      %360 = vst [vmem:[%s207 + $0x18] sm:$0xff] %v334
      %361 = vst [vmem:[%s207 + $0x20] sm:$0xff] %v339
      %362 = vst [vmem:[%s207 + $0x28] sm:$0xff] %v344
      %363 = vst [vmem:[%s207 + $0x30] sm:$0xff] %v349
      %364 = vst [vmem:[%s207 + $0x38] sm:$0xff] %v354
      %v365 = vld [vmem:[%s2] sm:$0xff]
      %v366 = vld [vmem:[%s2 + $0x8] sm:$0xff]
      %v367 = vld [vmem:[%s2 + $0x10] sm:$0xff]
      %v368 = vld [vmem:[%s2 + $0x18] sm:$0xff]
      %v369 = vld [vmem:[%s2 + $0x20] sm:$0xff]
      %v370 = vld [vmem:[%s2 + $0x28] sm:$0xff]
      %v371 = vld [vmem:[%s2 + $0x30] sm:$0xff]
      %v372 = vld [vmem:[%s2 + $0x38] sm:$0xff]
      %v373 = vld [vmem:[%s2 + $0x40] sm:$0xff]
      %v374 = vld [vmem:[%s2 + $0x48] sm:$0xff]
      %v375 = vld [vmem:[%s2 + $0x50] sm:$0xff]
      %v376 = vld [vmem:[%s2 + $0x58] sm:$0xff]
      %v377 = vld [vmem:[%s2 + $0x60] sm:$0xff]
      %v378 = vld [vmem:[%s2 + $0x68] sm:$0xff]
      %v379 = vld [vmem:[%s2 + $0x70] sm:$0xff]
      %v380 = vld [vmem:[%s2 + $0x78] sm:$0xff]
      %381 = vmatprep.subr.mxu0 0.0
      %382 = vmatpush1.msra.mxu0 %v380
      %383 = vmatprep.subr.mxu0 0.0
      %384 = vmatpush1.msra.mxu0 %v379
      %385 = vmatprep.subr.mxu0 0.0
      %386 = vmatpush1.msra.mxu0 %v378
      %387 = vmatprep.subr.mxu0 0.0
      %388 = vmatpush1.msra.mxu0 %v377
      %389 = vmatprep.subr.mxu0 0.0
      %390 = vmatpush1.msra.mxu0 %v376
      %391 = vmatprep.subr.mxu0 0.0
      %392 = vmatpush1.msra.mxu0 %v375
      %393 = vmatprep.subr.mxu0 0.0
      %394 = vmatpush1.msra.mxu0 %v374
      %395 = vmatprep.subr.mxu0 0.0
      %396 = vmatpush1.msra.mxu0 %v373
      %397 = vmatprep.subr.mxu0 0.0
      %398 = vmatpush1.msra.mxu0 %v372
      %399 = vmatprep.subr.mxu0 0.0
      %400 = vmatpush1.msra.mxu0 %v371
      %401 = vmatprep.subr.mxu0 0.0
      %402 = vmatpush1.msra.mxu0 %v370
      %403 = vmatprep.subr.mxu0 0.0
      %404 = vmatpush1.msra.mxu0 %v369
      %405 = vmatprep.subr.mxu0 0.0
      %406 = vmatpush1.msra.mxu0 %v368
      %407 = vmatprep.subr.mxu0 0.0
      %408 = vmatpush1.msra.mxu0 %v367
      %409 = vmatprep.subr.mxu0 0.0
      %410 = vmatpush1.msra.mxu0 %v366
      %411 = vmatprep.subr.mxu0 0.0
      %412 = vmatpush1.msra.mxu0 %v365
      %413 = vmatprep.subr.mxu0 0.0
      %414 = vmatpush2.msra.mxu0 0.0
      %415 = vmatprep.subr.mxu0 0.0
      %416 = vmatpush2.msra.mxu0 0.0
      %417 = vmatprep.subr.mxu0 0.0
      %418 = vmatpush2.msra.mxu0 0.0
      %419 = vmatprep.subr.mxu0 0.0
      %420 = vmatpush2.msra.mxu0 0.0
      %421 = vmatprep.subr.mxu0 0.0
      %422 = vmatpush2.msra.mxu0 0.0
      %423 = vmatprep.subr.mxu0 0.0
      %424 = vmatpush2.msra.mxu0 0.0
      %425 = vmatprep.subr.mxu0 0.0
      %426 = vmatpush2.msra.mxu0 0.0
      %427 = vmatprep.subr.mxu0 0.0
      %428 = vmatpush2.msra.mxu0 0.0
      %429 = vmatprep.subr.mxu0 0.0
      %430 = vmatpush2.msra.mxu0 0.0
      %431 = vmatprep.subr.mxu0 0.0
      %432 = vmatpush2.msra.mxu0 0.0
      %433 = vmatprep.subr.mxu0 0.0
      %434 = vmatpush2.msra.mxu0 0.0
      %435 = vmatprep.subr.mxu0 0.0
      %436 = vmatpush2.msra.mxu0 0.0
      %437 = vmatprep.subr.mxu0 0.0
      %438 = vmatpush2.msra.mxu0 0.0
      %439 = vmatprep.subr.mxu0 0.0
      %440 = vmatpush2.msra.mxu0 0.0
      %441 = vmatprep.subr.mxu0 0.0
      %442 = vmatpush2.msra.mxu0 0.0
      %443 = vmatprep.subr.mxu0 0.0
      %444 = vmatpush2.msra.mxu0 0.0
      %445 = vmatprep.mubr.f32.mxu0 0.0
      %446 = vmatmul.mubr.f32.gmra.mxu0 %v319
      %v447 = vpop.f32.mrf.mxu0
      %v448 = vadd.f32 0.0, %v447
      %v449 = vpop.f32.mrf.mxu0
      %450 = vmatprep.mubr.f32.mxu0 0.0
      %451 = vmatmul.mubr.f32.gmra.mxu0 %v324
      %v452 = vpop.f32.mrf.mxu0
      %v453 = vadd.f32 0.0, %v452
      %v454 = vpop.f32.mrf.mxu0
      %455 = vmatprep.mubr.f32.mxu0 0.0
      %456 = vmatmul.mubr.f32.gmra.mxu0 %v329
      %v457 = vpop.f32.mrf.mxu0
      %v458 = vadd.f32 0.0, %v457
      %v459 = vpop.f32.mrf.mxu0
      %460 = vmatprep.mubr.f32.mxu0 0.0
      %461 = vmatmul.mubr.f32.gmra.mxu0 %v334
      %v462 = vpop.f32.mrf.mxu0
      %v463 = vadd.f32 0.0, %v462
      %v464 = vpop.f32.mrf.mxu0
      %465 = vmatprep.mubr.f32.mxu0 0.0
      %466 = vmatmul.mubr.f32.gmra.mxu0 %v339
      %v467 = vpop.f32.mrf.mxu0
      %v468 = vadd.f32 0.0, %v467
      %v469 = vpop.f32.mrf.mxu0
      %470 = vmatprep.mubr.f32.mxu0 0.0
      %471 = vmatmul.mubr.f32.gmra.mxu0 %v344
      %v472 = vpop.f32.mrf.mxu0
      %v473 = vadd.f32 0.0, %v472
      %v474 = vpop.f32.mrf.mxu0
      %475 = vmatprep.mubr.f32.mxu0 0.0
      %476 = vmatmul.mubr.f32.gmra.mxu0 %v349
      %v477 = vpop.f32.mrf.mxu0
      %v478 = vadd.f32 0.0, %v477
      %v479 = vpop.f32.mrf.mxu0
      %480 = vmatprep.mubr.f32.mxu0 0.0
      %481 = vmatmul.mubr.f32.gmra.mxu0 %v354
      %v482 = vpop.f32.mrf.mxu0
      %v483 = vadd.f32 0.0, %v482
      %v484 = vpop.f32.mrf.mxu0
      %485 = vdwg.mxu0
      %vm486 = vcmask 130048
      %487 = vst.msk [vmem:[%s213] sm:$0xff] %vm486, %v448
      %488 = vst.msk [vmem:[%s213 + $0x8] sm:$0xff] %vm486, %v453
      %489 = vst.msk [vmem:[%s213 + $0x10] sm:$0xff] %vm486, %v458
      %490 = vst.msk [vmem:[%s213 + $0x18] sm:$0xff] %vm486, %v463
      %491 = vst.msk [vmem:[%s213 + $0x20] sm:$0xff] %vm486, %v468
      %492 = vst.msk [vmem:[%s213 + $0x28] sm:$0xff] %vm486, %v473
      %493 = vst.msk [vmem:[%s213 + $0x30] sm:$0xff] %vm486, %v478
      %494 = vst.msk [vmem:[%s213 + $0x38] sm:$0xff] %vm486, %v483
      %s495 = smul.u32 8, %s16
      %p496 = scmp.lt.s32.totalorder %s495, 31
      %s497 = scalar_select %p496, %s495, 31
      %s498 = smul.addr %s497, 8
      %s499 = scalar_lea.vmem %s3, %s498
      %s500 = smul.u32 8, %s16
      %p501 = scmp.lt.s32.totalorder %s500, 31
      %s502 = scalar_select %p501, %s500, 31
      %s503 = smul.addr %s502, 8
      %s504 = scalar_lea.vmem %s4, %s503
      // Predicated region
      $region33: #{gatnet_forward.4} parent=31 // pred_check
        %p505 = pneg %p102
      $region34: #{gatnet_forward.4} parent=31 // pred_check_branch
        %507 = sbr.rel (%p505) target = $region36
      $region35: #{gatnet_forward.4} parent=31 // pred_region
        %s508 = smul.u32 8, %s16
      $region36: #{gatnet_forward.4} parent=31 // pred_fallthru
        _
      // Predicated region
      $region37: #{gatnet_forward.4} parent=31 // pred_check
        %p509 = pneg %p128
      $region38: #{gatnet_forward.4} parent=31 // pred_check_branch
        %511 = sbr.rel (%p509) target = $region40
      $region39: #{gatnet_forward.4} parent=31 // pred_region
        %s512 = smul.u32 8, %s16
      $region40: #{gatnet_forward.4} parent=31 // pred_fallthru
        _
    $region32: #{gatnet_forward.4} parent=5 // pred_fallthru
      _
    %p513 = scmp.le.s32.totalorder 2, %s11
    // Predicated region
    $region41: #{gatnet_forward.4} parent=5 // pred_check
      %p514 = pneg %p513
    $region42: #{gatnet_forward.4} parent=5 // pred_check_branch
      %516 = sbr.rel (%p514) target = $region44
    $region43: #{gatnet_forward.4} parent=5 // pred_region
      %s517 = ssub.s32 %s11, 2
      // Predicated region
      $region45: #{gatnet_forward.4} parent=43 // pred_check
        %p518 = pneg %p108
      $region46: #{gatnet_forward.4} parent=43 // pred_check_branch
        %520 = sbr.rel (%p518) target = $region48
      $region47: #{gatnet_forward.4} parent=43 // pred_region
        %s521 = smul.u32 8, %s17
        %p522 = scmp.lt.s32.totalorder %s521, 31
        %s523 = scalar_select %p522, %s521, 31
        %s524 = smul.addr %s523, 8
        %s525 = scalar_lea.vmem %s3, %s524
      $region48: #{gatnet_forward.4} parent=43 // pred_fallthru
        _
      // Predicated region
      $region49: #{gatnet_forward.4} parent=43 // pred_check
        %p526 = pneg %p134
      $region50: #{gatnet_forward.4} parent=43 // pred_check_branch
        %528 = sbr.rel (%p526) target = $region52
      $region51: #{gatnet_forward.4} parent=43 // pred_region
        %s529 = smul.u32 8, %s17
        %p530 = scmp.lt.s32.totalorder %s529, 31
        %s531 = scalar_select %p530, %s529, 31
        %s532 = smul.addr %s531, 8
        %s533 = scalar_lea.vmem %s4, %s532
      $region52: #{gatnet_forward.4} parent=43 // pred_fallthru
        _
    $region44: #{gatnet_forward.4} parent=5 // pred_fallthru
      _
  $region6: #{gatnet_forward.4} parent=0 // loop_footer
    %s15 = sadd.s32 1, %s11
  $region7: #{gatnet_forward.4} parent=0 // loop_footer_branch
    %10 = sbr.rel target = $region3
  $region8: #{gatnet_forward.4} parent=0 // loop_exit
    _

// kernel: gatnet_forward.7
$region0: #{gatnet_forward.7}
  #allocation0 [shape = 'u32[]', space=smem, size = 0x4, offset = 0x4, fixed_abs, tag = 'smem constant byte address 0x4 - core index']
  #allocation1 [shape = 'u32[144,128]{1,0:T(1,128)}', space=vmem, size = 0x12000, scoped, tag = 'internal scratch']
  %s0 = inlined_call_operand.vmem [shape: bf16[256,128], index: 0, kind: input, shape index: {}, may-alias: {0,1}]
  %s1 = inlined_call_operand.vmem [shape: bf16[256,128], index: 1, kind: input, shape index: {}, may-alias: {0,1}]
  %s2 = inlined_call_operand.hbm [shape: f32[256,256], index: 2, kind: output, shape index: {}]
  %s3 = sld [smem:[#allocation0]]
  $region41: #{gatnet_forward.7} parent=0
    _
  %s5 = ssub.s32 1, %s3
  %s6 = scalar_select 0, %s5, %s3
  $region1: #{gatnet_forward.7} parent=0
    #allocation2 [shape = 'u8[131072]{0}', space=vmem, size = 0x20000, scoped, tag = 'output window, operand 0']
    #allocation3 [shape = 's32[2]{0}', space=sflag, size = 0x8, scoped, tag = 'scoped memory for gatnet_forward.7']
    %7 = vsyncpa [#allocation3], 0
    %s8 = scalar_lea.sflag [#allocation3], 1
    %9 = vsyncpa %s8, 0
    loop: start=0, step=1, limit=6
    $region2: #{gatnet_forward.7} parent=1 // loop_pre_header
      _
    $region3: #{gatnet_forward.7} parent=1 // loop_header
      %s11 = sphi 0, %s15
      %p12 = scmp.ge.s32.totalorder %s11, 6
      %s21 = sphi 0, %s23
      %s24 = sphi 0, %s21
      %s25 = sphi 0, %s24
      %s41 = sphi 0, %s25
      %s45 = sphi 0, %s45
      %s47 = sphi 0, %s45
      %s48 = sphi 0, %s47
      %s62 = sphi 0, %s48
      %s68 = sphi 0, %s70
      %s71 = sphi 0, %s68
      %s72 = sphi 0, %s71
      %s88 = sphi 0, %s72
    $region4: #{gatnet_forward.7} parent=1 // loop_header_branch
      %14 = sbr.rel (%p12) target = $region8
    $region5: #{gatnet_forward.7} parent=1 // loop_body
      %s16 = ssub.s32 %s11, 1
      %s17 = ssub.s32 %s11, 2
      %s18 = sadd.s32 %s11, 1
      %s19 = ssub.s32 %s11, %s18
      %p20 = scmp.eq.s32.totalorder %s19, 0
      %s22 = sadd.s32 %s21, 1
      %s23 = scalar_select %p20, %s21, %s22
      %p26 = pneg %p20
      %p27 = scmp.eq.s32.totalorder %s11, 3
      %p28 = por %p26, %p27
      %p29 = scmp.ne.s32.totalorder %s21, %s24
      %p30 = scmp.eq.s32.totalorder %s11, 0
      %p31 = por %p29, %p30
      %p32 = scmp.ne.s32.totalorder %s21, %s24
      %p33 = scmp.eq.s32.totalorder %s16, 3
      %p34 = por %p32, %p33
      %p35 = scmp.ne.s32.totalorder %s24, %s25
      %p36 = scmp.eq.s32.totalorder %s16, 0
      %p37 = por %p35, %p36
      %p38 = scmp.ne.s32.totalorder %s24, %s25
      %p39 = scmp.eq.s32.totalorder %s17, 3
      %p40 = por %p38, %p39
      %p42 = scmp.ne.s32.totalorder %s25, %s41
      %p43 = scmp.eq.s32.totalorder %s17, 0
      %p44 = por %p42, %p43
      %s46 = sadd.s32 %s45, 1
      %p49 = scmp.eq.s32.totalorder %s11, 3
      %p50 = scmp.ne.s32.totalorder %s45, %s47
      %p51 = scmp.eq.s32.totalorder %s11, 0
      %p52 = por %p50, %p51
      %p53 = scmp.ne.s32.totalorder %s45, %s47
      %p54 = scmp.eq.s32.totalorder %s16, 3
      %p55 = por %p53, %p54
      %p56 = scmp.ne.s32.totalorder %s47, %s48
      %p57 = scmp.eq.s32.totalorder %s16, 0
      %p58 = por %p56, %p57
      %p59 = scmp.ne.s32.totalorder %s47, %s48
      %p60 = scmp.eq.s32.totalorder %s17, 3
      %p61 = por %p59, %p60
      %p63 = scmp.ne.s32.totalorder %s48, %s62
      %p64 = scmp.eq.s32.totalorder %s17, 0
      %p65 = por %p63, %p64
      %s66 = ssub.s32 %s11, %s18
      %p67 = scmp.eq.s32.totalorder %s66, 0
      %s69 = sadd.s32 %s68, 1
      %s70 = scalar_select %p67, %s68, %s69
      %p73 = pneg %p67
      %p74 = scmp.eq.s32.totalorder %s11, 3
      %p75 = por %p73, %p74
      %p76 = scmp.ne.s32.totalorder %s68, %s71
      %p77 = scmp.eq.s32.totalorder %s11, 0
      %p78 = por %p76, %p77
      %p79 = scmp.ne.s32.totalorder %s68, %s71
      %p80 = scmp.eq.s32.totalorder %s16, 3
      %p81 = por %p79, %p80
      %p82 = scmp.ne.s32.totalorder %s71, %s72
      %p83 = scmp.eq.s32.totalorder %s16, 0
      %p84 = por %p82, %p83
      %p85 = scmp.ne.s32.totalorder %s71, %s72
      %p86 = scmp.eq.s32.totalorder %s17, 3
      %p87 = por %p85, %p86
      %p89 = scmp.ne.s32.totalorder %s72, %s88
      %p90 = scmp.eq.s32.totalorder %s17, 0
      %p91 = por %p89, %p90
      %p92 = scmp.le.s32.totalorder 1, %s11
      %p93 = scmp.lt.s32.totalorder %s11, 5
      %p94 = pnand %p92, %p93
      %p95 = pneg %p94
      // Predicated region
      $region9: #{gatnet_forward.7} parent=5 // pred_check
        _
      $region10: #{gatnet_forward.7} parent=5 // pred_check_branch
        %97 = sbr.rel (%p94) target = $region12
      $region11: #{gatnet_forward.7} parent=5 // pred_region
        %s98 = ssub.s32 %s11, 1
        // Predicated region
        $region13: #{gatnet_forward.7} parent=11 // pred_check
          %p99 = pneg %p58
        $region14: #{gatnet_forward.7} parent=11 // pred_check_branch
          %101 = sbr.rel (%p99) target = $region16
        $region15: #{gatnet_forward.7} parent=11 // pred_region
          _
        $region16: #{gatnet_forward.7} parent=11 // pred_fallthru
          _
      $region12: #{gatnet_forward.7} parent=5 // pred_fallthru
        _
      %p102 = scmp.lt.s32.totalorder %s11, 4
      // Predicated region
      $region17: #{gatnet_forward.7} parent=5 // pred_check
        %p103 = pneg %p102
      $region18: #{gatnet_forward.7} parent=5 // pred_check_branch
        %105 = sbr.rel (%p103) target = $region20
      $region19: #{gatnet_forward.7} parent=5 // pred_region
        // Predicated region
        $region21: #{gatnet_forward.7} parent=19 // pred_check
          %p106 = pneg %p31
        $region22: #{gatnet_forward.7} parent=19 // pred_check_branch
          %108 = sbr.rel (%p106) target = $region24
        $region23: #{gatnet_forward.7} parent=19 // pred_region
          %s109 = smul.u32 8, %s11
          %p110 = scmp.lt.s32.totalorder %s109, 31
          %s111 = scalar_select %p110, %s109, 31
          %s112 = smul.addr %s111, 4
          %s113 = scalar_lea.vmem %s0, %s112
          %s114 = smul.u32 8, %s11
        $region24: #{gatnet_forward.7} parent=19 // pred_fallthru
          _
      $region20: #{gatnet_forward.7} parent=5 // pred_fallthru
        _
      %p115 = scmp.le.s32.totalorder 1, %s11
      %p116 = scmp.lt.s32.totalorder %s11, 5
      %p117 = pnand %p115, %p116
      %p118 = pneg %p117
      // Predicated region
      $region25: #{gatnet_forward.7} parent=5 // pred_check
        _
      $region26: #{gatnet_forward.7} parent=5 // pred_check_branch
        %120 = sbr.rel (%p117) target = $region28
      $region27: #{gatnet_forward.7} parent=5 // pred_region
        %s121 = ssub.s32 %s11, 1
        %s122 = smul.u32 8, %s16
        %p123 = scmp.lt.s32.totalorder %s122, 31
        %s124 = scalar_select %p123, %s122, 31
        %s125 = smul.addr %s124, 4
        %s126 = scalar_lea.vmem %s0, %s125
        %p127 = pneg %p37
        %p128 = pneg %p34
        %p129 = pneg %p58
        %p130 = pneg %p55
        %p131 = pneg %p84
        %p132 = pneg %p81
        %s133 = sand.u32 %s71, 1
        %s134 = scalar_lea.sflag [#allocation3], %s133
        %s135 = sand.u32 %s71, 1
        %s136 = smul.addr %s135, 128
        %s137 = scalar_lea.vmem [#allocation2], %s136
        %s138 = smul.u32 8, %s16
        %p139 = scmp.lt.s32.totalorder %s138, 31
        %s140 = scalar_select %p139, %s138, 31
        %s141 = smul.addr %s140, 4
        %s142 = scalar_lea.vmem %s0, %s141
        %s143 = smul.u32 8, %s16
        %s144 = smul.u32 8, %s16
        %v145 = vld [vmem:[%s142] sm:$0xf]
        %v146 = vld [vmem:[%s142 + $0x4] sm:$0xf]
        %v147 = vld [vmem:[%s142 + $0x8] sm:$0xf]
        %v148 = vld [vmem:[%s142 + $0xc] sm:$0xf]
        %v149 = vld [vmem:[%s142 + $0x10] sm:$0xf]
        %v150 = vld [vmem:[%s142 + $0x14] sm:$0xf]
        %v151 = vld [vmem:[%s142 + $0x18] sm:$0xf]
        %v152 = vld [vmem:[%s142 + $0x1c] sm:$0xf]
        %v153 = vunpack.c.l.bf16 %v145
        %v154 = vunpack.c.l.bf16 %v146
        %v155 = vunpack.c.l.bf16 %v147
        %v156 = vunpack.c.l.bf16 %v148
        %v157 = vunpack.c.l.bf16 %v149
        %v158 = vunpack.c.l.bf16 %v150
        %v159 = vunpack.c.l.bf16 %v151
        %v160 = vunpack.c.l.bf16 %v152
        %v161 = vld [vmem:[%s1] sm:$0xf]
        %v162 = vld [vmem:[%s1 + $0x4] sm:$0xf]
        %v163 = vld [vmem:[%s1 + $0x8] sm:$0xf]
        %v164 = vld [vmem:[%s1 + $0xc] sm:$0xf]
        %v165 = vld [vmem:[%s1 + $0x10] sm:$0xf]
        %v166 = vld [vmem:[%s1 + $0x14] sm:$0xf]
        %v167 = vld [vmem:[%s1 + $0x18] sm:$0xf]
        %v168 = vld [vmem:[%s1 + $0x1c] sm:$0xf]
        %v169 = vld [vmem:[%s1 + $0x20] sm:$0xf]
        %v170 = vld [vmem:[%s1 + $0x24] sm:$0xf]
        %v171 = vld [vmem:[%s1 + $0x28] sm:$0xf]
        %v172 = vld [vmem:[%s1 + $0x2c] sm:$0xf]
        %v173 = vld [vmem:[%s1 + $0x30] sm:$0xf]
        %v174 = vld [vmem:[%s1 + $0x34] sm:$0xf]
        %v175 = vld [vmem:[%s1 + $0x38] sm:$0xf]
        %v176 = vld [vmem:[%s1 + $0x3c] sm:$0xf]
        %v177 = vld [vmem:[%s1 + $0x40] sm:$0xf]
        %v178 = vld [vmem:[%s1 + $0x44] sm:$0xf]
        %v179 = vld [vmem:[%s1 + $0x48] sm:$0xf]
        %v180 = vld [vmem:[%s1 + $0x4c] sm:$0xf]
        %v181 = vld [vmem:[%s1 + $0x50] sm:$0xf]
        %v182 = vld [vmem:[%s1 + $0x54] sm:$0xf]
        %v183 = vld [vmem:[%s1 + $0x58] sm:$0xf]
        %v184 = vld [vmem:[%s1 + $0x5c] sm:$0xf]
        %v185 = vld [vmem:[%s1 + $0x60] sm:$0xf]
        %v186 = vld [vmem:[%s1 + $0x64] sm:$0xf]
        %v187 = vld [vmem:[%s1 + $0x68] sm:$0xf]
        %v188 = vld [vmem:[%s1 + $0x6c] sm:$0xf]
        %v189 = vld [vmem:[%s1 + $0x70] sm:$0xf]
        %v190 = vld [vmem:[%s1 + $0x74] sm:$0xf]
        %v191 = vld [vmem:[%s1 + $0x78] sm:$0xf]
        %v192 = vld [vmem:[%s1 + $0x7c] sm:$0xf]
        %v193 = vunpack.c.l.bf16 %v161
        %v194 = vunpack.c.l.bf16 %v162
        %v195 = vunpack.c.l.bf16 %v163
        %v196 = vunpack.c.l.bf16 %v164
        %v197 = vunpack.c.l.bf16 %v165
        %v198 = vunpack.c.l.bf16 %v166
        %v199 = vunpack.c.l.bf16 %v167
        %v200 = vunpack.c.l.bf16 %v168
        %v201 = vunpack.c.l.bf16 %v169
        %v202 = vunpack.c.l.bf16 %v170
        %v203 = vunpack.c.l.bf16 %v171
        %v204 = vunpack.c.l.bf16 %v172
        %v205 = vunpack.c.l.bf16 %v173
        %v206 = vunpack.c.l.bf16 %v174
        %v207 = vunpack.c.l.bf16 %v175
        %v208 = vunpack.c.l.bf16 %v176
        %v209 = vunpack.c.l.bf16 %v177
        %v210 = vunpack.c.l.bf16 %v178
        %v211 = vunpack.c.l.bf16 %v179
        %v212 = vunpack.c.l.bf16 %v180
        %v213 = vunpack.c.l.bf16 %v181
        %v214 = vunpack.c.l.bf16 %v182
        %v215 = vunpack.c.l.bf16 %v183
        %v216 = vunpack.c.l.bf16 %v184
        %v217 = vunpack.c.l.bf16 %v185
        %v218 = vunpack.c.l.bf16 %v186
        %v219 = vunpack.c.l.bf16 %v187
        %v220 = vunpack.c.l.bf16 %v188
        %v221 = vunpack.c.l.bf16 %v189
        %v222 = vunpack.c.l.bf16 %v190
        %v223 = vunpack.c.l.bf16 %v191
        %v224 = vunpack.c.l.bf16 %v192
        %225 = vmatprep.subr.mxu0 0.0
        %226 = vmatpush1.xpose.msra.mxu0 %v208
        %227 = vmatprep.subr.mxu0 0.0
        %228 = vmatpush1.xpose.msra.mxu0 %v207
        %229 = vmatprep.subr.mxu0 0.0
        %230 = vmatpush1.xpose.msra.mxu0 %v206
        %231 = vmatprep.subr.mxu0 0.0
        %232 = vmatpush1.xpose.msra.mxu0 %v205
        %233 = vmatprep.subr.mxu0 0.0
        %234 = vmatpush1.xpose.msra.mxu0 %v204
        %235 = vmatprep.subr.mxu0 0.0
        %236 = vmatpush1.xpose.msra.mxu0 %v203
        %237 = vmatprep.subr.mxu0 0.0
        %238 = vmatpush1.xpose.msra.mxu0 %v202
        %239 = vmatprep.subr.mxu0 0.0
        %240 = vmatpush1.xpose.msra.mxu0 %v201
        %241 = vmatprep.subr.mxu0 0.0
        %242 = vmatpush1.xpose.msra.mxu0 %v200
        %243 = vmatprep.subr.mxu0 0.0
        %244 = vmatpush1.xpose.msra.mxu0 %v199
        %245 = vmatprep.subr.mxu0 0.0
        %246 = vmatpush1.xpose.msra.mxu0 %v198
        %247 = vmatprep.subr.mxu0 0.0
        %248 = vmatpush1.xpose.msra.mxu0 %v197
        %249 = vmatprep.subr.mxu0 0.0
        %250 = vmatpush1.xpose.msra.mxu0 %v196
        %251 = vmatprep.subr.mxu0 0.0
        %252 = vmatpush1.xpose.msra.mxu0 %v195
        %253 = vmatprep.subr.mxu0 0.0
        %254 = vmatpush1.xpose.msra.mxu0 %v194
        %255 = vmatprep.subr.mxu0 0.0
        %256 = vmatpush1.xpose.msra.mxu0 %v193
        %257 = vmatprep.subr.mxu0 0.0
        %258 = vmatpush2.xpose.msra.mxu0 %v224
        %259 = vmatprep.subr.mxu0 0.0
        %260 = vmatpush2.xpose.msra.mxu0 %v223
        %261 = vmatprep.subr.mxu0 0.0
        %262 = vmatpush2.xpose.msra.mxu0 %v222
        %263 = vmatprep.subr.mxu0 0.0
        %264 = vmatpush2.xpose.msra.mxu0 %v221
        %265 = vmatprep.subr.mxu0 0.0
        %266 = vmatpush2.xpose.msra.mxu0 %v220
        %267 = vmatprep.subr.mxu0 0.0
        %268 = vmatpush2.xpose.msra.mxu0 %v219
        %269 = vmatprep.subr.mxu0 0.0
        %270 = vmatpush2.xpose.msra.mxu0 %v218
        %271 = vmatprep.subr.mxu0 0.0
        %272 = vmatpush2.xpose.msra.mxu0 %v217
        %273 = vmatprep.subr.mxu0 0.0
        %274 = vmatpush2.xpose.msra.mxu0 %v216
        %275 = vmatprep.subr.mxu0 0.0
        %276 = vmatpush2.xpose.msra.mxu0 %v215
        %277 = vmatprep.subr.mxu0 0.0
        %278 = vmatpush2.xpose.msra.mxu0 %v214
        %279 = vmatprep.subr.mxu0 0.0
        %280 = vmatpush2.xpose.msra.mxu0 %v213
        %281 = vmatprep.subr.mxu0 0.0
        %282 = vmatpush2.xpose.msra.mxu0 %v212
        %283 = vmatprep.subr.mxu0 0.0
        %284 = vmatpush2.xpose.msra.mxu0 %v211
        %285 = vmatprep.subr.mxu0 0.0
        %286 = vmatpush2.xpose.msra.mxu0 %v210
        %287 = vmatprep.subr.mxu0 0.0
        %288 = vmatpush2.xpose.msra.mxu0 %v209
        %289 = vmatprep.mubr.f32.mxu0 0.0
        %290 = vmatmul.mubr.f32.gmra.mxu0 %v153
        %v291 = vpop.f32.mrf.mxu0
        %v292 = vadd.f32 0.0, %v291
        %v293 = vpop.f32.mrf.mxu0
        %v294 = vadd.f32 0.0, %v293
        %295 = vmatprep.mubr.f32.mxu0 0.0
        %296 = vmatmul.mubr.f32.gmra.mxu0 %v154
        %v297 = vpop.f32.mrf.mxu0
        %v298 = vadd.f32 0.0, %v297
        %v299 = vpop.f32.mrf.mxu0
        %v300 = vadd.f32 0.0, %v299
        %301 = vmatprep.mubr.f32.mxu0 0.0
        %302 = vmatmul.mubr.f32.gmra.mxu0 %v155
        %v303 = vpop.f32.mrf.mxu0
        %v304 = vadd.f32 0.0, %v303
        %v305 = vpop.f32.mrf.mxu0
        %v306 = vadd.f32 0.0, %v305
        %307 = vmatprep.mubr.f32.mxu0 0.0
        %308 = vmatmul.mubr.f32.gmra.mxu0 %v156
        %v309 = vpop.f32.mrf.mxu0
        %v310 = vadd.f32 0.0, %v309
        %v311 = vpop.f32.mrf.mxu0
        %v312 = vadd.f32 0.0, %v311
        %313 = vmatprep.mubr.f32.mxu0 0.0
        %314 = vmatmul.mubr.f32.gmra.mxu0 %v157
        %v315 = vpop.f32.mrf.mxu0
        %v316 = vadd.f32 0.0, %v315
        %v317 = vpop.f32.mrf.mxu0
        %v318 = vadd.f32 0.0, %v317
        %319 = vmatprep.mubr.f32.mxu0 0.0
        %320 = vmatmul.mubr.f32.gmra.mxu0 %v158
        %v321 = vpop.f32.mrf.mxu0
        %v322 = vadd.f32 0.0, %v321
        %v323 = vpop.f32.mrf.mxu0
        %v324 = vadd.f32 0.0, %v323
        %325 = vmatprep.mubr.f32.mxu0 0.0
        %326 = vmatmul.mubr.f32.gmra.mxu0 %v159
        %v327 = vpop.f32.mrf.mxu0
        %v328 = vadd.f32 0.0, %v327
        %v329 = vpop.f32.mrf.mxu0
        %v330 = vadd.f32 0.0, %v329
        %331 = vmatprep.mubr.f32.mxu0 0.0
        %332 = vmatmul.mubr.f32.gmra.mxu0 %v160
        %v333 = vpop.f32.mrf.mxu0
        %v334 = vadd.f32 0.0, %v333
        %v335 = vpop.f32.mrf.mxu0
        %v336 = vadd.f32 0.0, %v335
        %337 = vdwg.mxu0
        %338 = vst [vmem:[%s137] sm:$0xff] %v292
        %339 = vst [vmem:[%s137 + $0x8] sm:$0xff] %v294
        %340 = vst [vmem:[%s137 + $0x10] sm:$0xff] %v298
        %341 = vst [vmem:[%s137 + $0x18] sm:$0xff] %v300
        %342 = vst [vmem:[%s137 + $0x20] sm:$0xff] %v304
        %343 = vst [vmem:[%s137 + $0x28] sm:$0xff] %v306
        %344 = vst [vmem:[%s137 + $0x30] sm:$0xff] %v310
        %345 = vst [vmem:[%s137 + $0x38] sm:$0xff] %v312
        %346 = vst [vmem:[%s137 + $0x40] sm:$0xff] %v316
        %347 = vst [vmem:[%s137 + $0x48] sm:$0xff] %v318
        %348 = vst [vmem:[%s137 + $0x50] sm:$0xff] %v322
        %349 = vst [vmem:[%s137 + $0x58] sm:$0xff] %v324
        %350 = vst [vmem:[%s137 + $0x60] sm:$0xff] %v328
        %351 = vst [vmem:[%s137 + $0x68] sm:$0xff] %v330
        %352 = vst [vmem:[%s137 + $0x70] sm:$0xff] %v334
        %353 = vst [vmem:[%s137 + $0x78] sm:$0xff] %v336
        %s354 = sand.u32 %s71, 1
        %s355 = scalar_lea.sflag [#allocation3], %s354
        %s356 = sand.u32 %s71, 1
        %s357 = smul.addr %s356, 128
        %s358 = scalar_lea.vmem [#allocation2], %s357
        // Predicated region
        $region29: #{gatnet_forward.7} parent=27 // pred_check
          %p359 = pneg %p81
        $region30: #{gatnet_forward.7} parent=27 // pred_check_branch
          %361 = sbr.rel (%p359) target = $region32
        $region31: #{gatnet_forward.7} parent=27 // pred_region
          %s362 = smul.u32 8, %s16
          %s364 = ssub.s32 2048, 2048
          %365 = vsyncadd %s355, %s364
          %s366 = smul.addr %s362, 2
          %s367 = smul.addr %s366, 128
          %s368 = scalar_lea.hbm %s2, %s367
          %s369 = sshll.u32 %s358, 4
          %s370 = int_to_ptr.vmem [resolvable:$true] %s369
          %375 = dma.vmem_to_hbm [thread:$0]  %s370, 2048, %s368, %s355, 256, 256, 16
        $region32: #{gatnet_forward.7} parent=27 // pred_fallthru
          _
      $region28: #{gatnet_forward.7} parent=5 // pred_fallthru
        _
      %p376 = scmp.le.s32.totalorder 2, %s11
      // Predicated region
      $region33: #{gatnet_forward.7} parent=5 // pred_check
        %p377 = pneg %p376
      $region34: #{gatnet_forward.7} parent=5 // pred_check_branch
        %379 = sbr.rel (%p377) target = $region36
      $region35: #{gatnet_forward.7} parent=5 // pred_region
        %s380 = ssub.s32 %s11, 2
        // Predicated region
        $region37: #{gatnet_forward.7} parent=35 // pred_check
          %p381 = pneg %p87
        $region38: #{gatnet_forward.7} parent=35 // pred_check_branch
          %383 = sbr.rel (%p381) target = $region40
        $region39: #{gatnet_forward.7} parent=35 // pred_region
          %s384 = sand.u32 %s72, 1
          %s385 = scalar_lea.sflag [#allocation3], %s384
          %s386 = sand.u32 %s72, 1
          %s387 = smul.addr %s386, 128
          %s388 = scalar_lea.vmem [#allocation2], %s387
          %389 = dma.done %s385, 2048
        $region40: #{gatnet_forward.7} parent=35 // pred_fallthru
          _
      $region36: #{gatnet_forward.7} parent=5 // pred_fallthru
        _
    $region6: #{gatnet_forward.7} parent=1 // loop_footer
      %s15 = sadd.s32 1, %s11
    $region7: #{gatnet_forward.7} parent=1 // loop_footer_branch
      %10 = sbr.rel target = $region3
    $region8: #{gatnet_forward.7} parent=1 // loop_exit
      _
    %390 = vsyncpa [#allocation3], 1
    %s391 = scalar_lea.sflag [#allocation3], 1
    %392 = vsyncpa %s391, 1

// kernel: gatnet_forward.6
$region0: #{gatnet_forward.6}
  #allocation0 [shape = 'u32[]', space=smem, size = 0x4, offset = 0x4, fixed_abs, tag = 'smem constant byte address 0x4 - core index']
  #allocation1 [shape = 'u32[144,128]{1,0:T(1,128)}', space=vmem, size = 0x12000, scoped, tag = 'internal scratch']
  %s0 = inlined_call_operand.vmem [shape: f32[256,128], index: 0, kind: input, shape index: {}]
  %s1 = inlined_call_operand.vmem [shape: f32[1,256], index: 1, kind: input, shape index: {}]
  %s2 = inlined_call_operand.vmem [shape: f32[256,1], index: 2, kind: input, shape index: {}]
  %s3 = inlined_call_operand.vmem [shape: f32[1,128], index: 3, kind: input, shape index: {}]
  %s4 = inlined_call_operand.vmem [shape: s8[256,256], index: 4, kind: input, shape index: {}]
  %s5 = inlined_call_operand.vmem [shape: f32[256,128], index: 5, kind: output, shape index: {0}]
  %s6 = inlined_call_operand.vmem [shape: bf16[256,128], index: 6, kind: output, shape index: {1}]
  %7 = xla_tuple %s5, %s6
  %s8 = sld [smem:[#allocation0]]
  $region61: #{gatnet_forward.6} parent=0
    _
  %s10 = ssub.s32 1, %s8
  %s11 = scalar_select 0, %s10, %s8
  loop: start=0, step=1, limit=6
  $region2: #{gatnet_forward.6} parent=0 // loop_pre_header
    _
  $region3: #{gatnet_forward.6} parent=0 // loop_header
    %s13 = sphi 0, %s17
    %p14 = scmp.ge.s32.totalorder %s13, 6
    %s21 = sphi 0, %s21
    %s23 = sphi 0, %s21
    %s24 = sphi 0, %s23
    %s38 = sphi 0, %s24
    %s42 = sphi 0, %s42
    %s44 = sphi 0, %s42
    %s45 = sphi 0, %s44
    %s59 = sphi 0, %s45
    %s65 = sphi 0, %s67
    %s68 = sphi 0, %s65
    %s69 = sphi 0, %s68
    %s85 = sphi 0, %s69
    %s89 = sphi 0, %s89
    %s91 = sphi 0, %s89
    %s92 = sphi 0, %s91
    %s106 = sphi 0, %s92
    %s112 = sphi 0, %s114
    %s115 = sphi 0, %s112
    %s116 = sphi 0, %s115
    %s132 = sphi 0, %s116
    %s138 = sphi 0, %s140
    %s141 = sphi 0, %s138
    %s142 = sphi 0, %s141
    %s158 = sphi 0, %s142
    %s164 = sphi 0, %s166
    %s167 = sphi 0, %s164
    %s168 = sphi 0, %s167
    %s184 = sphi 0, %s168
  $region4: #{gatnet_forward.6} parent=0 // loop_header_branch
    %16 = sbr.rel (%p14) target = $region8
  $region5: #{gatnet_forward.6} parent=0 // loop_body
    %s18 = ssub.s32 %s13, 1
    %s19 = ssub.s32 %s13, 2
    %s20 = sadd.s32 %s13, 1
    %s22 = sadd.s32 %s21, 1
    %p25 = scmp.eq.s32.totalorder %s13, 3
    %p26 = scmp.ne.s32.totalorder %s21, %s23
    %p27 = scmp.eq.s32.totalorder %s13, 0
    %p28 = por %p26, %p27
    %p29 = scmp.ne.s32.totalorder %s21, %s23
    %p30 = scmp.eq.s32.totalorder %s18, 3
    %p31 = por %p29, %p30
    %p32 = scmp.ne.s32.totalorder %s23, %s24
    %p33 = scmp.eq.s32.totalorder %s18, 0
    %p34 = por %p32, %p33
    %p35 = scmp.ne.s32.totalorder %s23, %s24
    %p36 = scmp.eq.s32.totalorder %s19, 3
    %p37 = por %p35, %p36
    %p39 = scmp.ne.s32.totalorder %s24, %s38
    %p40 = scmp.eq.s32.totalorder %s19, 0
    %p41 = por %p39, %p40
    %s43 = sadd.s32 %s42, 1
    %p46 = scmp.eq.s32.totalorder %s13, 3
    %p47 = scmp.ne.s32.totalorder %s42, %s44
    %p48 = scmp.eq.s32.totalorder %s13, 0
    %p49 = por %p47, %p48
    %p50 = scmp.ne.s32.totalorder %s42, %s44
    %p51 = scmp.eq.s32.totalorder %s18, 3
    %p52 = por %p50, %p51
    %p53 = scmp.ne.s32.totalorder %s44, %s45
    %p54 = scmp.eq.s32.totalorder %s18, 0
    %p55 = por %p53, %p54
    %p56 = scmp.ne.s32.totalorder %s44, %s45
    %p57 = scmp.eq.s32.totalorder %s19, 3
    %p58 = por %p56, %p57
    %p60 = scmp.ne.s32.totalorder %s45, %s59
    %p61 = scmp.eq.s32.totalorder %s19, 0
    %p62 = por %p60, %p61
    %s63 = ssub.s32 %s13, %s20
    %p64 = scmp.eq.s32.totalorder %s63, 0
    %s66 = sadd.s32 %s65, 1
    %s67 = scalar_select %p64, %s65, %s66
    %p70 = pneg %p64
    %p71 = scmp.eq.s32.totalorder %s13, 3
    %p72 = por %p70, %p71
    %p73 = scmp.ne.s32.totalorder %s65, %s68
    %p74 = scmp.eq.s32.totalorder %s13, 0
    %p75 = por %p73, %p74
    %p76 = scmp.ne.s32.totalorder %s65, %s68
    %p77 = scmp.eq.s32.totalorder %s18, 3
    %p78 = por %p76, %p77
    %p79 = scmp.ne.s32.totalorder %s68, %s69
    %p80 = scmp.eq.s32.totalorder %s18, 0
    %p81 = por %p79, %p80
    %p82 = scmp.ne.s32.totalorder %s68, %s69
    %p83 = scmp.eq.s32.totalorder %s19, 3
    %p84 = por %p82, %p83
    %p86 = scmp.ne.s32.totalorder %s69, %s85
    %p87 = scmp.eq.s32.totalorder %s19, 0
    %p88 = por %p86, %p87
    %s90 = sadd.s32 %s89, 1
    %p93 = scmp.eq.s32.totalorder %s13, 3
    %p94 = scmp.ne.s32.totalorder %s89, %s91
    %p95 = scmp.eq.s32.totalorder %s13, 0
    %p96 = por %p94, %p95
    %p97 = scmp.ne.s32.totalorder %s89, %s91
    %p98 = scmp.eq.s32.totalorder %s18, 3
    %p99 = por %p97, %p98
    %p100 = scmp.ne.s32.totalorder %s91, %s92
    %p101 = scmp.eq.s32.totalorder %s18, 0
    %p102 = por %p100, %p101
    %p103 = scmp.ne.s32.totalorder %s91, %s92
    %p104 = scmp.eq.s32.totalorder %s19, 3
    %p105 = por %p103, %p104
    %p107 = scmp.ne.s32.totalorder %s92, %s106
    %p108 = scmp.eq.s32.totalorder %s19, 0
    %p109 = por %p107, %p108
    %s110 = ssub.s32 %s13, %s20
    %p111 = scmp.eq.s32.totalorder %s110, 0
    %s113 = sadd.s32 %s112, 1
    %s114 = scalar_select %p111, %s112, %s113
    %p117 = pneg %p111
    %p118 = scmp.eq.s32.totalorder %s13, 3
    %p119 = por %p117, %p118
    %p120 = scmp.ne.s32.totalorder %s112, %s115
    %p121 = scmp.eq.s32.totalorder %s13, 0
    %p122 = por %p120, %p121
    %p123 = scmp.ne.s32.totalorder %s112, %s115
    %p124 = scmp.eq.s32.totalorder %s18, 3
    %p125 = por %p123, %p124
    %p126 = scmp.ne.s32.totalorder %s115, %s116
    %p127 = scmp.eq.s32.totalorder %s18, 0
    %p128 = por %p126, %p127
    %p129 = scmp.ne.s32.totalorder %s115, %s116
    %p130 = scmp.eq.s32.totalorder %s19, 3
    %p131 = por %p129, %p130
    %p133 = scmp.ne.s32.totalorder %s116, %s132
    %p134 = scmp.eq.s32.totalorder %s19, 0
    %p135 = por %p133, %p134
    %s136 = ssub.s32 %s13, %s20
    %p137 = scmp.eq.s32.totalorder %s136, 0
    %s139 = sadd.s32 %s138, 1
    %s140 = scalar_select %p137, %s138, %s139
    %p143 = pneg %p137
    %p144 = scmp.eq.s32.totalorder %s13, 3
    %p145 = por %p143, %p144
    %p146 = scmp.ne.s32.totalorder %s138, %s141
    %p147 = scmp.eq.s32.totalorder %s13, 0
    %p148 = por %p146, %p147
    %p149 = scmp.ne.s32.totalorder %s138, %s141
    %p150 = scmp.eq.s32.totalorder %s18, 3
    %p151 = por %p149, %p150
    %p152 = scmp.ne.s32.totalorder %s141, %s142
    %p153 = scmp.eq.s32.totalorder %s18, 0
    %p154 = por %p152, %p153
    %p155 = scmp.ne.s32.totalorder %s141, %s142
    %p156 = scmp.eq.s32.totalorder %s19, 3
    %p157 = por %p155, %p156
    %p159 = scmp.ne.s32.totalorder %s142, %s158
    %p160 = scmp.eq.s32.totalorder %s19, 0
    %p161 = por %p159, %p160
    %s162 = ssub.s32 %s13, %s20
    %p163 = scmp.eq.s32.totalorder %s162, 0
    %s165 = sadd.s32 %s164, 1
    %s166 = scalar_select %p163, %s164, %s165
    %p169 = pneg %p163
    %p170 = scmp.eq.s32.totalorder %s13, 3
    %p171 = por %p169, %p170
    %p172 = scmp.ne.s32.totalorder %s164, %s167
    %p173 = scmp.eq.s32.totalorder %s13, 0
    %p174 = por %p172, %p173
    %p175 = scmp.ne.s32.totalorder %s164, %s167
    %p176 = scmp.eq.s32.totalorder %s18, 3
    %p177 = por %p175, %p176
    %p178 = scmp.ne.s32.totalorder %s167, %s168
    %p179 = scmp.eq.s32.totalorder %s18, 0
    %p180 = por %p178, %p179
    %p181 = scmp.ne.s32.totalorder %s167, %s168
    %p182 = scmp.eq.s32.totalorder %s19, 3
    %p183 = por %p181, %p182
    %p185 = scmp.ne.s32.totalorder %s168, %s184
    %p186 = scmp.eq.s32.totalorder %s19, 0
    %p187 = por %p185, %p186
    %p188 = scmp.le.s32.totalorder 1, %s13
    %p189 = scmp.lt.s32.totalorder %s13, 5
    %p190 = pnand %p188, %p189
    %p191 = pneg %p190
    // Predicated region
    $region9: #{gatnet_forward.6} parent=5 // pred_check
      _
    $region10: #{gatnet_forward.6} parent=5 // pred_check_branch
      %193 = sbr.rel (%p190) target = $region12
    $region11: #{gatnet_forward.6} parent=5 // pred_region
      %s194 = ssub.s32 %s13, 1
      // Predicated region
      $region13: #{gatnet_forward.6} parent=11 // pred_check
        %p195 = pneg %p34
      $region14: #{gatnet_forward.6} parent=11 // pred_check_branch
        %197 = sbr.rel (%p195) target = $region16
      $region15: #{gatnet_forward.6} parent=11 // pred_region
        _
      $region16: #{gatnet_forward.6} parent=11 // pred_fallthru
        _
      // Predicated region
      $region17: #{gatnet_forward.6} parent=11 // pred_check
        %p198 = pneg %p55
      $region18: #{gatnet_forward.6} parent=11 // pred_check_branch
        %200 = sbr.rel (%p198) target = $region20
      $region19: #{gatnet_forward.6} parent=11 // pred_region
        _
      $region20: #{gatnet_forward.6} parent=11 // pred_fallthru
        _
      // Predicated region
      $region21: #{gatnet_forward.6} parent=11 // pred_check
        %p201 = pneg %p102
      $region22: #{gatnet_forward.6} parent=11 // pred_check_branch
        %203 = sbr.rel (%p201) target = $region24
      $region23: #{gatnet_forward.6} parent=11 // pred_region
        _
      $region24: #{gatnet_forward.6} parent=11 // pred_fallthru
        _
    $region12: #{gatnet_forward.6} parent=5 // pred_fallthru
      _
    %p204 = scmp.lt.s32.totalorder %s13, 4
    // Predicated region
    $region25: #{gatnet_forward.6} parent=5 // pred_check
      %p205 = pneg %p204
    $region26: #{gatnet_forward.6} parent=5 // pred_check_branch
      %207 = sbr.rel (%p205) target = $region28
    $region27: #{gatnet_forward.6} parent=5 // pred_region
      // Predicated region
      $region29: #{gatnet_forward.6} parent=27 // pred_check
        %p208 = pneg %p75
      $region30: #{gatnet_forward.6} parent=27 // pred_check_branch
        %210 = sbr.rel (%p208) target = $region32
      $region31: #{gatnet_forward.6} parent=27 // pred_region
        %s211 = smul.u32 8, %s13
        %p212 = scmp.lt.s32.totalorder %s211, 31
        %s213 = scalar_select %p212, %s211, 31
        %s214 = smul.addr %s213, 8
        %s215 = scalar_lea.vmem %s2, %s214
        %s216 = smul.u32 8, %s13
      $region32: #{gatnet_forward.6} parent=27 // pred_fallthru
        _
      // Predicated region
      $region33: #{gatnet_forward.6} parent=27 // pred_check
        %p217 = pneg %p122
      $region34: #{gatnet_forward.6} parent=27 // pred_check_branch
        %219 = sbr.rel (%p217) target = $region36
      $region35: #{gatnet_forward.6} parent=27 // pred_region
        %s220 = smul.u32 2, %s13
        %p221 = scmp.lt.s32.totalorder %s220, 7
        %s222 = scalar_select %p221, %s220, 7
        %s223 = smul.addr %s222, 2
        %s224 = smul.addr %s223, 8
        %s225 = scalar_lea.vmem %s4, %s224
        %s226 = smul.u32 2, %s13
      $region36: #{gatnet_forward.6} parent=27 // pred_fallthru
        _
    $region28: #{gatnet_forward.6} parent=5 // pred_fallthru
      _
    %p227 = scmp.le.s32.totalorder 1, %s13
    %p228 = scmp.lt.s32.totalorder %s13, 5
    %p229 = pnand %p227, %p228
    %p230 = pneg %p229
    // Predicated region
    $region37: #{gatnet_forward.6} parent=5 // pred_check
      _
    $region38: #{gatnet_forward.6} parent=5 // pred_check_branch
      %232 = sbr.rel (%p229) target = $region40
    $region39: #{gatnet_forward.6} parent=5 // pred_region
      %s233 = ssub.s32 %s13, 1
      %p234 = pneg %p34
      %p235 = pneg %p31
      %p236 = pneg %p55
      %p237 = pneg %p52
      %s238 = smul.u32 8, %s18
      %p239 = scmp.lt.s32.totalorder %s238, 31
      %s240 = scalar_select %p239, %s238, 31
      %s241 = smul.addr %s240, 8
      %s242 = scalar_lea.vmem %s2, %s241
      %p243 = pneg %p81
      %p244 = pneg %p78
      %p245 = pneg %p102
      %p246 = pneg %p99
      %s247 = smul.u32 2, %s18
      %p248 = scmp.lt.s32.totalorder %s247, 7
      %s249 = scalar_select %p248, %s247, 7
      %s250 = smul.addr %s249, 2
      %s251 = smul.addr %s250, 8
      %s252 = scalar_lea.vmem %s4, %s251
      %p253 = pneg %p128
      %p254 = pneg %p125
      %p255 = pneg %p154
      %p256 = pneg %p151
      %s257 = smul.u32 8, %s18
      %p258 = scmp.lt.s32.totalorder %s257, 31
      %s259 = scalar_select %p258, %s257, 31
      %s260 = smul.addr %s259, 8
      %s261 = scalar_lea.vmem %s5, %s260
      %p262 = pneg %p180
      %p263 = pneg %p177
      %s264 = smul.u32 8, %s18
      %p265 = scmp.lt.s32.totalorder %s264, 31
      %s266 = scalar_select %p265, %s264, 31
      %s267 = smul.addr %s266, 4
      %s268 = scalar_lea.vmem %s6, %s267
      %s269 = smul.u32 8, %s18
      %p270 = scmp.lt.s32.totalorder %s269, 31
      %s271 = scalar_select %p270, %s269, 31
      %s272 = smul.addr %s271, 8
      %s273 = scalar_lea.vmem %s2, %s272
      %s274 = smul.u32 8, %s18
      %s275 = smul.u32 2, %s18
      %p276 = scmp.lt.s32.totalorder %s275, 7
      %s277 = scalar_select %p276, %s275, 7
      %s278 = smul.addr %s277, 2
      %s279 = smul.addr %s278, 8
      %s280 = scalar_lea.vmem %s4, %s279
      %s281 = smul.u32 2, %s18
      %s282 = smul.u32 8, %s18
      %p283 = scmp.lt.s32.totalorder %s282, 31
      %s284 = scalar_select %p283, %s282, 31
      %s285 = smul.addr %s284, 8
      %s286 = scalar_lea.vmem %s5, %s285
      %s287 = smul.u32 8, %s18
      %s288 = smul.u32 8, %s18
      %p289 = scmp.lt.s32.totalorder %s288, 31
      %s290 = scalar_select %p289, %s288, 31
      %s291 = smul.addr %s290, 4
      %s292 = scalar_lea.vmem %s6, %s291
      %s293 = smul.u32 8, %s18
      %v294 = vld [vmem:[%s280] sm:$0xff]
      %v295 = vld [vmem:[%s280 + $0x8] sm:$0xff]
      %v296 = vld [vmem:[%s280 + $0x10] sm:$0xff]
      %v297 = vld [vmem:[%s280 + $0x18] sm:$0xff]
      %v298 = vunpack.c.0.s8 %v294
      %v299 = vunpack.c.0.s8 %v295
      %v300 = vunpack.c.1.s8 %v294
      %v301 = vunpack.c.1.s8 %v295
      %v302 = vunpack.c.2.s8 %v294
      %v303 = vunpack.c.2.s8 %v295
      %v304 = vunpack.c.3.s8 %v294
      %v305 = vunpack.c.3.s8 %v295
      %v306 = vunpack.c.0.s8 %v296
      %v307 = vunpack.c.0.s8 %v297
      %v308 = vunpack.c.1.s8 %v296
      %v309 = vunpack.c.1.s8 %v297
      %v310 = vunpack.c.2.s8 %v296
      %v311 = vunpack.c.2.s8 %v297
      %v312 = vunpack.c.3.s8 %v296
      %v313 = vunpack.c.3.s8 %v297
      %v314 = vcvt.s32.f32 %v298
      %v315 = vcvt.s32.f32 %v299
      %v316 = vcvt.s32.f32 %v300
      %v317 = vcvt.s32.f32 %v301
      %v318 = vcvt.s32.f32 %v302
      %v319 = vcvt.s32.f32 %v303
      %v320 = vcvt.s32.f32 %v304
      %v321 = vcvt.s32.f32 %v305
      %v322 = vcvt.s32.f32 %v306
      %v323 = vcvt.s32.f32 %v307
      %v324 = vcvt.s32.f32 %v308
      %v325 = vcvt.s32.f32 %v309
      %v326 = vcvt.s32.f32 %v310
      %v327 = vcvt.s32.f32 %v311
      %v328 = vcvt.s32.f32 %v312
      %v329 = vcvt.s32.f32 %v313
      %vm330 = vcmp.gt.f32.partialorder %v314, 0.0
      %vm331 = vcmp.gt.f32.partialorder %v315, 0.0
      %vm332 = vcmp.gt.f32.partialorder %v316, 0.0
      %vm333 = vcmp.gt.f32.partialorder %v317, 0.0
      %vm334 = vcmp.gt.f32.partialorder %v318, 0.0
      %vm335 = vcmp.gt.f32.partialorder %v319, 0.0
      %vm336 = vcmp.gt.f32.partialorder %v320, 0.0
      %vm337 = vcmp.gt.f32.partialorder %v321, 0.0
      %vm338 = vcmp.gt.f32.partialorder %v322, 0.0
      %vm339 = vcmp.gt.f32.partialorder %v323, 0.0
      %vm340 = vcmp.gt.f32.partialorder %v324, 0.0
      %vm341 = vcmp.gt.f32.partialorder %v325, 0.0
      %vm342 = vcmp.gt.f32.partialorder %v326, 0.0
      %vm343 = vcmp.gt.f32.partialorder %v327, 0.0
      %vm344 = vcmp.gt.f32.partialorder %v328, 0.0
      %vm345 = vcmp.gt.f32.partialorder %v329, 0.0
      %v346 = vsel %vm330, 0.0, -1e+30
      %v347 = vsel %vm331, 0.0, -1e+30
      %v348 = vsel %vm332, 0.0, -1e+30
      %v349 = vsel %vm333, 0.0, -1e+30
      %v350 = vsel %vm334, 0.0, -1e+30
      %v351 = vsel %vm335, 0.0, -1e+30
      %v352 = vsel %vm336, 0.0, -1e+30
      %v353 = vsel %vm337, 0.0, -1e+30
      %v354 = vsel %vm338, 0.0, -1e+30
      %v355 = vsel %vm339, 0.0, -1e+30
      %v356 = vsel %vm340, 0.0, -1e+30
      %v357 = vsel %vm341, 0.0, -1e+30
      %v358 = vsel %vm342, 0.0, -1e+30
      %v359 = vsel %vm343, 0.0, -1e+30
      %v360 = vsel %vm344, 0.0, -1e+30
      %v361 = vsel %vm345, 0.0, -1e+30
      %v362 = vld [vmem:[%s273] sm:$0xff]
      %v363 = vld [vmem:[%s273 + $0x8] sm:$0xff]
      %v364 = vld [vmem:[%s273 + $0x10] sm:$0xff]
      %v365 = vld [vmem:[%s273 + $0x18] sm:$0xff]
      %v366 = vld [vmem:[%s273 + $0x20] sm:$0xff]
      %v367 = vld [vmem:[%s273 + $0x28] sm:$0xff]
      %v368 = vld [vmem:[%s273 + $0x30] sm:$0xff]
      %v369 = vld [vmem:[%s273 + $0x38] sm:$0xff]
      %v370 = vld [vmem:[%s1] sm:$0x3]
      %372 = vset.pattern.permute.xlu0 0
      %373 = vperm.xlu0 %372, %v362
      %v374 = vpop.permute.xlu0 %373
      %377 = vset.pattern.permute.xlu0 0
      %378 = vperm.xlu0 %377, %v363
      %v379 = vpop.permute.xlu0 %378
      %382 = vset.pattern.permute.xlu0 0
      %383 = vperm.xlu0 %382, %v364
      %v384 = vpop.permute.xlu0 %383
      %387 = vset.pattern.permute.xlu0 0
      %388 = vperm.xlu0 %387, %v365
      %v389 = vpop.permute.xlu0 %388
      %392 = vset.pattern.permute.xlu0 0
      %393 = vperm.xlu0 %392, %v366
      %v394 = vpop.permute.xlu0 %393
      %397 = vset.pattern.permute.xlu0 0
      %398 = vperm.xlu0 %397, %v367
      %v399 = vpop.permute.xlu0 %398
      %402 = vset.pattern.permute.xlu0 0
      %403 = vperm.xlu0 %402, %v368
      %v404 = vpop.permute.xlu0 %403
      %407 = vset.pattern.permute.xlu0 0
      %408 = vperm.xlu0 %407, %v369
      %v409 = vpop.permute.xlu0 %408
      %v412 = vlaneseq
      %v413 = vshrl.u32 %v412, 7
      %v414 = vsub.s32 0, %v413
      %v415 = vrot.slane %v370, %v414
      %v416 = vlaneseq
      %v417 = vshrl.u32 %v416, 7
      %v418 = vsub.s32 1, %v417
      %v419 = vrot.slane %v370, %v418
      %v422 = vadd.f32 %v374, %v415
      %v423 = vadd.f32 %v374, %v419
      %v424 = vadd.f32 %v379, %v415
      %v425 = vadd.f32 %v379, %v419
      %v426 = vadd.f32 %v384, %v415
      %v427 = vadd.f32 %v384, %v419
      %v428 = vadd.f32 %v389, %v415
      %v429 = vadd.f32 %v389, %v419
      %v430 = vadd.f32 %v394, %v415
      %v431 = vadd.f32 %v394, %v419
      %v432 = vadd.f32 %v399, %v415
      %v433 = vadd.f32 %v399, %v419
      %v434 = vadd.f32 %v404, %v415
      %v435 = vadd.f32 %v404, %v419
      %v436 = vadd.f32 %v409, %v415
      %v437 = vadd.f32 %v409, %v419
      %vm438 = vcmp.gt.f32.partialorder %v422, 0.0
      %vm439 = vcmp.gt.f32.partialorder %v423, 0.0
      %vm440 = vcmp.gt.f32.partialorder %v424, 0.0
      %vm441 = vcmp.gt.f32.partialorder %v425, 0.0
      %vm442 = vcmp.gt.f32.partialorder %v426, 0.0
      %vm443 = vcmp.gt.f32.partialorder %v427, 0.0
      %vm444 = vcmp.gt.f32.partialorder %v428, 0.0
      %vm445 = vcmp.gt.f32.partialorder %v429, 0.0
      %vm446 = vcmp.gt.f32.partialorder %v430, 0.0
      %vm447 = vcmp.gt.f32.partialorder %v431, 0.0
      %vm448 = vcmp.gt.f32.partialorder %v432, 0.0
      %vm449 = vcmp.gt.f32.partialorder %v433, 0.0
      %vm450 = vcmp.gt.f32.partialorder %v434, 0.0
      %vm451 = vcmp.gt.f32.partialorder %v435, 0.0
      %vm452 = vcmp.gt.f32.partialorder %v436, 0.0
      %vm453 = vcmp.gt.f32.partialorder %v437, 0.0
      %v454 = vmul.f32 %v422, 0.2
      %v455 = vmul.f32 %v423, 0.2
      %v456 = vmul.f32 %v424, 0.2
      %v457 = vmul.f32 %v425, 0.2
      %v458 = vmul.f32 %v426, 0.2
      %v459 = vmul.f32 %v427, 0.2
      %v460 = vmul.f32 %v428, 0.2
      %v461 = vmul.f32 %v429, 0.2
      %v462 = vmul.f32 %v430, 0.2
      %v463 = vmul.f32 %v431, 0.2
      %v464 = vmul.f32 %v432, 0.2
      %v465 = vmul.f32 %v433, 0.2
      %v466 = vmul.f32 %v434, 0.2
      %v467 = vmul.f32 %v435, 0.2
      %v468 = vmul.f32 %v436, 0.2
      %v469 = vmul.f32 %v437, 0.2
      %v470 = vsel %vm438, %v422, %v454
      %v471 = vsel %vm439, %v423, %v455
      %v472 = vsel %vm440, %v424, %v456
      %v473 = vsel %vm441, %v425, %v457
      %v474 = vsel %vm442, %v426, %v458
      %v475 = vsel %vm443, %v427, %v459
      %v476 = vsel %vm444, %v428, %v460
      %v477 = vsel %vm445, %v429, %v461
      %v478 = vsel %vm446, %v430, %v462
      %v479 = vsel %vm447, %v431, %v463
      %v480 = vsel %vm448, %v432, %v464
      %v481 = vsel %vm449, %v433, %v465
      %v482 = vsel %vm450, %v434, %v466
      %v483 = vsel %vm451, %v435, %v467
      %v484 = vsel %vm452, %v436, %v468
      %v485 = vsel %vm453, %v437, %v469
      %v486 = vadd.f32 %v470, %v346
      %v487 = vadd.f32 %v471, %v347
      %v488 = vadd.f32 %v472, %v348
      %v489 = vadd.f32 %v473, %v349
      %v490 = vadd.f32 %v474, %v350
      %v491 = vadd.f32 %v475, %v351
      %v492 = vadd.f32 %v476, %v352
      %v493 = vadd.f32 %v477, %v353
      %v494 = vadd.f32 %v478, %v354
      %v495 = vadd.f32 %v479, %v355
      %v496 = vadd.f32 %v480, %v356
      %v497 = vadd.f32 %v481, %v357
      %v498 = vadd.f32 %v482, %v358
      %v499 = vadd.f32 %v483, %v359
      %v500 = vadd.f32 %v484, %v360
      %v501 = vadd.f32 %v485, %v361
      %v502 = vmax.f32 %v486, %v487
      %503 = vmax.xlane.f32.xlu0 %v502
      %v504 = vpop.xlane.xlu0 %503
      %v505 = vmax.f32 %v488, %v489
      %506 = vmax.xlane.f32.xlu0 %v505
      %v507 = vpop.xlane.xlu0 %506
      %v508 = vmax.f32 %v490, %v491
      %509 = vmax.xlane.f32.xlu0 %v508
      %v510 = vpop.xlane.xlu0 %509
      %v511 = vmax.f32 %v492, %v493
      %512 = vmax.xlane.f32.xlu0 %v511
      %v513 = vpop.xlane.xlu0 %512
      %v514 = vmax.f32 %v494, %v495
      %515 = vmax.xlane.f32.xlu0 %v514
      %v516 = vpop.xlane.xlu0 %515
      %v517 = vmax.f32 %v496, %v497
      %518 = vmax.xlane.f32.xlu0 %v517
      %v519 = vpop.xlane.xlu0 %518
      %v520 = vmax.f32 %v498, %v499
      %521 = vmax.xlane.f32.xlu0 %v520
      %v522 = vpop.xlane.xlu0 %521
      %v523 = vmax.f32 %v500, %v501
      %524 = vmax.xlane.f32.xlu0 %v523
      %v525 = vpop.xlane.xlu0 %524
      %v526 = vsub.f32 %v486, %v504
      %v527 = vsub.f32 %v487, %v504
      %v528 = vsub.f32 %v488, %v507
      %v529 = vsub.f32 %v489, %v507
      %v530 = vsub.f32 %v490, %v510
      %v531 = vsub.f32 %v491, %v510
      %v532 = vsub.f32 %v492, %v513
      %v533 = vsub.f32 %v493, %v513
      %v534 = vsub.f32 %v494, %v516
      %v535 = vsub.f32 %v495, %v516
      %v536 = vsub.f32 %v496, %v519
      %v537 = vsub.f32 %v497, %v519
      %v538 = vsub.f32 %v498, %v522
      %v539 = vsub.f32 %v499, %v522
      %v540 = vsub.f32 %v500, %v525
      %v541 = vsub.f32 %v501, %v525
      %v542 = vmul.f32 %v526, 1.442695
      %v543 = vpow.pop %v542
      %v544 = vmul.f32 %v527, 1.442695
      %v545 = vpow.pop %v544
      %v546 = vmul.f32 %v528, 1.442695
      %v547 = vpow.pop %v546
      %v548 = vmul.f32 %v529, 1.442695
      %v549 = vpow.pop %v548
      %v550 = vmul.f32 %v530, 1.442695
      %v551 = vpow.pop %v550
      %v552 = vmul.f32 %v531, 1.442695
      %v553 = vpow.pop %v552
      %v554 = vmul.f32 %v532, 1.442695
      %v555 = vpow.pop %v554
      %v556 = vmul.f32 %v533, 1.442695
      %v557 = vpow.pop %v556
      %v558 = vmul.f32 %v534, 1.442695
      %v559 = vpow.pop %v558
      %v560 = vmul.f32 %v535, 1.442695
      %v561 = vpow.pop %v560
      %v562 = vmul.f32 %v536, 1.442695
      %v563 = vpow.pop %v562
      %v564 = vmul.f32 %v537, 1.442695
      %v565 = vpow.pop %v564
      %v566 = vmul.f32 %v538, 1.442695
      %v567 = vpow.pop %v566
      %v568 = vmul.f32 %v539, 1.442695
      %v569 = vpow.pop %v568
      %v570 = vmul.f32 %v540, 1.442695
      %v571 = vpow.pop %v570
      %v572 = vmul.f32 %v541, 1.442695
      %v573 = vpow.pop %v572
      %v574 = vadd.f32 %v543, %v545
      %575 = vadd.xlane.f32.xlu0 %v574
      %v576 = vpop.xlane.xlu0 %575
      %v577 = vadd.f32 %v547, %v549
      %578 = vadd.xlane.f32.xlu0 %v577
      %v579 = vpop.xlane.xlu0 %578
      %v580 = vadd.f32 %v551, %v553
      %581 = vadd.xlane.f32.xlu0 %v580
      %v582 = vpop.xlane.xlu0 %581
      %v583 = vadd.f32 %v555, %v557
      %584 = vadd.xlane.f32.xlu0 %v583
      %v585 = vpop.xlane.xlu0 %584
      %v586 = vadd.f32 %v559, %v561
      %587 = vadd.xlane.f32.xlu0 %v586
      %v588 = vpop.xlane.xlu0 %587
      %v589 = vadd.f32 %v563, %v565
      %590 = vadd.xlane.f32.xlu0 %v589
      %v591 = vpop.xlane.xlu0 %590
      %v592 = vadd.f32 %v567, %v569
      %593 = vadd.xlane.f32.xlu0 %v592
      %v594 = vpop.xlane.xlu0 %593
      %v595 = vadd.f32 %v571, %v573
      %596 = vadd.xlane.f32.xlu0 %v595
      %v597 = vpop.xlane.xlu0 %596
      %v598 = vrcp.pop %v576
      %v599 = vmul.f32 1.0, %v598
      %v600 = vrcp.pop %v579
      %v601 = vmul.f32 1.0, %v600
      %v602 = vrcp.pop %v582
      %v603 = vmul.f32 1.0, %v602
      %v604 = vrcp.pop %v585
      %v605 = vmul.f32 1.0, %v604
      %v606 = vrcp.pop %v588
      %v607 = vmul.f32 1.0, %v606
      %v608 = vrcp.pop %v591
      %v609 = vmul.f32 1.0, %v608
      %v610 = vrcp.pop %v594
      %v611 = vmul.f32 1.0, %v610
      %v612 = vrcp.pop %v597
      %v613 = vmul.f32 1.0, %v612
      %v614 = vmul.f32 %v543, %v599
      %v615 = vmul.f32 %v545, %v599
      %v616 = vmul.f32 %v547, %v601
      %v617 = vmul.f32 %v549, %v601
      %v618 = vmul.f32 %v551, %v603
      %v619 = vmul.f32 %v553, %v603
      %v620 = vmul.f32 %v555, %v605
      %v621 = vmul.f32 %v557, %v605
      %v622 = vmul.f32 %v559, %v607
      %v623 = vmul.f32 %v561, %v607
      %v624 = vmul.f32 %v563, %v609
      %v625 = vmul.f32 %v565, %v609
      %v626 = vmul.f32 %v567, %v611
      %v627 = vmul.f32 %v569, %v611
      %v628 = vmul.f32 %v571, %v613
      %v629 = vmul.f32 %v573, %v613
      %v630 = vld [vmem:[%s0] sm:$0xff]
      %v631 = vld [vmem:[%s0 + $0x8] sm:$0xff]
      %v632 = vld [vmem:[%s0 + $0x10] sm:$0xff]
      %v633 = vld [vmem:[%s0 + $0x18] sm:$0xff]
      %v634 = vld [vmem:[%s0 + $0x20] sm:$0xff]
      %v635 = vld [vmem:[%s0 + $0x28] sm:$0xff]
      %v636 = vld [vmem:[%s0 + $0x30] sm:$0xff]
      %v637 = vld [vmem:[%s0 + $0x38] sm:$0xff]
      %v638 = vld [vmem:[%s0 + $0x40] sm:$0xff]
      %v639 = vld [vmem:[%s0 + $0x48] sm:$0xff]
      %v640 = vld [vmem:[%s0 + $0x50] sm:$0xff]
      %v641 = vld [vmem:[%s0 + $0x58] sm:$0xff]
      %v642 = vld [vmem:[%s0 + $0x60] sm:$0xff]
      %v643 = vld [vmem:[%s0 + $0x68] sm:$0xff]
      %v644 = vld [vmem:[%s0 + $0x70] sm:$0xff]
      %v645 = vld [vmem:[%s0 + $0x78] sm:$0xff]
      %v646 = vld [vmem:[%s0 + $0x80] sm:$0xff]
      %v647 = vld [vmem:[%s0 + $0x88] sm:$0xff]
      %v648 = vld [vmem:[%s0 + $0x90] sm:$0xff]
      %v649 = vld [vmem:[%s0 + $0x98] sm:$0xff]
      %v650 = vld [vmem:[%s0 + $0xa0] sm:$0xff]
      %v651 = vld [vmem:[%s0 + $0xa8] sm:$0xff]
      %v652 = vld [vmem:[%s0 + $0xb0] sm:$0xff]
      %v653 = vld [vmem:[%s0 + $0xb8] sm:$0xff]
      %v654 = vld [vmem:[%s0 + $0xc0] sm:$0xff]
      %v655 = vld [vmem:[%s0 + $0xc8] sm:$0xff]
      %v656 = vld [vmem:[%s0 + $0xd0] sm:$0xff]
      %v657 = vld [vmem:[%s0 + $0xd8] sm:$0xff]
      %v658 = vld [vmem:[%s0 + $0xe0] sm:$0xff]
      %v659 = vld [vmem:[%s0 + $0xe8] sm:$0xff]
      %v660 = vld [vmem:[%s0 + $0xf0] sm:$0xff]
      %v661 = vld [vmem:[%s0 + $0xf8] sm:$0xff]
      %v662 = vld [vmem:[%s3] sm:$0x1]
      %v664 = vlaneseq
      %v665 = vshrl.u32 %v664, 7
      %v666 = vsub.s32 0, %v665
      %v667 = vrot.slane %v662, %v666
      %669 = vmatprep.subr.mxu0 0.0
      %670 = vmatpush1.msra.mxu0 %v645
      %671 = vmatprep.subr.mxu0 0.0
      %672 = vmatpush1.msra.mxu0 %v644
      %673 = vmatprep.subr.mxu0 0.0
      %674 = vmatpush1.msra.mxu0 %v643
      %675 = vmatprep.subr.mxu0 0.0
      %676 = vmatpush1.msra.mxu0 %v642
      %677 = vmatprep.subr.mxu0 0.0
      %678 = vmatpush1.msra.mxu0 %v641
      %679 = vmatprep.subr.mxu0 0.0
      %680 = vmatpush1.msra.mxu0 %v640
      %681 = vmatprep.subr.mxu0 0.0
      %682 = vmatpush1.msra.mxu0 %v639
      %683 = vmatprep.subr.mxu0 0.0
      %684 = vmatpush1.msra.mxu0 %v638
      %685 = vmatprep.subr.mxu0 0.0
      %686 = vmatpush1.msra.mxu0 %v637
      %687 = vmatprep.subr.mxu0 0.0
      %688 = vmatpush1.msra.mxu0 %v636
      %689 = vmatprep.subr.mxu0 0.0
      %690 = vmatpush1.msra.mxu0 %v635
      %691 = vmatprep.subr.mxu0 0.0
      %692 = vmatpush1.msra.mxu0 %v634
      %693 = vmatprep.subr.mxu0 0.0
      %694 = vmatpush1.msra.mxu0 %v633
      %695 = vmatprep.subr.mxu0 0.0
      %696 = vmatpush1.msra.mxu0 %v632
      %697 = vmatprep.subr.mxu0 0.0
      %698 = vmatpush1.msra.mxu0 %v631
      %699 = vmatprep.subr.mxu0 0.0
      %700 = vmatpush1.msra.mxu0 %v630
      %701 = vmatprep.subr.mxu0 0.0
      %702 = vmatpush2.msra.mxu0 %v661
      %703 = vmatprep.subr.mxu0 0.0
      %704 = vmatpush2.msra.mxu0 %v660
      %705 = vmatprep.subr.mxu0 0.0
      %706 = vmatpush2.msra.mxu0 %v659
      %707 = vmatprep.subr.mxu0 0.0
      %708 = vmatpush2.msra.mxu0 %v658
      %709 = vmatprep.subr.mxu0 0.0
      %710 = vmatpush2.msra.mxu0 %v657
      %711 = vmatprep.subr.mxu0 0.0
      %712 = vmatpush2.msra.mxu0 %v656
      %713 = vmatprep.subr.mxu0 0.0
      %714 = vmatpush2.msra.mxu0 %v655
      %715 = vmatprep.subr.mxu0 0.0
      %716 = vmatpush2.msra.mxu0 %v654
      %717 = vmatprep.subr.mxu0 0.0
      %718 = vmatpush2.msra.mxu0 %v653
      %719 = vmatprep.subr.mxu0 0.0
      %720 = vmatpush2.msra.mxu0 %v652
      %721 = vmatprep.subr.mxu0 0.0
      %722 = vmatpush2.msra.mxu0 %v651
      %723 = vmatprep.subr.mxu0 0.0
      %724 = vmatpush2.msra.mxu0 %v650
      %725 = vmatprep.subr.mxu0 0.0
      %726 = vmatpush2.msra.mxu0 %v649
      %727 = vmatprep.subr.mxu0 0.0
      %728 = vmatpush2.msra.mxu0 %v648
      %729 = vmatprep.subr.mxu0 0.0
      %730 = vmatpush2.msra.mxu0 %v647
      %731 = vmatprep.subr.mxu0 0.0
      %732 = vmatpush2.msra.mxu0 %v646
      %733 = vmatprep.mubr.f32.mxu0 %v615
      %734 = vmatmul.mubr.f32.gmra.mxu0 %v614
      %v735 = vpop.f32.mrf.mxu0
      %v736 = vadd.f32 %v667, %v735
      %v737 = vpop.f32.mrf.mxu0
      %738 = vmatprep.mubr.f32.mxu0 %v617
      %739 = vmatmul.mubr.f32.gmra.mxu0 %v616
      %v740 = vpop.f32.mrf.mxu0
      %v741 = vadd.f32 %v667, %v740
      %v742 = vpop.f32.mrf.mxu0
      %743 = vmatprep.mubr.f32.mxu0 %v619
      %744 = vmatmul.mubr.f32.gmra.mxu0 %v618
      %v745 = vpop.f32.mrf.mxu0
      %v746 = vadd.f32 %v667, %v745
      %v747 = vpop.f32.mrf.mxu0
      %748 = vmatprep.mubr.f32.mxu0 %v621
      %749 = vmatmul.mubr.f32.gmra.mxu0 %v620
      %v750 = vpop.f32.mrf.mxu0
      %v751 = vadd.f32 %v667, %v750
      %v752 = vpop.f32.mrf.mxu0
      %753 = vmatprep.mubr.f32.mxu0 %v623
      %754 = vmatmul.mubr.f32.gmra.mxu0 %v622
      %v755 = vpop.f32.mrf.mxu0
      %v756 = vadd.f32 %v667, %v755
      %v757 = vpop.f32.mrf.mxu0
      %758 = vmatprep.mubr.f32.mxu0 %v625
      %759 = vmatmul.mubr.f32.gmra.mxu0 %v624
      %v760 = vpop.f32.mrf.mxu0
      %v761 = vadd.f32 %v667, %v760
      %v762 = vpop.f32.mrf.mxu0
      %763 = vmatprep.mubr.f32.mxu0 %v627
      %764 = vmatmul.mubr.f32.gmra.mxu0 %v626
      %v765 = vpop.f32.mrf.mxu0
      %v766 = vadd.f32 %v667, %v765
      %v767 = vpop.f32.mrf.mxu0
      %768 = vmatprep.mubr.f32.mxu0 %v629
      %769 = vmatmul.mubr.f32.gmra.mxu0 %v628
      %v770 = vpop.f32.mrf.mxu0
      %v771 = vadd.f32 %v667, %v770
      %v772 = vpop.f32.mrf.mxu0
      %773 = vdwg.mxu0
      %v774 = vpack.c.bf16 %v741, %v736
      %v775 = vpack.c.bf16 %v751, %v746
      %v776 = vpack.c.bf16 %v761, %v756
      %v777 = vpack.c.bf16 %v771, %v766
      %v782 = vunpack.c.l.b16 %v774
      %v783 = vunpack.c.h.b16 %v774
      %v784 = vunpack.c.l.b16 %v775
      %v785 = vunpack.c.h.b16 %v775
      %v786 = vunpack.c.l.b16 %v776
      %v787 = vunpack.c.h.b16 %v776
      %v788 = vunpack.c.l.b16 %v777
      %v789 = vunpack.c.h.b16 %v777
      %v790 = vpack.c.b16 %v782, %v782
      %v791 = vpack.c.b16 %v783, %v783
      %v792 = vpack.c.b16 %v784, %v784
      %v793 = vpack.c.b16 %v785, %v785
      %v794 = vpack.c.b16 %v786, %v786
      %v795 = vpack.c.b16 %v787, %v787
      %v796 = vpack.c.b16 %v788, %v788
      %v797 = vpack.c.b16 %v789, %v789
      %806 = vst [vmem:[%s292] sm:$0xf] %v790
      %807 = vst [vmem:[%s292 + $0x4] sm:$0xf] %v791
      %808 = vst [vmem:[%s292 + $0x8] sm:$0xf] %v792
      %809 = vst [vmem:[%s292 + $0xc] sm:$0xf] %v793
      %810 = vst [vmem:[%s292 + $0x10] sm:$0xf] %v794
      %811 = vst [vmem:[%s292 + $0x14] sm:$0xf] %v795
      %812 = vst [vmem:[%s292 + $0x18] sm:$0xf] %v796
      %813 = vst [vmem:[%s292 + $0x1c] sm:$0xf] %v797
      %v814 = vlaneseq
      %v815 = vand.u32 %v814, 127
      %vm816 = vcmp.lt.s32.totalorder %v815, 8
      %v817 = vsel %vm816, %v736, -1e+30
      %v818 = vsel %vm816, %v741, -1e+30
      %v819 = vsel %vm816, %v746, -1e+30
      %v820 = vsel %vm816, %v751, -1e+30
      %v821 = vsel %vm816, %v756, -1e+30
      %v822 = vsel %vm816, %v761, -1e+30
      %v823 = vsel %vm816, %v766, -1e+30
      %v824 = vsel %vm816, %v771, -1e+30
      %825 = vmax.xlane.f32.xlu0 %v817
      %v826 = vpop.xlane.xlu0 %825
      %827 = vmax.xlane.f32.xlu0 %v818
      %v828 = vpop.xlane.xlu0 %827
      %829 = vmax.xlane.f32.xlu0 %v819
      %v830 = vpop.xlane.xlu0 %829
      %831 = vmax.xlane.f32.xlu0 %v820
      %v832 = vpop.xlane.xlu0 %831
      %833 = vmax.xlane.f32.xlu0 %v821
      %v834 = vpop.xlane.xlu0 %833
      %835 = vmax.xlane.f32.xlu0 %v822
      %v836 = vpop.xlane.xlu0 %835
      %837 = vmax.xlane.f32.xlu0 %v823
      %v838 = vpop.xlane.xlu0 %837
      %839 = vmax.xlane.f32.xlu0 %v824
      %v840 = vpop.xlane.xlu0 %839
      %v841 = vsub.f32 %v736, %v826
      %v842 = vsub.f32 %v741, %v828
      %v843 = vsub.f32 %v746, %v830
      %v844 = vsub.f32 %v751, %v832
      %v845 = vsub.f32 %v756, %v834
      %v846 = vsub.f32 %v761, %v836
      %v847 = vsub.f32 %v766, %v838
      %v848 = vsub.f32 %v771, %v840
      %v849 = vmul.f32 %v841, 1.442695
      %v850 = vpow.pop %v849
      %v851 = vmul.f32 %v842, 1.442695
      %v852 = vpow.pop %v851
      %v853 = vmul.f32 %v843, 1.442695
      %v854 = vpow.pop %v853
      %v855 = vmul.f32 %v844, 1.442695
      %v856 = vpow.pop %v855
      %v857 = vmul.f32 %v845, 1.442695
      %v858 = vpow.pop %v857
      %v859 = vmul.f32 %v846, 1.442695
      %v860 = vpow.pop %v859
      %v861 = vmul.f32 %v847, 1.442695
      %v862 = vpow.pop %v861
      %v863 = vmul.f32 %v848, 1.442695
      %v864 = vpow.pop %v863
      %v865 = vsel %vm816, %v850, 0.0
      %v866 = vsel %vm816, %v852, 0.0
      %v867 = vsel %vm816, %v854, 0.0
      %v868 = vsel %vm816, %v856, 0.0
      %v869 = vsel %vm816, %v858, 0.0
      %v870 = vsel %vm816, %v860, 0.0
      %v871 = vsel %vm816, %v862, 0.0
      %v872 = vsel %vm816, %v864, 0.0
      %873 = vadd.xlane.f32.xlu0 %v865
      %v874 = vpop.xlane.xlu0 %873
      %875 = vadd.xlane.f32.xlu0 %v866
      %v876 = vpop.xlane.xlu0 %875
      %877 = vadd.xlane.f32.xlu0 %v867
      %v878 = vpop.xlane.xlu0 %877
      %879 = vadd.xlane.f32.xlu0 %v868
      %v880 = vpop.xlane.xlu0 %879
      %881 = vadd.xlane.f32.xlu0 %v869
      %v882 = vpop.xlane.xlu0 %881
      %883 = vadd.xlane.f32.xlu0 %v870
      %v884 = vpop.xlane.xlu0 %883
      %885 = vadd.xlane.f32.xlu0 %v871
      %v886 = vpop.xlane.xlu0 %885
      %887 = vadd.xlane.f32.xlu0 %v872
      %v888 = vpop.xlane.xlu0 %887
      %v889 = vlog2.pop %v874
      %v890 = vmul.f32 %v889, 0.6931472
      %v891 = vlog2.pop %v876
      %v892 = vmul.f32 %v891, 0.6931472
      %v893 = vlog2.pop %v878
      %v894 = vmul.f32 %v893, 0.6931472
      %v895 = vlog2.pop %v880
      %v896 = vmul.f32 %v895, 0.6931472
      %v897 = vlog2.pop %v882
      %v898 = vmul.f32 %v897, 0.6931472
      %v899 = vlog2.pop %v884
      %v900 = vmul.f32 %v899, 0.6931472
      %v901 = vlog2.pop %v886
      %v902 = vmul.f32 %v901, 0.6931472
      %v903 = vlog2.pop %v888
      %v904 = vmul.f32 %v903, 0.6931472
      %v905 = vsub.f32 %v841, %v890
      %v906 = vsub.f32 %v842, %v892
      %v907 = vsub.f32 %v843, %v894
      %v908 = vsub.f32 %v844, %v896
      %v909 = vsub.f32 %v845, %v898
      %v910 = vsub.f32 %v846, %v900
      %v911 = vsub.f32 %v847, %v902
      %v912 = vsub.f32 %v848, %v904
      %913 = vst [vmem:[%s286] sm:$0xff] %v905
      %914 = vst [vmem:[%s286 + $0x8] sm:$0xff] %v906
      %915 = vst [vmem:[%s286 + $0x10] sm:$0xff] %v907
      %916 = vst [vmem:[%s286 + $0x18] sm:$0xff] %v908
      %917 = vst [vmem:[%s286 + $0x20] sm:$0xff] %v909
      %918 = vst [vmem:[%s286 + $0x28] sm:$0xff] %v910
      %919 = vst [vmem:[%s286 + $0x30] sm:$0xff] %v911
      %920 = vst [vmem:[%s286 + $0x38] sm:$0xff] %v912
      %s921 = smul.u32 8, %s18
      %p922 = scmp.lt.s32.totalorder %s921, 31
      %s923 = scalar_select %p922, %s921, 31
      %s924 = smul.addr %s923, 8
      %s925 = scalar_lea.vmem %s5, %s924
      %s926 = smul.u32 8, %s18
      %p927 = scmp.lt.s32.totalorder %s926, 31
      %s928 = scalar_select %p927, %s926, 31
      %s929 = smul.addr %s928, 4
      %s930 = scalar_lea.vmem %s6, %s929
      // Predicated region
      $region41: #{gatnet_forward.6} parent=39 // pred_check
        %p931 = pneg %p151
      $region42: #{gatnet_forward.6} parent=39 // pred_check_branch
        %933 = sbr.rel (%p931) target = $region44
      $region43: #{gatnet_forward.6} parent=39 // pred_region
        %s934 = smul.u32 8, %s18
      $region44: #{gatnet_forward.6} parent=39 // pred_fallthru
        _
      // Predicated region
      $region45: #{gatnet_forward.6} parent=39 // pred_check
        %p935 = pneg %p177
      $region46: #{gatnet_forward.6} parent=39 // pred_check_branch
        %937 = sbr.rel (%p935) target = $region48
      $region47: #{gatnet_forward.6} parent=39 // pred_region
        %s938 = smul.u32 8, %s18
      $region48: #{gatnet_forward.6} parent=39 // pred_fallthru
        _
    $region40: #{gatnet_forward.6} parent=5 // pred_fallthru
      _
    %p939 = scmp.le.s32.totalorder 2, %s13
    // Predicated region
    $region49: #{gatnet_forward.6} parent=5 // pred_check
      %p940 = pneg %p939
    $region50: #{gatnet_forward.6} parent=5 // pred_check_branch
      %942 = sbr.rel (%p940) target = $region52
    $region51: #{gatnet_forward.6} parent=5 // pred_region
      %s943 = ssub.s32 %s13, 2
      // Predicated region
      $region53: #{gatnet_forward.6} parent=51 // pred_check
        %p944 = pneg %p157
      $region54: #{gatnet_forward.6} parent=51 // pred_check_branch
        %946 = sbr.rel (%p944) target = $region56
      $region55: #{gatnet_forward.6} parent=51 // pred_region
        %s947 = smul.u32 8, %s19
        %p948 = scmp.lt.s32.totalorder %s947, 31
        %s949 = scalar_select %p948, %s947, 31
        %s950 = smul.addr %s949, 8
        %s951 = scalar_lea.vmem %s5, %s950
      $region56: #{gatnet_forward.6} parent=51 // pred_fallthru
        _
      // Predicated region
      $region57: #{gatnet_forward.6} parent=51 // pred_check
        %p952 = pneg %p183
      $region58: #{gatnet_forward.6} parent=51 // pred_check_branch
        %954 = sbr.rel (%p952) target = $region60
      $region59: #{gatnet_forward.6} parent=51 // pred_region
        %s955 = smul.u32 8, %s19
        %p956 = scmp.lt.s32.totalorder %s955, 31
        %s957 = scalar_select %p956, %s955, 31
        %s958 = smul.addr %s957, 4
        %s959 = scalar_lea.vmem %s6, %s958
      $region60: #{gatnet_forward.6} parent=51 // pred_fallthru
        _
    $region52: #{gatnet_forward.6} parent=5 // pred_fallthru
      _
  $region6: #{gatnet_forward.6} parent=0 // loop_footer
    %s17 = sadd.s32 1, %s13
  $region7: #{gatnet_forward.6} parent=0 // loop_footer_branch
    %12 = sbr.rel target = $region3
  $region8: #{gatnet_forward.6} parent=0 // loop_exit
    _

// kernel: gatnet_forward.5
$region0: #{gatnet_forward.5}
  #allocation0 [shape = 'u32[]', space=smem, size = 0x4, offset = 0x4, fixed_abs, tag = 'smem constant byte address 0x4 - core index']
  #allocation1 [shape = 'u32[144,128]{1,0:T(1,128)}', space=vmem, size = 0x12000, scoped, tag = 'internal scratch']
  %s0 = inlined_call_operand.vmem [shape: f32[256,128], index: 0, kind: input, shape index: {}]
  %s1 = inlined_call_operand.vmem [shape: f32[8,256], index: 1, kind: input, shape index: {}]
  %s2 = inlined_call_operand.vmem [shape: f32[256,8], index: 2, kind: input, shape index: {}]
  %s3 = inlined_call_operand.vmem [shape: f32[1,128], index: 3, kind: input, shape index: {}]
  %s4 = inlined_call_operand.vmem [shape: s8[256,256], index: 4, kind: input, shape index: {}]
  %s5 = inlined_call_operand.vmem [shape: f32[128,128], index: 5, kind: input, shape index: {}]
  %s6 = inlined_call_operand.vmem [shape: f32[128,2], index: 6, kind: input, shape index: {}]
  %s7 = inlined_call_operand.vmem [shape: f32[256,128], index: 7, kind: output, shape index: {0}]
  %s8 = inlined_call_operand.vmem [shape: f32[256,2], index: 8, kind: output, shape index: {1}]
  %9 = xla_tuple %s7, %s8
  %s10 = sld [smem:[#allocation0]]
  $region69: #{gatnet_forward.5} parent=0
    _
  %s12 = ssub.s32 1, %s10
  %s13 = scalar_select 0, %s12, %s10
  loop: start=0, step=1, limit=6
  $region2: #{gatnet_forward.5} parent=0 // loop_pre_header
    _
  $region3: #{gatnet_forward.5} parent=0 // loop_header
    %s15 = sphi 0, %s19
    %p16 = scmp.ge.s32.totalorder %s15, 6
    %s23 = sphi 0, %s23
    %s25 = sphi 0, %s23
    %s26 = sphi 0, %s25
    %s40 = sphi 0, %s26
    %s44 = sphi 0, %s44
    %s46 = sphi 0, %s44
    %s47 = sphi 0, %s46
    %s61 = sphi 0, %s47
    %s67 = sphi 0, %s69
    %s70 = sphi 0, %s67
    %s71 = sphi 0, %s70
    %s87 = sphi 0, %s71
    %s91 = sphi 0, %s91
    %s93 = sphi 0, %s91
    %s94 = sphi 0, %s93
    %s108 = sphi 0, %s94
    %s114 = sphi 0, %s116
    %s117 = sphi 0, %s114
    %s118 = sphi 0, %s117
    %s134 = sphi 0, %s118
    %s138 = sphi 0, %s138
    %s140 = sphi 0, %s138
    %s141 = sphi 0, %s140
    %s155 = sphi 0, %s141
    %s159 = sphi 0, %s159
    %s161 = sphi 0, %s159
    %s162 = sphi 0, %s161
    %s176 = sphi 0, %s162
    %s182 = sphi 0, %s184
    %s185 = sphi 0, %s182
    %s186 = sphi 0, %s185
    %s202 = sphi 0, %s186
    %s208 = sphi 0, %s210
    %s211 = sphi 0, %s208
    %s212 = sphi 0, %s211
    %s228 = sphi 0, %s212
  $region4: #{gatnet_forward.5} parent=0 // loop_header_branch
    %18 = sbr.rel (%p16) target = $region8
  $region5: #{gatnet_forward.5} parent=0 // loop_body
    %s20 = ssub.s32 %s15, 1
    %s21 = ssub.s32 %s15, 2
    %s22 = sadd.s32 %s15, 1
    %s24 = sadd.s32 %s23, 1
    %p27 = scmp.eq.s32.totalorder %s15, 3
    %p28 = scmp.ne.s32.totalorder %s23, %s25
    %p29 = scmp.eq.s32.totalorder %s15, 0
    %p30 = por %p28, %p29
    %p31 = scmp.ne.s32.totalorder %s23, %s25
    %p32 = scmp.eq.s32.totalorder %s20, 3
    %p33 = por %p31, %p32
    %p34 = scmp.ne.s32.totalorder %s25, %s26
    %p35 = scmp.eq.s32.totalorder %s20, 0
    %p36 = por %p34, %p35
    %p37 = scmp.ne.s32.totalorder %s25, %s26
    %p38 = scmp.eq.s32.totalorder %s21, 3
    %p39 = por %p37, %p38
    %p41 = scmp.ne.s32.totalorder %s26, %s40
    %p42 = scmp.eq.s32.totalorder %s21, 0
    %p43 = por %p41, %p42
    %s45 = sadd.s32 %s44, 1
    %p48 = scmp.eq.s32.totalorder %s15, 3
    %p49 = scmp.ne.s32.totalorder %s44, %s46
    %p50 = scmp.eq.s32.totalorder %s15, 0
    %p51 = por %p49, %p50
    %p52 = scmp.ne.s32.totalorder %s44, %s46
    %p53 = scmp.eq.s32.totalorder %s20, 3
    %p54 = por %p52, %p53
    %p55 = scmp.ne.s32.totalorder %s46, %s47
    %p56 = scmp.eq.s32.totalorder %s20, 0
    %p57 = por %p55, %p56
    %p58 = scmp.ne.s32.totalorder %s46, %s47
    %p59 = scmp.eq.s32.totalorder %s21, 3
    %p60 = por %p58, %p59
    %p62 = scmp.ne.s32.totalorder %s47, %s61
    %p63 = scmp.eq.s32.totalorder %s21, 0
    %p64 = por %p62, %p63
    %s65 = ssub.s32 %s15, %s22
    %p66 = scmp.eq.s32.totalorder %s65, 0
    %s68 = sadd.s32 %s67, 1
    %s69 = scalar_select %p66, %s67, %s68
    %p72 = pneg %p66
    %p73 = scmp.eq.s32.totalorder %s15, 3
    %p74 = por %p72, %p73
    %p75 = scmp.ne.s32.totalorder %s67, %s70
    %p76 = scmp.eq.s32.totalorder %s15, 0
    %p77 = por %p75, %p76
    %p78 = scmp.ne.s32.totalorder %s67, %s70
    %p79 = scmp.eq.s32.totalorder %s20, 3
    %p80 = por %p78, %p79
    %p81 = scmp.ne.s32.totalorder %s70, %s71
    %p82 = scmp.eq.s32.totalorder %s20, 0
    %p83 = por %p81, %p82
    %p84 = scmp.ne.s32.totalorder %s70, %s71
    %p85 = scmp.eq.s32.totalorder %s21, 3
    %p86 = por %p84, %p85
    %p88 = scmp.ne.s32.totalorder %s71, %s87
    %p89 = scmp.eq.s32.totalorder %s21, 0
    %p90 = por %p88, %p89
    %s92 = sadd.s32 %s91, 1
    %p95 = scmp.eq.s32.totalorder %s15, 3
    %p96 = scmp.ne.s32.totalorder %s91, %s93
    %p97 = scmp.eq.s32.totalorder %s15, 0
    %p98 = por %p96, %p97
    %p99 = scmp.ne.s32.totalorder %s91, %s93
    %p100 = scmp.eq.s32.totalorder %s20, 3
    %p101 = por %p99, %p100
    %p102 = scmp.ne.s32.totalorder %s93, %s94
    %p103 = scmp.eq.s32.totalorder %s20, 0
    %p104 = por %p102, %p103
    %p105 = scmp.ne.s32.totalorder %s93, %s94
    %p106 = scmp.eq.s32.totalorder %s21, 3
    %p107 = por %p105, %p106
    %p109 = scmp.ne.s32.totalorder %s94, %s108
    %p110 = scmp.eq.s32.totalorder %s21, 0
    %p111 = por %p109, %p110
    %s112 = ssub.s32 %s15, %s22
    %p113 = scmp.eq.s32.totalorder %s112, 0
    %s115 = sadd.s32 %s114, 1
    %s116 = scalar_select %p113, %s114, %s115
    %p119 = pneg %p113
    %p120 = scmp.eq.s32.totalorder %s15, 3
    %p121 = por %p119, %p120
    %p122 = scmp.ne.s32.totalorder %s114, %s117
    %p123 = scmp.eq.s32.totalorder %s15, 0
    %p124 = por %p122, %p123
    %p125 = scmp.ne.s32.totalorder %s114, %s117
    %p126 = scmp.eq.s32.totalorder %s20, 3
    %p127 = por %p125, %p126
    %p128 = scmp.ne.s32.totalorder %s117, %s118
    %p129 = scmp.eq.s32.totalorder %s20, 0
    %p130 = por %p128, %p129
    %p131 = scmp.ne.s32.totalorder %s117, %s118
    %p132 = scmp.eq.s32.totalorder %s21, 3
    %p133 = por %p131, %p132
    %p135 = scmp.ne.s32.totalorder %s118, %s134
    %p136 = scmp.eq.s32.totalorder %s21, 0
    %p137 = por %p135, %p136
    %s139 = sadd.s32 %s138, 1
    %p142 = scmp.eq.s32.totalorder %s15, 3
    %p143 = scmp.ne.s32.totalorder %s138, %s140
    %p144 = scmp.eq.s32.totalorder %s15, 0
    %p145 = por %p143, %p144
    %p146 = scmp.ne.s32.totalorder %s138, %s140
    %p147 = scmp.eq.s32.totalorder %s20, 3
    %p148 = por %p146, %p147
    %p149 = scmp.ne.s32.totalorder %s140, %s141
    %p150 = scmp.eq.s32.totalorder %s20, 0
    %p151 = por %p149, %p150
    %p152 = scmp.ne.s32.totalorder %s140, %s141
    %p153 = scmp.eq.s32.totalorder %s21, 3
    %p154 = por %p152, %p153
    %p156 = scmp.ne.s32.totalorder %s141, %s155
    %p157 = scmp.eq.s32.totalorder %s21, 0
    %p158 = por %p156, %p157
    %s160 = sadd.s32 %s159, 1
    %p163 = scmp.eq.s32.totalorder %s15, 3
    %p164 = scmp.ne.s32.totalorder %s159, %s161
    %p165 = scmp.eq.s32.totalorder %s15, 0
    %p166 = por %p164, %p165
    %p167 = scmp.ne.s32.totalorder %s159, %s161
    %p168 = scmp.eq.s32.totalorder %s20, 3
    %p169 = por %p167, %p168
    %p170 = scmp.ne.s32.totalorder %s161, %s162
    %p171 = scmp.eq.s32.totalorder %s20, 0
    %p172 = por %p170, %p171
    %p173 = scmp.ne.s32.totalorder %s161, %s162
    %p174 = scmp.eq.s32.totalorder %s21, 3
    %p175 = por %p173, %p174
    %p177 = scmp.ne.s32.totalorder %s162, %s176
    %p178 = scmp.eq.s32.totalorder %s21, 0
    %p179 = por %p177, %p178
    %s180 = ssub.s32 %s15, %s22
    %p181 = scmp.eq.s32.totalorder %s180, 0
    %s183 = sadd.s32 %s182, 1
    %s184 = scalar_select %p181, %s182, %s183
    %p187 = pneg %p181
    %p188 = scmp.eq.s32.totalorder %s15, 3
    %p189 = por %p187, %p188
    %p190 = scmp.ne.s32.totalorder %s182, %s185
    %p191 = scmp.eq.s32.totalorder %s15, 0
    %p192 = por %p190, %p191
    %p193 = scmp.ne.s32.totalorder %s182, %s185
    %p194 = scmp.eq.s32.totalorder %s20, 3
    %p195 = por %p193, %p194
    %p196 = scmp.ne.s32.totalorder %s185, %s186
    %p197 = scmp.eq.s32.totalorder %s20, 0
    %p198 = por %p196, %p197
    %p199 = scmp.ne.s32.totalorder %s185, %s186
    %p200 = scmp.eq.s32.totalorder %s21, 3
    %p201 = por %p199, %p200
    %p203 = scmp.ne.s32.totalorder %s186, %s202
    %p204 = scmp.eq.s32.totalorder %s21, 0
    %p205 = por %p203, %p204
    %s206 = ssub.s32 %s15, %s22
    %p207 = scmp.eq.s32.totalorder %s206, 0
    %s209 = sadd.s32 %s208, 1
    %s210 = scalar_select %p207, %s208, %s209
    %p213 = pneg %p207
    %p214 = scmp.eq.s32.totalorder %s15, 3
    %p215 = por %p213, %p214
    %p216 = scmp.ne.s32.totalorder %s208, %s211
    %p217 = scmp.eq.s32.totalorder %s15, 0
    %p218 = por %p216, %p217
    %p219 = scmp.ne.s32.totalorder %s208, %s211
    %p220 = scmp.eq.s32.totalorder %s20, 3
    %p221 = por %p219, %p220
    %p222 = scmp.ne.s32.totalorder %s211, %s212
    %p223 = scmp.eq.s32.totalorder %s20, 0
    %p224 = por %p222, %p223
    %p225 = scmp.ne.s32.totalorder %s211, %s212
    %p226 = scmp.eq.s32.totalorder %s21, 3
    %p227 = por %p225, %p226
    %p229 = scmp.ne.s32.totalorder %s212, %s228
    %p230 = scmp.eq.s32.totalorder %s21, 0
    %p231 = por %p229, %p230
    %p232 = scmp.le.s32.totalorder 1, %s15
    %p233 = scmp.lt.s32.totalorder %s15, 5
    %p234 = pnand %p232, %p233
    %p235 = pneg %p234
    // Predicated region
    $region9: #{gatnet_forward.5} parent=5 // pred_check
      _
    $region10: #{gatnet_forward.5} parent=5 // pred_check_branch
      %237 = sbr.rel (%p234) target = $region12
    $region11: #{gatnet_forward.5} parent=5 // pred_region
      %s238 = ssub.s32 %s15, 1
      // Predicated region
      $region13: #{gatnet_forward.5} parent=11 // pred_check
        %p239 = pneg %p36
      $region14: #{gatnet_forward.5} parent=11 // pred_check_branch
        %241 = sbr.rel (%p239) target = $region16
      $region15: #{gatnet_forward.5} parent=11 // pred_region
        _
      $region16: #{gatnet_forward.5} parent=11 // pred_fallthru
        _
      // Predicated region
      $region17: #{gatnet_forward.5} parent=11 // pred_check
        %p242 = pneg %p57
      $region18: #{gatnet_forward.5} parent=11 // pred_check_branch
        %244 = sbr.rel (%p242) target = $region20
      $region19: #{gatnet_forward.5} parent=11 // pred_region
        _
      $region20: #{gatnet_forward.5} parent=11 // pred_fallthru
        _
      // Predicated region
      $region21: #{gatnet_forward.5} parent=11 // pred_check
        %p245 = pneg %p104
      $region22: #{gatnet_forward.5} parent=11 // pred_check_branch
        %247 = sbr.rel (%p245) target = $region24
      $region23: #{gatnet_forward.5} parent=11 // pred_region
        _
      $region24: #{gatnet_forward.5} parent=11 // pred_fallthru
        _
      // Predicated region
      $region25: #{gatnet_forward.5} parent=11 // pred_check
        %p248 = pneg %p151
      $region26: #{gatnet_forward.5} parent=11 // pred_check_branch
        %250 = sbr.rel (%p248) target = $region28
      $region27: #{gatnet_forward.5} parent=11 // pred_region
        _
      $region28: #{gatnet_forward.5} parent=11 // pred_fallthru
        _
      // Predicated region
      $region29: #{gatnet_forward.5} parent=11 // pred_check
        %p251 = pneg %p172
      $region30: #{gatnet_forward.5} parent=11 // pred_check_branch
        %253 = sbr.rel (%p251) target = $region32
      $region31: #{gatnet_forward.5} parent=11 // pred_region
        _
      $region32: #{gatnet_forward.5} parent=11 // pred_fallthru
        _
    $region12: #{gatnet_forward.5} parent=5 // pred_fallthru
      _
    %p254 = scmp.lt.s32.totalorder %s15, 4
    // Predicated region
    $region33: #{gatnet_forward.5} parent=5 // pred_check
      %p255 = pneg %p254
    $region34: #{gatnet_forward.5} parent=5 // pred_check_branch
      %257 = sbr.rel (%p255) target = $region36
    $region35: #{gatnet_forward.5} parent=5 // pred_region
      // Predicated region
      $region37: #{gatnet_forward.5} parent=35 // pred_check
        %p258 = pneg %p77
      $region38: #{gatnet_forward.5} parent=35 // pred_check_branch
        %260 = sbr.rel (%p258) target = $region40
      $region39: #{gatnet_forward.5} parent=35 // pred_region
        %s261 = smul.u32 8, %s15
        %p262 = scmp.lt.s32.totalorder %s261, 31
        %s263 = scalar_select %p262, %s261, 31
        %s264 = smul.addr %s263, 8
        %s265 = scalar_lea.vmem %s2, %s264
        %s266 = smul.u32 8, %s15
      $region40: #{gatnet_forward.5} parent=35 // pred_fallthru
        _
      // Predicated region
      $region41: #{gatnet_forward.5} parent=35 // pred_check
        %p267 = pneg %p124
      $region42: #{gatnet_forward.5} parent=35 // pred_check_branch
        %269 = sbr.rel (%p267) target = $region44
      $region43: #{gatnet_forward.5} parent=35 // pred_region
        %s270 = smul.u32 2, %s15
        %p271 = scmp.lt.s32.totalorder %s270, 7
        %s272 = scalar_select %p271, %s270, 7
        %s273 = smul.addr %s272, 2
        %s274 = smul.addr %s273, 8
        %s275 = scalar_lea.vmem %s4, %s274
        %s276 = smul.u32 2, %s15
      $region44: #{gatnet_forward.5} parent=35 // pred_fallthru
        _
    $region36: #{gatnet_forward.5} parent=5 // pred_fallthru
      _
    %p277 = scmp.le.s32.totalorder 1, %s15
    %p278 = scmp.lt.s32.totalorder %s15, 5
    %p279 = pnand %p277, %p278
    %p280 = pneg %p279
    // Predicated region
    $region45: #{gatnet_forward.5} parent=5 // pred_check
      _
    $region46: #{gatnet_forward.5} parent=5 // pred_check_branch
      %282 = sbr.rel (%p279) target = $region48
    $region47: #{gatnet_forward.5} parent=5 // pred_region
      %s283 = ssub.s32 %s15, 1
      %p284 = pneg %p36
      %p285 = pneg %p33
      %p286 = pneg %p57
      %p287 = pneg %p54
      %s288 = smul.u32 8, %s20
      %p289 = scmp.lt.s32.totalorder %s288, 31
      %s290 = scalar_select %p289, %s288, 31
      %s291 = smul.addr %s290, 8
      %s292 = scalar_lea.vmem %s2, %s291
      %p293 = pneg %p83
      %p294 = pneg %p80
      %p295 = pneg %p104
      %p296 = pneg %p101
      %s297 = smul.u32 2, %s20
      %p298 = scmp.lt.s32.totalorder %s297, 7
      %s299 = scalar_select %p298, %s297, 7
      %s300 = smul.addr %s299, 2
      %s301 = smul.addr %s300, 8
      %s302 = scalar_lea.vmem %s4, %s301
      %p303 = pneg %p130
      %p304 = pneg %p127
      %p305 = pneg %p151
      %p306 = pneg %p148
      %p307 = pneg %p172
      %p308 = pneg %p169
      %p309 = pneg %p198
      %p310 = pneg %p195
      %s311 = smul.u32 8, %s20
      %p312 = scmp.lt.s32.totalorder %s311, 31
      %s313 = scalar_select %p312, %s311, 31
      %s314 = smul.addr %s313, 8
      %s315 = scalar_lea.vmem %s7, %s314
      %p316 = pneg %p224
      %p317 = pneg %p221
      %s318 = smul.u32 8, %s20
      %p319 = scmp.lt.s32.totalorder %s318, 31
      %s320 = scalar_select %p319, %s318, 31
      %s321 = smul.addr %s320, 8
      %s322 = scalar_lea.vmem %s8, %s321
      %s323 = smul.u32 8, %s20
      %p324 = scmp.lt.s32.totalorder %s323, 31
      %s325 = scalar_select %p324, %s323, 31
      %s326 = smul.addr %s325, 8
      %s327 = scalar_lea.vmem %s2, %s326
      %s328 = smul.u32 8, %s20
      %s329 = smul.u32 2, %s20
      %p330 = scmp.lt.s32.totalorder %s329, 7
      %s331 = scalar_select %p330, %s329, 7
      %s332 = smul.addr %s331, 2
      %s333 = smul.addr %s332, 8
      %s334 = scalar_lea.vmem %s4, %s333
      %s335 = smul.u32 2, %s20
      %s336 = smul.u32 8, %s20
      %p337 = scmp.lt.s32.totalorder %s336, 31
      %s338 = scalar_select %p337, %s336, 31
      %s339 = smul.addr %s338, 8
      %s340 = scalar_lea.vmem %s7, %s339
      %s341 = smul.u32 8, %s20
      %s342 = smul.u32 8, %s20
      %p343 = scmp.lt.s32.totalorder %s342, 31
      %s344 = scalar_select %p343, %s342, 31
      %s345 = smul.addr %s344, 8
      %s346 = scalar_lea.vmem %s8, %s345
      %s347 = smul.u32 8, %s20
      %v348 = vld [vmem:[%s334] sm:$0xff]
      %v349 = vld [vmem:[%s334 + $0x8] sm:$0xff]
      %v350 = vld [vmem:[%s334 + $0x10] sm:$0xff]
      %v351 = vld [vmem:[%s334 + $0x18] sm:$0xff]
      %v352 = vunpack.c.0.s8 %v348
      %v353 = vunpack.c.0.s8 %v349
      %v354 = vunpack.c.1.s8 %v348
      %v355 = vunpack.c.1.s8 %v349
      %v356 = vunpack.c.2.s8 %v348
      %v357 = vunpack.c.2.s8 %v349
      %v358 = vunpack.c.3.s8 %v348
      %v359 = vunpack.c.3.s8 %v349
      %v360 = vunpack.c.0.s8 %v350
      %v361 = vunpack.c.0.s8 %v351
      %v362 = vunpack.c.1.s8 %v350
      %v363 = vunpack.c.1.s8 %v351
      %v364 = vunpack.c.2.s8 %v350
      %v365 = vunpack.c.2.s8 %v351
      %v366 = vunpack.c.3.s8 %v350
      %v367 = vunpack.c.3.s8 %v351
      %v368 = vcvt.s32.f32 %v352
      %v369 = vcvt.s32.f32 %v353
      %v370 = vcvt.s32.f32 %v354
      %v371 = vcvt.s32.f32 %v355
      %v372 = vcvt.s32.f32 %v356
      %v373 = vcvt.s32.f32 %v357
      %v374 = vcvt.s32.f32 %v358
      %v375 = vcvt.s32.f32 %v359
      %v376 = vcvt.s32.f32 %v360
      %v377 = vcvt.s32.f32 %v361
      %v378 = vcvt.s32.f32 %v362
      %v379 = vcvt.s32.f32 %v363
      %v380 = vcvt.s32.f32 %v364
      %v381 = vcvt.s32.f32 %v365
      %v382 = vcvt.s32.f32 %v366
      %v383 = vcvt.s32.f32 %v367
      %vm384 = vcmp.gt.f32.partialorder %v368, 0.0
      %vm385 = vcmp.gt.f32.partialorder %v369, 0.0
      %vm386 = vcmp.gt.f32.partialorder %v370, 0.0
      %vm387 = vcmp.gt.f32.partialorder %v371, 0.0
      %vm388 = vcmp.gt.f32.partialorder %v372, 0.0
      %vm389 = vcmp.gt.f32.partialorder %v373, 0.0
      %vm390 = vcmp.gt.f32.partialorder %v374, 0.0
      %vm391 = vcmp.gt.f32.partialorder %v375, 0.0
      %vm392 = vcmp.gt.f32.partialorder %v376, 0.0
      %vm393 = vcmp.gt.f32.partialorder %v377, 0.0
      %vm394 = vcmp.gt.f32.partialorder %v378, 0.0
      %vm395 = vcmp.gt.f32.partialorder %v379, 0.0
      %vm396 = vcmp.gt.f32.partialorder %v380, 0.0
      %vm397 = vcmp.gt.f32.partialorder %v381, 0.0
      %vm398 = vcmp.gt.f32.partialorder %v382, 0.0
      %vm399 = vcmp.gt.f32.partialorder %v383, 0.0
      %v400 = vsel %vm384, 0.0, -1e+30
      %v401 = vsel %vm385, 0.0, -1e+30
      %v402 = vsel %vm386, 0.0, -1e+30
      %v403 = vsel %vm387, 0.0, -1e+30
      %v404 = vsel %vm388, 0.0, -1e+30
      %v405 = vsel %vm389, 0.0, -1e+30
      %v406 = vsel %vm390, 0.0, -1e+30
      %v407 = vsel %vm391, 0.0, -1e+30
      %v408 = vsel %vm392, 0.0, -1e+30
      %v409 = vsel %vm393, 0.0, -1e+30
      %v410 = vsel %vm394, 0.0, -1e+30
      %v411 = vsel %vm395, 0.0, -1e+30
      %v412 = vsel %vm396, 0.0, -1e+30
      %v413 = vsel %vm397, 0.0, -1e+30
      %v414 = vsel %vm398, 0.0, -1e+30
      %v415 = vsel %vm399, 0.0, -1e+30
      %v416 = vld [vmem:[%s0] sm:$0xff]
      %v417 = vld [vmem:[%s0 + $0x8] sm:$0xff]
      %v418 = vld [vmem:[%s0 + $0x10] sm:$0xff]
      %v419 = vld [vmem:[%s0 + $0x18] sm:$0xff]
      %v420 = vld [vmem:[%s0 + $0x20] sm:$0xff]
      %v421 = vld [vmem:[%s0 + $0x28] sm:$0xff]
      %v422 = vld [vmem:[%s0 + $0x30] sm:$0xff]
      %v423 = vld [vmem:[%s0 + $0x38] sm:$0xff]
      %v424 = vld [vmem:[%s0 + $0x40] sm:$0xff]
      %v425 = vld [vmem:[%s0 + $0x48] sm:$0xff]
      %v426 = vld [vmem:[%s0 + $0x50] sm:$0xff]
      %v427 = vld [vmem:[%s0 + $0x58] sm:$0xff]
      %v428 = vld [vmem:[%s0 + $0x60] sm:$0xff]
      %v429 = vld [vmem:[%s0 + $0x68] sm:$0xff]
      %v430 = vld [vmem:[%s0 + $0x70] sm:$0xff]
      %v431 = vld [vmem:[%s0 + $0x78] sm:$0xff]
      %v432 = vld [vmem:[%s0 + $0x80] sm:$0xff]
      %v433 = vld [vmem:[%s0 + $0x88] sm:$0xff]
      %v434 = vld [vmem:[%s0 + $0x90] sm:$0xff]
      %v435 = vld [vmem:[%s0 + $0x98] sm:$0xff]
      %v436 = vld [vmem:[%s0 + $0xa0] sm:$0xff]
      %v437 = vld [vmem:[%s0 + $0xa8] sm:$0xff]
      %v438 = vld [vmem:[%s0 + $0xb0] sm:$0xff]
      %v439 = vld [vmem:[%s0 + $0xb8] sm:$0xff]
      %v440 = vld [vmem:[%s0 + $0xc0] sm:$0xff]
      %v441 = vld [vmem:[%s0 + $0xc8] sm:$0xff]
      %v442 = vld [vmem:[%s0 + $0xd0] sm:$0xff]
      %v443 = vld [vmem:[%s0 + $0xd8] sm:$0xff]
      %v444 = vld [vmem:[%s0 + $0xe0] sm:$0xff]
      %v445 = vld [vmem:[%s0 + $0xe8] sm:$0xff]
      %v446 = vld [vmem:[%s0 + $0xf0] sm:$0xff]
      %v447 = vld [vmem:[%s0 + $0xf8] sm:$0xff]
      %v448 = vld [vmem:[%s327] sm:$0xff]
      %v449 = vld [vmem:[%s327 + $0x8] sm:$0xff]
      %v450 = vld [vmem:[%s327 + $0x10] sm:$0xff]
      %v451 = vld [vmem:[%s327 + $0x18] sm:$0xff]
      %v452 = vld [vmem:[%s327 + $0x20] sm:$0xff]
      %v453 = vld [vmem:[%s327 + $0x28] sm:$0xff]
      %v454 = vld [vmem:[%s327 + $0x30] sm:$0xff]
      %v455 = vld [vmem:[%s327 + $0x38] sm:$0xff]
      %v456 = vld [vmem:[%s1] sm:$0xff]
      %v457 = vld [vmem:[%s1 + $0x8] sm:$0xff]
      %459 = vset.pattern.permute.xlu0 0
      %460 = vperm.xlu0 %459, %v448
      %v461 = vpop.permute.xlu0 %460
      %464 = vset.pattern.permute.xlu0 0
      %465 = vperm.xlu0 %464, %v449
      %v466 = vpop.permute.xlu0 %465
      %469 = vset.pattern.permute.xlu0 0
      %470 = vperm.xlu0 %469, %v450
      %v471 = vpop.permute.xlu0 %470
      %474 = vset.pattern.permute.xlu0 0
      %475 = vperm.xlu0 %474, %v451
      %v476 = vpop.permute.xlu0 %475
      %479 = vset.pattern.permute.xlu0 0
      %480 = vperm.xlu0 %479, %v452
      %v481 = vpop.permute.xlu0 %480
      %484 = vset.pattern.permute.xlu0 0
      %485 = vperm.xlu0 %484, %v453
      %v486 = vpop.permute.xlu0 %485
      %489 = vset.pattern.permute.xlu0 0
      %490 = vperm.xlu0 %489, %v454
      %v491 = vpop.permute.xlu0 %490
      %494 = vset.pattern.permute.xlu0 0
      %495 = vperm.xlu0 %494, %v455
      %v496 = vpop.permute.xlu0 %495
      %v498 = vlaneseq
      %v499 = vshrl.u32 %v498, 7
      %v500 = vsub.s32 0, %v499
      %v501 = vrot.slane %v456, %v500
      %v502 = vlaneseq
      %v503 = vshrl.u32 %v502, 7
      %v504 = vsub.s32 0, %v503
      %v505 = vrot.slane %v457, %v504
      %v506 = vadd.f32 %v461, %v501
      %v507 = vadd.f32 %v461, %v505
      %v508 = vadd.f32 %v466, %v501
      %v509 = vadd.f32 %v466, %v505
      %v510 = vadd.f32 %v471, %v501
      %v511 = vadd.f32 %v471, %v505
      %v512 = vadd.f32 %v476, %v501
      %v513 = vadd.f32 %v476, %v505
      %v514 = vadd.f32 %v481, %v501
      %v515 = vadd.f32 %v481, %v505
      %v516 = vadd.f32 %v486, %v501
      %v517 = vadd.f32 %v486, %v505
      %v518 = vadd.f32 %v491, %v501
      %v519 = vadd.f32 %v491, %v505
      %v520 = vadd.f32 %v496, %v501
      %v521 = vadd.f32 %v496, %v505
      %vm522 = vcmp.gt.f32.partialorder %v506, 0.0
      %vm523 = vcmp.gt.f32.partialorder %v507, 0.0
      %vm524 = vcmp.gt.f32.partialorder %v508, 0.0
      %vm525 = vcmp.gt.f32.partialorder %v509, 0.0
      %vm526 = vcmp.gt.f32.partialorder %v510, 0.0
      %vm527 = vcmp.gt.f32.partialorder %v511, 0.0
      %vm528 = vcmp.gt.f32.partialorder %v512, 0.0
      %vm529 = vcmp.gt.f32.partialorder %v513, 0.0
      %vm530 = vcmp.gt.f32.partialorder %v514, 0.0
      %vm531 = vcmp.gt.f32.partialorder %v515, 0.0
      %vm532 = vcmp.gt.f32.partialorder %v516, 0.0
      %vm533 = vcmp.gt.f32.partialorder %v517, 0.0
      %vm534 = vcmp.gt.f32.partialorder %v518, 0.0
      %vm535 = vcmp.gt.f32.partialorder %v519, 0.0
      %vm536 = vcmp.gt.f32.partialorder %v520, 0.0
      %vm537 = vcmp.gt.f32.partialorder %v521, 0.0
      %v538 = vmul.f32 %v506, 0.2
      %v539 = vmul.f32 %v507, 0.2
      %v540 = vmul.f32 %v508, 0.2
      %v541 = vmul.f32 %v509, 0.2
      %v542 = vmul.f32 %v510, 0.2
      %v543 = vmul.f32 %v511, 0.2
      %v544 = vmul.f32 %v512, 0.2
      %v545 = vmul.f32 %v513, 0.2
      %v546 = vmul.f32 %v514, 0.2
      %v547 = vmul.f32 %v515, 0.2
      %v548 = vmul.f32 %v516, 0.2
      %v549 = vmul.f32 %v517, 0.2
      %v550 = vmul.f32 %v518, 0.2
      %v551 = vmul.f32 %v519, 0.2
      %v552 = vmul.f32 %v520, 0.2
      %v553 = vmul.f32 %v521, 0.2
      %v554 = vsel %vm522, %v506, %v538
      %v555 = vsel %vm523, %v507, %v539
      %v556 = vsel %vm524, %v508, %v540
      %v557 = vsel %vm525, %v509, %v541
      %v558 = vsel %vm526, %v510, %v542
      %v559 = vsel %vm527, %v511, %v543
      %v560 = vsel %vm528, %v512, %v544
      %v561 = vsel %vm529, %v513, %v545
      %v562 = vsel %vm530, %v514, %v546
      %v563 = vsel %vm531, %v515, %v547
      %v564 = vsel %vm532, %v516, %v548
      %v565 = vsel %vm533, %v517, %v549
      %v566 = vsel %vm534, %v518, %v550
      %v567 = vsel %vm535, %v519, %v551
      %v568 = vsel %vm536, %v520, %v552
      %v569 = vsel %vm537, %v521, %v553
      %v570 = vadd.f32 %v554, %v400
      %v571 = vadd.f32 %v555, %v401
      %v572 = vadd.f32 %v556, %v402
      %v573 = vadd.f32 %v557, %v403
      %v574 = vadd.f32 %v558, %v404
      %v575 = vadd.f32 %v559, %v405
      %v576 = vadd.f32 %v560, %v406
      %v577 = vadd.f32 %v561, %v407
      %v578 = vadd.f32 %v562, %v408
      %v579 = vadd.f32 %v563, %v409
      %v580 = vadd.f32 %v564, %v410
      %v581 = vadd.f32 %v565, %v411
      %v582 = vadd.f32 %v566, %v412
      %v583 = vadd.f32 %v567, %v413
      %v584 = vadd.f32 %v568, %v414
      %v585 = vadd.f32 %v569, %v415
      %v586 = vmax.f32 %v570, %v571
      %587 = vmax.xlane.f32.xlu0 %v586
      %v588 = vpop.xlane.xlu0 %587
      %v589 = vmax.f32 %v572, %v573
      %590 = vmax.xlane.f32.xlu0 %v589
      %v591 = vpop.xlane.xlu0 %590
      %v592 = vmax.f32 %v574, %v575
      %593 = vmax.xlane.f32.xlu0 %v592
      %v594 = vpop.xlane.xlu0 %593
      %v595 = vmax.f32 %v576, %v577
      %596 = vmax.xlane.f32.xlu0 %v595
      %v597 = vpop.xlane.xlu0 %596
      %v598 = vmax.f32 %v578, %v579
      %599 = vmax.xlane.f32.xlu0 %v598
      %v600 = vpop.xlane.xlu0 %599
      %v601 = vmax.f32 %v580, %v581
      %602 = vmax.xlane.f32.xlu0 %v601
      %v603 = vpop.xlane.xlu0 %602
      %v604 = vmax.f32 %v582, %v583
      %605 = vmax.xlane.f32.xlu0 %v604
      %v606 = vpop.xlane.xlu0 %605
      %v607 = vmax.f32 %v584, %v585
      %608 = vmax.xlane.f32.xlu0 %v607
      %v609 = vpop.xlane.xlu0 %608
      %v610 = vsub.f32 %v570, %v588
      %v611 = vsub.f32 %v571, %v588
      %v612 = vsub.f32 %v572, %v591
      %v613 = vsub.f32 %v573, %v591
      %v614 = vsub.f32 %v574, %v594
      %v615 = vsub.f32 %v575, %v594
      %v616 = vsub.f32 %v576, %v597
      %v617 = vsub.f32 %v577, %v597
      %v618 = vsub.f32 %v578, %v600
      %v619 = vsub.f32 %v579, %v600
      %v620 = vsub.f32 %v580, %v603
      %v621 = vsub.f32 %v581, %v603
      %v622 = vsub.f32 %v582, %v606
      %v623 = vsub.f32 %v583, %v606
      %v624 = vsub.f32 %v584, %v609
      %v625 = vsub.f32 %v585, %v609
      %v626 = vmul.f32 %v610, 1.442695
      %v627 = vpow.pop %v626
      %v628 = vmul.f32 %v611, 1.442695
      %v629 = vpow.pop %v628
      %v630 = vmul.f32 %v612, 1.442695
      %v631 = vpow.pop %v630
      %v632 = vmul.f32 %v613, 1.442695
      %v633 = vpow.pop %v632
      %v634 = vmul.f32 %v614, 1.442695
      %v635 = vpow.pop %v634
      %v636 = vmul.f32 %v615, 1.442695
      %v637 = vpow.pop %v636
      %v638 = vmul.f32 %v616, 1.442695
      %v639 = vpow.pop %v638
      %v640 = vmul.f32 %v617, 1.442695
      %v641 = vpow.pop %v640
      %v642 = vmul.f32 %v618, 1.442695
      %v643 = vpow.pop %v642
      %v644 = vmul.f32 %v619, 1.442695
      %v645 = vpow.pop %v644
      %v646 = vmul.f32 %v620, 1.442695
      %v647 = vpow.pop %v646
      %v648 = vmul.f32 %v621, 1.442695
      %v649 = vpow.pop %v648
      %v650 = vmul.f32 %v622, 1.442695
      %v651 = vpow.pop %v650
      %v652 = vmul.f32 %v623, 1.442695
      %v653 = vpow.pop %v652
      %v654 = vmul.f32 %v624, 1.442695
      %v655 = vpow.pop %v654
      %v656 = vmul.f32 %v625, 1.442695
      %v657 = vpow.pop %v656
      %v658 = vadd.f32 %v627, %v629
      %659 = vadd.xlane.f32.xlu0 %v658
      %v660 = vpop.xlane.xlu0 %659
      %v661 = vadd.f32 %v631, %v633
      %662 = vadd.xlane.f32.xlu0 %v661
      %v663 = vpop.xlane.xlu0 %662
      %v664 = vadd.f32 %v635, %v637
      %665 = vadd.xlane.f32.xlu0 %v664
      %v666 = vpop.xlane.xlu0 %665
      %v667 = vadd.f32 %v639, %v641
      %668 = vadd.xlane.f32.xlu0 %v667
      %v669 = vpop.xlane.xlu0 %668
      %v670 = vadd.f32 %v643, %v645
      %671 = vadd.xlane.f32.xlu0 %v670
      %v672 = vpop.xlane.xlu0 %671
      %v673 = vadd.f32 %v647, %v649
      %674 = vadd.xlane.f32.xlu0 %v673
      %v675 = vpop.xlane.xlu0 %674
      %v676 = vadd.f32 %v651, %v653
      %677 = vadd.xlane.f32.xlu0 %v676
      %v678 = vpop.xlane.xlu0 %677
      %v679 = vadd.f32 %v655, %v657
      %680 = vadd.xlane.f32.xlu0 %v679
      %v681 = vpop.xlane.xlu0 %680
      %v682 = vrcp.pop %v660
      %v683 = vmul.f32 1.0, %v682
      %v684 = vrcp.pop %v663
      %v685 = vmul.f32 1.0, %v684
      %v686 = vrcp.pop %v666
      %v687 = vmul.f32 1.0, %v686
      %v688 = vrcp.pop %v669
      %v689 = vmul.f32 1.0, %v688
      %v690 = vrcp.pop %v672
      %v691 = vmul.f32 1.0, %v690
      %v692 = vrcp.pop %v675
      %v693 = vmul.f32 1.0, %v692
      %v694 = vrcp.pop %v678
      %v695 = vmul.f32 1.0, %v694
      %v696 = vrcp.pop %v681
      %v697 = vmul.f32 1.0, %v696
      %v698 = vmul.f32 %v627, %v683
      %v699 = vmul.f32 %v629, %v683
      %v700 = vmul.f32 %v631, %v685
      %v701 = vmul.f32 %v633, %v685
      %v702 = vmul.f32 %v635, %v687
      %v703 = vmul.f32 %v637, %v687
      %v704 = vmul.f32 %v639, %v689
      %v705 = vmul.f32 %v641, %v689
      %v706 = vmul.f32 %v643, %v691
      %v707 = vmul.f32 %v645, %v691
      %v708 = vmul.f32 %v647, %v693
      %v709 = vmul.f32 %v649, %v693
      %v710 = vmul.f32 %v651, %v695
      %v711 = vmul.f32 %v653, %v695
      %v712 = vmul.f32 %v655, %v697
      %v713 = vmul.f32 %v657, %v697
      %714 = vmatprep.subr.mxu0 0.0
      %715 = vmatpush1.msra.mxu0 %v431
      %716 = vmatprep.subr.mxu0 0.0
      %717 = vmatpush1.msra.mxu0 %v430
      %718 = vmatprep.subr.mxu0 0.0
      %719 = vmatpush1.msra.mxu0 %v429
      %720 = vmatprep.subr.mxu0 0.0
      %721 = vmatpush1.msra.mxu0 %v428
      %722 = vmatprep.subr.mxu0 0.0
      %723 = vmatpush1.msra.mxu0 %v427
      %724 = vmatprep.subr.mxu0 0.0
      %725 = vmatpush1.msra.mxu0 %v426
      %726 = vmatprep.subr.mxu0 0.0
      %727 = vmatpush1.msra.mxu0 %v425
      %728 = vmatprep.subr.mxu0 0.0
      %729 = vmatpush1.msra.mxu0 %v424
      %730 = vmatprep.subr.mxu0 0.0
      %731 = vmatpush1.msra.mxu0 %v423
      %732 = vmatprep.subr.mxu0 0.0
      %733 = vmatpush1.msra.mxu0 %v422
      %734 = vmatprep.subr.mxu0 0.0
      %735 = vmatpush1.msra.mxu0 %v421
      %736 = vmatprep.subr.mxu0 0.0
      %737 = vmatpush1.msra.mxu0 %v420
      %738 = vmatprep.subr.mxu0 0.0
      %739 = vmatpush1.msra.mxu0 %v419
      %740 = vmatprep.subr.mxu0 0.0
      %741 = vmatpush1.msra.mxu0 %v418
      %742 = vmatprep.subr.mxu0 0.0
      %743 = vmatpush1.msra.mxu0 %v417
      %744 = vmatprep.subr.mxu0 0.0
      %745 = vmatpush1.msra.mxu0 %v416
      %746 = vmatprep.subr.mxu0 0.0
      %747 = vmatpush2.msra.mxu0 %v447
      %748 = vmatprep.subr.mxu0 0.0
      %749 = vmatpush2.msra.mxu0 %v446
      %750 = vmatprep.subr.mxu0 0.0
      %751 = vmatpush2.msra.mxu0 %v445
      %752 = vmatprep.subr.mxu0 0.0
      %753 = vmatpush2.msra.mxu0 %v444
      %754 = vmatprep.subr.mxu0 0.0
      %755 = vmatpush2.msra.mxu0 %v443
      %756 = vmatprep.subr.mxu0 0.0
      %757 = vmatpush2.msra.mxu0 %v442
      %758 = vmatprep.subr.mxu0 0.0
      %759 = vmatpush2.msra.mxu0 %v441
      %760 = vmatprep.subr.mxu0 0.0
      %761 = vmatpush2.msra.mxu0 %v440
      %762 = vmatprep.subr.mxu0 0.0
      %763 = vmatpush2.msra.mxu0 %v439
      %764 = vmatprep.subr.mxu0 0.0
      %765 = vmatpush2.msra.mxu0 %v438
      %766 = vmatprep.subr.mxu0 0.0
      %767 = vmatpush2.msra.mxu0 %v437
      %768 = vmatprep.subr.mxu0 0.0
      %769 = vmatpush2.msra.mxu0 %v436
      %770 = vmatprep.subr.mxu0 0.0
      %771 = vmatpush2.msra.mxu0 %v435
      %772 = vmatprep.subr.mxu0 0.0
      %773 = vmatpush2.msra.mxu0 %v434
      %774 = vmatprep.subr.mxu0 0.0
      %775 = vmatpush2.msra.mxu0 %v433
      %776 = vmatprep.subr.mxu0 0.0
      %777 = vmatpush2.msra.mxu0 %v432
      %778 = vmatprep.mubr.f32.mxu0 %v699
      %779 = vmatmul.mubr.f32.gmra.mxu0 %v698
      %v780 = vpop.f32.mrf.mxu0
      %v781 = vadd.f32 0.0, %v780
      %v782 = vpop.f32.mrf.mxu0
      %783 = vmatprep.mubr.f32.mxu0 %v701
      %784 = vmatmul.mubr.f32.gmra.mxu0 %v700
      %v785 = vpop.f32.mrf.mxu0
      %v786 = vadd.f32 0.0, %v785
      %v787 = vpop.f32.mrf.mxu0
      %788 = vmatprep.mubr.f32.mxu0 %v703
      %789 = vmatmul.mubr.f32.gmra.mxu0 %v702
      %v790 = vpop.f32.mrf.mxu0
      %v791 = vadd.f32 0.0, %v790
      %v792 = vpop.f32.mrf.mxu0
      %793 = vmatprep.mubr.f32.mxu0 %v705
      %794 = vmatmul.mubr.f32.gmra.mxu0 %v704
      %v795 = vpop.f32.mrf.mxu0
      %v796 = vadd.f32 0.0, %v795
      %v797 = vpop.f32.mrf.mxu0
      %798 = vmatprep.mubr.f32.mxu0 %v707
      %799 = vmatmul.mubr.f32.gmra.mxu0 %v706
      %v800 = vpop.f32.mrf.mxu0
      %v801 = vadd.f32 0.0, %v800
      %v802 = vpop.f32.mrf.mxu0
      %803 = vmatprep.mubr.f32.mxu0 %v709
      %804 = vmatmul.mubr.f32.gmra.mxu0 %v708
      %v805 = vpop.f32.mrf.mxu0
      %v806 = vadd.f32 0.0, %v805
      %v807 = vpop.f32.mrf.mxu0
      %808 = vmatprep.mubr.f32.mxu0 %v711
      %809 = vmatmul.mubr.f32.gmra.mxu0 %v710
      %v810 = vpop.f32.mrf.mxu0
      %v811 = vadd.f32 0.0, %v810
      %v812 = vpop.f32.mrf.mxu0
      %813 = vmatprep.mubr.f32.mxu0 %v713
      %814 = vmatmul.mubr.f32.gmra.mxu0 %v712
      %v815 = vpop.f32.mrf.mxu0
      %v816 = vadd.f32 0.0, %v815
      %v817 = vpop.f32.mrf.mxu0
      %818 = vdwg.mxu0
      %819 = vset.pattern.permute.xlu0 1
      %820 = vperm.xlu0 %819, %v448
      %v821 = vpop.permute.xlu0 %820
      %823 = vset.pattern.permute.xlu0 1
      %824 = vperm.xlu0 %823, %v449
      %v825 = vpop.permute.xlu0 %824
      %827 = vset.pattern.permute.xlu0 1
      %828 = vperm.xlu0 %827, %v450
      %v829 = vpop.permute.xlu0 %828
      %831 = vset.pattern.permute.xlu0 1
      %832 = vperm.xlu0 %831, %v451
      %v833 = vpop.permute.xlu0 %832
      %835 = vset.pattern.permute.xlu0 1
      %836 = vperm.xlu0 %835, %v452
      %v837 = vpop.permute.xlu0 %836
      %839 = vset.pattern.permute.xlu0 1
      %840 = vperm.xlu0 %839, %v453
      %v841 = vpop.permute.xlu0 %840
      %843 = vset.pattern.permute.xlu0 1
      %844 = vperm.xlu0 %843, %v454
      %v845 = vpop.permute.xlu0 %844
      %847 = vset.pattern.permute.xlu0 1
      %848 = vperm.xlu0 %847, %v455
      %v849 = vpop.permute.xlu0 %848
      %v851 = vlaneseq
      %v852 = vshrl.u32 %v851, 7
      %v853 = vsub.s32 1, %v852
      %v854 = vrot.slane %v456, %v853
      %v855 = vlaneseq
      %v856 = vshrl.u32 %v855, 7
      %v857 = vsub.s32 1, %v856
      %v858 = vrot.slane %v457, %v857
      %v859 = vadd.f32 %v821, %v854
      %v860 = vadd.f32 %v821, %v858
      %v861 = vadd.f32 %v825, %v854
      %v862 = vadd.f32 %v825, %v858
      %v863 = vadd.f32 %v829, %v854
      %v864 = vadd.f32 %v829, %v858
      %v865 = vadd.f32 %v833, %v854
      %v866 = vadd.f32 %v833, %v858
      %v867 = vadd.f32 %v837, %v854
      %v868 = vadd.f32 %v837, %v858
      %v869 = vadd.f32 %v841, %v854
      %v870 = vadd.f32 %v841, %v858
      %v871 = vadd.f32 %v845, %v854
      %v872 = vadd.f32 %v845, %v858
      %v873 = vadd.f32 %v849, %v854
      %v874 = vadd.f32 %v849, %v858
      %vm875 = vcmp.gt.f32.partialorder %v859, 0.0
      %vm876 = vcmp.gt.f32.partialorder %v860, 0.0
      %vm877 = vcmp.gt.f32.partialorder %v861, 0.0
      %vm878 = vcmp.gt.f32.partialorder %v862, 0.0
      %vm879 = vcmp.gt.f32.partialorder %v863, 0.0
      %vm880 = vcmp.gt.f32.partialorder %v864, 0.0
      %vm881 = vcmp.gt.f32.partialorder %v865, 0.0
      %vm882 = vcmp.gt.f32.partialorder %v866, 0.0
      %vm883 = vcmp.gt.f32.partialorder %v867, 0.0
      %vm884 = vcmp.gt.f32.partialorder %v868, 0.0
      %vm885 = vcmp.gt.f32.partialorder %v869, 0.0
      %vm886 = vcmp.gt.f32.partialorder %v870, 0.0
      %vm887 = vcmp.gt.f32.partialorder %v871, 0.0
      %vm888 = vcmp.gt.f32.partialorder %v872, 0.0
      %vm889 = vcmp.gt.f32.partialorder %v873, 0.0
      %vm890 = vcmp.gt.f32.partialorder %v874, 0.0
      %v891 = vmul.f32 %v859, 0.2
      %v892 = vmul.f32 %v860, 0.2
      %v893 = vmul.f32 %v861, 0.2
      %v894 = vmul.f32 %v862, 0.2
      %v895 = vmul.f32 %v863, 0.2
      %v896 = vmul.f32 %v864, 0.2
      %v897 = vmul.f32 %v865, 0.2
      %v898 = vmul.f32 %v866, 0.2
      %v899 = vmul.f32 %v867, 0.2
      %v900 = vmul.f32 %v868, 0.2
      %v901 = vmul.f32 %v869, 0.2
      %v902 = vmul.f32 %v870, 0.2
      %v903 = vmul.f32 %v871, 0.2
      %v904 = vmul.f32 %v872, 0.2
      %v905 = vmul.f32 %v873, 0.2
      %v906 = vmul.f32 %v874, 0.2
      %v907 = vsel %vm875, %v859, %v891
      %v908 = vsel %vm876, %v860, %v892
      %v909 = vsel %vm877, %v861, %v893
      %v910 = vsel %vm878, %v862, %v894
      %v911 = vsel %vm879, %v863, %v895
      %v912 = vsel %vm880, %v864, %v896
      %v913 = vsel %vm881, %v865, %v897
      %v914 = vsel %vm882, %v866, %v898
      %v915 = vsel %vm883, %v867, %v899
      %v916 = vsel %vm884, %v868, %v900
      %v917 = vsel %vm885, %v869, %v901
      %v918 = vsel %vm886, %v870, %v902
      %v919 = vsel %vm887, %v871, %v903
      %v920 = vsel %vm888, %v872, %v904
      %v921 = vsel %vm889, %v873, %v905
      %v922 = vsel %vm890, %v874, %v906
      %v923 = vadd.f32 %v907, %v400
      %v924 = vadd.f32 %v908, %v401
      %v925 = vadd.f32 %v909, %v402
      %v926 = vadd.f32 %v910, %v403
      %v927 = vadd.f32 %v911, %v404
      %v928 = vadd.f32 %v912, %v405
      %v929 = vadd.f32 %v913, %v406
      %v930 = vadd.f32 %v914, %v407
      %v931 = vadd.f32 %v915, %v408
      %v932 = vadd.f32 %v916, %v409
      %v933 = vadd.f32 %v917, %v410
      %v934 = vadd.f32 %v918, %v411
      %v935 = vadd.f32 %v919, %v412
      %v936 = vadd.f32 %v920, %v413
      %v937 = vadd.f32 %v921, %v414
      %v938 = vadd.f32 %v922, %v415
      %v939 = vmax.f32 %v923, %v924
      %940 = vmax.xlane.f32.xlu0 %v939
      %v941 = vpop.xlane.xlu0 %940
      %v942 = vmax.f32 %v925, %v926
      %943 = vmax.xlane.f32.xlu0 %v942
      %v944 = vpop.xlane.xlu0 %943
      %v945 = vmax.f32 %v927, %v928
      %946 = vmax.xlane.f32.xlu0 %v945
      %v947 = vpop.xlane.xlu0 %946
      %v948 = vmax.f32 %v929, %v930
      %949 = vmax.xlane.f32.xlu0 %v948
      %v950 = vpop.xlane.xlu0 %949
      %v951 = vmax.f32 %v931, %v932
      %952 = vmax.xlane.f32.xlu0 %v951
      %v953 = vpop.xlane.xlu0 %952
      %v954 = vmax.f32 %v933, %v934
      %955 = vmax.xlane.f32.xlu0 %v954
      %v956 = vpop.xlane.xlu0 %955
      %v957 = vmax.f32 %v935, %v936
      %958 = vmax.xlane.f32.xlu0 %v957
      %v959 = vpop.xlane.xlu0 %958
      %v960 = vmax.f32 %v937, %v938
      %961 = vmax.xlane.f32.xlu0 %v960
      %v962 = vpop.xlane.xlu0 %961
      %v963 = vsub.f32 %v923, %v941
      %v964 = vsub.f32 %v924, %v941
      %v965 = vsub.f32 %v925, %v944
      %v966 = vsub.f32 %v926, %v944
      %v967 = vsub.f32 %v927, %v947
      %v968 = vsub.f32 %v928, %v947
      %v969 = vsub.f32 %v929, %v950
      %v970 = vsub.f32 %v930, %v950
      %v971 = vsub.f32 %v931, %v953
      %v972 = vsub.f32 %v932, %v953
      %v973 = vsub.f32 %v933, %v956
      %v974 = vsub.f32 %v934, %v956
      %v975 = vsub.f32 %v935, %v959
      %v976 = vsub.f32 %v936, %v959
      %v977 = vsub.f32 %v937, %v962
      %v978 = vsub.f32 %v938, %v962
      %v979 = vmul.f32 %v963, 1.442695
      %v980 = vpow.pop %v979
      %v981 = vmul.f32 %v964, 1.442695
      %v982 = vpow.pop %v981
      %v983 = vmul.f32 %v965, 1.442695
      %v984 = vpow.pop %v983
      %v985 = vmul.f32 %v966, 1.442695
      %v986 = vpow.pop %v985
      %v987 = vmul.f32 %v967, 1.442695
      %v988 = vpow.pop %v987
      %v989 = vmul.f32 %v968, 1.442695
      %v990 = vpow.pop %v989
      %v991 = vmul.f32 %v969, 1.442695
      %v992 = vpow.pop %v991
      %v993 = vmul.f32 %v970, 1.442695
      %v994 = vpow.pop %v993
      %v995 = vmul.f32 %v971, 1.442695
      %v996 = vpow.pop %v995
      %v997 = vmul.f32 %v972, 1.442695
      %v998 = vpow.pop %v997
      %v999 = vmul.f32 %v973, 1.442695
      %v1000 = vpow.pop %v999
      %v1001 = vmul.f32 %v974, 1.442695
      %v1002 = vpow.pop %v1001
      %v1003 = vmul.f32 %v975, 1.442695
      %v1004 = vpow.pop %v1003
      %v1005 = vmul.f32 %v976, 1.442695
      %v1006 = vpow.pop %v1005
      %v1007 = vmul.f32 %v977, 1.442695
      %v1008 = vpow.pop %v1007
      %v1009 = vmul.f32 %v978, 1.442695
      %v1010 = vpow.pop %v1009
      %v1011 = vadd.f32 %v980, %v982
      %1012 = vadd.xlane.f32.xlu0 %v1011
      %v1013 = vpop.xlane.xlu0 %1012
      %v1014 = vadd.f32 %v984, %v986
      %1015 = vadd.xlane.f32.xlu0 %v1014
      %v1016 = vpop.xlane.xlu0 %1015
      %v1017 = vadd.f32 %v988, %v990
      %1018 = vadd.xlane.f32.xlu0 %v1017
      %v1019 = vpop.xlane.xlu0 %1018
      %v1020 = vadd.f32 %v992, %v994
      %1021 = vadd.xlane.f32.xlu0 %v1020
      %v1022 = vpop.xlane.xlu0 %1021
      %v1023 = vadd.f32 %v996, %v998
      %1024 = vadd.xlane.f32.xlu0 %v1023
      %v1025 = vpop.xlane.xlu0 %1024
      %v1026 = vadd.f32 %v1000, %v1002
      %1027 = vadd.xlane.f32.xlu0 %v1026
      %v1028 = vpop.xlane.xlu0 %1027
      %v1029 = vadd.f32 %v1004, %v1006
      %1030 = vadd.xlane.f32.xlu0 %v1029
      %v1031 = vpop.xlane.xlu0 %1030
      %v1032 = vadd.f32 %v1008, %v1010
      %1033 = vadd.xlane.f32.xlu0 %v1032
      %v1034 = vpop.xlane.xlu0 %1033
      %v1035 = vrcp.pop %v1013
      %v1036 = vmul.f32 1.0, %v1035
      %v1037 = vrcp.pop %v1016
      %v1038 = vmul.f32 1.0, %v1037
      %v1039 = vrcp.pop %v1019
      %v1040 = vmul.f32 1.0, %v1039
      %v1041 = vrcp.pop %v1022
      %v1042 = vmul.f32 1.0, %v1041
      %v1043 = vrcp.pop %v1025
      %v1044 = vmul.f32 1.0, %v1043
      %v1045 = vrcp.pop %v1028
      %v1046 = vmul.f32 1.0, %v1045
      %v1047 = vrcp.pop %v1031
      %v1048 = vmul.f32 1.0, %v1047
      %v1049 = vrcp.pop %v1034
      %v1050 = vmul.f32 1.0, %v1049
      %v1051 = vmul.f32 %v980, %v1036
      %v1052 = vmul.f32 %v982, %v1036
      %v1053 = vmul.f32 %v984, %v1038
      %v1054 = vmul.f32 %v986, %v1038
      %v1055 = vmul.f32 %v988, %v1040
      %v1056 = vmul.f32 %v990, %v1040
      %v1057 = vmul.f32 %v992, %v1042
      %v1058 = vmul.f32 %v994, %v1042
      %v1059 = vmul.f32 %v996, %v1044
      %v1060 = vmul.f32 %v998, %v1044
      %v1061 = vmul.f32 %v1000, %v1046
      %v1062 = vmul.f32 %v1002, %v1046
      %v1063 = vmul.f32 %v1004, %v1048
      %v1064 = vmul.f32 %v1006, %v1048
      %v1065 = vmul.f32 %v1008, %v1050
      %v1066 = vmul.f32 %v1010, %v1050
      %1099 = vrot.lane.b32.xlu0 %v416, 120
      %v1100 = vpop.permute.xlu0 %1099
      %1101 = vrot.lane.b32.xlu0 %v417, 120
      %v1102 = vpop.permute.xlu0 %1101
      %1103 = vrot.lane.b32.xlu0 %v418, 120
      %v1104 = vpop.permute.xlu0 %1103
      %1105 = vrot.lane.b32.xlu0 %v419, 120
      %v1106 = vpop.permute.xlu0 %1105
      %1107 = vrot.lane.b32.xlu0 %v420, 120
      %v1108 = vpop.permute.xlu0 %1107
      %1109 = vrot.lane.b32.xlu0 %v421, 120
      %v1110 = vpop.permute.xlu0 %1109
      %1111 = vrot.lane.b32.xlu0 %v422, 120
      %v1112 = vpop.permute.xlu0 %1111
      %1113 = vrot.lane.b32.xlu0 %v423, 120
      %v1114 = vpop.permute.xlu0 %1113
      %1115 = vrot.lane.b32.xlu0 %v424, 120
      %v1116 = vpop.permute.xlu0 %1115
      %1117 = vrot.lane.b32.xlu0 %v425, 120
      %v1118 = vpop.permute.xlu0 %1117
      %1119 = vrot.lane.b32.xlu0 %v426, 120
      %v1120 = vpop.permute.xlu0 %1119
      %1121 = vrot.lane.b32.xlu0 %v427, 120
      %v1122 = vpop.permute.xlu0 %1121
      %1123 = vrot.lane.b32.xlu0 %v428, 120
      %v1124 = vpop.permute.xlu0 %1123
      %1125 = vrot.lane.b32.xlu0 %v429, 120
      %v1126 = vpop.permute.xlu0 %1125
      %1127 = vrot.lane.b32.xlu0 %v430, 120
      %v1128 = vpop.permute.xlu0 %1127
      %1129 = vrot.lane.b32.xlu0 %v431, 120
      %v1130 = vpop.permute.xlu0 %1129
      %1131 = vrot.lane.b32.xlu0 %v432, 120
      %v1132 = vpop.permute.xlu0 %1131
      %1133 = vrot.lane.b32.xlu0 %v433, 120
      %v1134 = vpop.permute.xlu0 %1133
      %1135 = vrot.lane.b32.xlu0 %v434, 120
      %v1136 = vpop.permute.xlu0 %1135
      %1137 = vrot.lane.b32.xlu0 %v435, 120
      %v1138 = vpop.permute.xlu0 %1137
      %1139 = vrot.lane.b32.xlu0 %v436, 120
      %v1140 = vpop.permute.xlu0 %1139
      %1141 = vrot.lane.b32.xlu0 %v437, 120
      %v1142 = vpop.permute.xlu0 %1141
      %1143 = vrot.lane.b32.xlu0 %v438, 120
      %v1144 = vpop.permute.xlu0 %1143
      %1145 = vrot.lane.b32.xlu0 %v439, 120
      %v1146 = vpop.permute.xlu0 %1145
      %1147 = vrot.lane.b32.xlu0 %v440, 120
      %v1148 = vpop.permute.xlu0 %1147
      %1149 = vrot.lane.b32.xlu0 %v441, 120
      %v1150 = vpop.permute.xlu0 %1149
      %1151 = vrot.lane.b32.xlu0 %v442, 120
      %v1152 = vpop.permute.xlu0 %1151
      %1153 = vrot.lane.b32.xlu0 %v443, 120
      %v1154 = vpop.permute.xlu0 %1153
      %1155 = vrot.lane.b32.xlu0 %v444, 120
      %v1156 = vpop.permute.xlu0 %1155
      %1157 = vrot.lane.b32.xlu0 %v445, 120
      %v1158 = vpop.permute.xlu0 %1157
      %1159 = vrot.lane.b32.xlu0 %v446, 120
      %v1160 = vpop.permute.xlu0 %1159
      %1161 = vrot.lane.b32.xlu0 %v447, 120
      %v1162 = vpop.permute.xlu0 %1161
      %1195 = vmatprep.subr.mxu0 0.0
      %1196 = vmatpush1.msra.mxu0 %v1130
      %1197 = vmatprep.subr.mxu0 0.0
      %1198 = vmatpush1.msra.mxu0 %v1128
      %1199 = vmatprep.subr.mxu0 0.0
      %1200 = vmatpush1.msra.mxu0 %v1126
      %1201 = vmatprep.subr.mxu0 0.0
      %1202 = vmatpush1.msra.mxu0 %v1124
      %1203 = vmatprep.subr.mxu0 0.0
      %1204 = vmatpush1.msra.mxu0 %v1122
      %1205 = vmatprep.subr.mxu0 0.0
      %1206 = vmatpush1.msra.mxu0 %v1120
      %1207 = vmatprep.subr.mxu0 0.0
      %1208 = vmatpush1.msra.mxu0 %v1118
      %1209 = vmatprep.subr.mxu0 0.0
      %1210 = vmatpush1.msra.mxu0 %v1116
      %1211 = vmatprep.subr.mxu0 0.0
      %1212 = vmatpush1.msra.mxu0 %v1114
      %1213 = vmatprep.subr.mxu0 0.0
      %1214 = vmatpush1.msra.mxu0 %v1112
      %1215 = vmatprep.subr.mxu0 0.0
      %1216 = vmatpush1.msra.mxu0 %v1110
      %1217 = vmatprep.subr.mxu0 0.0
      %1218 = vmatpush1.msra.mxu0 %v1108
      %1219 = vmatprep.subr.mxu0 0.0
      %1220 = vmatpush1.msra.mxu0 %v1106
      %1221 = vmatprep.subr.mxu0 0.0
      %1222 = vmatpush1.msra.mxu0 %v1104
      %1223 = vmatprep.subr.mxu0 0.0
      %1224 = vmatpush1.msra.mxu0 %v1102
      %1225 = vmatprep.subr.mxu0 0.0
      %1226 = vmatpush1.msra.mxu0 %v1100
      %1227 = vmatprep.subr.mxu0 0.0
      %1228 = vmatpush2.msra.mxu0 %v1162
      %1229 = vmatprep.subr.mxu0 0.0
      %1230 = vmatpush2.msra.mxu0 %v1160
      %1231 = vmatprep.subr.mxu0 0.0
      %1232 = vmatpush2.msra.mxu0 %v1158
      %1233 = vmatprep.subr.mxu0 0.0
      %1234 = vmatpush2.msra.mxu0 %v1156
      %1235 = vmatprep.subr.mxu0 0.0
      %1236 = vmatpush2.msra.mxu0 %v1154
      %1237 = vmatprep.subr.mxu0 0.0
      %1238 = vmatpush2.msra.mxu0 %v1152
      %1239 = vmatprep.subr.mxu0 0.0
      %1240 = vmatpush2.msra.mxu0 %v1150
      %1241 = vmatprep.subr.mxu0 0.0
      %1242 = vmatpush2.msra.mxu0 %v1148
      %1243 = vmatprep.subr.mxu0 0.0
      %1244 = vmatpush2.msra.mxu0 %v1146
      %1245 = vmatprep.subr.mxu0 0.0
      %1246 = vmatpush2.msra.mxu0 %v1144
      %1247 = vmatprep.subr.mxu0 0.0
      %1248 = vmatpush2.msra.mxu0 %v1142
      %1249 = vmatprep.subr.mxu0 0.0
      %1250 = vmatpush2.msra.mxu0 %v1140
      %1251 = vmatprep.subr.mxu0 0.0
      %1252 = vmatpush2.msra.mxu0 %v1138
      %1253 = vmatprep.subr.mxu0 0.0
      %1254 = vmatpush2.msra.mxu0 %v1136
      %1255 = vmatprep.subr.mxu0 0.0
      %1256 = vmatpush2.msra.mxu0 %v1134
      %1257 = vmatprep.subr.mxu0 0.0
      %1258 = vmatpush2.msra.mxu0 %v1132
      %1259 = vmatprep.mubr.f32.mxu0 %v1052
      %1260 = vmatmul.mubr.f32.gmra.mxu0 %v1051
      %v1261 = vpop.f32.mrf.mxu0
      %v1262 = vadd.f32 0.0, %v1261
      %v1263 = vpop.f32.mrf.mxu0
      %1264 = vmatprep.mubr.f32.mxu0 %v1054
      %1265 = vmatmul.mubr.f32.gmra.mxu0 %v1053
      %v1266 = vpop.f32.mrf.mxu0
      %v1267 = vadd.f32 0.0, %v1266
      %v1268 = vpop.f32.mrf.mxu0
      %1269 = vmatprep.mubr.f32.mxu0 %v1056
      %1270 = vmatmul.mubr.f32.gmra.mxu0 %v1055
      %v1271 = vpop.f32.mrf.mxu0
      %v1272 = vadd.f32 0.0, %v1271
      %v1273 = vpop.f32.mrf.mxu0
      %1274 = vmatprep.mubr.f32.mxu0 %v1058
      %1275 = vmatmul.mubr.f32.gmra.mxu0 %v1057
      %v1276 = vpop.f32.mrf.mxu0
      %v1277 = vadd.f32 0.0, %v1276
      %v1278 = vpop.f32.mrf.mxu0
      %1279 = vmatprep.mubr.f32.mxu0 %v1060
      %1280 = vmatmul.mubr.f32.gmra.mxu0 %v1059
      %v1281 = vpop.f32.mrf.mxu0
      %v1282 = vadd.f32 0.0, %v1281
      %v1283 = vpop.f32.mrf.mxu0
      %1284 = vmatprep.mubr.f32.mxu0 %v1062
      %1285 = vmatmul.mubr.f32.gmra.mxu0 %v1061
      %v1286 = vpop.f32.mrf.mxu0
      %v1287 = vadd.f32 0.0, %v1286
      %v1288 = vpop.f32.mrf.mxu0
      %1289 = vmatprep.mubr.f32.mxu0 %v1064
      %1290 = vmatmul.mubr.f32.gmra.mxu0 %v1063
      %v1291 = vpop.f32.mrf.mxu0
      %v1292 = vadd.f32 0.0, %v1291
      %v1293 = vpop.f32.mrf.mxu0
      %1294 = vmatprep.mubr.f32.mxu0 %v1066
      %1295 = vmatmul.mubr.f32.gmra.mxu0 %v1065
      %v1296 = vpop.f32.mrf.mxu0
      %v1297 = vadd.f32 0.0, %v1296
      %v1298 = vpop.f32.mrf.mxu0
      %1299 = vdwg.mxu0
      %1300 = vset.pattern.permute.xlu0 2
      %1301 = vperm.xlu0 %1300, %v448
      %v1302 = vpop.permute.xlu0 %1301
      %1304 = vset.pattern.permute.xlu0 2
      %1305 = vperm.xlu0 %1304, %v449
      %v1306 = vpop.permute.xlu0 %1305
      %1308 = vset.pattern.permute.xlu0 2
      %1309 = vperm.xlu0 %1308, %v450
      %v1310 = vpop.permute.xlu0 %1309
      %1312 = vset.pattern.permute.xlu0 2
      %1313 = vperm.xlu0 %1312, %v451
      %v1314 = vpop.permute.xlu0 %1313
      %1316 = vset.pattern.permute.xlu0 2
      %1317 = vperm.xlu0 %1316, %v452
      %v1318 = vpop.permute.xlu0 %1317
      %1320 = vset.pattern.permute.xlu0 2
      %1321 = vperm.xlu0 %1320, %v453
      %v1322 = vpop.permute.xlu0 %1321
      %1324 = vset.pattern.permute.xlu0 2
      %1325 = vperm.xlu0 %1324, %v454
      %v1326 = vpop.permute.xlu0 %1325
      %1328 = vset.pattern.permute.xlu0 2
      %1329 = vperm.xlu0 %1328, %v455
      %v1330 = vpop.permute.xlu0 %1329
      %v1332 = vlaneseq
      %v1333 = vshrl.u32 %v1332, 7
      %v1334 = vsub.s32 2, %v1333
      %v1335 = vrot.slane %v456, %v1334
      %v1336 = vlaneseq
      %v1337 = vshrl.u32 %v1336, 7
      %v1338 = vsub.s32 2, %v1337
      %v1339 = vrot.slane %v457, %v1338
      %v1340 = vadd.f32 %v1302, %v1335
      %v1341 = vadd.f32 %v1302, %v1339
      %v1342 = vadd.f32 %v1306, %v1335
      %v1343 = vadd.f32 %v1306, %v1339
      %v1344 = vadd.f32 %v1310, %v1335
      %v1345 = vadd.f32 %v1310, %v1339
      %v1346 = vadd.f32 %v1314, %v1335
      %v1347 = vadd.f32 %v1314, %v1339
      %v1348 = vadd.f32 %v1318, %v1335
      %v1349 = vadd.f32 %v1318, %v1339
      %v1350 = vadd.f32 %v1322, %v1335
      %v1351 = vadd.f32 %v1322, %v1339
      %v1352 = vadd.f32 %v1326, %v1335
      %v1353 = vadd.f32 %v1326, %v1339
      %v1354 = vadd.f32 %v1330, %v1335
      %v1355 = vadd.f32 %v1330, %v1339
      %vm1356 = vcmp.gt.f32.partialorder %v1340, 0.0
      %vm1357 = vcmp.gt.f32.partialorder %v1341, 0.0
      %vm1358 = vcmp.gt.f32.partialorder %v1342, 0.0
      %vm1359 = vcmp.gt.f32.partialorder %v1343, 0.0
      %vm1360 = vcmp.gt.f32.partialorder %v1344, 0.0
      %vm1361 = vcmp.gt.f32.partialorder %v1345, 0.0
      %vm1362 = vcmp.gt.f32.partialorder %v1346, 0.0
      %vm1363 = vcmp.gt.f32.partialorder %v1347, 0.0
      %vm1364 = vcmp.gt.f32.partialorder %v1348, 0.0
      %vm1365 = vcmp.gt.f32.partialorder %v1349, 0.0
      %vm1366 = vcmp.gt.f32.partialorder %v1350, 0.0
      %vm1367 = vcmp.gt.f32.partialorder %v1351, 0.0
      %vm1368 = vcmp.gt.f32.partialorder %v1352, 0.0
      %vm1369 = vcmp.gt.f32.partialorder %v1353, 0.0
      %vm1370 = vcmp.gt.f32.partialorder %v1354, 0.0
      %vm1371 = vcmp.gt.f32.partialorder %v1355, 0.0
      %v1372 = vmul.f32 %v1340, 0.2
      %v1373 = vmul.f32 %v1341, 0.2
      %v1374 = vmul.f32 %v1342, 0.2
      %v1375 = vmul.f32 %v1343, 0.2
      %v1376 = vmul.f32 %v1344, 0.2
      %v1377 = vmul.f32 %v1345, 0.2
      %v1378 = vmul.f32 %v1346, 0.2
      %v1379 = vmul.f32 %v1347, 0.2
      %v1380 = vmul.f32 %v1348, 0.2
      %v1381 = vmul.f32 %v1349, 0.2
      %v1382 = vmul.f32 %v1350, 0.2
      %v1383 = vmul.f32 %v1351, 0.2
      %v1384 = vmul.f32 %v1352, 0.2
      %v1385 = vmul.f32 %v1353, 0.2
      %v1386 = vmul.f32 %v1354, 0.2
      %v1387 = vmul.f32 %v1355, 0.2
      %v1388 = vsel %vm1356, %v1340, %v1372
      %v1389 = vsel %vm1357, %v1341, %v1373
      %v1390 = vsel %vm1358, %v1342, %v1374
      %v1391 = vsel %vm1359, %v1343, %v1375
      %v1392 = vsel %vm1360, %v1344, %v1376
      %v1393 = vsel %vm1361, %v1345, %v1377
      %v1394 = vsel %vm1362, %v1346, %v1378
      %v1395 = vsel %vm1363, %v1347, %v1379
      %v1396 = vsel %vm1364, %v1348, %v1380
      %v1397 = vsel %vm1365, %v1349, %v1381
      %v1398 = vsel %vm1366, %v1350, %v1382
      %v1399 = vsel %vm1367, %v1351, %v1383
      %v1400 = vsel %vm1368, %v1352, %v1384
      %v1401 = vsel %vm1369, %v1353, %v1385
      %v1402 = vsel %vm1370, %v1354, %v1386
      %v1403 = vsel %vm1371, %v1355, %v1387
      %v1404 = vadd.f32 %v1388, %v400
      %v1405 = vadd.f32 %v1389, %v401
      %v1406 = vadd.f32 %v1390, %v402
      %v1407 = vadd.f32 %v1391, %v403
      %v1408 = vadd.f32 %v1392, %v404
      %v1409 = vadd.f32 %v1393, %v405
      %v1410 = vadd.f32 %v1394, %v406
      %v1411 = vadd.f32 %v1395, %v407
      %v1412 = vadd.f32 %v1396, %v408
      %v1413 = vadd.f32 %v1397, %v409
      %v1414 = vadd.f32 %v1398, %v410
      %v1415 = vadd.f32 %v1399, %v411
      %v1416 = vadd.f32 %v1400, %v412
      %v1417 = vadd.f32 %v1401, %v413
      %v1418 = vadd.f32 %v1402, %v414
      %v1419 = vadd.f32 %v1403, %v415
      %v1420 = vmax.f32 %v1404, %v1405
      %1421 = vmax.xlane.f32.xlu0 %v1420
      %v1422 = vpop.xlane.xlu0 %1421
      %v1423 = vmax.f32 %v1406, %v1407
      %1424 = vmax.xlane.f32.xlu0 %v1423
      %v1425 = vpop.xlane.xlu0 %1424
      %v1426 = vmax.f32 %v1408, %v1409
      %1427 = vmax.xlane.f32.xlu0 %v1426
      %v1428 = vpop.xlane.xlu0 %1427
      %v1429 = vmax.f32 %v1410, %v1411
      %1430 = vmax.xlane.f32.xlu0 %v1429
      %v1431 = vpop.xlane.xlu0 %1430
      %v1432 = vmax.f32 %v1412, %v1413
      %1433 = vmax.xlane.f32.xlu0 %v1432
      %v1434 = vpop.xlane.xlu0 %1433
      %v1435 = vmax.f32 %v1414, %v1415
      %1436 = vmax.xlane.f32.xlu0 %v1435
      %v1437 = vpop.xlane.xlu0 %1436
      %v1438 = vmax.f32 %v1416, %v1417
      %1439 = vmax.xlane.f32.xlu0 %v1438
      %v1440 = vpop.xlane.xlu0 %1439
      %v1441 = vmax.f32 %v1418, %v1419
      %1442 = vmax.xlane.f32.xlu0 %v1441
      %v1443 = vpop.xlane.xlu0 %1442
      %v1444 = vsub.f32 %v1404, %v1422
      %v1445 = vsub.f32 %v1405, %v1422
      %v1446 = vsub.f32 %v1406, %v1425
      %v1447 = vsub.f32 %v1407, %v1425
      %v1448 = vsub.f32 %v1408, %v1428
      %v1449 = vsub.f32 %v1409, %v1428
      %v1450 = vsub.f32 %v1410, %v1431
      %v1451 = vsub.f32 %v1411, %v1431
      %v1452 = vsub.f32 %v1412, %v1434
      %v1453 = vsub.f32 %v1413, %v1434
      %v1454 = vsub.f32 %v1414, %v1437
      %v1455 = vsub.f32 %v1415, %v1437
      %v1456 = vsub.f32 %v1416, %v1440
      %v1457 = vsub.f32 %v1417, %v1440
      %v1458 = vsub.f32 %v1418, %v1443
      %v1459 = vsub.f32 %v1419, %v1443
      %v1460 = vmul.f32 %v1444, 1.442695
      %v1461 = vpow.pop %v1460
      %v1462 = vmul.f32 %v1445, 1.442695
      %v1463 = vpow.pop %v1462
      %v1464 = vmul.f32 %v1446, 1.442695
      %v1465 = vpow.pop %v1464
      %v1466 = vmul.f32 %v1447, 1.442695
      %v1467 = vpow.pop %v1466
      %v1468 = vmul.f32 %v1448, 1.442695
      %v1469 = vpow.pop %v1468
      %v1470 = vmul.f32 %v1449, 1.442695
      %v1471 = vpow.pop %v1470
      %v1472 = vmul.f32 %v1450, 1.442695
      %v1473 = vpow.pop %v1472
      %v1474 = vmul.f32 %v1451, 1.442695
      %v1475 = vpow.pop %v1474
      %v1476 = vmul.f32 %v1452, 1.442695
      %v1477 = vpow.pop %v1476
      %v1478 = vmul.f32 %v1453, 1.442695
      %v1479 = vpow.pop %v1478
      %v1480 = vmul.f32 %v1454, 1.442695
      %v1481 = vpow.pop %v1480
      %v1482 = vmul.f32 %v1455, 1.442695
      %v1483 = vpow.pop %v1482
      %v1484 = vmul.f32 %v1456, 1.442695
      %v1485 = vpow.pop %v1484
      %v1486 = vmul.f32 %v1457, 1.442695
      %v1487 = vpow.pop %v1486
      %v1488 = vmul.f32 %v1458, 1.442695
      %v1489 = vpow.pop %v1488
      %v1490 = vmul.f32 %v1459, 1.442695
      %v1491 = vpow.pop %v1490
      %v1492 = vadd.f32 %v1461, %v1463
      %1493 = vadd.xlane.f32.xlu0 %v1492
      %v1494 = vpop.xlane.xlu0 %1493
      %v1495 = vadd.f32 %v1465, %v1467
      %1496 = vadd.xlane.f32.xlu0 %v1495
      %v1497 = vpop.xlane.xlu0 %1496
      %v1498 = vadd.f32 %v1469, %v1471
      %1499 = vadd.xlane.f32.xlu0 %v1498
      %v1500 = vpop.xlane.xlu0 %1499
      %v1501 = vadd.f32 %v1473, %v1475
      %1502 = vadd.xlane.f32.xlu0 %v1501
      %v1503 = vpop.xlane.xlu0 %1502
      %v1504 = vadd.f32 %v1477, %v1479
      %1505 = vadd.xlane.f32.xlu0 %v1504
      %v1506 = vpop.xlane.xlu0 %1505
      %v1507 = vadd.f32 %v1481, %v1483
      %1508 = vadd.xlane.f32.xlu0 %v1507
      %v1509 = vpop.xlane.xlu0 %1508
      %v1510 = vadd.f32 %v1485, %v1487
      %1511 = vadd.xlane.f32.xlu0 %v1510
      %v1512 = vpop.xlane.xlu0 %1511
      %v1513 = vadd.f32 %v1489, %v1491
      %1514 = vadd.xlane.f32.xlu0 %v1513
      %v1515 = vpop.xlane.xlu0 %1514
      %v1516 = vrcp.pop %v1494
      %v1517 = vmul.f32 1.0, %v1516
      %v1518 = vrcp.pop %v1497
      %v1519 = vmul.f32 1.0, %v1518
      %v1520 = vrcp.pop %v1500
      %v1521 = vmul.f32 1.0, %v1520
      %v1522 = vrcp.pop %v1503
      %v1523 = vmul.f32 1.0, %v1522
      %v1524 = vrcp.pop %v1506
      %v1525 = vmul.f32 1.0, %v1524
      %v1526 = vrcp.pop %v1509
      %v1527 = vmul.f32 1.0, %v1526
      %v1528 = vrcp.pop %v1512
      %v1529 = vmul.f32 1.0, %v1528
      %v1530 = vrcp.pop %v1515
      %v1531 = vmul.f32 1.0, %v1530
      %v1532 = vmul.f32 %v1461, %v1517
      %v1533 = vmul.f32 %v1463, %v1517
      %v1534 = vmul.f32 %v1465, %v1519
      %v1535 = vmul.f32 %v1467, %v1519
      %v1536 = vmul.f32 %v1469, %v1521
      %v1537 = vmul.f32 %v1471, %v1521
      %v1538 = vmul.f32 %v1473, %v1523
      %v1539 = vmul.f32 %v1475, %v1523
      %v1540 = vmul.f32 %v1477, %v1525
      %v1541 = vmul.f32 %v1479, %v1525
      %v1542 = vmul.f32 %v1481, %v1527
      %v1543 = vmul.f32 %v1483, %v1527
      %v1544 = vmul.f32 %v1485, %v1529
      %v1545 = vmul.f32 %v1487, %v1529
      %v1546 = vmul.f32 %v1489, %v1531
      %v1547 = vmul.f32 %v1491, %v1531
      %1548 = vrot.lane.b32.xlu0 %v416, 112
      %v1549 = vpop.permute.xlu0 %1548
      %1550 = vrot.lane.b32.xlu0 %v417, 112
      %v1551 = vpop.permute.xlu0 %1550
      %1552 = vrot.lane.b32.xlu0 %v418, 112
      %v1553 = vpop.permute.xlu0 %1552
      %1554 = vrot.lane.b32.xlu0 %v419, 112
      %v1555 = vpop.permute.xlu0 %1554
      %1556 = vrot.lane.b32.xlu0 %v420, 112
      %v1557 = vpop.permute.xlu0 %1556
      %1558 = vrot.lane.b32.xlu0 %v421, 112
      %v1559 = vpop.permute.xlu0 %1558
      %1560 = vrot.lane.b32.xlu0 %v422, 112
      %v1561 = vpop.permute.xlu0 %1560
      %1562 = vrot.lane.b32.xlu0 %v423, 112
      %v1563 = vpop.permute.xlu0 %1562
      %1564 = vrot.lane.b32.xlu0 %v424, 112
      %v1565 = vpop.permute.xlu0 %1564
      %1566 = vrot.lane.b32.xlu0 %v425, 112
      %v1567 = vpop.permute.xlu0 %1566
      %1568 = vrot.lane.b32.xlu0 %v426, 112
      %v1569 = vpop.permute.xlu0 %1568
      %1570 = vrot.lane.b32.xlu0 %v427, 112
      %v1571 = vpop.permute.xlu0 %1570
      %1572 = vrot.lane.b32.xlu0 %v428, 112
      %v1573 = vpop.permute.xlu0 %1572
      %1574 = vrot.lane.b32.xlu0 %v429, 112
      %v1575 = vpop.permute.xlu0 %1574
      %1576 = vrot.lane.b32.xlu0 %v430, 112
      %v1577 = vpop.permute.xlu0 %1576
      %1578 = vrot.lane.b32.xlu0 %v431, 112
      %v1579 = vpop.permute.xlu0 %1578
      %1580 = vrot.lane.b32.xlu0 %v432, 112
      %v1581 = vpop.permute.xlu0 %1580
      %1582 = vrot.lane.b32.xlu0 %v433, 112
      %v1583 = vpop.permute.xlu0 %1582
      %1584 = vrot.lane.b32.xlu0 %v434, 112
      %v1585 = vpop.permute.xlu0 %1584
      %1586 = vrot.lane.b32.xlu0 %v435, 112
      %v1587 = vpop.permute.xlu0 %1586
      %1588 = vrot.lane.b32.xlu0 %v436, 112
      %v1589 = vpop.permute.xlu0 %1588
      %1590 = vrot.lane.b32.xlu0 %v437, 112
      %v1591 = vpop.permute.xlu0 %1590
      %1592 = vrot.lane.b32.xlu0 %v438, 112
      %v1593 = vpop.permute.xlu0 %1592
      %1594 = vrot.lane.b32.xlu0 %v439, 112
      %v1595 = vpop.permute.xlu0 %1594
      %1596 = vrot.lane.b32.xlu0 %v440, 112
      %v1597 = vpop.permute.xlu0 %1596
      %1598 = vrot.lane.b32.xlu0 %v441, 112
      %v1599 = vpop.permute.xlu0 %1598
      %1600 = vrot.lane.b32.xlu0 %v442, 112
      %v1601 = vpop.permute.xlu0 %1600
      %1602 = vrot.lane.b32.xlu0 %v443, 112
      %v1603 = vpop.permute.xlu0 %1602
      %1604 = vrot.lane.b32.xlu0 %v444, 112
      %v1605 = vpop.permute.xlu0 %1604
      %1606 = vrot.lane.b32.xlu0 %v445, 112
      %v1607 = vpop.permute.xlu0 %1606
      %1608 = vrot.lane.b32.xlu0 %v446, 112
      %v1609 = vpop.permute.xlu0 %1608
      %1610 = vrot.lane.b32.xlu0 %v447, 112
      %v1611 = vpop.permute.xlu0 %1610
      %1644 = vmatprep.subr.mxu0 0.0
      %1645 = vmatpush1.msra.mxu0 %v1579
      %1646 = vmatprep.subr.mxu0 0.0
      %1647 = vmatpush1.msra.mxu0 %v1577
      %1648 = vmatprep.subr.mxu0 0.0
      %1649 = vmatpush1.msra.mxu0 %v1575
      %1650 = vmatprep.subr.mxu0 0.0
      %1651 = vmatpush1.msra.mxu0 %v1573
      %1652 = vmatprep.subr.mxu0 0.0
      %1653 = vmatpush1.msra.mxu0 %v1571
      %1654 = vmatprep.subr.mxu0 0.0
      %1655 = vmatpush1.msra.mxu0 %v1569
      %1656 = vmatprep.subr.mxu0 0.0
      %1657 = vmatpush1.msra.mxu0 %v1567
      %1658 = vmatprep.subr.mxu0 0.0
      %1659 = vmatpush1.msra.mxu0 %v1565
      %1660 = vmatprep.subr.mxu0 0.0
      %1661 = vmatpush1.msra.mxu0 %v1563
      %1662 = vmatprep.subr.mxu0 0.0
      %1663 = vmatpush1.msra.mxu0 %v1561
      %1664 = vmatprep.subr.mxu0 0.0
      %1665 = vmatpush1.msra.mxu0 %v1559
      %1666 = vmatprep.subr.mxu0 0.0
      %1667 = vmatpush1.msra.mxu0 %v1557
      %1668 = vmatprep.subr.mxu0 0.0
      %1669 = vmatpush1.msra.mxu0 %v1555
      %1670 = vmatprep.subr.mxu0 0.0
      %1671 = vmatpush1.msra.mxu0 %v1553
      %1672 = vmatprep.subr.mxu0 0.0
      %1673 = vmatpush1.msra.mxu0 %v1551
      %1674 = vmatprep.subr.mxu0 0.0
      %1675 = vmatpush1.msra.mxu0 %v1549
      %1676 = vmatprep.subr.mxu0 0.0
      %1677 = vmatpush2.msra.mxu0 %v1611
      %1678 = vmatprep.subr.mxu0 0.0
      %1679 = vmatpush2.msra.mxu0 %v1609
      %1680 = vmatprep.subr.mxu0 0.0
      %1681 = vmatpush2.msra.mxu0 %v1607
      %1682 = vmatprep.subr.mxu0 0.0
      %1683 = vmatpush2.msra.mxu0 %v1605
      %1684 = vmatprep.subr.mxu0 0.0
      %1685 = vmatpush2.msra.mxu0 %v1603
      %1686 = vmatprep.subr.mxu0 0.0
      %1687 = vmatpush2.msra.mxu0 %v1601
      %1688 = vmatprep.subr.mxu0 0.0
      %1689 = vmatpush2.msra.mxu0 %v1599
      %1690 = vmatprep.subr.mxu0 0.0
      %1691 = vmatpush2.msra.mxu0 %v1597
      %1692 = vmatprep.subr.mxu0 0.0
      %1693 = vmatpush2.msra.mxu0 %v1595
      %1694 = vmatprep.subr.mxu0 0.0
      %1695 = vmatpush2.msra.mxu0 %v1593
      %1696 = vmatprep.subr.mxu0 0.0
      %1697 = vmatpush2.msra.mxu0 %v1591
      %1698 = vmatprep.subr.mxu0 0.0
      %1699 = vmatpush2.msra.mxu0 %v1589
      %1700 = vmatprep.subr.mxu0 0.0
      %1701 = vmatpush2.msra.mxu0 %v1587
      %1702 = vmatprep.subr.mxu0 0.0
      %1703 = vmatpush2.msra.mxu0 %v1585
      %1704 = vmatprep.subr.mxu0 0.0
      %1705 = vmatpush2.msra.mxu0 %v1583
      %1706 = vmatprep.subr.mxu0 0.0
      %1707 = vmatpush2.msra.mxu0 %v1581
      %1708 = vmatprep.mubr.f32.mxu0 %v1533
      %1709 = vmatmul.mubr.f32.gmra.mxu0 %v1532
      %v1710 = vpop.f32.mrf.mxu0
      %v1711 = vadd.f32 0.0, %v1710
      %v1712 = vpop.f32.mrf.mxu0
      %1713 = vmatprep.mubr.f32.mxu0 %v1535
      %1714 = vmatmul.mubr.f32.gmra.mxu0 %v1534
      %v1715 = vpop.f32.mrf.mxu0
      %v1716 = vadd.f32 0.0, %v1715
      %v1717 = vpop.f32.mrf.mxu0
      %1718 = vmatprep.mubr.f32.mxu0 %v1537
      %1719 = vmatmul.mubr.f32.gmra.mxu0 %v1536
      %v1720 = vpop.f32.mrf.mxu0
      %v1721 = vadd.f32 0.0, %v1720
      %v1722 = vpop.f32.mrf.mxu0
      %1723 = vmatprep.mubr.f32.mxu0 %v1539
      %1724 = vmatmul.mubr.f32.gmra.mxu0 %v1538
      %v1725 = vpop.f32.mrf.mxu0
      %v1726 = vadd.f32 0.0, %v1725
      %v1727 = vpop.f32.mrf.mxu0
      %1728 = vmatprep.mubr.f32.mxu0 %v1541
      %1729 = vmatmul.mubr.f32.gmra.mxu0 %v1540
      %v1730 = vpop.f32.mrf.mxu0
      %v1731 = vadd.f32 0.0, %v1730
      %v1732 = vpop.f32.mrf.mxu0
      %1733 = vmatprep.mubr.f32.mxu0 %v1543
      %1734 = vmatmul.mubr.f32.gmra.mxu0 %v1542
      %v1735 = vpop.f32.mrf.mxu0
      %v1736 = vadd.f32 0.0, %v1735
      %v1737 = vpop.f32.mrf.mxu0
      %1738 = vmatprep.mubr.f32.mxu0 %v1545
      %1739 = vmatmul.mubr.f32.gmra.mxu0 %v1544
      %v1740 = vpop.f32.mrf.mxu0
      %v1741 = vadd.f32 0.0, %v1740
      %v1742 = vpop.f32.mrf.mxu0
      %1743 = vmatprep.mubr.f32.mxu0 %v1547
      %1744 = vmatmul.mubr.f32.gmra.mxu0 %v1546
      %v1745 = vpop.f32.mrf.mxu0
      %v1746 = vadd.f32 0.0, %v1745
      %v1747 = vpop.f32.mrf.mxu0
      %1748 = vdwg.mxu0
      %1749 = vset.pattern.permute.xlu0 3
      %1750 = vperm.xlu0 %1749, %v448
      %v1751 = vpop.permute.xlu0 %1750
      %1753 = vset.pattern.permute.xlu0 3
      %1754 = vperm.xlu0 %1753, %v449
      %v1755 = vpop.permute.xlu0 %1754
      %1757 = vset.pattern.permute.xlu0 3
      %1758 = vperm.xlu0 %1757, %v450
      %v1759 = vpop.permute.xlu0 %1758
      %1761 = vset.pattern.permute.xlu0 3
      %1762 = vperm.xlu0 %1761, %v451
      %v1763 = vpop.permute.xlu0 %1762
      %1765 = vset.pattern.permute.xlu0 3
      %1766 = vperm.xlu0 %1765, %v452
      %v1767 = vpop.permute.xlu0 %1766
      %1769 = vset.pattern.permute.xlu0 3
      %1770 = vperm.xlu0 %1769, %v453
      %v1771 = vpop.permute.xlu0 %1770
      %1773 = vset.pattern.permute.xlu0 3
      %1774 = vperm.xlu0 %1773, %v454
      %v1775 = vpop.permute.xlu0 %1774
      %1777 = vset.pattern.permute.xlu0 3
      %1778 = vperm.xlu0 %1777, %v455
      %v1779 = vpop.permute.xlu0 %1778
      %v1781 = vlaneseq
      %v1782 = vshrl.u32 %v1781, 7
      %v1783 = vsub.s32 3, %v1782
      %v1784 = vrot.slane %v456, %v1783
      %v1785 = vlaneseq
      %v1786 = vshrl.u32 %v1785, 7
      %v1787 = vsub.s32 3, %v1786
      %v1788 = vrot.slane %v457, %v1787
      %v1789 = vadd.f32 %v1751, %v1784
      %v1790 = vadd.f32 %v1751, %v1788
      %v1791 = vadd.f32 %v1755, %v1784
      %v1792 = vadd.f32 %v1755, %v1788
      %v1793 = vadd.f32 %v1759, %v1784
      %v1794 = vadd.f32 %v1759, %v1788
      %v1795 = vadd.f32 %v1763, %v1784
      %v1796 = vadd.f32 %v1763, %v1788
      %v1797 = vadd.f32 %v1767, %v1784
      %v1798 = vadd.f32 %v1767, %v1788
      %v1799 = vadd.f32 %v1771, %v1784
      %v1800 = vadd.f32 %v1771, %v1788
      %v1801 = vadd.f32 %v1775, %v1784
      %v1802 = vadd.f32 %v1775, %v1788
      %v1803 = vadd.f32 %v1779, %v1784
      %v1804 = vadd.f32 %v1779, %v1788
      %vm1805 = vcmp.gt.f32.partialorder %v1789, 0.0
      %vm1806 = vcmp.gt.f32.partialorder %v1790, 0.0
      %vm1807 = vcmp.gt.f32.partialorder %v1791, 0.0
      %vm1808 = vcmp.gt.f32.partialorder %v1792, 0.0
      %vm1809 = vcmp.gt.f32.partialorder %v1793, 0.0
      %vm1810 = vcmp.gt.f32.partialorder %v1794, 0.0
      %vm1811 = vcmp.gt.f32.partialorder %v1795, 0.0
      %vm1812 = vcmp.gt.f32.partialorder %v1796, 0.0
      %vm1813 = vcmp.gt.f32.partialorder %v1797, 0.0
      %vm1814 = vcmp.gt.f32.partialorder %v1798, 0.0
      %vm1815 = vcmp.gt.f32.partialorder %v1799, 0.0
      %vm1816 = vcmp.gt.f32.partialorder %v1800, 0.0
      %vm1817 = vcmp.gt.f32.partialorder %v1801, 0.0
      %vm1818 = vcmp.gt.f32.partialorder %v1802, 0.0
      %vm1819 = vcmp.gt.f32.partialorder %v1803, 0.0
      %vm1820 = vcmp.gt.f32.partialorder %v1804, 0.0
      %v1821 = vmul.f32 %v1789, 0.2
      %v1822 = vmul.f32 %v1790, 0.2
      %v1823 = vmul.f32 %v1791, 0.2
      %v1824 = vmul.f32 %v1792, 0.2
      %v1825 = vmul.f32 %v1793, 0.2
      %v1826 = vmul.f32 %v1794, 0.2
      %v1827 = vmul.f32 %v1795, 0.2
      %v1828 = vmul.f32 %v1796, 0.2
      %v1829 = vmul.f32 %v1797, 0.2
      %v1830 = vmul.f32 %v1798, 0.2
      %v1831 = vmul.f32 %v1799, 0.2
      %v1832 = vmul.f32 %v1800, 0.2
      %v1833 = vmul.f32 %v1801, 0.2
      %v1834 = vmul.f32 %v1802, 0.2
      %v1835 = vmul.f32 %v1803, 0.2
      %v1836 = vmul.f32 %v1804, 0.2
      %v1837 = vsel %vm1805, %v1789, %v1821
      %v1838 = vsel %vm1806, %v1790, %v1822
      %v1839 = vsel %vm1807, %v1791, %v1823
      %v1840 = vsel %vm1808, %v1792, %v1824
      %v1841 = vsel %vm1809, %v1793, %v1825
      %v1842 = vsel %vm1810, %v1794, %v1826
      %v1843 = vsel %vm1811, %v1795, %v1827
      %v1844 = vsel %vm1812, %v1796, %v1828
      %v1845 = vsel %vm1813, %v1797, %v1829
      %v1846 = vsel %vm1814, %v1798, %v1830
      %v1847 = vsel %vm1815, %v1799, %v1831
      %v1848 = vsel %vm1816, %v1800, %v1832
      %v1849 = vsel %vm1817, %v1801, %v1833
      %v1850 = vsel %vm1818, %v1802, %v1834
      %v1851 = vsel %vm1819, %v1803, %v1835
      %v1852 = vsel %vm1820, %v1804, %v1836
      %v1853 = vadd.f32 %v1837, %v400
      %v1854 = vadd.f32 %v1838, %v401
      %v1855 = vadd.f32 %v1839, %v402
      %v1856 = vadd.f32 %v1840, %v403
      %v1857 = vadd.f32 %v1841, %v404
      %v1858 = vadd.f32 %v1842, %v405
      %v1859 = vadd.f32 %v1843, %v406
      %v1860 = vadd.f32 %v1844, %v407
      %v1861 = vadd.f32 %v1845, %v408
      %v1862 = vadd.f32 %v1846, %v409
      %v1863 = vadd.f32 %v1847, %v410
      %v1864 = vadd.f32 %v1848, %v411
      %v1865 = vadd.f32 %v1849, %v412
      %v1866 = vadd.f32 %v1850, %v413
      %v1867 = vadd.f32 %v1851, %v414
      %v1868 = vadd.f32 %v1852, %v415
      %v1869 = vmax.f32 %v1853, %v1854
      %1870 = vmax.xlane.f32.xlu0 %v1869
      %v1871 = vpop.xlane.xlu0 %1870
      %v1872 = vmax.f32 %v1855, %v1856
      %1873 = vmax.xlane.f32.xlu0 %v1872
      %v1874 = vpop.xlane.xlu0 %1873
      %v1875 = vmax.f32 %v1857, %v1858
      %1876 = vmax.xlane.f32.xlu0 %v1875
      %v1877 = vpop.xlane.xlu0 %1876
      %v1878 = vmax.f32 %v1859, %v1860
      %1879 = vmax.xlane.f32.xlu0 %v1878
      %v1880 = vpop.xlane.xlu0 %1879
      %v1881 = vmax.f32 %v1861, %v1862
      %1882 = vmax.xlane.f32.xlu0 %v1881
      %v1883 = vpop.xlane.xlu0 %1882
      %v1884 = vmax.f32 %v1863, %v1864
      %1885 = vmax.xlane.f32.xlu0 %v1884
      %v1886 = vpop.xlane.xlu0 %1885
      %v1887 = vmax.f32 %v1865, %v1866
      %1888 = vmax.xlane.f32.xlu0 %v1887
      %v1889 = vpop.xlane.xlu0 %1888
      %v1890 = vmax.f32 %v1867, %v1868
      %1891 = vmax.xlane.f32.xlu0 %v1890
      %v1892 = vpop.xlane.xlu0 %1891
      %v1893 = vsub.f32 %v1853, %v1871
      %v1894 = vsub.f32 %v1854, %v1871
      %v1895 = vsub.f32 %v1855, %v1874
      %v1896 = vsub.f32 %v1856, %v1874
      %v1897 = vsub.f32 %v1857, %v1877
      %v1898 = vsub.f32 %v1858, %v1877
      %v1899 = vsub.f32 %v1859, %v1880
      %v1900 = vsub.f32 %v1860, %v1880
      %v1901 = vsub.f32 %v1861, %v1883
      %v1902 = vsub.f32 %v1862, %v1883
      %v1903 = vsub.f32 %v1863, %v1886
      %v1904 = vsub.f32 %v1864, %v1886
      %v1905 = vsub.f32 %v1865, %v1889
      %v1906 = vsub.f32 %v1866, %v1889
      %v1907 = vsub.f32 %v1867, %v1892
      %v1908 = vsub.f32 %v1868, %v1892
      %v1909 = vmul.f32 %v1893, 1.442695
      %v1910 = vpow.pop %v1909
      %v1911 = vmul.f32 %v1894, 1.442695
      %v1912 = vpow.pop %v1911
      %v1913 = vmul.f32 %v1895, 1.442695
      %v1914 = vpow.pop %v1913
      %v1915 = vmul.f32 %v1896, 1.442695
      %v1916 = vpow.pop %v1915
      %v1917 = vmul.f32 %v1897, 1.442695
      %v1918 = vpow.pop %v1917
      %v1919 = vmul.f32 %v1898, 1.442695
      %v1920 = vpow.pop %v1919
      %v1921 = vmul.f32 %v1899, 1.442695
      %v1922 = vpow.pop %v1921
      %v1923 = vmul.f32 %v1900, 1.442695
      %v1924 = vpow.pop %v1923
      %v1925 = vmul.f32 %v1901, 1.442695
      %v1926 = vpow.pop %v1925
      %v1927 = vmul.f32 %v1902, 1.442695
      %v1928 = vpow.pop %v1927
      %v1929 = vmul.f32 %v1903, 1.442695
      %v1930 = vpow.pop %v1929
      %v1931 = vmul.f32 %v1904, 1.442695
      %v1932 = vpow.pop %v1931
      %v1933 = vmul.f32 %v1905, 1.442695
      %v1934 = vpow.pop %v1933
      %v1935 = vmul.f32 %v1906, 1.442695
      %v1936 = vpow.pop %v1935
      %v1937 = vmul.f32 %v1907, 1.442695
      %v1938 = vpow.pop %v1937
      %v1939 = vmul.f32 %v1908, 1.442695
      %v1940 = vpow.pop %v1939
      %v1941 = vadd.f32 %v1910, %v1912
      %1942 = vadd.xlane.f32.xlu0 %v1941
      %v1943 = vpop.xlane.xlu0 %1942
      %v1944 = vadd.f32 %v1914, %v1916
      %1945 = vadd.xlane.f32.xlu0 %v1944
      %v1946 = vpop.xlane.xlu0 %1945
      %v1947 = vadd.f32 %v1918, %v1920
      %1948 = vadd.xlane.f32.xlu0 %v1947
      %v1949 = vpop.xlane.xlu0 %1948
      %v1950 = vadd.f32 %v1922, %v1924
      %1951 = vadd.xlane.f32.xlu0 %v1950
      %v1952 = vpop.xlane.xlu0 %1951
      %v1953 = vadd.f32 %v1926, %v1928
      %1954 = vadd.xlane.f32.xlu0 %v1953
      %v1955 = vpop.xlane.xlu0 %1954
      %v1956 = vadd.f32 %v1930, %v1932
      %1957 = vadd.xlane.f32.xlu0 %v1956
      %v1958 = vpop.xlane.xlu0 %1957
      %v1959 = vadd.f32 %v1934, %v1936
      %1960 = vadd.xlane.f32.xlu0 %v1959
      %v1961 = vpop.xlane.xlu0 %1960
      %v1962 = vadd.f32 %v1938, %v1940
      %1963 = vadd.xlane.f32.xlu0 %v1962
      %v1964 = vpop.xlane.xlu0 %1963
      %v1965 = vrcp.pop %v1943
      %v1966 = vmul.f32 1.0, %v1965
      %v1967 = vrcp.pop %v1946
      %v1968 = vmul.f32 1.0, %v1967
      %v1969 = vrcp.pop %v1949
      %v1970 = vmul.f32 1.0, %v1969
      %v1971 = vrcp.pop %v1952
      %v1972 = vmul.f32 1.0, %v1971
      %v1973 = vrcp.pop %v1955
      %v1974 = vmul.f32 1.0, %v1973
      %v1975 = vrcp.pop %v1958
      %v1976 = vmul.f32 1.0, %v1975
      %v1977 = vrcp.pop %v1961
      %v1978 = vmul.f32 1.0, %v1977
      %v1979 = vrcp.pop %v1964
      %v1980 = vmul.f32 1.0, %v1979
      %v1981 = vmul.f32 %v1910, %v1966
      %v1982 = vmul.f32 %v1912, %v1966
      %v1983 = vmul.f32 %v1914, %v1968
      %v1984 = vmul.f32 %v1916, %v1968
      %v1985 = vmul.f32 %v1918, %v1970
      %v1986 = vmul.f32 %v1920, %v1970
      %v1987 = vmul.f32 %v1922, %v1972
      %v1988 = vmul.f32 %v1924, %v1972
      %v1989 = vmul.f32 %v1926, %v1974
      %v1990 = vmul.f32 %v1928, %v1974
      %v1991 = vmul.f32 %v1930, %v1976
      %v1992 = vmul.f32 %v1932, %v1976
      %v1993 = vmul.f32 %v1934, %v1978
      %v1994 = vmul.f32 %v1936, %v1978
      %v1995 = vmul.f32 %v1938, %v1980
      %v1996 = vmul.f32 %v1940, %v1980
      %1997 = vrot.lane.b32.xlu0 %v416, 104
      %v1998 = vpop.permute.xlu0 %1997
      %1999 = vrot.lane.b32.xlu0 %v417, 104
      %v2000 = vpop.permute.xlu0 %1999
      %2001 = vrot.lane.b32.xlu0 %v418, 104
      %v2002 = vpop.permute.xlu0 %2001
      %2003 = vrot.lane.b32.xlu0 %v419, 104
      %v2004 = vpop.permute.xlu0 %2003
      %2005 = vrot.lane.b32.xlu0 %v420, 104
      %v2006 = vpop.permute.xlu0 %2005
      %2007 = vrot.lane.b32.xlu0 %v421, 104
      %v2008 = vpop.permute.xlu0 %2007
      %2009 = vrot.lane.b32.xlu0 %v422, 104
      %v2010 = vpop.permute.xlu0 %2009
      %2011 = vrot.lane.b32.xlu0 %v423, 104
      %v2012 = vpop.permute.xlu0 %2011
      %2013 = vrot.lane.b32.xlu0 %v424, 104
      %v2014 = vpop.permute.xlu0 %2013
      %2015 = vrot.lane.b32.xlu0 %v425, 104
      %v2016 = vpop.permute.xlu0 %2015
      %2017 = vrot.lane.b32.xlu0 %v426, 104
      %v2018 = vpop.permute.xlu0 %2017
      %2019 = vrot.lane.b32.xlu0 %v427, 104
      %v2020 = vpop.permute.xlu0 %2019
      %2021 = vrot.lane.b32.xlu0 %v428, 104
      %v2022 = vpop.permute.xlu0 %2021
      %2023 = vrot.lane.b32.xlu0 %v429, 104
      %v2024 = vpop.permute.xlu0 %2023
      %2025 = vrot.lane.b32.xlu0 %v430, 104
      %v2026 = vpop.permute.xlu0 %2025
      %2027 = vrot.lane.b32.xlu0 %v431, 104
      %v2028 = vpop.permute.xlu0 %2027
      %2029 = vrot.lane.b32.xlu0 %v432, 104
      %v2030 = vpop.permute.xlu0 %2029
      %2031 = vrot.lane.b32.xlu0 %v433, 104
      %v2032 = vpop.permute.xlu0 %2031
      %2033 = vrot.lane.b32.xlu0 %v434, 104
      %v2034 = vpop.permute.xlu0 %2033
      %2035 = vrot.lane.b32.xlu0 %v435, 104
      %v2036 = vpop.permute.xlu0 %2035
      %2037 = vrot.lane.b32.xlu0 %v436, 104
      %v2038 = vpop.permute.xlu0 %2037
      %2039 = vrot.lane.b32.xlu0 %v437, 104
      %v2040 = vpop.permute.xlu0 %2039
      %2041 = vrot.lane.b32.xlu0 %v438, 104
      %v2042 = vpop.permute.xlu0 %2041
      %2043 = vrot.lane.b32.xlu0 %v439, 104
      %v2044 = vpop.permute.xlu0 %2043
      %2045 = vrot.lane.b32.xlu0 %v440, 104
      %v2046 = vpop.permute.xlu0 %2045
      %2047 = vrot.lane.b32.xlu0 %v441, 104
      %v2048 = vpop.permute.xlu0 %2047
      %2049 = vrot.lane.b32.xlu0 %v442, 104
      %v2050 = vpop.permute.xlu0 %2049
      %2051 = vrot.lane.b32.xlu0 %v443, 104
      %v2052 = vpop.permute.xlu0 %2051
      %2053 = vrot.lane.b32.xlu0 %v444, 104
      %v2054 = vpop.permute.xlu0 %2053
      %2055 = vrot.lane.b32.xlu0 %v445, 104
      %v2056 = vpop.permute.xlu0 %2055
      %2057 = vrot.lane.b32.xlu0 %v446, 104
      %v2058 = vpop.permute.xlu0 %2057
      %2059 = vrot.lane.b32.xlu0 %v447, 104
      %v2060 = vpop.permute.xlu0 %2059
      %2093 = vmatprep.subr.mxu0 0.0
      %2094 = vmatpush1.msra.mxu0 %v2028
      %2095 = vmatprep.subr.mxu0 0.0
      %2096 = vmatpush1.msra.mxu0 %v2026
      %2097 = vmatprep.subr.mxu0 0.0
      %2098 = vmatpush1.msra.mxu0 %v2024
      %2099 = vmatprep.subr.mxu0 0.0
      %2100 = vmatpush1.msra.mxu0 %v2022
      %2101 = vmatprep.subr.mxu0 0.0
      %2102 = vmatpush1.msra.mxu0 %v2020
      %2103 = vmatprep.subr.mxu0 0.0
      %2104 = vmatpush1.msra.mxu0 %v2018
      %2105 = vmatprep.subr.mxu0 0.0
      %2106 = vmatpush1.msra.mxu0 %v2016
      %2107 = vmatprep.subr.mxu0 0.0
      %2108 = vmatpush1.msra.mxu0 %v2014
      %2109 = vmatprep.subr.mxu0 0.0
      %2110 = vmatpush1.msra.mxu0 %v2012
      %2111 = vmatprep.subr.mxu0 0.0
      %2112 = vmatpush1.msra.mxu0 %v2010
      %2113 = vmatprep.subr.mxu0 0.0
      %2114 = vmatpush1.msra.mxu0 %v2008
      %2115 = vmatprep.subr.mxu0 0.0
      %2116 = vmatpush1.msra.mxu0 %v2006
      %2117 = vmatprep.subr.mxu0 0.0
      %2118 = vmatpush1.msra.mxu0 %v2004
      %2119 = vmatprep.subr.mxu0 0.0
      %2120 = vmatpush1.msra.mxu0 %v2002
      %2121 = vmatprep.subr.mxu0 0.0
      %2122 = vmatpush1.msra.mxu0 %v2000
      %2123 = vmatprep.subr.mxu0 0.0
      %2124 = vmatpush1.msra.mxu0 %v1998
      %2125 = vmatprep.subr.mxu0 0.0
      %2126 = vmatpush2.msra.mxu0 %v2060
      %2127 = vmatprep.subr.mxu0 0.0
      %2128 = vmatpush2.msra.mxu0 %v2058
      %2129 = vmatprep.subr.mxu0 0.0
      %2130 = vmatpush2.msra.mxu0 %v2056
      %2131 = vmatprep.subr.mxu0 0.0
      %2132 = vmatpush2.msra.mxu0 %v2054
      %2133 = vmatprep.subr.mxu0 0.0
      %2134 = vmatpush2.msra.mxu0 %v2052
      %2135 = vmatprep.subr.mxu0 0.0
      %2136 = vmatpush2.msra.mxu0 %v2050
      %2137 = vmatprep.subr.mxu0 0.0
      %2138 = vmatpush2.msra.mxu0 %v2048
      %2139 = vmatprep.subr.mxu0 0.0
      %2140 = vmatpush2.msra.mxu0 %v2046
      %2141 = vmatprep.subr.mxu0 0.0
      %2142 = vmatpush2.msra.mxu0 %v2044
      %2143 = vmatprep.subr.mxu0 0.0
      %2144 = vmatpush2.msra.mxu0 %v2042
      %2145 = vmatprep.subr.mxu0 0.0
      %2146 = vmatpush2.msra.mxu0 %v2040
      %2147 = vmatprep.subr.mxu0 0.0
      %2148 = vmatpush2.msra.mxu0 %v2038
      %2149 = vmatprep.subr.mxu0 0.0
      %2150 = vmatpush2.msra.mxu0 %v2036
      %2151 = vmatprep.subr.mxu0 0.0
      %2152 = vmatpush2.msra.mxu0 %v2034
      %2153 = vmatprep.subr.mxu0 0.0
      %2154 = vmatpush2.msra.mxu0 %v2032
      %2155 = vmatprep.subr.mxu0 0.0
      %2156 = vmatpush2.msra.mxu0 %v2030
      %2157 = vmatprep.mubr.f32.mxu0 %v1982
      %2158 = vmatmul.mubr.f32.gmra.mxu0 %v1981
      %v2159 = vpop.f32.mrf.mxu0
      %v2160 = vadd.f32 0.0, %v2159
      %v2161 = vpop.f32.mrf.mxu0
      %2162 = vmatprep.mubr.f32.mxu0 %v1984
      %2163 = vmatmul.mubr.f32.gmra.mxu0 %v1983
      %v2164 = vpop.f32.mrf.mxu0
      %v2165 = vadd.f32 0.0, %v2164
      %v2166 = vpop.f32.mrf.mxu0
      %2167 = vmatprep.mubr.f32.mxu0 %v1986
      %2168 = vmatmul.mubr.f32.gmra.mxu0 %v1985
      %v2169 = vpop.f32.mrf.mxu0
      %v2170 = vadd.f32 0.0, %v2169
      %v2171 = vpop.f32.mrf.mxu0
      %2172 = vmatprep.mubr.f32.mxu0 %v1988
      %2173 = vmatmul.mubr.f32.gmra.mxu0 %v1987
      %v2174 = vpop.f32.mrf.mxu0
      %v2175 = vadd.f32 0.0, %v2174
      %v2176 = vpop.f32.mrf.mxu0
      %2177 = vmatprep.mubr.f32.mxu0 %v1990
      %2178 = vmatmul.mubr.f32.gmra.mxu0 %v1989
      %v2179 = vpop.f32.mrf.mxu0
      %v2180 = vadd.f32 0.0, %v2179
      %v2181 = vpop.f32.mrf.mxu0
      %2182 = vmatprep.mubr.f32.mxu0 %v1992
      %2183 = vmatmul.mubr.f32.gmra.mxu0 %v1991
      %v2184 = vpop.f32.mrf.mxu0
      %v2185 = vadd.f32 0.0, %v2184
      %v2186 = vpop.f32.mrf.mxu0
      %2187 = vmatprep.mubr.f32.mxu0 %v1994
      %2188 = vmatmul.mubr.f32.gmra.mxu0 %v1993
      %v2189 = vpop.f32.mrf.mxu0
      %v2190 = vadd.f32 0.0, %v2189
      %v2191 = vpop.f32.mrf.mxu0
      %2192 = vmatprep.mubr.f32.mxu0 %v1996
      %2193 = vmatmul.mubr.f32.gmra.mxu0 %v1995
      %v2194 = vpop.f32.mrf.mxu0
      %v2195 = vadd.f32 0.0, %v2194
      %v2196 = vpop.f32.mrf.mxu0
      %2197 = vdwg.mxu0
      %2198 = vset.pattern.permute.xlu0 4
      %2199 = vperm.xlu0 %2198, %v448
      %v2200 = vpop.permute.xlu0 %2199
      %2202 = vset.pattern.permute.xlu0 4
      %2203 = vperm.xlu0 %2202, %v449
      %v2204 = vpop.permute.xlu0 %2203
      %2206 = vset.pattern.permute.xlu0 4
      %2207 = vperm.xlu0 %2206, %v450
      %v2208 = vpop.permute.xlu0 %2207
      %2210 = vset.pattern.permute.xlu0 4
      %2211 = vperm.xlu0 %2210, %v451
      %v2212 = vpop.permute.xlu0 %2211
      %2214 = vset.pattern.permute.xlu0 4
      %2215 = vperm.xlu0 %2214, %v452
      %v2216 = vpop.permute.xlu0 %2215
      %2218 = vset.pattern.permute.xlu0 4
      %2219 = vperm.xlu0 %2218, %v453
      %v2220 = vpop.permute.xlu0 %2219
      %2222 = vset.pattern.permute.xlu0 4
      %2223 = vperm.xlu0 %2222, %v454
      %v2224 = vpop.permute.xlu0 %2223
      %2226 = vset.pattern.permute.xlu0 4
      %2227 = vperm.xlu0 %2226, %v455
      %v2228 = vpop.permute.xlu0 %2227
      %v2230 = vlaneseq
      %v2231 = vshrl.u32 %v2230, 7
      %v2232 = vsub.s32 4, %v2231
      %v2233 = vrot.slane %v456, %v2232
      %v2234 = vlaneseq
      %v2235 = vshrl.u32 %v2234, 7
      %v2236 = vsub.s32 4, %v2235
      %v2237 = vrot.slane %v457, %v2236
      %v2238 = vadd.f32 %v2200, %v2233
      %v2239 = vadd.f32 %v2200, %v2237
      %v2240 = vadd.f32 %v2204, %v2233
      %v2241 = vadd.f32 %v2204, %v2237
      %v2242 = vadd.f32 %v2208, %v2233
      %v2243 = vadd.f32 %v2208, %v2237
      %v2244 = vadd.f32 %v2212, %v2233
      %v2245 = vadd.f32 %v2212, %v2237
      %v2246 = vadd.f32 %v2216, %v2233
      %v2247 = vadd.f32 %v2216, %v2237
      %v2248 = vadd.f32 %v2220, %v2233
      %v2249 = vadd.f32 %v2220, %v2237
      %v2250 = vadd.f32 %v2224, %v2233
      %v2251 = vadd.f32 %v2224, %v2237
      %v2252 = vadd.f32 %v2228, %v2233
      %v2253 = vadd.f32 %v2228, %v2237
      %vm2254 = vcmp.gt.f32.partialorder %v2238, 0.0
      %vm2255 = vcmp.gt.f32.partialorder %v2239, 0.0
      %vm2256 = vcmp.gt.f32.partialorder %v2240, 0.0
      %vm2257 = vcmp.gt.f32.partialorder %v2241, 0.0
      %vm2258 = vcmp.gt.f32.partialorder %v2242, 0.0
      %vm2259 = vcmp.gt.f32.partialorder %v2243, 0.0
      %vm2260 = vcmp.gt.f32.partialorder %v2244, 0.0
      %vm2261 = vcmp.gt.f32.partialorder %v2245, 0.0
      %vm2262 = vcmp.gt.f32.partialorder %v2246, 0.0
      %vm2263 = vcmp.gt.f32.partialorder %v2247, 0.0
      %vm2264 = vcmp.gt.f32.partialorder %v2248, 0.0
      %vm2265 = vcmp.gt.f32.partialorder %v2249, 0.0
      %vm2266 = vcmp.gt.f32.partialorder %v2250, 0.0
      %vm2267 = vcmp.gt.f32.partialorder %v2251, 0.0
      %vm2268 = vcmp.gt.f32.partialorder %v2252, 0.0
      %vm2269 = vcmp.gt.f32.partialorder %v2253, 0.0
      %v2270 = vmul.f32 %v2238, 0.2
      %v2271 = vmul.f32 %v2239, 0.2
      %v2272 = vmul.f32 %v2240, 0.2
      %v2273 = vmul.f32 %v2241, 0.2
      %v2274 = vmul.f32 %v2242, 0.2
      %v2275 = vmul.f32 %v2243, 0.2
      %v2276 = vmul.f32 %v2244, 0.2
      %v2277 = vmul.f32 %v2245, 0.2
      %v2278 = vmul.f32 %v2246, 0.2
      %v2279 = vmul.f32 %v2247, 0.2
      %v2280 = vmul.f32 %v2248, 0.2
      %v2281 = vmul.f32 %v2249, 0.2
      %v2282 = vmul.f32 %v2250, 0.2
      %v2283 = vmul.f32 %v2251, 0.2
      %v2284 = vmul.f32 %v2252, 0.2
      %v2285 = vmul.f32 %v2253, 0.2
      %v2286 = vsel %vm2254, %v2238, %v2270
      %v2287 = vsel %vm2255, %v2239, %v2271
      %v2288 = vsel %vm2256, %v2240, %v2272
      %v2289 = vsel %vm2257, %v2241, %v2273
      %v2290 = vsel %vm2258, %v2242, %v2274
      %v2291 = vsel %vm2259, %v2243, %v2275
      %v2292 = vsel %vm2260, %v2244, %v2276
      %v2293 = vsel %vm2261, %v2245, %v2277
      %v2294 = vsel %vm2262, %v2246, %v2278
      %v2295 = vsel %vm2263, %v2247, %v2279
      %v2296 = vsel %vm2264, %v2248, %v2280
      %v2297 = vsel %vm2265, %v2249, %v2281
      %v2298 = vsel %vm2266, %v2250, %v2282
      %v2299 = vsel %vm2267, %v2251, %v2283
      %v2300 = vsel %vm2268, %v2252, %v2284
      %v2301 = vsel %vm2269, %v2253, %v2285
      %v2302 = vadd.f32 %v2286, %v400
      %v2303 = vadd.f32 %v2287, %v401
      %v2304 = vadd.f32 %v2288, %v402
      %v2305 = vadd.f32 %v2289, %v403
      %v2306 = vadd.f32 %v2290, %v404
      %v2307 = vadd.f32 %v2291, %v405
      %v2308 = vadd.f32 %v2292, %v406
      %v2309 = vadd.f32 %v2293, %v407
      %v2310 = vadd.f32 %v2294, %v408
      %v2311 = vadd.f32 %v2295, %v409
      %v2312 = vadd.f32 %v2296, %v410
      %v2313 = vadd.f32 %v2297, %v411
      %v2314 = vadd.f32 %v2298, %v412
      %v2315 = vadd.f32 %v2299, %v413
      %v2316 = vadd.f32 %v2300, %v414
      %v2317 = vadd.f32 %v2301, %v415
      %v2318 = vmax.f32 %v2302, %v2303
      %2319 = vmax.xlane.f32.xlu0 %v2318
      %v2320 = vpop.xlane.xlu0 %2319
      %v2321 = vmax.f32 %v2304, %v2305
      %2322 = vmax.xlane.f32.xlu0 %v2321
      %v2323 = vpop.xlane.xlu0 %2322
      %v2324 = vmax.f32 %v2306, %v2307
      %2325 = vmax.xlane.f32.xlu0 %v2324
      %v2326 = vpop.xlane.xlu0 %2325
      %v2327 = vmax.f32 %v2308, %v2309
      %2328 = vmax.xlane.f32.xlu0 %v2327
      %v2329 = vpop.xlane.xlu0 %2328
      %v2330 = vmax.f32 %v2310, %v2311
      %2331 = vmax.xlane.f32.xlu0 %v2330
      %v2332 = vpop.xlane.xlu0 %2331
      %v2333 = vmax.f32 %v2312, %v2313
      %2334 = vmax.xlane.f32.xlu0 %v2333
      %v2335 = vpop.xlane.xlu0 %2334
      %v2336 = vmax.f32 %v2314, %v2315
      %2337 = vmax.xlane.f32.xlu0 %v2336
      %v2338 = vpop.xlane.xlu0 %2337
      %v2339 = vmax.f32 %v2316, %v2317
      %2340 = vmax.xlane.f32.xlu0 %v2339
      %v2341 = vpop.xlane.xlu0 %2340
      %v2342 = vsub.f32 %v2302, %v2320
      %v2343 = vsub.f32 %v2303, %v2320
      %v2344 = vsub.f32 %v2304, %v2323
      %v2345 = vsub.f32 %v2305, %v2323
      %v2346 = vsub.f32 %v2306, %v2326
      %v2347 = vsub.f32 %v2307, %v2326
      %v2348 = vsub.f32 %v2308, %v2329
      %v2349 = vsub.f32 %v2309, %v2329
      %v2350 = vsub.f32 %v2310, %v2332
      %v2351 = vsub.f32 %v2311, %v2332
      %v2352 = vsub.f32 %v2312, %v2335
      %v2353 = vsub.f32 %v2313, %v2335
      %v2354 = vsub.f32 %v2314, %v2338
      %v2355 = vsub.f32 %v2315, %v2338
      %v2356 = vsub.f32 %v2316, %v2341
      %v2357 = vsub.f32 %v2317, %v2341
      %v2358 = vmul.f32 %v2342, 1.442695
      %v2359 = vpow.pop %v2358
      %v2360 = vmul.f32 %v2343, 1.442695
      %v2361 = vpow.pop %v2360
      %v2362 = vmul.f32 %v2344, 1.442695
      %v2363 = vpow.pop %v2362
      %v2364 = vmul.f32 %v2345, 1.442695
      %v2365 = vpow.pop %v2364
      %v2366 = vmul.f32 %v2346, 1.442695
      %v2367 = vpow.pop %v2366
      %v2368 = vmul.f32 %v2347, 1.442695
      %v2369 = vpow.pop %v2368
      %v2370 = vmul.f32 %v2348, 1.442695
      %v2371 = vpow.pop %v2370
      %v2372 = vmul.f32 %v2349, 1.442695
      %v2373 = vpow.pop %v2372
      %v2374 = vmul.f32 %v2350, 1.442695
      %v2375 = vpow.pop %v2374
      %v2376 = vmul.f32 %v2351, 1.442695
      %v2377 = vpow.pop %v2376
      %v2378 = vmul.f32 %v2352, 1.442695
      %v2379 = vpow.pop %v2378
      %v2380 = vmul.f32 %v2353, 1.442695
      %v2381 = vpow.pop %v2380
      %v2382 = vmul.f32 %v2354, 1.442695
      %v2383 = vpow.pop %v2382
      %v2384 = vmul.f32 %v2355, 1.442695
      %v2385 = vpow.pop %v2384
      %v2386 = vmul.f32 %v2356, 1.442695
      %v2387 = vpow.pop %v2386
      %v2388 = vmul.f32 %v2357, 1.442695
      %v2389 = vpow.pop %v2388
      %v2390 = vadd.f32 %v2359, %v2361
      %2391 = vadd.xlane.f32.xlu0 %v2390
      %v2392 = vpop.xlane.xlu0 %2391
      %v2393 = vadd.f32 %v2363, %v2365
      %2394 = vadd.xlane.f32.xlu0 %v2393
      %v2395 = vpop.xlane.xlu0 %2394
      %v2396 = vadd.f32 %v2367, %v2369
      %2397 = vadd.xlane.f32.xlu0 %v2396
      %v2398 = vpop.xlane.xlu0 %2397
      %v2399 = vadd.f32 %v2371, %v2373
      %2400 = vadd.xlane.f32.xlu0 %v2399
      %v2401 = vpop.xlane.xlu0 %2400
      %v2402 = vadd.f32 %v2375, %v2377
      %2403 = vadd.xlane.f32.xlu0 %v2402
      %v2404 = vpop.xlane.xlu0 %2403
      %v2405 = vadd.f32 %v2379, %v2381
      %2406 = vadd.xlane.f32.xlu0 %v2405
      %v2407 = vpop.xlane.xlu0 %2406
      %v2408 = vadd.f32 %v2383, %v2385
      %2409 = vadd.xlane.f32.xlu0 %v2408
      %v2410 = vpop.xlane.xlu0 %2409
      %v2411 = vadd.f32 %v2387, %v2389
      %2412 = vadd.xlane.f32.xlu0 %v2411
      %v2413 = vpop.xlane.xlu0 %2412
      %v2414 = vrcp.pop %v2392
      %v2415 = vmul.f32 1.0, %v2414
      %v2416 = vrcp.pop %v2395
      %v2417 = vmul.f32 1.0, %v2416
      %v2418 = vrcp.pop %v2398
      %v2419 = vmul.f32 1.0, %v2418
      %v2420 = vrcp.pop %v2401
      %v2421 = vmul.f32 1.0, %v2420
      %v2422 = vrcp.pop %v2404
      %v2423 = vmul.f32 1.0, %v2422
      %v2424 = vrcp.pop %v2407
      %v2425 = vmul.f32 1.0, %v2424
      %v2426 = vrcp.pop %v2410
      %v2427 = vmul.f32 1.0, %v2426
      %v2428 = vrcp.pop %v2413
      %v2429 = vmul.f32 1.0, %v2428
      %v2430 = vmul.f32 %v2359, %v2415
      %v2431 = vmul.f32 %v2361, %v2415
      %v2432 = vmul.f32 %v2363, %v2417
      %v2433 = vmul.f32 %v2365, %v2417
      %v2434 = vmul.f32 %v2367, %v2419
      %v2435 = vmul.f32 %v2369, %v2419
      %v2436 = vmul.f32 %v2371, %v2421
      %v2437 = vmul.f32 %v2373, %v2421
      %v2438 = vmul.f32 %v2375, %v2423
      %v2439 = vmul.f32 %v2377, %v2423
      %v2440 = vmul.f32 %v2379, %v2425
      %v2441 = vmul.f32 %v2381, %v2425
      %v2442 = vmul.f32 %v2383, %v2427
      %v2443 = vmul.f32 %v2385, %v2427
      %v2444 = vmul.f32 %v2387, %v2429
      %v2445 = vmul.f32 %v2389, %v2429
      %2446 = vrot.lane.b32.xlu0 %v416, 96
      %v2447 = vpop.permute.xlu0 %2446
      %2448 = vrot.lane.b32.xlu0 %v417, 96
      %v2449 = vpop.permute.xlu0 %2448
      %2450 = vrot.lane.b32.xlu0 %v418, 96
      %v2451 = vpop.permute.xlu0 %2450
      %2452 = vrot.lane.b32.xlu0 %v419, 96
      %v2453 = vpop.permute.xlu0 %2452
      %2454 = vrot.lane.b32.xlu0 %v420, 96
      %v2455 = vpop.permute.xlu0 %2454
      %2456 = vrot.lane.b32.xlu0 %v421, 96
      %v2457 = vpop.permute.xlu0 %2456
      %2458 = vrot.lane.b32.xlu0 %v422, 96
      %v2459 = vpop.permute.xlu0 %2458
      %2460 = vrot.lane.b32.xlu0 %v423, 96
      %v2461 = vpop.permute.xlu0 %2460
      %2462 = vrot.lane.b32.xlu0 %v424, 96
      %v2463 = vpop.permute.xlu0 %2462
      %2464 = vrot.lane.b32.xlu0 %v425, 96
      %v2465 = vpop.permute.xlu0 %2464
      %2466 = vrot.lane.b32.xlu0 %v426, 96
      %v2467 = vpop.permute.xlu0 %2466
      %2468 = vrot.lane.b32.xlu0 %v427, 96
      %v2469 = vpop.permute.xlu0 %2468
      %2470 = vrot.lane.b32.xlu0 %v428, 96
      %v2471 = vpop.permute.xlu0 %2470
      %2472 = vrot.lane.b32.xlu0 %v429, 96
      %v2473 = vpop.permute.xlu0 %2472
      %2474 = vrot.lane.b32.xlu0 %v430, 96
      %v2475 = vpop.permute.xlu0 %2474
      %2476 = vrot.lane.b32.xlu0 %v431, 96
      %v2477 = vpop.permute.xlu0 %2476
      %2478 = vrot.lane.b32.xlu0 %v432, 96
      %v2479 = vpop.permute.xlu0 %2478
      %2480 = vrot.lane.b32.xlu0 %v433, 96
      %v2481 = vpop.permute.xlu0 %2480
      %2482 = vrot.lane.b32.xlu0 %v434, 96
      %v2483 = vpop.permute.xlu0 %2482
      %2484 = vrot.lane.b32.xlu0 %v435, 96
      %v2485 = vpop.permute.xlu0 %2484
      %2486 = vrot.lane.b32.xlu0 %v436, 96
      %v2487 = vpop.permute.xlu0 %2486
      %2488 = vrot.lane.b32.xlu0 %v437, 96
      %v2489 = vpop.permute.xlu0 %2488
      %2490 = vrot.lane.b32.xlu0 %v438, 96
      %v2491 = vpop.permute.xlu0 %2490
      %2492 = vrot.lane.b32.xlu0 %v439, 96
      %v2493 = vpop.permute.xlu0 %2492
      %2494 = vrot.lane.b32.xlu0 %v440, 96
      %v2495 = vpop.permute.xlu0 %2494
      %2496 = vrot.lane.b32.xlu0 %v441, 96
      %v2497 = vpop.permute.xlu0 %2496
      %2498 = vrot.lane.b32.xlu0 %v442, 96
      %v2499 = vpop.permute.xlu0 %2498
      %2500 = vrot.lane.b32.xlu0 %v443, 96
      %v2501 = vpop.permute.xlu0 %2500
      %2502 = vrot.lane.b32.xlu0 %v444, 96
      %v2503 = vpop.permute.xlu0 %2502
      %2504 = vrot.lane.b32.xlu0 %v445, 96
      %v2505 = vpop.permute.xlu0 %2504
      %2506 = vrot.lane.b32.xlu0 %v446, 96
      %v2507 = vpop.permute.xlu0 %2506
      %2508 = vrot.lane.b32.xlu0 %v447, 96
      %v2509 = vpop.permute.xlu0 %2508
      %2542 = vmatprep.subr.mxu0 0.0
      %2543 = vmatpush1.msra.mxu0 %v2477
      %2544 = vmatprep.subr.mxu0 0.0
      %2545 = vmatpush1.msra.mxu0 %v2475
      %2546 = vmatprep.subr.mxu0 0.0
      %2547 = vmatpush1.msra.mxu0 %v2473
      %2548 = vmatprep.subr.mxu0 0.0
      %2549 = vmatpush1.msra.mxu0 %v2471
      %2550 = vmatprep.subr.mxu0 0.0
      %2551 = vmatpush1.msra.mxu0 %v2469
      %2552 = vmatprep.subr.mxu0 0.0
      %2553 = vmatpush1.msra.mxu0 %v2467
      %2554 = vmatprep.subr.mxu0 0.0
      %2555 = vmatpush1.msra.mxu0 %v2465
      %2556 = vmatprep.subr.mxu0 0.0
      %2557 = vmatpush1.msra.mxu0 %v2463
      %2558 = vmatprep.subr.mxu0 0.0
      %2559 = vmatpush1.msra.mxu0 %v2461
      %2560 = vmatprep.subr.mxu0 0.0
      %2561 = vmatpush1.msra.mxu0 %v2459
      %2562 = vmatprep.subr.mxu0 0.0
      %2563 = vmatpush1.msra.mxu0 %v2457
      %2564 = vmatprep.subr.mxu0 0.0
      %2565 = vmatpush1.msra.mxu0 %v2455
      %2566 = vmatprep.subr.mxu0 0.0
      %2567 = vmatpush1.msra.mxu0 %v2453
      %2568 = vmatprep.subr.mxu0 0.0
      %2569 = vmatpush1.msra.mxu0 %v2451
      %2570 = vmatprep.subr.mxu0 0.0
      %2571 = vmatpush1.msra.mxu0 %v2449
      %2572 = vmatprep.subr.mxu0 0.0
      %2573 = vmatpush1.msra.mxu0 %v2447
      %2574 = vmatprep.subr.mxu0 0.0
      %2575 = vmatpush2.msra.mxu0 %v2509
      %2576 = vmatprep.subr.mxu0 0.0
      %2577 = vmatpush2.msra.mxu0 %v2507
      %2578 = vmatprep.subr.mxu0 0.0
      %2579 = vmatpush2.msra.mxu0 %v2505
      %2580 = vmatprep.subr.mxu0 0.0
      %2581 = vmatpush2.msra.mxu0 %v2503
      %2582 = vmatprep.subr.mxu0 0.0
      %2583 = vmatpush2.msra.mxu0 %v2501
      %2584 = vmatprep.subr.mxu0 0.0
      %2585 = vmatpush2.msra.mxu0 %v2499
      %2586 = vmatprep.subr.mxu0 0.0
      %2587 = vmatpush2.msra.mxu0 %v2497
      %2588 = vmatprep.subr.mxu0 0.0
      %2589 = vmatpush2.msra.mxu0 %v2495
      %2590 = vmatprep.subr.mxu0 0.0
      %2591 = vmatpush2.msra.mxu0 %v2493
      %2592 = vmatprep.subr.mxu0 0.0
      %2593 = vmatpush2.msra.mxu0 %v2491
      %2594 = vmatprep.subr.mxu0 0.0
      %2595 = vmatpush2.msra.mxu0 %v2489
      %2596 = vmatprep.subr.mxu0 0.0
      %2597 = vmatpush2.msra.mxu0 %v2487
      %2598 = vmatprep.subr.mxu0 0.0
      %2599 = vmatpush2.msra.mxu0 %v2485
      %2600 = vmatprep.subr.mxu0 0.0
      %2601 = vmatpush2.msra.mxu0 %v2483
      %2602 = vmatprep.subr.mxu0 0.0
      %2603 = vmatpush2.msra.mxu0 %v2481
      %2604 = vmatprep.subr.mxu0 0.0
      %2605 = vmatpush2.msra.mxu0 %v2479
      %2606 = vmatprep.mubr.f32.mxu0 %v2431
      %2607 = vmatmul.mubr.f32.gmra.mxu0 %v2430
      %v2608 = vpop.f32.mrf.mxu0
      %v2609 = vadd.f32 0.0, %v2608
      %v2610 = vpop.f32.mrf.mxu0
      %2611 = vmatprep.mubr.f32.mxu0 %v2433
      %2612 = vmatmul.mubr.f32.gmra.mxu0 %v2432
      %v2613 = vpop.f32.mrf.mxu0
      %v2614 = vadd.f32 0.0, %v2613
      %v2615 = vpop.f32.mrf.mxu0
      %2616 = vmatprep.mubr.f32.mxu0 %v2435
      %2617 = vmatmul.mubr.f32.gmra.mxu0 %v2434
      %v2618 = vpop.f32.mrf.mxu0
      %v2619 = vadd.f32 0.0, %v2618
      %v2620 = vpop.f32.mrf.mxu0
      %2621 = vmatprep.mubr.f32.mxu0 %v2437
      %2622 = vmatmul.mubr.f32.gmra.mxu0 %v2436
      %v2623 = vpop.f32.mrf.mxu0
      %v2624 = vadd.f32 0.0, %v2623
      %v2625 = vpop.f32.mrf.mxu0
      %2626 = vmatprep.mubr.f32.mxu0 %v2439
      %2627 = vmatmul.mubr.f32.gmra.mxu0 %v2438
      %v2628 = vpop.f32.mrf.mxu0
      %v2629 = vadd.f32 0.0, %v2628
      %v2630 = vpop.f32.mrf.mxu0
      %2631 = vmatprep.mubr.f32.mxu0 %v2441
      %2632 = vmatmul.mubr.f32.gmra.mxu0 %v2440
      %v2633 = vpop.f32.mrf.mxu0
      %v2634 = vadd.f32 0.0, %v2633
      %v2635 = vpop.f32.mrf.mxu0
      %2636 = vmatprep.mubr.f32.mxu0 %v2443
      %2637 = vmatmul.mubr.f32.gmra.mxu0 %v2442
      %v2638 = vpop.f32.mrf.mxu0
      %v2639 = vadd.f32 0.0, %v2638
      %v2640 = vpop.f32.mrf.mxu0
      %2641 = vmatprep.mubr.f32.mxu0 %v2445
      %2642 = vmatmul.mubr.f32.gmra.mxu0 %v2444
      %v2643 = vpop.f32.mrf.mxu0
      %v2644 = vadd.f32 0.0, %v2643
      %v2645 = vpop.f32.mrf.mxu0
      %2646 = vdwg.mxu0
      %2647 = vset.pattern.permute.xlu0 5
      %2648 = vperm.xlu0 %2647, %v448
      %v2649 = vpop.permute.xlu0 %2648
      %2651 = vset.pattern.permute.xlu0 5
      %2652 = vperm.xlu0 %2651, %v449
      %v2653 = vpop.permute.xlu0 %2652
      %2655 = vset.pattern.permute.xlu0 5
      %2656 = vperm.xlu0 %2655, %v450
      %v2657 = vpop.permute.xlu0 %2656
      %2659 = vset.pattern.permute.xlu0 5
      %2660 = vperm.xlu0 %2659, %v451
      %v2661 = vpop.permute.xlu0 %2660
      %2663 = vset.pattern.permute.xlu0 5
      %2664 = vperm.xlu0 %2663, %v452
      %v2665 = vpop.permute.xlu0 %2664
      %2667 = vset.pattern.permute.xlu0 5
      %2668 = vperm.xlu0 %2667, %v453
      %v2669 = vpop.permute.xlu0 %2668
      %2671 = vset.pattern.permute.xlu0 5
      %2672 = vperm.xlu0 %2671, %v454
      %v2673 = vpop.permute.xlu0 %2672
      %2675 = vset.pattern.permute.xlu0 5
      %2676 = vperm.xlu0 %2675, %v455
      %v2677 = vpop.permute.xlu0 %2676
      %v2679 = vlaneseq
      %v2680 = vshrl.u32 %v2679, 7
      %v2681 = vsub.s32 5, %v2680
      %v2682 = vrot.slane %v456, %v2681
      %v2683 = vlaneseq
      %v2684 = vshrl.u32 %v2683, 7
      %v2685 = vsub.s32 5, %v2684
      %v2686 = vrot.slane %v457, %v2685
      %v2687 = vadd.f32 %v2649, %v2682
      %v2688 = vadd.f32 %v2649, %v2686
      %v2689 = vadd.f32 %v2653, %v2682
      %v2690 = vadd.f32 %v2653, %v2686
      %v2691 = vadd.f32 %v2657, %v2682
      %v2692 = vadd.f32 %v2657, %v2686
      %v2693 = vadd.f32 %v2661, %v2682
      %v2694 = vadd.f32 %v2661, %v2686
      %v2695 = vadd.f32 %v2665, %v2682
      %v2696 = vadd.f32 %v2665, %v2686
      %v2697 = vadd.f32 %v2669, %v2682
      %v2698 = vadd.f32 %v2669, %v2686
      %v2699 = vadd.f32 %v2673, %v2682
      %v2700 = vadd.f32 %v2673, %v2686
      %v2701 = vadd.f32 %v2677, %v2682
      %v2702 = vadd.f32 %v2677, %v2686
      %vm2703 = vcmp.gt.f32.partialorder %v2687, 0.0
      %vm2704 = vcmp.gt.f32.partialorder %v2688, 0.0
      %vm2705 = vcmp.gt.f32.partialorder %v2689, 0.0
      %vm2706 = vcmp.gt.f32.partialorder %v2690, 0.0
      %vm2707 = vcmp.gt.f32.partialorder %v2691, 0.0
      %vm2708 = vcmp.gt.f32.partialorder %v2692, 0.0
      %vm2709 = vcmp.gt.f32.partialorder %v2693, 0.0
      %vm2710 = vcmp.gt.f32.partialorder %v2694, 0.0
      %vm2711 = vcmp.gt.f32.partialorder %v2695, 0.0
      %vm2712 = vcmp.gt.f32.partialorder %v2696, 0.0
      %vm2713 = vcmp.gt.f32.partialorder %v2697, 0.0
      %vm2714 = vcmp.gt.f32.partialorder %v2698, 0.0
      %vm2715 = vcmp.gt.f32.partialorder %v2699, 0.0
      %vm2716 = vcmp.gt.f32.partialorder %v2700, 0.0
      %vm2717 = vcmp.gt.f32.partialorder %v2701, 0.0
      %vm2718 = vcmp.gt.f32.partialorder %v2702, 0.0
      %v2719 = vmul.f32 %v2687, 0.2
      %v2720 = vmul.f32 %v2688, 0.2
      %v2721 = vmul.f32 %v2689, 0.2
      %v2722 = vmul.f32 %v2690, 0.2
      %v2723 = vmul.f32 %v2691, 0.2
      %v2724 = vmul.f32 %v2692, 0.2
      %v2725 = vmul.f32 %v2693, 0.2
      %v2726 = vmul.f32 %v2694, 0.2
      %v2727 = vmul.f32 %v2695, 0.2
      %v2728 = vmul.f32 %v2696, 0.2
      %v2729 = vmul.f32 %v2697, 0.2
      %v2730 = vmul.f32 %v2698, 0.2
      %v2731 = vmul.f32 %v2699, 0.2
      %v2732 = vmul.f32 %v2700, 0.2
      %v2733 = vmul.f32 %v2701, 0.2
      %v2734 = vmul.f32 %v2702, 0.2
      %v2735 = vsel %vm2703, %v2687, %v2719
      %v2736 = vsel %vm2704, %v2688, %v2720
      %v2737 = vsel %vm2705, %v2689, %v2721
      %v2738 = vsel %vm2706, %v2690, %v2722
      %v2739 = vsel %vm2707, %v2691, %v2723
      %v2740 = vsel %vm2708, %v2692, %v2724
      %v2741 = vsel %vm2709, %v2693, %v2725
      %v2742 = vsel %vm2710, %v2694, %v2726
      %v2743 = vsel %vm2711, %v2695, %v2727
      %v2744 = vsel %vm2712, %v2696, %v2728
      %v2745 = vsel %vm2713, %v2697, %v2729
      %v2746 = vsel %vm2714, %v2698, %v2730
      %v2747 = vsel %vm2715, %v2699, %v2731
      %v2748 = vsel %vm2716, %v2700, %v2732
      %v2749 = vsel %vm2717, %v2701, %v2733
      %v2750 = vsel %vm2718, %v2702, %v2734
      %v2751 = vadd.f32 %v2735, %v400
      %v2752 = vadd.f32 %v2736, %v401
      %v2753 = vadd.f32 %v2737, %v402
      %v2754 = vadd.f32 %v2738, %v403
      %v2755 = vadd.f32 %v2739, %v404
      %v2756 = vadd.f32 %v2740, %v405
      %v2757 = vadd.f32 %v2741, %v406
      %v2758 = vadd.f32 %v2742, %v407
      %v2759 = vadd.f32 %v2743, %v408
      %v2760 = vadd.f32 %v2744, %v409
      %v2761 = vadd.f32 %v2745, %v410
      %v2762 = vadd.f32 %v2746, %v411
      %v2763 = vadd.f32 %v2747, %v412
      %v2764 = vadd.f32 %v2748, %v413
      %v2765 = vadd.f32 %v2749, %v414
      %v2766 = vadd.f32 %v2750, %v415
      %v2767 = vmax.f32 %v2751, %v2752
      %2768 = vmax.xlane.f32.xlu0 %v2767
      %v2769 = vpop.xlane.xlu0 %2768
      %v2770 = vmax.f32 %v2753, %v2754
      %2771 = vmax.xlane.f32.xlu0 %v2770
      %v2772 = vpop.xlane.xlu0 %2771
      %v2773 = vmax.f32 %v2755, %v2756
      %2774 = vmax.xlane.f32.xlu0 %v2773
      %v2775 = vpop.xlane.xlu0 %2774
      %v2776 = vmax.f32 %v2757, %v2758
      %2777 = vmax.xlane.f32.xlu0 %v2776
      %v2778 = vpop.xlane.xlu0 %2777
      %v2779 = vmax.f32 %v2759, %v2760
      %2780 = vmax.xlane.f32.xlu0 %v2779
      %v2781 = vpop.xlane.xlu0 %2780
      %v2782 = vmax.f32 %v2761, %v2762
      %2783 = vmax.xlane.f32.xlu0 %v2782
      %v2784 = vpop.xlane.xlu0 %2783
      %v2785 = vmax.f32 %v2763, %v2764
      %2786 = vmax.xlane.f32.xlu0 %v2785
      %v2787 = vpop.xlane.xlu0 %2786
      %v2788 = vmax.f32 %v2765, %v2766
      %2789 = vmax.xlane.f32.xlu0 %v2788
      %v2790 = vpop.xlane.xlu0 %2789
      %v2791 = vsub.f32 %v2751, %v2769
      %v2792 = vsub.f32 %v2752, %v2769
      %v2793 = vsub.f32 %v2753, %v2772
      %v2794 = vsub.f32 %v2754, %v2772
      %v2795 = vsub.f32 %v2755, %v2775
      %v2796 = vsub.f32 %v2756, %v2775
      %v2797 = vsub.f32 %v2757, %v2778
      %v2798 = vsub.f32 %v2758, %v2778
      %v2799 = vsub.f32 %v2759, %v2781
      %v2800 = vsub.f32 %v2760, %v2781
      %v2801 = vsub.f32 %v2761, %v2784
      %v2802 = vsub.f32 %v2762, %v2784
      %v2803 = vsub.f32 %v2763, %v2787
      %v2804 = vsub.f32 %v2764, %v2787
      %v2805 = vsub.f32 %v2765, %v2790
      %v2806 = vsub.f32 %v2766, %v2790
      %v2807 = vmul.f32 %v2791, 1.442695
      %v2808 = vpow.pop %v2807
      %v2809 = vmul.f32 %v2792, 1.442695
      %v2810 = vpow.pop %v2809
      %v2811 = vmul.f32 %v2793, 1.442695
      %v2812 = vpow.pop %v2811
      %v2813 = vmul.f32 %v2794, 1.442695
      %v2814 = vpow.pop %v2813
      %v2815 = vmul.f32 %v2795, 1.442695
      %v2816 = vpow.pop %v2815
      %v2817 = vmul.f32 %v2796, 1.442695
      %v2818 = vpow.pop %v2817
      %v2819 = vmul.f32 %v2797, 1.442695
      %v2820 = vpow.pop %v2819
      %v2821 = vmul.f32 %v2798, 1.442695
      %v2822 = vpow.pop %v2821
      %v2823 = vmul.f32 %v2799, 1.442695
      %v2824 = vpow.pop %v2823
      %v2825 = vmul.f32 %v2800, 1.442695
      %v2826 = vpow.pop %v2825
      %v2827 = vmul.f32 %v2801, 1.442695
      %v2828 = vpow.pop %v2827
      %v2829 = vmul.f32 %v2802, 1.442695
      %v2830 = vpow.pop %v2829
      %v2831 = vmul.f32 %v2803, 1.442695
      %v2832 = vpow.pop %v2831
      %v2833 = vmul.f32 %v2804, 1.442695
      %v2834 = vpow.pop %v2833
      %v2835 = vmul.f32 %v2805, 1.442695
      %v2836 = vpow.pop %v2835
      %v2837 = vmul.f32 %v2806, 1.442695
      %v2838 = vpow.pop %v2837
      %v2839 = vadd.f32 %v2808, %v2810
      %2840 = vadd.xlane.f32.xlu0 %v2839
      %v2841 = vpop.xlane.xlu0 %2840
      %v2842 = vadd.f32 %v2812, %v2814
      %2843 = vadd.xlane.f32.xlu0 %v2842
      %v2844 = vpop.xlane.xlu0 %2843
      %v2845 = vadd.f32 %v2816, %v2818
      %2846 = vadd.xlane.f32.xlu0 %v2845
      %v2847 = vpop.xlane.xlu0 %2846
      %v2848 = vadd.f32 %v2820, %v2822
      %2849 = vadd.xlane.f32.xlu0 %v2848
      %v2850 = vpop.xlane.xlu0 %2849
      %v2851 = vadd.f32 %v2824, %v2826
      %2852 = vadd.xlane.f32.xlu0 %v2851
      %v2853 = vpop.xlane.xlu0 %2852
      %v2854 = vadd.f32 %v2828, %v2830
      %2855 = vadd.xlane.f32.xlu0 %v2854
      %v2856 = vpop.xlane.xlu0 %2855
      %v2857 = vadd.f32 %v2832, %v2834
      %2858 = vadd.xlane.f32.xlu0 %v2857
      %v2859 = vpop.xlane.xlu0 %2858
      %v2860 = vadd.f32 %v2836, %v2838
      %2861 = vadd.xlane.f32.xlu0 %v2860
      %v2862 = vpop.xlane.xlu0 %2861
      %v2863 = vrcp.pop %v2841
      %v2864 = vmul.f32 1.0, %v2863
      %v2865 = vrcp.pop %v2844
      %v2866 = vmul.f32 1.0, %v2865
      %v2867 = vrcp.pop %v2847
      %v2868 = vmul.f32 1.0, %v2867
      %v2869 = vrcp.pop %v2850
      %v2870 = vmul.f32 1.0, %v2869
      %v2871 = vrcp.pop %v2853
      %v2872 = vmul.f32 1.0, %v2871
      %v2873 = vrcp.pop %v2856
      %v2874 = vmul.f32 1.0, %v2873
      %v2875 = vrcp.pop %v2859
      %v2876 = vmul.f32 1.0, %v2875
      %v2877 = vrcp.pop %v2862
      %v2878 = vmul.f32 1.0, %v2877
      %v2879 = vmul.f32 %v2808, %v2864
      %v2880 = vmul.f32 %v2810, %v2864
      %v2881 = vmul.f32 %v2812, %v2866
      %v2882 = vmul.f32 %v2814, %v2866
      %v2883 = vmul.f32 %v2816, %v2868
      %v2884 = vmul.f32 %v2818, %v2868
      %v2885 = vmul.f32 %v2820, %v2870
      %v2886 = vmul.f32 %v2822, %v2870
      %v2887 = vmul.f32 %v2824, %v2872
      %v2888 = vmul.f32 %v2826, %v2872
      %v2889 = vmul.f32 %v2828, %v2874
      %v2890 = vmul.f32 %v2830, %v2874
      %v2891 = vmul.f32 %v2832, %v2876
      %v2892 = vmul.f32 %v2834, %v2876
      %v2893 = vmul.f32 %v2836, %v2878
      %v2894 = vmul.f32 %v2838, %v2878
      %2895 = vrot.lane.b32.xlu0 %v416, 88
      %v2896 = vpop.permute.xlu0 %2895
      %2897 = vrot.lane.b32.xlu0 %v417, 88
      %v2898 = vpop.permute.xlu0 %2897
      %2899 = vrot.lane.b32.xlu0 %v418, 88
      %v2900 = vpop.permute.xlu0 %2899
      %2901 = vrot.lane.b32.xlu0 %v419, 88
      %v2902 = vpop.permute.xlu0 %2901
      %2903 = vrot.lane.b32.xlu0 %v420, 88
      %v2904 = vpop.permute.xlu0 %2903
      %2905 = vrot.lane.b32.xlu0 %v421, 88
      %v2906 = vpop.permute.xlu0 %2905
      %2907 = vrot.lane.b32.xlu0 %v422, 88
      %v2908 = vpop.permute.xlu0 %2907
      %2909 = vrot.lane.b32.xlu0 %v423, 88
      %v2910 = vpop.permute.xlu0 %2909
      %2911 = vrot.lane.b32.xlu0 %v424, 88
      %v2912 = vpop.permute.xlu0 %2911
      %2913 = vrot.lane.b32.xlu0 %v425, 88
      %v2914 = vpop.permute.xlu0 %2913
      %2915 = vrot.lane.b32.xlu0 %v426, 88
      %v2916 = vpop.permute.xlu0 %2915
      %2917 = vrot.lane.b32.xlu0 %v427, 88
      %v2918 = vpop.permute.xlu0 %2917
      %2919 = vrot.lane.b32.xlu0 %v428, 88
      %v2920 = vpop.permute.xlu0 %2919
      %2921 = vrot.lane.b32.xlu0 %v429, 88
      %v2922 = vpop.permute.xlu0 %2921
      %2923 = vrot.lane.b32.xlu0 %v430, 88
      %v2924 = vpop.permute.xlu0 %2923
      %2925 = vrot.lane.b32.xlu0 %v431, 88
      %v2926 = vpop.permute.xlu0 %2925
      %2927 = vrot.lane.b32.xlu0 %v432, 88
      %v2928 = vpop.permute.xlu0 %2927
      %2929 = vrot.lane.b32.xlu0 %v433, 88
      %v2930 = vpop.permute.xlu0 %2929
      %2931 = vrot.lane.b32.xlu0 %v434, 88
      %v2932 = vpop.permute.xlu0 %2931
      %2933 = vrot.lane.b32.xlu0 %v435, 88
      %v2934 = vpop.permute.xlu0 %2933
      %2935 = vrot.lane.b32.xlu0 %v436, 88
      %v2936 = vpop.permute.xlu0 %2935
      %2937 = vrot.lane.b32.xlu0 %v437, 88
      %v2938 = vpop.permute.xlu0 %2937
      %2939 = vrot.lane.b32.xlu0 %v438, 88
      %v2940 = vpop.permute.xlu0 %2939
      %2941 = vrot.lane.b32.xlu0 %v439, 88
      %v2942 = vpop.permute.xlu0 %2941
      %2943 = vrot.lane.b32.xlu0 %v440, 88
      %v2944 = vpop.permute.xlu0 %2943
      %2945 = vrot.lane.b32.xlu0 %v441, 88
      %v2946 = vpop.permute.xlu0 %2945
      %2947 = vrot.lane.b32.xlu0 %v442, 88
      %v2948 = vpop.permute.xlu0 %2947
      %2949 = vrot.lane.b32.xlu0 %v443, 88
      %v2950 = vpop.permute.xlu0 %2949
      %2951 = vrot.lane.b32.xlu0 %v444, 88
      %v2952 = vpop.permute.xlu0 %2951
      %2953 = vrot.lane.b32.xlu0 %v445, 88
      %v2954 = vpop.permute.xlu0 %2953
      %2955 = vrot.lane.b32.xlu0 %v446, 88
      %v2956 = vpop.permute.xlu0 %2955
      %2957 = vrot.lane.b32.xlu0 %v447, 88
      %v2958 = vpop.permute.xlu0 %2957
      %2991 = vmatprep.subr.mxu0 0.0
      %2992 = vmatpush1.msra.mxu0 %v2926
      %2993 = vmatprep.subr.mxu0 0.0
      %2994 = vmatpush1.msra.mxu0 %v2924
      %2995 = vmatprep.subr.mxu0 0.0
      %2996 = vmatpush1.msra.mxu0 %v2922
      %2997 = vmatprep.subr.mxu0 0.0
      %2998 = vmatpush1.msra.mxu0 %v2920
      %2999 = vmatprep.subr.mxu0 0.0
      %3000 = vmatpush1.msra.mxu0 %v2918
      %3001 = vmatprep.subr.mxu0 0.0
      %3002 = vmatpush1.msra.mxu0 %v2916
      %3003 = vmatprep.subr.mxu0 0.0
      %3004 = vmatpush1.msra.mxu0 %v2914
      %3005 = vmatprep.subr.mxu0 0.0
      %3006 = vmatpush1.msra.mxu0 %v2912
      %3007 = vmatprep.subr.mxu0 0.0
      %3008 = vmatpush1.msra.mxu0 %v2910
      %3009 = vmatprep.subr.mxu0 0.0
      %3010 = vmatpush1.msra.mxu0 %v2908
      %3011 = vmatprep.subr.mxu0 0.0
      %3012 = vmatpush1.msra.mxu0 %v2906
      %3013 = vmatprep.subr.mxu0 0.0
      %3014 = vmatpush1.msra.mxu0 %v2904
      %3015 = vmatprep.subr.mxu0 0.0
      %3016 = vmatpush1.msra.mxu0 %v2902
      %3017 = vmatprep.subr.mxu0 0.0
      %3018 = vmatpush1.msra.mxu0 %v2900
      %3019 = vmatprep.subr.mxu0 0.0
      %3020 = vmatpush1.msra.mxu0 %v2898
      %3021 = vmatprep.subr.mxu0 0.0
      %3022 = vmatpush1.msra.mxu0 %v2896
      %3023 = vmatprep.subr.mxu0 0.0
      %3024 = vmatpush2.msra.mxu0 %v2958
      %3025 = vmatprep.subr.mxu0 0.0
      %3026 = vmatpush2.msra.mxu0 %v2956
      %3027 = vmatprep.subr.mxu0 0.0
      %3028 = vmatpush2.msra.mxu0 %v2954
      %3029 = vmatprep.subr.mxu0 0.0
      %3030 = vmatpush2.msra.mxu0 %v2952
      %3031 = vmatprep.subr.mxu0 0.0
      %3032 = vmatpush2.msra.mxu0 %v2950
      %3033 = vmatprep.subr.mxu0 0.0
      %3034 = vmatpush2.msra.mxu0 %v2948
      %3035 = vmatprep.subr.mxu0 0.0
      %3036 = vmatpush2.msra.mxu0 %v2946
      %3037 = vmatprep.subr.mxu0 0.0
      %3038 = vmatpush2.msra.mxu0 %v2944
      %3039 = vmatprep.subr.mxu0 0.0
      %3040 = vmatpush2.msra.mxu0 %v2942
      %3041 = vmatprep.subr.mxu0 0.0
      %3042 = vmatpush2.msra.mxu0 %v2940
      %3043 = vmatprep.subr.mxu0 0.0
      %3044 = vmatpush2.msra.mxu0 %v2938
      %3045 = vmatprep.subr.mxu0 0.0
      %3046 = vmatpush2.msra.mxu0 %v2936
      %3047 = vmatprep.subr.mxu0 0.0
      %3048 = vmatpush2.msra.mxu0 %v2934
      %3049 = vmatprep.subr.mxu0 0.0
      %3050 = vmatpush2.msra.mxu0 %v2932
      %3051 = vmatprep.subr.mxu0 0.0
      %3052 = vmatpush2.msra.mxu0 %v2930
      %3053 = vmatprep.subr.mxu0 0.0
      %3054 = vmatpush2.msra.mxu0 %v2928
      %3055 = vmatprep.mubr.f32.mxu0 %v2880
      %3056 = vmatmul.mubr.f32.gmra.mxu0 %v2879
      %v3057 = vpop.f32.mrf.mxu0
      %v3058 = vadd.f32 0.0, %v3057
      %v3059 = vpop.f32.mrf.mxu0
      %3060 = vmatprep.mubr.f32.mxu0 %v2882
      %3061 = vmatmul.mubr.f32.gmra.mxu0 %v2881
      %v3062 = vpop.f32.mrf.mxu0
      %v3063 = vadd.f32 0.0, %v3062
      %v3064 = vpop.f32.mrf.mxu0
      %3065 = vmatprep.mubr.f32.mxu0 %v2884
      %3066 = vmatmul.mubr.f32.gmra.mxu0 %v2883
      %v3067 = vpop.f32.mrf.mxu0
      %v3068 = vadd.f32 0.0, %v3067
      %v3069 = vpop.f32.mrf.mxu0
      %3070 = vmatprep.mubr.f32.mxu0 %v2886
      %3071 = vmatmul.mubr.f32.gmra.mxu0 %v2885
      %v3072 = vpop.f32.mrf.mxu0
      %v3073 = vadd.f32 0.0, %v3072
      %v3074 = vpop.f32.mrf.mxu0
      %3075 = vmatprep.mubr.f32.mxu0 %v2888
      %3076 = vmatmul.mubr.f32.gmra.mxu0 %v2887
      %v3077 = vpop.f32.mrf.mxu0
      %v3078 = vadd.f32 0.0, %v3077
      %v3079 = vpop.f32.mrf.mxu0
      %3080 = vmatprep.mubr.f32.mxu0 %v2890
      %3081 = vmatmul.mubr.f32.gmra.mxu0 %v2889
      %v3082 = vpop.f32.mrf.mxu0
      %v3083 = vadd.f32 0.0, %v3082
      %v3084 = vpop.f32.mrf.mxu0
      %3085 = vmatprep.mubr.f32.mxu0 %v2892
      %3086 = vmatmul.mubr.f32.gmra.mxu0 %v2891
      %v3087 = vpop.f32.mrf.mxu0
      %v3088 = vadd.f32 0.0, %v3087
      %v3089 = vpop.f32.mrf.mxu0
      %3090 = vmatprep.mubr.f32.mxu0 %v2894
      %3091 = vmatmul.mubr.f32.gmra.mxu0 %v2893
      %v3092 = vpop.f32.mrf.mxu0
      %v3093 = vadd.f32 0.0, %v3092
      %v3094 = vpop.f32.mrf.mxu0
      %3095 = vdwg.mxu0
      %3096 = vset.pattern.permute.xlu0 6
      %3097 = vperm.xlu0 %3096, %v448
      %v3098 = vpop.permute.xlu0 %3097
      %3100 = vset.pattern.permute.xlu0 6
      %3101 = vperm.xlu0 %3100, %v449
      %v3102 = vpop.permute.xlu0 %3101
      %3104 = vset.pattern.permute.xlu0 6
      %3105 = vperm.xlu0 %3104, %v450
      %v3106 = vpop.permute.xlu0 %3105
      %3108 = vset.pattern.permute.xlu0 6
      %3109 = vperm.xlu0 %3108, %v451
      %v3110 = vpop.permute.xlu0 %3109
      %3112 = vset.pattern.permute.xlu0 6
      %3113 = vperm.xlu0 %3112, %v452
      %v3114 = vpop.permute.xlu0 %3113
      %3116 = vset.pattern.permute.xlu0 6
      %3117 = vperm.xlu0 %3116, %v453
      %v3118 = vpop.permute.xlu0 %3117
      %3120 = vset.pattern.permute.xlu0 6
      %3121 = vperm.xlu0 %3120, %v454
      %v3122 = vpop.permute.xlu0 %3121
      %3124 = vset.pattern.permute.xlu0 6
      %3125 = vperm.xlu0 %3124, %v455
      %v3126 = vpop.permute.xlu0 %3125
      %v3128 = vlaneseq
      %v3129 = vshrl.u32 %v3128, 7
      %v3130 = vsub.s32 6, %v3129
      %v3131 = vrot.slane %v456, %v3130
      %v3132 = vlaneseq
      %v3133 = vshrl.u32 %v3132, 7
      %v3134 = vsub.s32 6, %v3133
      %v3135 = vrot.slane %v457, %v3134
      %v3136 = vadd.f32 %v3098, %v3131
      %v3137 = vadd.f32 %v3098, %v3135
      %v3138 = vadd.f32 %v3102, %v3131
      %v3139 = vadd.f32 %v3102, %v3135
      %v3140 = vadd.f32 %v3106, %v3131
      %v3141 = vadd.f32 %v3106, %v3135
      %v3142 = vadd.f32 %v3110, %v3131
      %v3143 = vadd.f32 %v3110, %v3135
      %v3144 = vadd.f32 %v3114, %v3131
      %v3145 = vadd.f32 %v3114, %v3135
      %v3146 = vadd.f32 %v3118, %v3131
      %v3147 = vadd.f32 %v3118, %v3135
      %v3148 = vadd.f32 %v3122, %v3131
      %v3149 = vadd.f32 %v3122, %v3135
      %v3150 = vadd.f32 %v3126, %v3131
      %v3151 = vadd.f32 %v3126, %v3135
      %vm3152 = vcmp.gt.f32.partialorder %v3136, 0.0
      %vm3153 = vcmp.gt.f32.partialorder %v3137, 0.0
      %vm3154 = vcmp.gt.f32.partialorder %v3138, 0.0
      %vm3155 = vcmp.gt.f32.partialorder %v3139, 0.0
      %vm3156 = vcmp.gt.f32.partialorder %v3140, 0.0
      %vm3157 = vcmp.gt.f32.partialorder %v3141, 0.0
      %vm3158 = vcmp.gt.f32.partialorder %v3142, 0.0
      %vm3159 = vcmp.gt.f32.partialorder %v3143, 0.0
      %vm3160 = vcmp.gt.f32.partialorder %v3144, 0.0
      %vm3161 = vcmp.gt.f32.partialorder %v3145, 0.0
      %vm3162 = vcmp.gt.f32.partialorder %v3146, 0.0
      %vm3163 = vcmp.gt.f32.partialorder %v3147, 0.0
      %vm3164 = vcmp.gt.f32.partialorder %v3148, 0.0
      %vm3165 = vcmp.gt.f32.partialorder %v3149, 0.0
      %vm3166 = vcmp.gt.f32.partialorder %v3150, 0.0
      %vm3167 = vcmp.gt.f32.partialorder %v3151, 0.0
      %v3168 = vmul.f32 %v3136, 0.2
      %v3169 = vmul.f32 %v3137, 0.2
      %v3170 = vmul.f32 %v3138, 0.2
      %v3171 = vmul.f32 %v3139, 0.2
      %v3172 = vmul.f32 %v3140, 0.2
      %v3173 = vmul.f32 %v3141, 0.2
      %v3174 = vmul.f32 %v3142, 0.2
      %v3175 = vmul.f32 %v3143, 0.2
      %v3176 = vmul.f32 %v3144, 0.2
      %v3177 = vmul.f32 %v3145, 0.2
      %v3178 = vmul.f32 %v3146, 0.2
      %v3179 = vmul.f32 %v3147, 0.2
      %v3180 = vmul.f32 %v3148, 0.2
      %v3181 = vmul.f32 %v3149, 0.2
      %v3182 = vmul.f32 %v3150, 0.2
      %v3183 = vmul.f32 %v3151, 0.2
      %v3184 = vsel %vm3152, %v3136, %v3168
      %v3185 = vsel %vm3153, %v3137, %v3169
      %v3186 = vsel %vm3154, %v3138, %v3170
      %v3187 = vsel %vm3155, %v3139, %v3171
      %v3188 = vsel %vm3156, %v3140, %v3172
      %v3189 = vsel %vm3157, %v3141, %v3173
      %v3190 = vsel %vm3158, %v3142, %v3174
      %v3191 = vsel %vm3159, %v3143, %v3175
      %v3192 = vsel %vm3160, %v3144, %v3176
      %v3193 = vsel %vm3161, %v3145, %v3177
      %v3194 = vsel %vm3162, %v3146, %v3178
      %v3195 = vsel %vm3163, %v3147, %v3179
      %v3196 = vsel %vm3164, %v3148, %v3180
      %v3197 = vsel %vm3165, %v3149, %v3181
      %v3198 = vsel %vm3166, %v3150, %v3182
      %v3199 = vsel %vm3167, %v3151, %v3183
      %v3200 = vadd.f32 %v3184, %v400
      %v3201 = vadd.f32 %v3185, %v401
      %v3202 = vadd.f32 %v3186, %v402
      %v3203 = vadd.f32 %v3187, %v403
      %v3204 = vadd.f32 %v3188, %v404
      %v3205 = vadd.f32 %v3189, %v405
      %v3206 = vadd.f32 %v3190, %v406
      %v3207 = vadd.f32 %v3191, %v407
      %v3208 = vadd.f32 %v3192, %v408
      %v3209 = vadd.f32 %v3193, %v409
      %v3210 = vadd.f32 %v3194, %v410
      %v3211 = vadd.f32 %v3195, %v411
      %v3212 = vadd.f32 %v3196, %v412
      %v3213 = vadd.f32 %v3197, %v413
      %v3214 = vadd.f32 %v3198, %v414
      %v3215 = vadd.f32 %v3199, %v415
      %v3216 = vmax.f32 %v3200, %v3201
      %3217 = vmax.xlane.f32.xlu0 %v3216
      %v3218 = vpop.xlane.xlu0 %3217
      %v3219 = vmax.f32 %v3202, %v3203
      %3220 = vmax.xlane.f32.xlu0 %v3219
      %v3221 = vpop.xlane.xlu0 %3220
      %v3222 = vmax.f32 %v3204, %v3205
      %3223 = vmax.xlane.f32.xlu0 %v3222
      %v3224 = vpop.xlane.xlu0 %3223
      %v3225 = vmax.f32 %v3206, %v3207
      %3226 = vmax.xlane.f32.xlu0 %v3225
      %v3227 = vpop.xlane.xlu0 %3226
      %v3228 = vmax.f32 %v3208, %v3209
      %3229 = vmax.xlane.f32.xlu0 %v3228
      %v3230 = vpop.xlane.xlu0 %3229
      %v3231 = vmax.f32 %v3210, %v3211
      %3232 = vmax.xlane.f32.xlu0 %v3231
      %v3233 = vpop.xlane.xlu0 %3232
      %v3234 = vmax.f32 %v3212, %v3213
      %3235 = vmax.xlane.f32.xlu0 %v3234
      %v3236 = vpop.xlane.xlu0 %3235
      %v3237 = vmax.f32 %v3214, %v3215
      %3238 = vmax.xlane.f32.xlu0 %v3237
      %v3239 = vpop.xlane.xlu0 %3238
      %v3240 = vsub.f32 %v3200, %v3218
      %v3241 = vsub.f32 %v3201, %v3218
      %v3242 = vsub.f32 %v3202, %v3221
      %v3243 = vsub.f32 %v3203, %v3221
      %v3244 = vsub.f32 %v3204, %v3224
      %v3245 = vsub.f32 %v3205, %v3224
      %v3246 = vsub.f32 %v3206, %v3227
      %v3247 = vsub.f32 %v3207, %v3227
      %v3248 = vsub.f32 %v3208, %v3230
      %v3249 = vsub.f32 %v3209, %v3230
      %v3250 = vsub.f32 %v3210, %v3233
      %v3251 = vsub.f32 %v3211, %v3233
      %v3252 = vsub.f32 %v3212, %v3236
      %v3253 = vsub.f32 %v3213, %v3236
      %v3254 = vsub.f32 %v3214, %v3239
      %v3255 = vsub.f32 %v3215, %v3239
      %v3256 = vmul.f32 %v3240, 1.442695
      %v3257 = vpow.pop %v3256
      %v3258 = vmul.f32 %v3241, 1.442695
      %v3259 = vpow.pop %v3258
      %v3260 = vmul.f32 %v3242, 1.442695
      %v3261 = vpow.pop %v3260
      %v3262 = vmul.f32 %v3243, 1.442695
      %v3263 = vpow.pop %v3262
      %v3264 = vmul.f32 %v3244, 1.442695
      %v3265 = vpow.pop %v3264
      %v3266 = vmul.f32 %v3245, 1.442695
      %v3267 = vpow.pop %v3266
      %v3268 = vmul.f32 %v3246, 1.442695
      %v3269 = vpow.pop %v3268
      %v3270 = vmul.f32 %v3247, 1.442695
      %v3271 = vpow.pop %v3270
      %v3272 = vmul.f32 %v3248, 1.442695
      %v3273 = vpow.pop %v3272
      %v3274 = vmul.f32 %v3249, 1.442695
      %v3275 = vpow.pop %v3274
      %v3276 = vmul.f32 %v3250, 1.442695
      %v3277 = vpow.pop %v3276
      %v3278 = vmul.f32 %v3251, 1.442695
      %v3279 = vpow.pop %v3278
      %v3280 = vmul.f32 %v3252, 1.442695
      %v3281 = vpow.pop %v3280
      %v3282 = vmul.f32 %v3253, 1.442695
      %v3283 = vpow.pop %v3282
      %v3284 = vmul.f32 %v3254, 1.442695
      %v3285 = vpow.pop %v3284
      %v3286 = vmul.f32 %v3255, 1.442695
      %v3287 = vpow.pop %v3286
      %v3288 = vadd.f32 %v3257, %v3259
      %3289 = vadd.xlane.f32.xlu0 %v3288
      %v3290 = vpop.xlane.xlu0 %3289
      %v3291 = vadd.f32 %v3261, %v3263
      %3292 = vadd.xlane.f32.xlu0 %v3291
      %v3293 = vpop.xlane.xlu0 %3292
      %v3294 = vadd.f32 %v3265, %v3267
      %3295 = vadd.xlane.f32.xlu0 %v3294
      %v3296 = vpop.xlane.xlu0 %3295
      %v3297 = vadd.f32 %v3269, %v3271
      %3298 = vadd.xlane.f32.xlu0 %v3297
      %v3299 = vpop.xlane.xlu0 %3298
      %v3300 = vadd.f32 %v3273, %v3275
      %3301 = vadd.xlane.f32.xlu0 %v3300
      %v3302 = vpop.xlane.xlu0 %3301
      %v3303 = vadd.f32 %v3277, %v3279
      %3304 = vadd.xlane.f32.xlu0 %v3303
      %v3305 = vpop.xlane.xlu0 %3304
      %v3306 = vadd.f32 %v3281, %v3283
      %3307 = vadd.xlane.f32.xlu0 %v3306
      %v3308 = vpop.xlane.xlu0 %3307
      %v3309 = vadd.f32 %v3285, %v3287
      %3310 = vadd.xlane.f32.xlu0 %v3309
      %v3311 = vpop.xlane.xlu0 %3310
      %v3312 = vrcp.pop %v3290
      %v3313 = vmul.f32 1.0, %v3312
      %v3314 = vrcp.pop %v3293
      %v3315 = vmul.f32 1.0, %v3314
      %v3316 = vrcp.pop %v3296
      %v3317 = vmul.f32 1.0, %v3316
      %v3318 = vrcp.pop %v3299
      %v3319 = vmul.f32 1.0, %v3318
      %v3320 = vrcp.pop %v3302
      %v3321 = vmul.f32 1.0, %v3320
      %v3322 = vrcp.pop %v3305
      %v3323 = vmul.f32 1.0, %v3322
      %v3324 = vrcp.pop %v3308
      %v3325 = vmul.f32 1.0, %v3324
      %v3326 = vrcp.pop %v3311
      %v3327 = vmul.f32 1.0, %v3326
      %v3328 = vmul.f32 %v3257, %v3313
      %v3329 = vmul.f32 %v3259, %v3313
      %v3330 = vmul.f32 %v3261, %v3315
      %v3331 = vmul.f32 %v3263, %v3315
      %v3332 = vmul.f32 %v3265, %v3317
      %v3333 = vmul.f32 %v3267, %v3317
      %v3334 = vmul.f32 %v3269, %v3319
      %v3335 = vmul.f32 %v3271, %v3319
      %v3336 = vmul.f32 %v3273, %v3321
      %v3337 = vmul.f32 %v3275, %v3321
      %v3338 = vmul.f32 %v3277, %v3323
      %v3339 = vmul.f32 %v3279, %v3323
      %v3340 = vmul.f32 %v3281, %v3325
      %v3341 = vmul.f32 %v3283, %v3325
      %v3342 = vmul.f32 %v3285, %v3327
      %v3343 = vmul.f32 %v3287, %v3327
      %3344 = vrot.lane.b32.xlu0 %v416, 80
      %v3345 = vpop.permute.xlu0 %3344
      %3346 = vrot.lane.b32.xlu0 %v417, 80
      %v3347 = vpop.permute.xlu0 %3346
      %3348 = vrot.lane.b32.xlu0 %v418, 80
      %v3349 = vpop.permute.xlu0 %3348
      %3350 = vrot.lane.b32.xlu0 %v419, 80
      %v3351 = vpop.permute.xlu0 %3350
      %3352 = vrot.lane.b32.xlu0 %v420, 80
      %v3353 = vpop.permute.xlu0 %3352
      %3354 = vrot.lane.b32.xlu0 %v421, 80
      %v3355 = vpop.permute.xlu0 %3354
      %3356 = vrot.lane.b32.xlu0 %v422, 80
      %v3357 = vpop.permute.xlu0 %3356
      %3358 = vrot.lane.b32.xlu0 %v423, 80
      %v3359 = vpop.permute.xlu0 %3358
      %3360 = vrot.lane.b32.xlu0 %v424, 80
      %v3361 = vpop.permute.xlu0 %3360
      %3362 = vrot.lane.b32.xlu0 %v425, 80
      %v3363 = vpop.permute.xlu0 %3362
      %3364 = vrot.lane.b32.xlu0 %v426, 80
      %v3365 = vpop.permute.xlu0 %3364
      %3366 = vrot.lane.b32.xlu0 %v427, 80
      %v3367 = vpop.permute.xlu0 %3366
      %3368 = vrot.lane.b32.xlu0 %v428, 80
      %v3369 = vpop.permute.xlu0 %3368
      %3370 = vrot.lane.b32.xlu0 %v429, 80
      %v3371 = vpop.permute.xlu0 %3370
      %3372 = vrot.lane.b32.xlu0 %v430, 80
      %v3373 = vpop.permute.xlu0 %3372
      %3374 = vrot.lane.b32.xlu0 %v431, 80
      %v3375 = vpop.permute.xlu0 %3374
      %3376 = vrot.lane.b32.xlu0 %v432, 80
      %v3377 = vpop.permute.xlu0 %3376
      %3378 = vrot.lane.b32.xlu0 %v433, 80
      %v3379 = vpop.permute.xlu0 %3378
      %3380 = vrot.lane.b32.xlu0 %v434, 80
      %v3381 = vpop.permute.xlu0 %3380
      %3382 = vrot.lane.b32.xlu0 %v435, 80
      %v3383 = vpop.permute.xlu0 %3382
      %3384 = vrot.lane.b32.xlu0 %v436, 80
      %v3385 = vpop.permute.xlu0 %3384
      %3386 = vrot.lane.b32.xlu0 %v437, 80
      %v3387 = vpop.permute.xlu0 %3386
      %3388 = vrot.lane.b32.xlu0 %v438, 80
      %v3389 = vpop.permute.xlu0 %3388
      %3390 = vrot.lane.b32.xlu0 %v439, 80
      %v3391 = vpop.permute.xlu0 %3390
      %3392 = vrot.lane.b32.xlu0 %v440, 80
      %v3393 = vpop.permute.xlu0 %3392
      %3394 = vrot.lane.b32.xlu0 %v441, 80
      %v3395 = vpop.permute.xlu0 %3394
      %3396 = vrot.lane.b32.xlu0 %v442, 80
      %v3397 = vpop.permute.xlu0 %3396
      %3398 = vrot.lane.b32.xlu0 %v443, 80
      %v3399 = vpop.permute.xlu0 %3398
      %3400 = vrot.lane.b32.xlu0 %v444, 80
      %v3401 = vpop.permute.xlu0 %3400
      %3402 = vrot.lane.b32.xlu0 %v445, 80
      %v3403 = vpop.permute.xlu0 %3402
      %3404 = vrot.lane.b32.xlu0 %v446, 80
      %v3405 = vpop.permute.xlu0 %3404
      %3406 = vrot.lane.b32.xlu0 %v447, 80
      %v3407 = vpop.permute.xlu0 %3406
      %3440 = vmatprep.subr.mxu0 0.0
      %3441 = vmatpush1.msra.mxu0 %v3375
      %3442 = vmatprep.subr.mxu0 0.0
      %3443 = vmatpush1.msra.mxu0 %v3373
      %3444 = vmatprep.subr.mxu0 0.0
      %3445 = vmatpush1.msra.mxu0 %v3371
      %3446 = vmatprep.subr.mxu0 0.0
      %3447 = vmatpush1.msra.mxu0 %v3369
      %3448 = vmatprep.subr.mxu0 0.0
      %3449 = vmatpush1.msra.mxu0 %v3367
      %3450 = vmatprep.subr.mxu0 0.0
      %3451 = vmatpush1.msra.mxu0 %v3365
      %3452 = vmatprep.subr.mxu0 0.0
      %3453 = vmatpush1.msra.mxu0 %v3363
      %3454 = vmatprep.subr.mxu0 0.0
      %3455 = vmatpush1.msra.mxu0 %v3361
      %3456 = vmatprep.subr.mxu0 0.0
      %3457 = vmatpush1.msra.mxu0 %v3359
      %3458 = vmatprep.subr.mxu0 0.0
      %3459 = vmatpush1.msra.mxu0 %v3357
      %3460 = vmatprep.subr.mxu0 0.0
      %3461 = vmatpush1.msra.mxu0 %v3355
      %3462 = vmatprep.subr.mxu0 0.0
      %3463 = vmatpush1.msra.mxu0 %v3353
      %3464 = vmatprep.subr.mxu0 0.0
      %3465 = vmatpush1.msra.mxu0 %v3351
      %3466 = vmatprep.subr.mxu0 0.0
      %3467 = vmatpush1.msra.mxu0 %v3349
      %3468 = vmatprep.subr.mxu0 0.0
      %3469 = vmatpush1.msra.mxu0 %v3347
      %3470 = vmatprep.subr.mxu0 0.0
      %3471 = vmatpush1.msra.mxu0 %v3345
      %3472 = vmatprep.subr.mxu0 0.0
      %3473 = vmatpush2.msra.mxu0 %v3407
      %3474 = vmatprep.subr.mxu0 0.0
      %3475 = vmatpush2.msra.mxu0 %v3405
      %3476 = vmatprep.subr.mxu0 0.0
      %3477 = vmatpush2.msra.mxu0 %v3403
      %3478 = vmatprep.subr.mxu0 0.0
      %3479 = vmatpush2.msra.mxu0 %v3401
      %3480 = vmatprep.subr.mxu0 0.0
      %3481 = vmatpush2.msra.mxu0 %v3399
      %3482 = vmatprep.subr.mxu0 0.0
      %3483 = vmatpush2.msra.mxu0 %v3397
      %3484 = vmatprep.subr.mxu0 0.0
      %3485 = vmatpush2.msra.mxu0 %v3395
      %3486 = vmatprep.subr.mxu0 0.0
      %3487 = vmatpush2.msra.mxu0 %v3393
      %3488 = vmatprep.subr.mxu0 0.0
      %3489 = vmatpush2.msra.mxu0 %v3391
      %3490 = vmatprep.subr.mxu0 0.0
      %3491 = vmatpush2.msra.mxu0 %v3389
      %3492 = vmatprep.subr.mxu0 0.0
      %3493 = vmatpush2.msra.mxu0 %v3387
      %3494 = vmatprep.subr.mxu0 0.0
      %3495 = vmatpush2.msra.mxu0 %v3385
      %3496 = vmatprep.subr.mxu0 0.0
      %3497 = vmatpush2.msra.mxu0 %v3383
      %3498 = vmatprep.subr.mxu0 0.0
      %3499 = vmatpush2.msra.mxu0 %v3381
      %3500 = vmatprep.subr.mxu0 0.0
      %3501 = vmatpush2.msra.mxu0 %v3379
      %3502 = vmatprep.subr.mxu0 0.0
      %3503 = vmatpush2.msra.mxu0 %v3377
      %3504 = vmatprep.mubr.f32.mxu0 %v3329
      %3505 = vmatmul.mubr.f32.gmra.mxu0 %v3328
      %v3506 = vpop.f32.mrf.mxu0
      %v3507 = vadd.f32 0.0, %v3506
      %v3508 = vpop.f32.mrf.mxu0
      %3509 = vmatprep.mubr.f32.mxu0 %v3331
      %3510 = vmatmul.mubr.f32.gmra.mxu0 %v3330
      %v3511 = vpop.f32.mrf.mxu0
      %v3512 = vadd.f32 0.0, %v3511
      %v3513 = vpop.f32.mrf.mxu0
      %3514 = vmatprep.mubr.f32.mxu0 %v3333
      %3515 = vmatmul.mubr.f32.gmra.mxu0 %v3332
      %v3516 = vpop.f32.mrf.mxu0
      %v3517 = vadd.f32 0.0, %v3516
      %v3518 = vpop.f32.mrf.mxu0
      %3519 = vmatprep.mubr.f32.mxu0 %v3335
      %3520 = vmatmul.mubr.f32.gmra.mxu0 %v3334
      %v3521 = vpop.f32.mrf.mxu0
      %v3522 = vadd.f32 0.0, %v3521
      %v3523 = vpop.f32.mrf.mxu0
      %3524 = vmatprep.mubr.f32.mxu0 %v3337
      %3525 = vmatmul.mubr.f32.gmra.mxu0 %v3336
      %v3526 = vpop.f32.mrf.mxu0
      %v3527 = vadd.f32 0.0, %v3526
      %v3528 = vpop.f32.mrf.mxu0
      %3529 = vmatprep.mubr.f32.mxu0 %v3339
      %3530 = vmatmul.mubr.f32.gmra.mxu0 %v3338
      %v3531 = vpop.f32.mrf.mxu0
      %v3532 = vadd.f32 0.0, %v3531
      %v3533 = vpop.f32.mrf.mxu0
      %3534 = vmatprep.mubr.f32.mxu0 %v3341
      %3535 = vmatmul.mubr.f32.gmra.mxu0 %v3340
      %v3536 = vpop.f32.mrf.mxu0
      %v3537 = vadd.f32 0.0, %v3536
      %v3538 = vpop.f32.mrf.mxu0
      %3539 = vmatprep.mubr.f32.mxu0 %v3343
      %3540 = vmatmul.mubr.f32.gmra.mxu0 %v3342
      %v3541 = vpop.f32.mrf.mxu0
      %v3542 = vadd.f32 0.0, %v3541
      %v3543 = vpop.f32.mrf.mxu0
      %3544 = vdwg.mxu0
      %3545 = vset.pattern.permute.xlu0 7
      %3546 = vperm.xlu0 %3545, %v448
      %v3547 = vpop.permute.xlu0 %3546
      %3549 = vset.pattern.permute.xlu0 7
      %3550 = vperm.xlu0 %3549, %v449
      %v3551 = vpop.permute.xlu0 %3550
      %3553 = vset.pattern.permute.xlu0 7
      %3554 = vperm.xlu0 %3553, %v450
      %v3555 = vpop.permute.xlu0 %3554
      %3557 = vset.pattern.permute.xlu0 7
      %3558 = vperm.xlu0 %3557, %v451
      %v3559 = vpop.permute.xlu0 %3558
      %3561 = vset.pattern.permute.xlu0 7
      %3562 = vperm.xlu0 %3561, %v452
      %v3563 = vpop.permute.xlu0 %3562
      %3565 = vset.pattern.permute.xlu0 7
      %3566 = vperm.xlu0 %3565, %v453
      %v3567 = vpop.permute.xlu0 %3566
      %3569 = vset.pattern.permute.xlu0 7
      %3570 = vperm.xlu0 %3569, %v454
      %v3571 = vpop.permute.xlu0 %3570
      %3573 = vset.pattern.permute.xlu0 7
      %3574 = vperm.xlu0 %3573, %v455
      %v3575 = vpop.permute.xlu0 %3574
      %v3577 = vlaneseq
      %v3578 = vshrl.u32 %v3577, 7
      %v3579 = vsub.s32 7, %v3578
      %v3580 = vrot.slane %v456, %v3579
      %v3581 = vlaneseq
      %v3582 = vshrl.u32 %v3581, 7
      %v3583 = vsub.s32 7, %v3582
      %v3584 = vrot.slane %v457, %v3583
      %v3585 = vadd.f32 %v3547, %v3580
      %v3586 = vadd.f32 %v3547, %v3584
      %v3587 = vadd.f32 %v3551, %v3580
      %v3588 = vadd.f32 %v3551, %v3584
      %v3589 = vadd.f32 %v3555, %v3580
      %v3590 = vadd.f32 %v3555, %v3584
      %v3591 = vadd.f32 %v3559, %v3580
      %v3592 = vadd.f32 %v3559, %v3584
      %v3593 = vadd.f32 %v3563, %v3580
      %v3594 = vadd.f32 %v3563, %v3584
      %v3595 = vadd.f32 %v3567, %v3580
      %v3596 = vadd.f32 %v3567, %v3584
      %v3597 = vadd.f32 %v3571, %v3580
      %v3598 = vadd.f32 %v3571, %v3584
      %v3599 = vadd.f32 %v3575, %v3580
      %v3600 = vadd.f32 %v3575, %v3584
      %vm3601 = vcmp.gt.f32.partialorder %v3585, 0.0
      %vm3602 = vcmp.gt.f32.partialorder %v3586, 0.0
      %vm3603 = vcmp.gt.f32.partialorder %v3587, 0.0
      %vm3604 = vcmp.gt.f32.partialorder %v3588, 0.0
      %vm3605 = vcmp.gt.f32.partialorder %v3589, 0.0
      %vm3606 = vcmp.gt.f32.partialorder %v3590, 0.0
      %vm3607 = vcmp.gt.f32.partialorder %v3591, 0.0
      %vm3608 = vcmp.gt.f32.partialorder %v3592, 0.0
      %vm3609 = vcmp.gt.f32.partialorder %v3593, 0.0
      %vm3610 = vcmp.gt.f32.partialorder %v3594, 0.0
      %vm3611 = vcmp.gt.f32.partialorder %v3595, 0.0
      %vm3612 = vcmp.gt.f32.partialorder %v3596, 0.0
      %vm3613 = vcmp.gt.f32.partialorder %v3597, 0.0
      %vm3614 = vcmp.gt.f32.partialorder %v3598, 0.0
      %vm3615 = vcmp.gt.f32.partialorder %v3599, 0.0
      %vm3616 = vcmp.gt.f32.partialorder %v3600, 0.0
      %v3617 = vmul.f32 %v3585, 0.2
      %v3618 = vmul.f32 %v3586, 0.2
      %v3619 = vmul.f32 %v3587, 0.2
      %v3620 = vmul.f32 %v3588, 0.2
      %v3621 = vmul.f32 %v3589, 0.2
      %v3622 = vmul.f32 %v3590, 0.2
      %v3623 = vmul.f32 %v3591, 0.2
      %v3624 = vmul.f32 %v3592, 0.2
      %v3625 = vmul.f32 %v3593, 0.2
      %v3626 = vmul.f32 %v3594, 0.2
      %v3627 = vmul.f32 %v3595, 0.2
      %v3628 = vmul.f32 %v3596, 0.2
      %v3629 = vmul.f32 %v3597, 0.2
      %v3630 = vmul.f32 %v3598, 0.2
      %v3631 = vmul.f32 %v3599, 0.2
      %v3632 = vmul.f32 %v3600, 0.2
      %v3633 = vsel %vm3601, %v3585, %v3617
      %v3634 = vsel %vm3602, %v3586, %v3618
      %v3635 = vsel %vm3603, %v3587, %v3619
      %v3636 = vsel %vm3604, %v3588, %v3620
      %v3637 = vsel %vm3605, %v3589, %v3621
      %v3638 = vsel %vm3606, %v3590, %v3622
      %v3639 = vsel %vm3607, %v3591, %v3623
      %v3640 = vsel %vm3608, %v3592, %v3624
      %v3641 = vsel %vm3609, %v3593, %v3625
      %v3642 = vsel %vm3610, %v3594, %v3626
      %v3643 = vsel %vm3611, %v3595, %v3627
      %v3644 = vsel %vm3612, %v3596, %v3628
      %v3645 = vsel %vm3613, %v3597, %v3629
      %v3646 = vsel %vm3614, %v3598, %v3630
      %v3647 = vsel %vm3615, %v3599, %v3631
      %v3648 = vsel %vm3616, %v3600, %v3632
      %v3649 = vadd.f32 %v3633, %v400
      %v3650 = vadd.f32 %v3634, %v401
      %v3651 = vadd.f32 %v3635, %v402
      %v3652 = vadd.f32 %v3636, %v403
      %v3653 = vadd.f32 %v3637, %v404
      %v3654 = vadd.f32 %v3638, %v405
      %v3655 = vadd.f32 %v3639, %v406
      %v3656 = vadd.f32 %v3640, %v407
      %v3657 = vadd.f32 %v3641, %v408
      %v3658 = vadd.f32 %v3642, %v409
      %v3659 = vadd.f32 %v3643, %v410
      %v3660 = vadd.f32 %v3644, %v411
      %v3661 = vadd.f32 %v3645, %v412
      %v3662 = vadd.f32 %v3646, %v413
      %v3663 = vadd.f32 %v3647, %v414
      %v3664 = vadd.f32 %v3648, %v415
      %v3665 = vmax.f32 %v3649, %v3650
      %3666 = vmax.xlane.f32.xlu0 %v3665
      %v3667 = vpop.xlane.xlu0 %3666
      %v3668 = vmax.f32 %v3651, %v3652
      %3669 = vmax.xlane.f32.xlu0 %v3668
      %v3670 = vpop.xlane.xlu0 %3669
      %v3671 = vmax.f32 %v3653, %v3654
      %3672 = vmax.xlane.f32.xlu0 %v3671
      %v3673 = vpop.xlane.xlu0 %3672
      %v3674 = vmax.f32 %v3655, %v3656
      %3675 = vmax.xlane.f32.xlu0 %v3674
      %v3676 = vpop.xlane.xlu0 %3675
      %v3677 = vmax.f32 %v3657, %v3658
      %3678 = vmax.xlane.f32.xlu0 %v3677
      %v3679 = vpop.xlane.xlu0 %3678
      %v3680 = vmax.f32 %v3659, %v3660
      %3681 = vmax.xlane.f32.xlu0 %v3680
      %v3682 = vpop.xlane.xlu0 %3681
      %v3683 = vmax.f32 %v3661, %v3662
      %3684 = vmax.xlane.f32.xlu0 %v3683
      %v3685 = vpop.xlane.xlu0 %3684
      %v3686 = vmax.f32 %v3663, %v3664
      %3687 = vmax.xlane.f32.xlu0 %v3686
      %v3688 = vpop.xlane.xlu0 %3687
      %v3689 = vsub.f32 %v3649, %v3667
      %v3690 = vsub.f32 %v3650, %v3667
      %v3691 = vsub.f32 %v3651, %v3670
      %v3692 = vsub.f32 %v3652, %v3670
      %v3693 = vsub.f32 %v3653, %v3673
      %v3694 = vsub.f32 %v3654, %v3673
      %v3695 = vsub.f32 %v3655, %v3676
      %v3696 = vsub.f32 %v3656, %v3676
      %v3697 = vsub.f32 %v3657, %v3679
      %v3698 = vsub.f32 %v3658, %v3679
      %v3699 = vsub.f32 %v3659, %v3682
      %v3700 = vsub.f32 %v3660, %v3682
      %v3701 = vsub.f32 %v3661, %v3685
      %v3702 = vsub.f32 %v3662, %v3685
      %v3703 = vsub.f32 %v3663, %v3688
      %v3704 = vsub.f32 %v3664, %v3688
      %v3705 = vmul.f32 %v3689, 1.442695
      %v3706 = vpow.pop %v3705
      %v3707 = vmul.f32 %v3690, 1.442695
      %v3708 = vpow.pop %v3707
      %v3709 = vmul.f32 %v3691, 1.442695
      %v3710 = vpow.pop %v3709
      %v3711 = vmul.f32 %v3692, 1.442695
      %v3712 = vpow.pop %v3711
      %v3713 = vmul.f32 %v3693, 1.442695
      %v3714 = vpow.pop %v3713
      %v3715 = vmul.f32 %v3694, 1.442695
      %v3716 = vpow.pop %v3715
      %v3717 = vmul.f32 %v3695, 1.442695
      %v3718 = vpow.pop %v3717
      %v3719 = vmul.f32 %v3696, 1.442695
      %v3720 = vpow.pop %v3719
      %v3721 = vmul.f32 %v3697, 1.442695
      %v3722 = vpow.pop %v3721
      %v3723 = vmul.f32 %v3698, 1.442695
      %v3724 = vpow.pop %v3723
      %v3725 = vmul.f32 %v3699, 1.442695
      %v3726 = vpow.pop %v3725
      %v3727 = vmul.f32 %v3700, 1.442695
      %v3728 = vpow.pop %v3727
      %v3729 = vmul.f32 %v3701, 1.442695
      %v3730 = vpow.pop %v3729
      %v3731 = vmul.f32 %v3702, 1.442695
      %v3732 = vpow.pop %v3731
      %v3733 = vmul.f32 %v3703, 1.442695
      %v3734 = vpow.pop %v3733
      %v3735 = vmul.f32 %v3704, 1.442695
      %v3736 = vpow.pop %v3735
      %v3737 = vadd.f32 %v3706, %v3708
      %3738 = vadd.xlane.f32.xlu0 %v3737
      %v3739 = vpop.xlane.xlu0 %3738
      %v3740 = vadd.f32 %v3710, %v3712
      %3741 = vadd.xlane.f32.xlu0 %v3740
      %v3742 = vpop.xlane.xlu0 %3741
      %v3743 = vadd.f32 %v3714, %v3716
      %3744 = vadd.xlane.f32.xlu0 %v3743
      %v3745 = vpop.xlane.xlu0 %3744
      %v3746 = vadd.f32 %v3718, %v3720
      %3747 = vadd.xlane.f32.xlu0 %v3746
      %v3748 = vpop.xlane.xlu0 %3747
      %v3749 = vadd.f32 %v3722, %v3724
      %3750 = vadd.xlane.f32.xlu0 %v3749
      %v3751 = vpop.xlane.xlu0 %3750
      %v3752 = vadd.f32 %v3726, %v3728
      %3753 = vadd.xlane.f32.xlu0 %v3752
      %v3754 = vpop.xlane.xlu0 %3753
      %v3755 = vadd.f32 %v3730, %v3732
      %3756 = vadd.xlane.f32.xlu0 %v3755
      %v3757 = vpop.xlane.xlu0 %3756
      %v3758 = vadd.f32 %v3734, %v3736
      %3759 = vadd.xlane.f32.xlu0 %v3758
      %v3760 = vpop.xlane.xlu0 %3759
      %v3761 = vrcp.pop %v3739
      %v3762 = vmul.f32 1.0, %v3761
      %v3763 = vrcp.pop %v3742
      %v3764 = vmul.f32 1.0, %v3763
      %v3765 = vrcp.pop %v3745
      %v3766 = vmul.f32 1.0, %v3765
      %v3767 = vrcp.pop %v3748
      %v3768 = vmul.f32 1.0, %v3767
      %v3769 = vrcp.pop %v3751
      %v3770 = vmul.f32 1.0, %v3769
      %v3771 = vrcp.pop %v3754
      %v3772 = vmul.f32 1.0, %v3771
      %v3773 = vrcp.pop %v3757
      %v3774 = vmul.f32 1.0, %v3773
      %v3775 = vrcp.pop %v3760
      %v3776 = vmul.f32 1.0, %v3775
      %v3777 = vmul.f32 %v3706, %v3762
      %v3778 = vmul.f32 %v3708, %v3762
      %v3779 = vmul.f32 %v3710, %v3764
      %v3780 = vmul.f32 %v3712, %v3764
      %v3781 = vmul.f32 %v3714, %v3766
      %v3782 = vmul.f32 %v3716, %v3766
      %v3783 = vmul.f32 %v3718, %v3768
      %v3784 = vmul.f32 %v3720, %v3768
      %v3785 = vmul.f32 %v3722, %v3770
      %v3786 = vmul.f32 %v3724, %v3770
      %v3787 = vmul.f32 %v3726, %v3772
      %v3788 = vmul.f32 %v3728, %v3772
      %v3789 = vmul.f32 %v3730, %v3774
      %v3790 = vmul.f32 %v3732, %v3774
      %v3791 = vmul.f32 %v3734, %v3776
      %v3792 = vmul.f32 %v3736, %v3776
      %3793 = vrot.lane.b32.xlu0 %v416, 72
      %v3794 = vpop.permute.xlu0 %3793
      %3795 = vrot.lane.b32.xlu0 %v417, 72
      %v3796 = vpop.permute.xlu0 %3795
      %3797 = vrot.lane.b32.xlu0 %v418, 72
      %v3798 = vpop.permute.xlu0 %3797
      %3799 = vrot.lane.b32.xlu0 %v419, 72
      %v3800 = vpop.permute.xlu0 %3799
      %3801 = vrot.lane.b32.xlu0 %v420, 72
      %v3802 = vpop.permute.xlu0 %3801
      %3803 = vrot.lane.b32.xlu0 %v421, 72
      %v3804 = vpop.permute.xlu0 %3803
      %3805 = vrot.lane.b32.xlu0 %v422, 72
      %v3806 = vpop.permute.xlu0 %3805
      %3807 = vrot.lane.b32.xlu0 %v423, 72
      %v3808 = vpop.permute.xlu0 %3807
      %3809 = vrot.lane.b32.xlu0 %v424, 72
      %v3810 = vpop.permute.xlu0 %3809
      %3811 = vrot.lane.b32.xlu0 %v425, 72
      %v3812 = vpop.permute.xlu0 %3811
      %3813 = vrot.lane.b32.xlu0 %v426, 72
      %v3814 = vpop.permute.xlu0 %3813
      %3815 = vrot.lane.b32.xlu0 %v427, 72
      %v3816 = vpop.permute.xlu0 %3815
      %3817 = vrot.lane.b32.xlu0 %v428, 72
      %v3818 = vpop.permute.xlu0 %3817
      %3819 = vrot.lane.b32.xlu0 %v429, 72
      %v3820 = vpop.permute.xlu0 %3819
      %3821 = vrot.lane.b32.xlu0 %v430, 72
      %v3822 = vpop.permute.xlu0 %3821
      %3823 = vrot.lane.b32.xlu0 %v431, 72
      %v3824 = vpop.permute.xlu0 %3823
      %3825 = vrot.lane.b32.xlu0 %v432, 72
      %v3826 = vpop.permute.xlu0 %3825
      %3827 = vrot.lane.b32.xlu0 %v433, 72
      %v3828 = vpop.permute.xlu0 %3827
      %3829 = vrot.lane.b32.xlu0 %v434, 72
      %v3830 = vpop.permute.xlu0 %3829
      %3831 = vrot.lane.b32.xlu0 %v435, 72
      %v3832 = vpop.permute.xlu0 %3831
      %3833 = vrot.lane.b32.xlu0 %v436, 72
      %v3834 = vpop.permute.xlu0 %3833
      %3835 = vrot.lane.b32.xlu0 %v437, 72
      %v3836 = vpop.permute.xlu0 %3835
      %3837 = vrot.lane.b32.xlu0 %v438, 72
      %v3838 = vpop.permute.xlu0 %3837
      %3839 = vrot.lane.b32.xlu0 %v439, 72
      %v3840 = vpop.permute.xlu0 %3839
      %3841 = vrot.lane.b32.xlu0 %v440, 72
      %v3842 = vpop.permute.xlu0 %3841
      %3843 = vrot.lane.b32.xlu0 %v441, 72
      %v3844 = vpop.permute.xlu0 %3843
      %3845 = vrot.lane.b32.xlu0 %v442, 72
      %v3846 = vpop.permute.xlu0 %3845
      %3847 = vrot.lane.b32.xlu0 %v443, 72
      %v3848 = vpop.permute.xlu0 %3847
      %3849 = vrot.lane.b32.xlu0 %v444, 72
      %v3850 = vpop.permute.xlu0 %3849
      %3851 = vrot.lane.b32.xlu0 %v445, 72
      %v3852 = vpop.permute.xlu0 %3851
      %3853 = vrot.lane.b32.xlu0 %v446, 72
      %v3854 = vpop.permute.xlu0 %3853
      %3855 = vrot.lane.b32.xlu0 %v447, 72
      %v3856 = vpop.permute.xlu0 %3855
      %3889 = vmatprep.subr.mxu0 0.0
      %3890 = vmatpush1.msra.mxu0 %v3824
      %3891 = vmatprep.subr.mxu0 0.0
      %3892 = vmatpush1.msra.mxu0 %v3822
      %3893 = vmatprep.subr.mxu0 0.0
      %3894 = vmatpush1.msra.mxu0 %v3820
      %3895 = vmatprep.subr.mxu0 0.0
      %3896 = vmatpush1.msra.mxu0 %v3818
      %3897 = vmatprep.subr.mxu0 0.0
      %3898 = vmatpush1.msra.mxu0 %v3816
      %3899 = vmatprep.subr.mxu0 0.0
      %3900 = vmatpush1.msra.mxu0 %v3814
      %3901 = vmatprep.subr.mxu0 0.0
      %3902 = vmatpush1.msra.mxu0 %v3812
      %3903 = vmatprep.subr.mxu0 0.0
      %3904 = vmatpush1.msra.mxu0 %v3810
      %3905 = vmatprep.subr.mxu0 0.0
      %3906 = vmatpush1.msra.mxu0 %v3808
      %3907 = vmatprep.subr.mxu0 0.0
      %3908 = vmatpush1.msra.mxu0 %v3806
      %3909 = vmatprep.subr.mxu0 0.0
      %3910 = vmatpush1.msra.mxu0 %v3804
      %3911 = vmatprep.subr.mxu0 0.0
      %3912 = vmatpush1.msra.mxu0 %v3802
      %3913 = vmatprep.subr.mxu0 0.0
      %3914 = vmatpush1.msra.mxu0 %v3800
      %3915 = vmatprep.subr.mxu0 0.0
      %3916 = vmatpush1.msra.mxu0 %v3798
      %3917 = vmatprep.subr.mxu0 0.0
      %3918 = vmatpush1.msra.mxu0 %v3796
      %3919 = vmatprep.subr.mxu0 0.0
      %3920 = vmatpush1.msra.mxu0 %v3794
      %3921 = vmatprep.subr.mxu0 0.0
      %3922 = vmatpush2.msra.mxu0 %v3856
      %3923 = vmatprep.subr.mxu0 0.0
      %3924 = vmatpush2.msra.mxu0 %v3854
      %3925 = vmatprep.subr.mxu0 0.0
      %3926 = vmatpush2.msra.mxu0 %v3852
      %3927 = vmatprep.subr.mxu0 0.0
      %3928 = vmatpush2.msra.mxu0 %v3850
      %3929 = vmatprep.subr.mxu0 0.0
      %3930 = vmatpush2.msra.mxu0 %v3848
      %3931 = vmatprep.subr.mxu0 0.0
      %3932 = vmatpush2.msra.mxu0 %v3846
      %3933 = vmatprep.subr.mxu0 0.0
      %3934 = vmatpush2.msra.mxu0 %v3844
      %3935 = vmatprep.subr.mxu0 0.0
      %3936 = vmatpush2.msra.mxu0 %v3842
      %3937 = vmatprep.subr.mxu0 0.0
      %3938 = vmatpush2.msra.mxu0 %v3840
      %3939 = vmatprep.subr.mxu0 0.0
      %3940 = vmatpush2.msra.mxu0 %v3838
      %3941 = vmatprep.subr.mxu0 0.0
      %3942 = vmatpush2.msra.mxu0 %v3836
      %3943 = vmatprep.subr.mxu0 0.0
      %3944 = vmatpush2.msra.mxu0 %v3834
      %3945 = vmatprep.subr.mxu0 0.0
      %3946 = vmatpush2.msra.mxu0 %v3832
      %3947 = vmatprep.subr.mxu0 0.0
      %3948 = vmatpush2.msra.mxu0 %v3830
      %3949 = vmatprep.subr.mxu0 0.0
      %3950 = vmatpush2.msra.mxu0 %v3828
      %3951 = vmatprep.subr.mxu0 0.0
      %3952 = vmatpush2.msra.mxu0 %v3826
      %3953 = vmatprep.mubr.f32.mxu0 %v3778
      %3954 = vmatmul.mubr.f32.gmra.mxu0 %v3777
      %v3955 = vpop.f32.mrf.mxu0
      %v3956 = vadd.f32 0.0, %v3955
      %v3957 = vpop.f32.mrf.mxu0
      %3958 = vmatprep.mubr.f32.mxu0 %v3780
      %3959 = vmatmul.mubr.f32.gmra.mxu0 %v3779
      %v3960 = vpop.f32.mrf.mxu0
      %v3961 = vadd.f32 0.0, %v3960
      %v3962 = vpop.f32.mrf.mxu0
      %3963 = vmatprep.mubr.f32.mxu0 %v3782
      %3964 = vmatmul.mubr.f32.gmra.mxu0 %v3781
      %v3965 = vpop.f32.mrf.mxu0
      %v3966 = vadd.f32 0.0, %v3965
      %v3967 = vpop.f32.mrf.mxu0
      %3968 = vmatprep.mubr.f32.mxu0 %v3784
      %3969 = vmatmul.mubr.f32.gmra.mxu0 %v3783
      %v3970 = vpop.f32.mrf.mxu0
      %v3971 = vadd.f32 0.0, %v3970
      %v3972 = vpop.f32.mrf.mxu0
      %3973 = vmatprep.mubr.f32.mxu0 %v3786
      %3974 = vmatmul.mubr.f32.gmra.mxu0 %v3785
      %v3975 = vpop.f32.mrf.mxu0
      %v3976 = vadd.f32 0.0, %v3975
      %v3977 = vpop.f32.mrf.mxu0
      %3978 = vmatprep.mubr.f32.mxu0 %v3788
      %3979 = vmatmul.mubr.f32.gmra.mxu0 %v3787
      %v3980 = vpop.f32.mrf.mxu0
      %v3981 = vadd.f32 0.0, %v3980
      %v3982 = vpop.f32.mrf.mxu0
      %3983 = vmatprep.mubr.f32.mxu0 %v3790
      %3984 = vmatmul.mubr.f32.gmra.mxu0 %v3789
      %v3985 = vpop.f32.mrf.mxu0
      %v3986 = vadd.f32 0.0, %v3985
      %v3987 = vpop.f32.mrf.mxu0
      %3988 = vmatprep.mubr.f32.mxu0 %v3792
      %3989 = vmatmul.mubr.f32.gmra.mxu0 %v3791
      %v3990 = vpop.f32.mrf.mxu0
      %v3991 = vadd.f32 0.0, %v3990
      %v3992 = vpop.f32.mrf.mxu0
      %3993 = vdwg.mxu0
      %4002 = vrot.lane.b32.xlu0 %v1262, 8
      %v4003 = vpop.permute.xlu0 %4002
      %4004 = vrot.lane.b32.xlu0 %v1267, 8
      %v4005 = vpop.permute.xlu0 %4004
      %4006 = vrot.lane.b32.xlu0 %v1272, 8
      %v4007 = vpop.permute.xlu0 %4006
      %4008 = vrot.lane.b32.xlu0 %v1277, 8
      %v4009 = vpop.permute.xlu0 %4008
      %4010 = vrot.lane.b32.xlu0 %v1282, 8
      %v4011 = vpop.permute.xlu0 %4010
      %4012 = vrot.lane.b32.xlu0 %v1287, 8
      %v4013 = vpop.permute.xlu0 %4012
      %4014 = vrot.lane.b32.xlu0 %v1292, 8
      %v4015 = vpop.permute.xlu0 %4014
      %4016 = vrot.lane.b32.xlu0 %v1297, 8
      %v4017 = vpop.permute.xlu0 %4016
      %4034 = vrot.lane.b32.xlu0 %v1711, 16
      %v4035 = vpop.permute.xlu0 %4034
      %4036 = vrot.lane.b32.xlu0 %v1716, 16
      %v4037 = vpop.permute.xlu0 %4036
      %4038 = vrot.lane.b32.xlu0 %v1721, 16
      %v4039 = vpop.permute.xlu0 %4038
      %4040 = vrot.lane.b32.xlu0 %v1726, 16
      %v4041 = vpop.permute.xlu0 %4040
      %4042 = vrot.lane.b32.xlu0 %v1731, 16
      %v4043 = vpop.permute.xlu0 %4042
      %4044 = vrot.lane.b32.xlu0 %v1736, 16
      %v4045 = vpop.permute.xlu0 %4044
      %4046 = vrot.lane.b32.xlu0 %v1741, 16
      %v4047 = vpop.permute.xlu0 %4046
      %4048 = vrot.lane.b32.xlu0 %v1746, 16
      %v4049 = vpop.permute.xlu0 %4048
      %4066 = vrot.lane.b32.xlu0 %v2160, 24
      %v4067 = vpop.permute.xlu0 %4066
      %4068 = vrot.lane.b32.xlu0 %v2165, 24
      %v4069 = vpop.permute.xlu0 %4068
      %4070 = vrot.lane.b32.xlu0 %v2170, 24
      %v4071 = vpop.permute.xlu0 %4070
      %4072 = vrot.lane.b32.xlu0 %v2175, 24
      %v4073 = vpop.permute.xlu0 %4072
      %4074 = vrot.lane.b32.xlu0 %v2180, 24
      %v4075 = vpop.permute.xlu0 %4074
      %4076 = vrot.lane.b32.xlu0 %v2185, 24
      %v4077 = vpop.permute.xlu0 %4076
      %4078 = vrot.lane.b32.xlu0 %v2190, 24
      %v4079 = vpop.permute.xlu0 %4078
      %4080 = vrot.lane.b32.xlu0 %v2195, 24
      %v4081 = vpop.permute.xlu0 %4080
      %4098 = vrot.lane.b32.xlu0 %v2609, 32
      %v4099 = vpop.permute.xlu0 %4098
      %4100 = vrot.lane.b32.xlu0 %v2614, 32
      %v4101 = vpop.permute.xlu0 %4100
      %4102 = vrot.lane.b32.xlu0 %v2619, 32
      %v4103 = vpop.permute.xlu0 %4102
      %4104 = vrot.lane.b32.xlu0 %v2624, 32
      %v4105 = vpop.permute.xlu0 %4104
      %4106 = vrot.lane.b32.xlu0 %v2629, 32
      %v4107 = vpop.permute.xlu0 %4106
      %4108 = vrot.lane.b32.xlu0 %v2634, 32
      %v4109 = vpop.permute.xlu0 %4108
      %4110 = vrot.lane.b32.xlu0 %v2639, 32
      %v4111 = vpop.permute.xlu0 %4110
      %4112 = vrot.lane.b32.xlu0 %v2644, 32
      %v4113 = vpop.permute.xlu0 %4112
      %4130 = vrot.lane.b32.xlu0 %v3058, 40
      %v4131 = vpop.permute.xlu0 %4130
      %4132 = vrot.lane.b32.xlu0 %v3063, 40
      %v4133 = vpop.permute.xlu0 %4132
      %4134 = vrot.lane.b32.xlu0 %v3068, 40
      %v4135 = vpop.permute.xlu0 %4134
      %4136 = vrot.lane.b32.xlu0 %v3073, 40
      %v4137 = vpop.permute.xlu0 %4136
      %4138 = vrot.lane.b32.xlu0 %v3078, 40
      %v4139 = vpop.permute.xlu0 %4138
      %4140 = vrot.lane.b32.xlu0 %v3083, 40
      %v4141 = vpop.permute.xlu0 %4140
      %4142 = vrot.lane.b32.xlu0 %v3088, 40
      %v4143 = vpop.permute.xlu0 %4142
      %4144 = vrot.lane.b32.xlu0 %v3093, 40
      %v4145 = vpop.permute.xlu0 %4144
      %4162 = vrot.lane.b32.xlu0 %v3507, 48
      %v4163 = vpop.permute.xlu0 %4162
      %4164 = vrot.lane.b32.xlu0 %v3512, 48
      %v4165 = vpop.permute.xlu0 %4164
      %4166 = vrot.lane.b32.xlu0 %v3517, 48
      %v4167 = vpop.permute.xlu0 %4166
      %4168 = vrot.lane.b32.xlu0 %v3522, 48
      %v4169 = vpop.permute.xlu0 %4168
      %4170 = vrot.lane.b32.xlu0 %v3527, 48
      %v4171 = vpop.permute.xlu0 %4170
      %4172 = vrot.lane.b32.xlu0 %v3532, 48
      %v4173 = vpop.permute.xlu0 %4172
      %4174 = vrot.lane.b32.xlu0 %v3537, 48
      %v4175 = vpop.permute.xlu0 %4174
      %4176 = vrot.lane.b32.xlu0 %v3542, 48
      %v4177 = vpop.permute.xlu0 %4176
      %4194 = vrot.lane.b32.xlu0 %v3956, 56
      %v4195 = vpop.permute.xlu0 %4194
      %4196 = vrot.lane.b32.xlu0 %v3961, 56
      %v4197 = vpop.permute.xlu0 %4196
      %4198 = vrot.lane.b32.xlu0 %v3966, 56
      %v4199 = vpop.permute.xlu0 %4198
      %4200 = vrot.lane.b32.xlu0 %v3971, 56
      %v4201 = vpop.permute.xlu0 %4200
      %4202 = vrot.lane.b32.xlu0 %v3976, 56
      %v4203 = vpop.permute.xlu0 %4202
      %4204 = vrot.lane.b32.xlu0 %v3981, 56
      %v4205 = vpop.permute.xlu0 %4204
      %4206 = vrot.lane.b32.xlu0 %v3986, 56
      %v4207 = vpop.permute.xlu0 %4206
      %4208 = vrot.lane.b32.xlu0 %v3991, 56
      %v4209 = vpop.permute.xlu0 %4208
      %vm4218 = vcmask 64512
      %v4219 = vsel %vm4218, %v781, %v4003
      %v4220 = vsel %vm4218, %v786, %v4005
      %v4221 = vsel %vm4218, %v791, %v4007
      %v4222 = vsel %vm4218, %v796, %v4009
      %v4223 = vsel %vm4218, %v801, %v4011
      %v4224 = vsel %vm4218, %v806, %v4013
      %v4225 = vsel %vm4218, %v811, %v4015
      %v4226 = vsel %vm4218, %v816, %v4017
      %vm4227 = vcmask 130048
      %v4228 = vsel %vm4227, %v4219, %v4035
      %v4229 = vsel %vm4227, %v4220, %v4037
      %v4230 = vsel %vm4227, %v4221, %v4039
      %v4231 = vsel %vm4227, %v4222, %v4041
      %v4232 = vsel %vm4227, %v4223, %v4043
      %v4233 = vsel %vm4227, %v4224, %v4045
      %v4234 = vsel %vm4227, %v4225, %v4047
      %v4235 = vsel %vm4227, %v4226, %v4049
      %vm4236 = vcmask 195584
      %v4237 = vsel %vm4236, %v4228, %v4067
      %v4238 = vsel %vm4236, %v4229, %v4069
      %v4239 = vsel %vm4236, %v4230, %v4071
      %v4240 = vsel %vm4236, %v4231, %v4073
      %v4241 = vsel %vm4236, %v4232, %v4075
      %v4242 = vsel %vm4236, %v4233, %v4077
      %v4243 = vsel %vm4236, %v4234, %v4079
      %v4244 = vsel %vm4236, %v4235, %v4081
      %vm4245 = vcmask 261120
      %v4246 = vsel %vm4245, %v4237, %v4099
      %v4247 = vsel %vm4245, %v4238, %v4101
      %v4248 = vsel %vm4245, %v4239, %v4103
      %v4249 = vsel %vm4245, %v4240, %v4105
      %v4250 = vsel %vm4245, %v4241, %v4107
      %v4251 = vsel %vm4245, %v4242, %v4109
      %v4252 = vsel %vm4245, %v4243, %v4111
      %v4253 = vsel %vm4245, %v4244, %v4113
      %vm4254 = vcmask 326656
      %v4255 = vsel %vm4254, %v4246, %v4131
      %v4256 = vsel %vm4254, %v4247, %v4133
      %v4257 = vsel %vm4254, %v4248, %v4135
      %v4258 = vsel %vm4254, %v4249, %v4137
      %v4259 = vsel %vm4254, %v4250, %v4139
      %v4260 = vsel %vm4254, %v4251, %v4141
      %v4261 = vsel %vm4254, %v4252, %v4143
      %v4262 = vsel %vm4254, %v4253, %v4145
      %vm4263 = vcmask 392192
      %v4264 = vsel %vm4263, %v4255, %v4163
      %v4265 = vsel %vm4263, %v4256, %v4165
      %v4266 = vsel %vm4263, %v4257, %v4167
      %v4267 = vsel %vm4263, %v4258, %v4169
      %v4268 = vsel %vm4263, %v4259, %v4171
      %v4269 = vsel %vm4263, %v4260, %v4173
      %v4270 = vsel %vm4263, %v4261, %v4175
      %v4271 = vsel %vm4263, %v4262, %v4177
      %vm4272 = vcmask 457728
      %v4273 = vsel %vm4272, %v4264, %v4195
      %v4274 = vsel %vm4272, %v4265, %v4197
      %v4275 = vsel %vm4272, %v4266, %v4199
      %v4276 = vsel %vm4272, %v4267, %v4201
      %v4277 = vsel %vm4272, %v4268, %v4203
      %v4278 = vsel %vm4272, %v4269, %v4205
      %v4279 = vsel %vm4272, %v4270, %v4207
      %v4280 = vsel %vm4272, %v4271, %v4209
      %vm4281 = vcmask 523264
      %v4282 = vsel %vm4281, %v4273, 0.0
      %v4283 = vsel %vm4281, %v4274, 0.0
      %v4284 = vsel %vm4281, %v4275, 0.0
      %v4285 = vsel %vm4281, %v4276, 0.0
      %v4286 = vsel %vm4281, %v4277, 0.0
      %v4287 = vsel %vm4281, %v4278, 0.0
      %v4288 = vsel %vm4281, %v4279, 0.0
      %v4289 = vsel %vm4281, %v4280, 0.0
      %v4290 = vld [vmem:[%s3] sm:$0x1]
      %v4292 = vlaneseq
      %v4293 = vshrl.u32 %v4292, 7
      %v4294 = vsub.s32 0, %v4293
      %v4295 = vrot.slane %v4290, %v4294
      %v4297 = vadd.f32 %v4282, %v4295
      %v4298 = vadd.f32 %v4283, %v4295
      %v4299 = vadd.f32 %v4284, %v4295
      %v4300 = vadd.f32 %v4285, %v4295
      %v4301 = vadd.f32 %v4286, %v4295
      %v4302 = vadd.f32 %v4287, %v4295
      %v4303 = vadd.f32 %v4288, %v4295
      %v4304 = vadd.f32 %v4289, %v4295
      %vm4305 = vcmp.gt.f32.partialorder %v4297, 0.0
      %vm4306 = vcmp.gt.f32.partialorder %v4298, 0.0
      %vm4307 = vcmp.gt.f32.partialorder %v4299, 0.0
      %vm4308 = vcmp.gt.f32.partialorder %v4300, 0.0
      %vm4309 = vcmp.gt.f32.partialorder %v4301, 0.0
      %vm4310 = vcmp.gt.f32.partialorder %v4302, 0.0
      %vm4311 = vcmp.gt.f32.partialorder %v4303, 0.0
      %vm4312 = vcmp.gt.f32.partialorder %v4304, 0.0
      %v4313 = vmul.f32 %v4297, 1.442695
      %v4314 = vpow.pop %v4313
      %v4315 = vmul.f32 %v4298, 1.442695
      %v4316 = vpow.pop %v4315
      %v4317 = vmul.f32 %v4299, 1.442695
      %v4318 = vpow.pop %v4317
      %v4319 = vmul.f32 %v4300, 1.442695
      %v4320 = vpow.pop %v4319
      %v4321 = vmul.f32 %v4301, 1.442695
      %v4322 = vpow.pop %v4321
      %v4323 = vmul.f32 %v4302, 1.442695
      %v4324 = vpow.pop %v4323
      %v4325 = vmul.f32 %v4303, 1.442695
      %v4326 = vpow.pop %v4325
      %v4327 = vmul.f32 %v4304, 1.442695
      %v4328 = vpow.pop %v4327
      %v4329 = vsub.f32 %v4314, 1.0
      %v4330 = vsub.f32 %v4316, 1.0
      %v4331 = vsub.f32 %v4318, 1.0
      %v4332 = vsub.f32 %v4320, 1.0
      %v4333 = vsub.f32 %v4322, 1.0
      %v4334 = vsub.f32 %v4324, 1.0
      %v4335 = vsub.f32 %v4326, 1.0
      %v4336 = vsub.f32 %v4328, 1.0
      %v4337 = vsel %vm4305, %v4297, %v4329
      %v4338 = vsel %vm4306, %v4298, %v4330
      %v4339 = vsel %vm4307, %v4299, %v4331
      %v4340 = vsel %vm4308, %v4300, %v4332
      %v4341 = vsel %vm4309, %v4301, %v4333
      %v4342 = vsel %vm4310, %v4302, %v4334
      %v4343 = vsel %vm4311, %v4303, %v4335
      %v4344 = vsel %vm4312, %v4304, %v4336
      %v4345 = vld [vmem:[%s5] sm:$0xff]
      %v4346 = vld [vmem:[%s5 + $0x8] sm:$0xff]
      %v4347 = vld [vmem:[%s5 + $0x10] sm:$0xff]
      %v4348 = vld [vmem:[%s5 + $0x18] sm:$0xff]
      %v4349 = vld [vmem:[%s5 + $0x20] sm:$0xff]
      %v4350 = vld [vmem:[%s5 + $0x28] sm:$0xff]
      %v4351 = vld [vmem:[%s5 + $0x30] sm:$0xff]
      %v4352 = vld [vmem:[%s5 + $0x38] sm:$0xff]
      %v4353 = vld [vmem:[%s5 + $0x40] sm:$0xff]
      %v4354 = vld [vmem:[%s5 + $0x48] sm:$0xff]
      %v4355 = vld [vmem:[%s5 + $0x50] sm:$0xff]
      %v4356 = vld [vmem:[%s5 + $0x58] sm:$0xff]
      %v4357 = vld [vmem:[%s5 + $0x60] sm:$0xff]
      %v4358 = vld [vmem:[%s5 + $0x68] sm:$0xff]
      %v4359 = vld [vmem:[%s5 + $0x70] sm:$0xff]
      %v4360 = vld [vmem:[%s5 + $0x78] sm:$0xff]
      %4361 = vmatprep.subr.mxu0 0.0
      %4362 = vmatpush1.msra.mxu0 %v4360
      %4363 = vmatprep.subr.mxu0 0.0
      %4364 = vmatpush1.msra.mxu0 %v4359
      %4365 = vmatprep.subr.mxu0 0.0
      %4366 = vmatpush1.msra.mxu0 %v4358
      %4367 = vmatprep.subr.mxu0 0.0
      %4368 = vmatpush1.msra.mxu0 %v4357
      %4369 = vmatprep.subr.mxu0 0.0
      %4370 = vmatpush1.msra.mxu0 %v4356
      %4371 = vmatprep.subr.mxu0 0.0
      %4372 = vmatpush1.msra.mxu0 %v4355
      %4373 = vmatprep.subr.mxu0 0.0
      %4374 = vmatpush1.msra.mxu0 %v4354
      %4375 = vmatprep.subr.mxu0 0.0
      %4376 = vmatpush1.msra.mxu0 %v4353
      %4377 = vmatprep.subr.mxu0 0.0
      %4378 = vmatpush1.msra.mxu0 %v4352
      %4379 = vmatprep.subr.mxu0 0.0
      %4380 = vmatpush1.msra.mxu0 %v4351
      %4381 = vmatprep.subr.mxu0 0.0
      %4382 = vmatpush1.msra.mxu0 %v4350
      %4383 = vmatprep.subr.mxu0 0.0
      %4384 = vmatpush1.msra.mxu0 %v4349
      %4385 = vmatprep.subr.mxu0 0.0
      %4386 = vmatpush1.msra.mxu0 %v4348
      %4387 = vmatprep.subr.mxu0 0.0
      %4388 = vmatpush1.msra.mxu0 %v4347
      %4389 = vmatprep.subr.mxu0 0.0
      %4390 = vmatpush1.msra.mxu0 %v4346
      %4391 = vmatprep.subr.mxu0 0.0
      %4392 = vmatpush1.msra.mxu0 %v4345
      %4393 = vmatprep.subr.mxu0 0.0
      %4394 = vmatpush2.msra.mxu0 0.0
      %4395 = vmatprep.subr.mxu0 0.0
      %4396 = vmatpush2.msra.mxu0 0.0
      %4397 = vmatprep.subr.mxu0 0.0
      %4398 = vmatpush2.msra.mxu0 0.0
      %4399 = vmatprep.subr.mxu0 0.0
      %4400 = vmatpush2.msra.mxu0 0.0
      %4401 = vmatprep.subr.mxu0 0.0
      %4402 = vmatpush2.msra.mxu0 0.0
      %4403 = vmatprep.subr.mxu0 0.0
      %4404 = vmatpush2.msra.mxu0 0.0
      %4405 = vmatprep.subr.mxu0 0.0
      %4406 = vmatpush2.msra.mxu0 0.0
      %4407 = vmatprep.subr.mxu0 0.0
      %4408 = vmatpush2.msra.mxu0 0.0
      %4409 = vmatprep.subr.mxu0 0.0
      %4410 = vmatpush2.msra.mxu0 0.0
      %4411 = vmatprep.subr.mxu0 0.0
      %4412 = vmatpush2.msra.mxu0 0.0
      %4413 = vmatprep.subr.mxu0 0.0
      %4414 = vmatpush2.msra.mxu0 0.0
      %4415 = vmatprep.subr.mxu0 0.0
      %4416 = vmatpush2.msra.mxu0 0.0
      %4417 = vmatprep.subr.mxu0 0.0
      %4418 = vmatpush2.msra.mxu0 0.0
      %4419 = vmatprep.subr.mxu0 0.0
      %4420 = vmatpush2.msra.mxu0 0.0
      %4421 = vmatprep.subr.mxu0 0.0
      %4422 = vmatpush2.msra.mxu0 0.0
      %4423 = vmatprep.subr.mxu0 0.0
      %4424 = vmatpush2.msra.mxu0 0.0
      %4425 = vmatprep.mubr.f32.mxu0 0.0
      %4426 = vmatmul.mubr.f32.gmra.mxu0 %v4337
      %v4427 = vpop.f32.mrf.mxu0
      %v4428 = vadd.f32 0.0, %v4427
      %v4429 = vpop.f32.mrf.mxu0
      %4430 = vmatprep.mubr.f32.mxu0 0.0
      %4431 = vmatmul.mubr.f32.gmra.mxu0 %v4338
      %v4432 = vpop.f32.mrf.mxu0
      %v4433 = vadd.f32 0.0, %v4432
      %v4434 = vpop.f32.mrf.mxu0
      %4435 = vmatprep.mubr.f32.mxu0 0.0
      %4436 = vmatmul.mubr.f32.gmra.mxu0 %v4339
      %v4437 = vpop.f32.mrf.mxu0
      %v4438 = vadd.f32 0.0, %v4437
      %v4439 = vpop.f32.mrf.mxu0
      %4440 = vmatprep.mubr.f32.mxu0 0.0
      %4441 = vmatmul.mubr.f32.gmra.mxu0 %v4340
      %v4442 = vpop.f32.mrf.mxu0
      %v4443 = vadd.f32 0.0, %v4442
      %v4444 = vpop.f32.mrf.mxu0
      %4445 = vmatprep.mubr.f32.mxu0 0.0
      %4446 = vmatmul.mubr.f32.gmra.mxu0 %v4341
      %v4447 = vpop.f32.mrf.mxu0
      %v4448 = vadd.f32 0.0, %v4447
      %v4449 = vpop.f32.mrf.mxu0
      %4450 = vmatprep.mubr.f32.mxu0 0.0
      %4451 = vmatmul.mubr.f32.gmra.mxu0 %v4342
      %v4452 = vpop.f32.mrf.mxu0
      %v4453 = vadd.f32 0.0, %v4452
      %v4454 = vpop.f32.mrf.mxu0
      %4455 = vmatprep.mubr.f32.mxu0 0.0
      %4456 = vmatmul.mubr.f32.gmra.mxu0 %v4343
      %v4457 = vpop.f32.mrf.mxu0
      %v4458 = vadd.f32 0.0, %v4457
      %v4459 = vpop.f32.mrf.mxu0
      %4460 = vmatprep.mubr.f32.mxu0 0.0
      %4461 = vmatmul.mubr.f32.gmra.mxu0 %v4344
      %v4462 = vpop.f32.mrf.mxu0
      %v4463 = vadd.f32 0.0, %v4462
      %v4464 = vpop.f32.mrf.mxu0
      %4465 = vdwg.mxu0
      %4466 = vst [vmem:[%s340] sm:$0xff] %v4428
      %4467 = vst [vmem:[%s340 + $0x8] sm:$0xff] %v4433
      %4468 = vst [vmem:[%s340 + $0x10] sm:$0xff] %v4438
      %4469 = vst [vmem:[%s340 + $0x18] sm:$0xff] %v4443
      %4470 = vst [vmem:[%s340 + $0x20] sm:$0xff] %v4448
      %4471 = vst [vmem:[%s340 + $0x28] sm:$0xff] %v4453
      %4472 = vst [vmem:[%s340 + $0x30] sm:$0xff] %v4458
      %4473 = vst [vmem:[%s340 + $0x38] sm:$0xff] %v4463
      %v4474 = vld [vmem:[%s6] sm:$0xff]
      %v4475 = vld [vmem:[%s6 + $0x8] sm:$0xff]
      %v4476 = vld [vmem:[%s6 + $0x10] sm:$0xff]
      %v4477 = vld [vmem:[%s6 + $0x18] sm:$0xff]
      %v4478 = vld [vmem:[%s6 + $0x20] sm:$0xff]
      %v4479 = vld [vmem:[%s6 + $0x28] sm:$0xff]
      %v4480 = vld [vmem:[%s6 + $0x30] sm:$0xff]
      %v4481 = vld [vmem:[%s6 + $0x38] sm:$0xff]
      %v4482 = vld [vmem:[%s6 + $0x40] sm:$0xff]
      %v4483 = vld [vmem:[%s6 + $0x48] sm:$0xff]
      %v4484 = vld [vmem:[%s6 + $0x50] sm:$0xff]
      %v4485 = vld [vmem:[%s6 + $0x58] sm:$0xff]
      %v4486 = vld [vmem:[%s6 + $0x60] sm:$0xff]
      %v4487 = vld [vmem:[%s6 + $0x68] sm:$0xff]
      %v4488 = vld [vmem:[%s6 + $0x70] sm:$0xff]
      %v4489 = vld [vmem:[%s6 + $0x78] sm:$0xff]
      %4490 = vmatprep.subr.mxu0 0.0
      %4491 = vmatpush1.msra.mxu0 %v4489
      %4492 = vmatprep.subr.mxu0 0.0
      %4493 = vmatpush1.msra.mxu0 %v4488
      %4494 = vmatprep.subr.mxu0 0.0
      %4495 = vmatpush1.msra.mxu0 %v4487
      %4496 = vmatprep.subr.mxu0 0.0
      %4497 = vmatpush1.msra.mxu0 %v4486
      %4498 = vmatprep.subr.mxu0 0.0
      %4499 = vmatpush1.msra.mxu0 %v4485
      %4500 = vmatprep.subr.mxu0 0.0
      %4501 = vmatpush1.msra.mxu0 %v4484
      %4502 = vmatprep.subr.mxu0 0.0
      %4503 = vmatpush1.msra.mxu0 %v4483
      %4504 = vmatprep.subr.mxu0 0.0
      %4505 = vmatpush1.msra.mxu0 %v4482
      %4506 = vmatprep.subr.mxu0 0.0
      %4507 = vmatpush1.msra.mxu0 %v4481
      %4508 = vmatprep.subr.mxu0 0.0
      %4509 = vmatpush1.msra.mxu0 %v4480
      %4510 = vmatprep.subr.mxu0 0.0
      %4511 = vmatpush1.msra.mxu0 %v4479
      %4512 = vmatprep.subr.mxu0 0.0
      %4513 = vmatpush1.msra.mxu0 %v4478
      %4514 = vmatprep.subr.mxu0 0.0
      %4515 = vmatpush1.msra.mxu0 %v4477
      %4516 = vmatprep.subr.mxu0 0.0
      %4517 = vmatpush1.msra.mxu0 %v4476
      %4518 = vmatprep.subr.mxu0 0.0
      %4519 = vmatpush1.msra.mxu0 %v4475
      %4520 = vmatprep.subr.mxu0 0.0
      %4521 = vmatpush1.msra.mxu0 %v4474
      %4522 = vmatprep.subr.mxu0 0.0
      %4523 = vmatpush2.msra.mxu0 0.0
      %4524 = vmatprep.subr.mxu0 0.0
      %4525 = vmatpush2.msra.mxu0 0.0
      %4526 = vmatprep.subr.mxu0 0.0
      %4527 = vmatpush2.msra.mxu0 0.0
      %4528 = vmatprep.subr.mxu0 0.0
      %4529 = vmatpush2.msra.mxu0 0.0
      %4530 = vmatprep.subr.mxu0 0.0
      %4531 = vmatpush2.msra.mxu0 0.0
      %4532 = vmatprep.subr.mxu0 0.0
      %4533 = vmatpush2.msra.mxu0 0.0
      %4534 = vmatprep.subr.mxu0 0.0
      %4535 = vmatpush2.msra.mxu0 0.0
      %4536 = vmatprep.subr.mxu0 0.0
      %4537 = vmatpush2.msra.mxu0 0.0
      %4538 = vmatprep.subr.mxu0 0.0
      %4539 = vmatpush2.msra.mxu0 0.0
      %4540 = vmatprep.subr.mxu0 0.0
      %4541 = vmatpush2.msra.mxu0 0.0
      %4542 = vmatprep.subr.mxu0 0.0
      %4543 = vmatpush2.msra.mxu0 0.0
      %4544 = vmatprep.subr.mxu0 0.0
      %4545 = vmatpush2.msra.mxu0 0.0
      %4546 = vmatprep.subr.mxu0 0.0
      %4547 = vmatpush2.msra.mxu0 0.0
      %4548 = vmatprep.subr.mxu0 0.0
      %4549 = vmatpush2.msra.mxu0 0.0
      %4550 = vmatprep.subr.mxu0 0.0
      %4551 = vmatpush2.msra.mxu0 0.0
      %4552 = vmatprep.subr.mxu0 0.0
      %4553 = vmatpush2.msra.mxu0 0.0
      %4554 = vmatprep.mubr.f32.mxu0 0.0
      %4555 = vmatmul.mubr.f32.gmra.mxu0 %v4428
      %v4556 = vpop.f32.mrf.mxu0
      %v4557 = vadd.f32 0.0, %v4556
      %v4558 = vpop.f32.mrf.mxu0
      %4559 = vmatprep.mubr.f32.mxu0 0.0
      %4560 = vmatmul.mubr.f32.gmra.mxu0 %v4433
      %v4561 = vpop.f32.mrf.mxu0
      %v4562 = vadd.f32 0.0, %v4561
      %v4563 = vpop.f32.mrf.mxu0
      %4564 = vmatprep.mubr.f32.mxu0 0.0
      %4565 = vmatmul.mubr.f32.gmra.mxu0 %v4438
      %v4566 = vpop.f32.mrf.mxu0
      %v4567 = vadd.f32 0.0, %v4566
      %v4568 = vpop.f32.mrf.mxu0
      %4569 = vmatprep.mubr.f32.mxu0 0.0
      %4570 = vmatmul.mubr.f32.gmra.mxu0 %v4443
      %v4571 = vpop.f32.mrf.mxu0
      %v4572 = vadd.f32 0.0, %v4571
      %v4573 = vpop.f32.mrf.mxu0
      %4574 = vmatprep.mubr.f32.mxu0 0.0
      %4575 = vmatmul.mubr.f32.gmra.mxu0 %v4448
      %v4576 = vpop.f32.mrf.mxu0
      %v4577 = vadd.f32 0.0, %v4576
      %v4578 = vpop.f32.mrf.mxu0
      %4579 = vmatprep.mubr.f32.mxu0 0.0
      %4580 = vmatmul.mubr.f32.gmra.mxu0 %v4453
      %v4581 = vpop.f32.mrf.mxu0
      %v4582 = vadd.f32 0.0, %v4581
      %v4583 = vpop.f32.mrf.mxu0
      %4584 = vmatprep.mubr.f32.mxu0 0.0
      %4585 = vmatmul.mubr.f32.gmra.mxu0 %v4458
      %v4586 = vpop.f32.mrf.mxu0
      %v4587 = vadd.f32 0.0, %v4586
      %v4588 = vpop.f32.mrf.mxu0
      %4589 = vmatprep.mubr.f32.mxu0 0.0
      %4590 = vmatmul.mubr.f32.gmra.mxu0 %v4463
      %v4591 = vpop.f32.mrf.mxu0
      %v4592 = vadd.f32 0.0, %v4591
      %v4593 = vpop.f32.mrf.mxu0
      %4594 = vdwg.mxu0
      %vm4595 = vcmask 15360
      %4596 = vst.msk [vmem:[%s346] sm:$0xff] %vm4595, %v4557
      %4597 = vst.msk [vmem:[%s346 + $0x8] sm:$0xff] %vm4595, %v4562
      %4598 = vst.msk [vmem:[%s346 + $0x10] sm:$0xff] %vm4595, %v4567
      %4599 = vst.msk [vmem:[%s346 + $0x18] sm:$0xff] %vm4595, %v4572
      %4600 = vst.msk [vmem:[%s346 + $0x20] sm:$0xff] %vm4595, %v4577
      %4601 = vst.msk [vmem:[%s346 + $0x28] sm:$0xff] %vm4595, %v4582
      %4602 = vst.msk [vmem:[%s346 + $0x30] sm:$0xff] %vm4595, %v4587
      %4603 = vst.msk [vmem:[%s346 + $0x38] sm:$0xff] %vm4595, %v4592
      %s4604 = smul.u32 8, %s20
      %p4605 = scmp.lt.s32.totalorder %s4604, 31
      %s4606 = scalar_select %p4605, %s4604, 31
      %s4607 = smul.addr %s4606, 8
      %s4608 = scalar_lea.vmem %s7, %s4607
      %s4609 = smul.u32 8, %s20
      %p4610 = scmp.lt.s32.totalorder %s4609, 31
      %s4611 = scalar_select %p4610, %s4609, 31
      %s4612 = smul.addr %s4611, 8
      %s4613 = scalar_lea.vmem %s8, %s4612
      // Predicated region
      $region49: #{gatnet_forward.5} parent=47 // pred_check
        %p4614 = pneg %p195
      $region50: #{gatnet_forward.5} parent=47 // pred_check_branch
        %4616 = sbr.rel (%p4614) target = $region52
      $region51: #{gatnet_forward.5} parent=47 // pred_region
        %s4617 = smul.u32 8, %s20
      $region52: #{gatnet_forward.5} parent=47 // pred_fallthru
        _
      // Predicated region
      $region53: #{gatnet_forward.5} parent=47 // pred_check
        %p4618 = pneg %p221
      $region54: #{gatnet_forward.5} parent=47 // pred_check_branch
        %4620 = sbr.rel (%p4618) target = $region56
      $region55: #{gatnet_forward.5} parent=47 // pred_region
        %s4621 = smul.u32 8, %s20
      $region56: #{gatnet_forward.5} parent=47 // pred_fallthru
        _
    $region48: #{gatnet_forward.5} parent=5 // pred_fallthru
      _
    %p4622 = scmp.le.s32.totalorder 2, %s15
    // Predicated region
    $region57: #{gatnet_forward.5} parent=5 // pred_check
      %p4623 = pneg %p4622
    $region58: #{gatnet_forward.5} parent=5 // pred_check_branch
      %4625 = sbr.rel (%p4623) target = $region60
    $region59: #{gatnet_forward.5} parent=5 // pred_region
      %s4626 = ssub.s32 %s15, 2
      // Predicated region
      $region61: #{gatnet_forward.5} parent=59 // pred_check
        %p4627 = pneg %p201
      $region62: #{gatnet_forward.5} parent=59 // pred_check_branch
        %4629 = sbr.rel (%p4627) target = $region64
      $region63: #{gatnet_forward.5} parent=59 // pred_region
        %s4630 = smul.u32 8, %s21
        %p4631 = scmp.lt.s32.totalorder %s4630, 31
        %s4632 = scalar_select %p4631, %s4630, 31
        %s4633 = smul.addr %s4632, 8
        %s4634 = scalar_lea.vmem %s7, %s4633
      $region64: #{gatnet_forward.5} parent=59 // pred_fallthru
        _
      // Predicated region
      $region65: #{gatnet_forward.5} parent=59 // pred_check
        %p4635 = pneg %p227
      $region66: #{gatnet_forward.5} parent=59 // pred_check_branch
        %4637 = sbr.rel (%p4635) target = $region68
      $region67: #{gatnet_forward.5} parent=59 // pred_region
        %s4638 = smul.u32 8, %s21
        %p4639 = scmp.lt.s32.totalorder %s4638, 31
        %s4640 = scalar_select %p4639, %s4638, 31
        %s4641 = smul.addr %s4640, 8
        %s4642 = scalar_lea.vmem %s8, %s4641
      $region68: #{gatnet_forward.5} parent=59 // pred_fallthru
        _
    $region60: #{gatnet_forward.5} parent=5 // pred_fallthru
      _
  $region6: #{gatnet_forward.5} parent=0 // loop_footer
    %s19 = sadd.s32 1, %s15
  $region7: #{gatnet_forward.5} parent=0 // loop_footer_branch
    %14 = sbr.rel target = $region3
  $region8: #{gatnet_forward.5} parent=0 // loop_exit
    _

</llo_original>
